<compile_context>
chip_gen: v5e
topology: v5e:2x2
jax: 0.10.0
libtpu: 0.0.40
codegen_flags: <defaults>
</compile_context>

<pallas_src>
import jax
import jax.numpy as jnp
from jax.experimental import pallas as pl
from jax.experimental.pallas import tpu as pltpu

_BF16 = jnp.bfloat16
_TPU_VMEM_BYTES = None


def _vmem_bytes():
    global _TPU_VMEM_BYTES
    if _TPU_VMEM_BYTES is None:
        try:
            _TPU_VMEM_BYTES = int(pltpu.get_tpu_info().vmem_capacity_bytes)
        except Exception:
            _TPU_VMEM_BYTES = 64 * 1024 * 1024   # conservative (v7x per-TC)
    return _TPU_VMEM_BYTES


def _mosaic_params(*sem):
    limit = max(32 * 1024 * 1024,
                min(_vmem_bytes() * 3 // 4, 96 * 1024 * 1024))
    return pltpu.CompilerParams(dimension_semantics=tuple(sem),
                                vmem_limit_bytes=int(limit))


def _pick_tile(total, target, mult=8):
    """Largest divisor of `total` <= target that is a multiple of `mult`;
    falls back to `total` (block == full dim is always layout-legal)."""
    for t in range(min(total, target), 0, -1):
        if total % t == 0 and t % mult == 0:
            return t
    return total


# ----------------------------- conv1: 1x1 conv ------------------------------

def _conv1x1_kernel(x_ref, w_ref, y_ref, st_ref):
    y = jnp.dot(x_ref[...], w_ref[...], preferred_element_type=jnp.float32)
    y_ref[...] = y.astype(y_ref.dtype)
    s = jnp.sum(y, axis=0, keepdims=True)
    d = y - s * (1.0 / y.shape[0])                      # mean-shifted per tile
    st_ref[0:1, :] = s
    st_ref[1:2, :] = jnp.sum(d * d, axis=0, keepdims=True)


def conv1x1_stats(x_flat, w, tm_target):
    """1x1 conv as (M, K) @ (K, C) tiled over M; weight VMEM-resident.
    Returns bf16 pre-BN output and per-tile [sum, centered-ssq] stats."""
    m, k = x_flat.shape
    c = w.shape[1]
    tm = _pick_tile(m, tm_target)
    g = m // tm
    y, st = pl.pallas_call(
        _conv1x1_kernel,
        out_shape=(jax.ShapeDtypeStruct((m, c), _BF16),
                   jax.ShapeDtypeStruct((g, 2, c), jnp.float32)),
        grid=(g,),
        in_specs=[pl.BlockSpec((tm, k), lambda i: (i, 0)),
                  pl.BlockSpec((k, c), lambda i: (0, 0))],        # resident
        out_specs=(pl.BlockSpec((tm, c), lambda i: (i, 0)),
                   pl.BlockSpec((None, 2, c), lambda i: (i, 0, 0))),
        compiler_params=_mosaic_params("parallel"),
    )(x_flat, w)
    return y, st, tm


# ------------------------ upsample: ConvTranspose2d -------------------------

def _upsample_kernel(x_ref, w_ref, b_ref, o_ref):
    tr, wi, cd = x_ref.shape
    r2 = o_ref.shape[-1]
    x = x_ref[...].reshape(tr * wi, cd)
    for a in range(2):   # output-row parity; weight columns ordered (b, cout)
        y = jnp.dot(x, w_ref[a], preferred_element_type=jnp.float32) + b_ref[...]
        o_ref[:, a, :, :] = y.reshape(tr, wi, r2).astype(o_ref.dtype)


def upsample2x(x_rows, w_r, b_t):
    """ConvTranspose2d(k=2, s=2).  x_rows: (N*Hi, Wi, Cd) bf16;
    w_r: (2, Cd, 2*r) bf16; b_t: (1, 2*r) f32.  The (N*Hi, 2, Wi, 2*r) bf16
    output reshapes for free to (N, 2Hi, 2Wi, r)."""
    nr, wi, cd = x_rows.shape
    r2 = w_r.shape[-1]
    tr = _pick_tile(nr, 256)
    return pl.pallas_call(
        _upsample_kernel,
        out_shape=jax.ShapeDtypeStruct((nr, 2, wi, r2), _BF16),
        grid=(nr // tr,),
        in_specs=[pl.BlockSpec((tr, wi, cd), lambda i: (i, 0, 0)),
                  pl.BlockSpec(w_r.shape, lambda i: (0, 0, 0)),   # resident
                  pl.BlockSpec(b_t.shape, lambda i: (0, 0))],     # resident
        out_specs=pl.BlockSpec((tr, 2, wi, r2), lambda i: (i, 0, 0, 0)),
        compiler_params=_mosaic_params("parallel"),
    )(x_rows, w_r, b_t)


# ----------------------- conv2 / conv3: fused 3x3 conv ----------------------

def _affine_relu_bf16(x_ref, sc_ref, sh_ref):
    # fused training-mode BatchNorm (precomputed scale/shift) + ReLU of the
    # producer layer, applied on the fly to the consumer conv's input tile
    return jnp.maximum(x_ref[...].astype(jnp.float32) * sc_ref[...] + sh_ref[...],
                       0.0).astype(_BF16)


def _accum_taps(acc, xpad, w_ref, h, w):
    # xpad: (h+2, w+2, cin) zero-padded window (VMEM value); 9 shifted-slice
    # matmuls with f32 accumulation.  Slices touch only leading/sublane dims.
    cin = xpad.shape[-1]
    for dh in range(3):
        for dw in range(3):
            patch = xpad[dh:dh + h, dw:dw + w, :].reshape(h * w, cin)
            acc = acc + jnp.dot(patch, w_ref[dh, dw],
                                preferred_element_type=jnp.float32)
    return acc


def _store_out_and_stats(acc, o_ref, st_ref, h, w):
    co = o_ref.shape[-1]
    o_ref[...] = acc.reshape(h, w, co).astype(o_ref.dtype)
    s = jnp.sum(acc, axis=0, keepdims=True)
    d = acc - s * (1.0 / (h * w))                        # mean-shifted per tile
    st_ref[0:1, :] = s
    st_ref[1:2, :] = jnp.sum(d * d, axis=0, keepdims=True)


def _conv3x3_fused_kernel(x_ref, sc_ref, sh_ref, w_ref, o_ref, st_ref, pbuf):
    h, w, co = o_ref.shape
    pbuf[...] = jnp.zeros_like(pbuf)                     # zero halo, VMEM only
    pbuf[1:h + 1, 1:w + 1, :] = _affine_relu_bf16(x_ref, sc_ref, sh_ref)
    acc = _accum_taps(jnp.zeros((h * w, co), jnp.float32), pbuf[...], w_ref, h, w)
    _store_out_and_stats(acc, o_ref, st_ref, h, w)


def _conv3x3_cat_fused_kernel(x1_ref, xu_ref, sc_ref, sh_ref, wa_ref, wb_ref,
                              o_ref, st_ref, pbuf1, pbuf2):
    # conv over channel-concat([BN+ReLU(x1), xu]) done as two tap-sets
    # (no concat, no im2col, no padded copy in HBM)
    h, w, co = o_ref.shape
    pbuf1[...] = jnp.zeros_like(pbuf1)
    pbuf2[...] = jnp.zeros_like(pbuf2)
    pbuf1[1:h + 1, 1:w + 1, :] = _affine_relu_bf16(x1_ref, sc_ref, sh_ref)
    pbuf2[1:h + 1, 1:w + 1, :] = xu_ref[...]
    acc = _accum_taps(jnp.zeros((h * w, co), jnp.float32), pbuf1[...], wa_ref, h, w)
    acc = _accum_taps(acc, pbuf2[...], wb_ref, h, w)
    _store_out_and_stats(acc, o_ref, st_ref, h, w)


def conv3x3_fused(x_pre, scale, shift, w_t, extra=None, out_dtype=_BF16):
    """'same' 3x3 conv of concat([relu(x_pre*scale+shift), extra], ch axis).

    x_pre / extra: (N, H, W, C*) bf16 activations; w_t: (3, 3, Ctot, Co)
    transposed torch weight.  One grid step = one batch image; the zero-padded
    window lives only in VMEM; the producer BN+ReLU is fused into the input
    path; a (2, Co) [sum, centered-ssq] stat block per image feeds the
    consumer BatchNorm.  Conv bias is omitted (cancelled by training-mode BN).
    """
    n, h, w, c1 = x_pre.shape
    co = w_t.shape[-1]

    args = [x_pre]
    in_specs = [pl.BlockSpec((None, h, w, c1), lambda i: (i, 0, 0, 0))]
    scratch = [pltpu.VMEM((h + 2, w + 2, c1), _BF16)]
    if extra is not None:
        c2 = extra.shape[-1]
        args.append(extra)
        in_specs.append(pl.BlockSpec((None, h, w, c2), lambda i: (i, 0, 0, 0)))
        scratch.append(pltpu.VMEM((h + 2, w + 2, c2), _BF16))

    args += [scale, shift]
    in_specs += [pl.BlockSpec((1, c1), lambda i: (0, 0)),         # resident
                 pl.BlockSpec((1, c1), lambda i: (0, 0))]         # resident

    if extra is None:
        kernel = _conv3x3_fused_kernel
        wargs = [w_t.astype(_BF16)]
    else:
        kernel = _conv3x3_cat_fused_kernel
        wargs = [w_t[:, :, :c1, :].astype(_BF16),
                 w_t[:, :, c1:, :].astype(_BF16)]
    for wt in wargs:
        args.append(wt)
        in_specs.append(pl.BlockSpec(wt.shape, lambda i: (0, 0, 0, 0)))  # resident

    return pl.pallas_call(
        kernel,
        out_shape=(jax.ShapeDtypeStruct((n, h, w, co), out_dtype),
                   jax.ShapeDtypeStruct((n, 2, co), jnp.float32)),
        grid=(n,),
        in_specs=in_specs,
        out_specs=(pl.BlockSpec((None, h, w, co), lambda i: (i, 0, 0, 0)),
                   pl.BlockSpec((None, 2, co), lambda i: (i, 0, 0))),
        scratch_shapes=scratch,
        compiler_params=_mosaic_params("parallel"),
    )(*args)


# ------------------------------ JAX glue -------------------------------------

def _bn_affine(st, n_per_tile, gamma, beta, eps=1e-5):
    """Training-mode BatchNorm2d affine from per-tile [sum, centered ssq]
    (Chan parallel-variance combination, biased variance)."""
    s = st[:, 0, :]
    q = st[:, 1, :]
    count = st.shape[0] * n_per_tile
    mean = jnp.sum(s, axis=0) / count
    var = (jnp.sum(q, axis=0)
           + n_per_tile * jnp.sum((s / n_per_tile - mean) ** 2, axis=0)) / count
    var = jnp.maximum(var, 0.0)
    scale = gamma * jax.lax.rsqrt(var + eps)
    shift = beta - mean * scale
    c = gamma.shape[0]
    return scale.reshape(1, c), shift.reshape(1, c)


def init_params(key, in_channels_down, in_channels_path, reduce_dim_to):
    ks = jax.random.split(key, 8)
    r = reduce_dim_to
    p = {
        # conv1: Conv2d(in_channels_path, r, 1) + BN
        "w1": 0.1 * jax.random.normal(ks[0], (r, in_channels_path, 1, 1)),
        "b1": 0.1 * jax.random.normal(ks[1], (r,)),   # cancelled by training-mode BN
        "g1": jnp.ones((r,)), "be1": jnp.zeros((r,)),
        # upsample: ConvTranspose2d(in_channels_down, r, kernel=2, stride=2)
        "wu": 0.1 * jax.random.normal(ks[2], (in_channels_down, r, 2, 2)),
        "bu": 0.1 * jax.random.normal(ks[3], (r,)),
        # conv2: Conv2d(2r, r, 3, padding='same') + BN
        "w2": 0.1 * jax.random.normal(ks[4], (r, 2 * r, 3, 3)),
        "b2": 0.1 * jax.random.normal(ks[5], (r,)),   # cancelled by training-mode BN
        "g2": jnp.ones((r,)), "be2": jnp.zeros((r,)),
        # conv3: Conv2d(r, r, 3, padding='same') + BN
        "w3": 0.1 * jax.random.normal(ks[6], (r, r, 3, 3)),
        "b3": 0.1 * jax.random.normal(ks[7], (r,)),   # cancelled by training-mode BN
        "g3": jnp.ones((r,)), "be3": jnp.zeros((r,)),
    }
    return {k: v.astype(jnp.float32) for k, v in p.items()}


def upsampling_block(p, contract_nchw, x_nchw):
    n, cp_c, h, w = contract_nchw.shape
    _, cd, hi, wi = x_nchw.shape
    r = p["g1"].shape[0]
    m = n * h * w

    # entry layout change (NCHW -> NHWC); bf16 downcast fused into it by XLA
    cp = jnp.transpose(contract_nchw, (0, 2, 3, 1)).reshape(m, cp_c).astype(_BF16)
    xd = jnp.transpose(x_nchw, (0, 2, 3, 1)).reshape(n * hi, wi, cd).astype(_BF16)

    # generation-aware row-tile target (v5e/v6e: 128 MiB VMEM, v7x: 64 MiB/TC)
    tm_target = 2048 if _vmem_bytes() >= 100 * 1024 * 1024 else 1024

    # --- conv1: 1x1 conv + stats (b1 cancelled by training-mode BN) ---
    w1 = p["w1"].reshape(r, cp_c).T.astype(_BF16)                    # (Cp, r)
    y1_pre, st1, tm1 = conv1x1_stats(cp, w1, tm_target)
    sc1, sh1 = _bn_affine(st1, tm1, p["g1"], p["be1"])

    # --- upsample: ConvTranspose2d(k=2, s=2); bias bu kept (zero padding
    #     makes its effect spatially non-uniform through conv2) ---
    w_u = jnp.transpose(p["wu"], (2, 0, 3, 1)).reshape(2, cd, 2 * r).astype(_BF16)
    b_u = jnp.tile(p["bu"], 2).reshape(1, 2 * r)
    yu = upsample2x(xd, w_u, b_u).reshape(n, 2 * hi, 2 * wi, r)      # free reshape

    # --- conv2: 3x3 'same' over concat([BN1+ReLU(y1), yu]); BN1+ReLU fused ---
    w2 = jnp.transpose(p["w2"], (2, 3, 1, 0))                        # (3,3,2r,r)
    y2_pre, st2 = conv3x3_fused(y1_pre.reshape(n, h, w, r), sc1, sh1, w2,
                                extra=yu, out_dtype=_BF16)
    sc2, sh2 = _bn_affine(st2, h * w, p["g2"], p["be2"])

    # --- conv3: 3x3 'same'; BN2+ReLU fused on its input ---
    w3 = jnp.transpose(p["w3"], (2, 3, 1, 0))                        # (3,3,r,r)
    y3_pre, st3 = conv3x3_fused(y2_pre, sc2, sh2, w3, extra=None,
                                out_dtype=jnp.float32)
    sc3, sh3 = _bn_affine(st3, h * w, p["g3"], p["be3"])

    # --- final BN3+ReLU: folded by XLA into the exit NCHW transpose ---
    y3 = jnp.maximum(y3_pre * sc3.reshape(1, 1, 1, r) + sh3.reshape(1, 1, 1, r),
                     0.0)
    return jnp.transpose(y3, (0, 3, 1, 2))                           # back to NCHW


# ------------------------------- main ----------------------------------------

if __name__ == "__main__":
    key = jax.random.PRNGKey(0)
    k_cp, k_x, k_p = jax.random.split(key, 3)

    batch = 2
    in_channels_down = 8     # channels of the tensor coming up from below
    in_channels_path = 4     # channels of the skip-connection tensor
    reduce_dim_to = 8
    H, W = 16, 16            # spatial size of the skip connection

    contract_path = jax.random.normal(
        k_cp, (batch, in_channels_path, H, W), jnp.float32)
    x_down = jax.random.normal(
        k_x, (batch, in_channels_down, H // 2, W // 2), jnp.float32)

    params = init_params(k_p, in_channels_down, in_channels_path, reduce_dim_to)

    out = jax.jit(upsampling_block)(params, contract_path, x_down)
    out = jax.block_until_ready(out)

    assert out.shape == (batch, reduce_dim_to, H, W), out.shape
    assert jnp.all(jnp.isfinite(out))
    print("KERNEL_OK")
</pallas_src>

<mosaic_0001>
module attributes {stable_mosaic.version = 11 : i64} {
  func.func @_upsample_kernel(%arg0: i32, %arg1: memref<16x8x8xbf16, #tpu.memory_space<vmem>>, %arg2: memref<2x8x16xbf16, #tpu.memory_space<vmem>>, %arg3: memref<1x16xf32, #tpu.memory_space<vmem>>, %arg4: memref<16x2x8x16xbf16, #tpu.memory_space<vmem>>) attributes {dimension_semantics = [#tpu.dimension_semantics<parallel>], iteration_bounds = array<i64: 1>, scalar_prefetch = 0 : i64, scratch_operands = 0 : i64, tpu.core_type = #tpu.core_type<tc>, window_params = [{transform_indices = @transform_0, window_bounds = array<i64: 16, 8, 8>}, {pipeline_mode = #tpu.pipeline_mode<synchronous>, transform_indices = @transform_1, window_bounds = array<i64: 2, 8, 16>}, {pipeline_mode = #tpu.pipeline_mode<synchronous>, transform_indices = @transform_2, window_bounds = array<i64: 1, 16>}, {transform_indices = @transform_3, window_bounds = array<i64: 16, 2, 8, 16>}]} {
    %c0 = arith.constant 0 : index
    %c0_0 = arith.constant 0 : index
    %c0_1 = arith.constant 0 : index
    %0 = vector.load %arg1[%c0, %c0_0, %c0_1] : memref<16x8x8xbf16, #tpu.memory_space<vmem>>, vector<16x8x8xbf16>
    %1 = vector.shape_cast %0 : vector<16x8x8xbf16> to vector<128x8xbf16>
    %c0_2 = arith.constant 0 : index
    %c0_3 = arith.constant 0 : index
    %c0_4 = arith.constant 0 : index
    %2 = vector.load %arg2[%c0_2, %c0_3, %c0_4] : memref<2x8x16xbf16, #tpu.memory_space<vmem>>, vector<1x8x16xbf16>
    %3 = vector.shape_cast %2 : vector<1x8x16xbf16> to vector<8x16xbf16>
    %cst = arith.constant dense<0.000000e+00> : vector<128x16xf32>
    %4 = tpu.matmul %1, %3, %cst {dimension_numbers = #tpu.dot_dimension_numbers<[1], [0], [0], [1], [0, 0, 1, 1], [], []>} : vector<128x8xbf16>, vector<8x16xbf16>, vector<128x16xf32> -> vector<128x16xf32>
    %c0_5 = arith.constant 0 : index
    %c0_6 = arith.constant 0 : index
    %5 = vector.load %arg3[%c0_5, %c0_6] : memref<1x16xf32, #tpu.memory_space<vmem>>, vector<1x16xf32>
    %6 = vector.broadcast %5 : vector<1x16xf32> to vector<128x16xf32>
    %7 = arith.addf %4, %6 : vector<128x16xf32>
    %8 = vector.shape_cast %7 : vector<128x16xf32> to vector<16x8x16xf32>
    %9 = arith.truncf %8 : vector<16x8x16xf32> to vector<16x8x16xbf16>
    %c0_7 = arith.constant 0 : index
    %c0_8 = arith.constant 0 : index
    %c0_9 = arith.constant 0 : index
    %c0_10 = arith.constant 0 : index
    %10 = vector.load %arg4[%c0_7, %c0_8, %c0_9, %c0_10] : memref<16x2x8x16xbf16, #tpu.memory_space<vmem>>, vector<16x1x8x16xbf16>
    %11 = vector.shape_cast %10 : vector<16x1x8x16xbf16> to vector<16x8x16xbf16>
    %12 = vector.shape_cast %9 : vector<16x8x16xbf16> to vector<16x1x8x16xbf16>
    tpu.vector_store %arg4[%c0_7, %c0_8, %c0_9, %c0_10], %12 {strides = array<i32>} : memref<16x2x8x16xbf16, #tpu.memory_space<vmem>>, vector<16x1x8x16xbf16>,
    %c1 = arith.constant 1 : index
    %c0_11 = arith.constant 0 : index
    %c0_12 = arith.constant 0 : index
    %13 = vector.load %arg2[%c1, %c0_11, %c0_12] : memref<2x8x16xbf16, #tpu.memory_space<vmem>>, vector<1x8x16xbf16>
    %14 = vector.shape_cast %13 : vector<1x8x16xbf16> to vector<8x16xbf16>
    %cst_13 = arith.constant dense<0.000000e+00> : vector<128x16xf32>
    %15 = tpu.matmul %1, %14, %cst_13 {dimension_numbers = #tpu.dot_dimension_numbers<[1], [0], [0], [1], [0, 0, 1, 1], [], []>} : vector<128x8xbf16>, vector<8x16xbf16>, vector<128x16xf32> -> vector<128x16xf32>
    %c0_14 = arith.constant 0 : index
    %c0_15 = arith.constant 0 : index
    %16 = vector.load %arg3[%c0_14, %c0_15] : memref<1x16xf32, #tpu.memory_space<vmem>>, vector<1x16xf32>
    %17 = vector.broadcast %16 : vector<1x16xf32> to vector<128x16xf32>
    %18 = arith.addf %15, %17 : vector<128x16xf32>
    %19 = vector.shape_cast %18 : vector<128x16xf32> to vector<16x8x16xf32>
    %20 = arith.truncf %19 : vector<16x8x16xf32> to vector<16x8x16xbf16>
    %c0_16 = arith.constant 0 : index
    %c1_17 = arith.constant 1 : index
    %c0_18 = arith.constant 0 : index
    %c0_19 = arith.constant 0 : index
    %21 = vector.load %arg4[%c0_16, %c1_17, %c0_18, %c0_19] : memref<16x2x8x16xbf16, #tpu.memory_space<vmem>>, vector<16x1x8x16xbf16>
    %22 = vector.shape_cast %21 : vector<16x1x8x16xbf16> to vector<16x8x16xbf16>
    %23 = vector.shape_cast %20 : vector<16x8x16xbf16> to vector<16x1x8x16xbf16>
    tpu.vector_store %arg4[%c0_16, %c1_17, %c0_18, %c0_19], %23 {strides = array<i32>} : memref<16x2x8x16xbf16, #tpu.memory_space<vmem>>, vector<16x1x8x16xbf16>,
    return
  }
  func.func @transform_0(%arg0: i32) -> (i32, i32, i32) {
    %c0_i32 = arith.constant 0 : i32
    %c0_i32_0 = arith.constant 0 : i32
    %c0_i32_1 = arith.constant 0 : i32
    return %arg0, %c0_i32, %c0_i32_0 : i32, i32, i32
  }
  func.func @transform_1(%arg0: i32) -> (i32, i32, i32) {
    %c0_i32 = arith.constant 0 : i32
    %c0_i32_0 = arith.constant 0 : i32
    %c0_i32_1 = arith.constant 0 : i32
    %c0_i32_2 = arith.constant 0 : i32
    return %c0_i32, %c0_i32_0, %c0_i32_1 : i32, i32, i32
  }
  func.func @transform_2(%arg0: i32) -> (i32, i32) {
    %c0_i32 = arith.constant 0 : i32
    %c0_i32_0 = arith.constant 0 : i32
    %c0_i32_1 = arith.constant 0 : i32
    return %c0_i32, %c0_i32_0 : i32, i32
  }
  func.func @transform_3(%arg0: i32) -> (i32, i32, i32, i32) {
    %c0_i32 = arith.constant 0 : i32
    %c0_i32_0 = arith.constant 0 : i32
    %c0_i32_1 = arith.constant 0 : i32
    %c0_i32_2 = arith.constant 0 : i32
    return %arg0, %c0_i32, %c0_i32_0, %c0_i32_1 : i32, i32, i32, i32
  }
}

module attributes {stable_mosaic.version = 11 : i64} {
  func.func @_conv1x1_kernel(%arg0: i32, %arg1: memref<512x4xbf16, #tpu.memory_space<vmem>>, %arg2: memref<4x8xbf16, #tpu.memory_space<vmem>>, %arg3: memref<512x8xbf16, #tpu.memory_space<vmem>>, %arg4: memref<1x2x8xf32, #tpu.memory_space<vmem>>) attributes {dimension_semantics = [#tpu.dimension_semantics<parallel>], iteration_bounds = array<i64: 1>, scalar_prefetch = 0 : i64, scratch_operands = 0 : i64, tpu.core_type = #tpu.core_type<tc>, window_params = [{transform_indices = @transform_0, window_bounds = array<i64: 512, 4>}, {pipeline_mode = #tpu.pipeline_mode<synchronous>, transform_indices = @transform_1, window_bounds = array<i64: 4, 8>}, {transform_indices = @transform_2, window_bounds = array<i64: 512, 8>}, {transform_indices = @transform_3, window_bounds = array<i64: 1, 2, 8>}]} {
    %c0 = arith.constant 0 : index
    %c0_0 = arith.constant 0 : index
    %0 = vector.load %arg1[%c0, %c0_0] : memref<512x4xbf16, #tpu.memory_space<vmem>>, vector<512x4xbf16>
    %c0_1 = arith.constant 0 : index
    %c0_2 = arith.constant 0 : index
    %1 = vector.load %arg2[%c0_1, %c0_2] : memref<4x8xbf16, #tpu.memory_space<vmem>>, vector<4x8xbf16>
    %cst = arith.constant dense<0.000000e+00> : vector<512x8xf32>
    %2 = tpu.matmul %0, %1, %cst {dimension_numbers = #tpu.dot_dimension_numbers<[1], [0], [0], [1], [0, 0, 1, 1], [], []>} : vector<512x4xbf16>, vector<4x8xbf16>, vector<512x8xf32> -> vector<512x8xf32>
    %3 = arith.truncf %2 : vector<512x8xf32> to vector<512x8xbf16>
    %c0_3 = arith.constant 0 : index
    %c0_4 = arith.constant 0 : index
    %4 = vector.load %arg3[%c0_3, %c0_4] : memref<512x8xbf16, #tpu.memory_space<vmem>>, vector<512x8xbf16>
    tpu.vector_store %arg3[%c0_3, %c0_4], %3 {strides = array<i32>} : memref<512x8xbf16, #tpu.memory_space<vmem>>, vector<512x8xbf16>,
    %cst_5 = arith.constant dense<0.000000e+00> : vector<8xf32>
    %5 = vector.multi_reduction <add>, %2, %cst_5 [0] : vector<512x8xf32> to vector<8xf32>
    %6 = vector.shape_cast %5 : vector<8xf32> to vector<1x8xf32>
    %cst_6 = arith.constant 0.001953125 : f32
    %7 = vector.broadcast %cst_6 : f32 to vector<1x8xf32>
    %8 = arith.mulf %6, %7 : vector<1x8xf32>
    %9 = vector.broadcast %8 : vector<1x8xf32> to vector<512x8xf32>
    %10 = arith.subf %2, %9 : vector<512x8xf32>
    %c0_7 = arith.constant 0 : index
    %c0_8 = arith.constant 0 : index
    %c0_9 = arith.constant 0 : index
    %11 = vector.load %arg4[%c0_7, %c0_8, %c0_9] : memref<1x2x8xf32, #tpu.memory_space<vmem>>, vector<1x1x8xf32>
    %12 = vector.shape_cast %11 : vector<1x1x8xf32> to vector<1x8xf32>
    %13 = vector.shape_cast %6 : vector<1x8xf32> to vector<1x1x8xf32>
    tpu.vector_store %arg4[%c0_7, %c0_8, %c0_9], %13 {strides = array<i32>} : memref<1x2x8xf32, #tpu.memory_space<vmem>>, vector<1x1x8xf32>,
    %14 = arith.mulf %10, %10 : vector<512x8xf32>
    %cst_10 = arith.constant dense<0.000000e+00> : vector<8xf32>
    %15 = vector.multi_reduction <add>, %14, %cst_10 [0] : vector<512x8xf32> to vector<8xf32>
    %16 = vector.shape_cast %15 : vector<8xf32> to vector<1x8xf32>
    %c0_11 = arith.constant 0 : index
    %c1 = arith.constant 1 : index
    %c0_12 = arith.constant 0 : index
    %17 = vector.load %arg4[%c0_11, %c1, %c0_12] : memref<1x2x8xf32, #tpu.memory_space<vmem>>, vector<1x1x8xf32>
    %18 = vector.shape_cast %17 : vector<1x1x8xf32> to vector<1x8xf32>
    %19 = vector.shape_cast %16 : vector<1x8xf32> to vector<1x1x8xf32>
    tpu.vector_store %arg4[%c0_11, %c1, %c0_12], %19 {strides = array<i32>} : memref<1x2x8xf32, #tpu.memory_space<vmem>>, vector<1x1x8xf32>,
    return
  }
  func.func @transform_0(%arg0: i32) -> (i32, i32) {
    %c0_i32 = arith.constant 0 : i32
    %c0_i32_0 = arith.constant 0 : i32
    return %arg0, %c0_i32 : i32, i32
  }
  func.func @transform_1(%arg0: i32) -> (i32, i32) {
    %c0_i32 = arith.constant 0 : i32
    %c0_i32_0 = arith.constant 0 : i32
    %c0_i32_1 = arith.constant 0 : i32
    return %c0_i32, %c0_i32_0 : i32, i32
  }
  func.func @transform_2(%arg0: i32) -> (i32, i32) {
    %c0_i32 = arith.constant 0 : i32
    %c0_i32_0 = arith.constant 0 : i32
    return %arg0, %c0_i32 : i32, i32
  }
  func.func @transform_3(%arg0: i32) -> (i32, i32, i32) {
    %c0_i32 = arith.constant 0 : i32
    %c0_i32_0 = arith.constant 0 : i32
    %c0_i32_1 = arith.constant 0 : i32
    return %arg0, %c0_i32, %c0_i32_0 : i32, i32, i32
  }
}

module attributes {stable_mosaic.version = 11 : i64} {
  func.func @_conv3x3_cat_fused_kernel(%arg0: i32, %arg1: memref<1x16x16x8xbf16, #tpu.memory_space<vmem>>, %arg2: memref<1x16x16x8xbf16, #tpu.memory_space<vmem>>, %arg3: memref<1x8xf32, #tpu.memory_space<vmem>>, %arg4: memref<1x8xf32, #tpu.memory_space<vmem>>, %arg5: memref<3x3x8x8xbf16, #tpu.memory_space<vmem>>, %arg6: memref<3x3x8x8xbf16, #tpu.memory_space<vmem>>, %arg7: memref<1x16x16x8xbf16, #tpu.memory_space<vmem>>, %arg8: memref<1x2x8xf32, #tpu.memory_space<vmem>>, %arg9: memref<18x18x8xbf16, #tpu.memory_space<vmem>>, %arg10: memref<18x18x8xbf16, #tpu.memory_space<vmem>>) attributes {dimension_semantics = [#tpu.dimension_semantics<parallel>], iteration_bounds = array<i64: 2>, scalar_prefetch = 0 : i64, scratch_operands = 2 : i64, tpu.core_type = #tpu.core_type<tc>, window_params = [{transform_indices = @transform_0, window_bounds = array<i64: 1, 16, 16, 8>}, {transform_indices = @transform_1, window_bounds = array<i64: 1, 16, 16, 8>}, {pipeline_mode = #tpu.pipeline_mode<synchronous>, transform_indices = @transform_2, window_bounds = array<i64: 1, 8>}, {pipeline_mode = #tpu.pipeline_mode<synchronous>, transform_indices = @transform_3, window_bounds = array<i64: 1, 8>}, {pipeline_mode = #tpu.pipeline_mode<synchronous>, transform_indices = @transform_4, window_bounds = array<i64: 3, 3, 8, 8>}, {pipeline_mode = #tpu.pipeline_mode<synchronous>, transform_indices = @transform_5, window_bounds = array<i64: 3, 3, 8, 8>}, {transform_indices = @transform_6, window_bounds = array<i64: 1, 16, 16, 8>}, {transform_indices = @transform_7, window_bounds = array<i64: 1, 2, 8>}]} {
    %cst = arith.constant 0.000000e+00 : bf16
    %0 = vector.broadcast %cst : bf16 to vector<18x18x8xbf16>
    %c0 = arith.constant 0 : index
    %c0_0 = arith.constant 0 : index
    %c0_1 = arith.constant 0 : index
    %1 = vector.load %arg9[%c0, %c0_0, %c0_1] : memref<18x18x8xbf16, #tpu.memory_space<vmem>>, vector<18x18x8xbf16>
    tpu.vector_store %arg9[%c0, %c0_0, %c0_1], %0 {strides = array<i32>} : memref<18x18x8xbf16, #tpu.memory_space<vmem>>, vector<18x18x8xbf16>,
    %cst_2 = arith.constant 0.000000e+00 : bf16
    %2 = vector.broadcast %cst_2 : bf16 to vector<18x18x8xbf16>
    %c0_3 = arith.constant 0 : index
    %c0_4 = arith.constant 0 : index
    %c0_5 = arith.constant 0 : index
    %3 = vector.load %arg10[%c0_3, %c0_4, %c0_5] : memref<18x18x8xbf16, #tpu.memory_space<vmem>>, vector<18x18x8xbf16>
    tpu.vector_store %arg10[%c0_3, %c0_4, %c0_5], %2 {strides = array<i32>} : memref<18x18x8xbf16, #tpu.memory_space<vmem>>, vector<18x18x8xbf16>,
    %c0_6 = arith.constant 0 : index
    %c0_7 = arith.constant 0 : index
    %c0_8 = arith.constant 0 : index
    %c0_9 = arith.constant 0 : index
    %4 = vector.load %arg1[%c0_6, %c0_7, %c0_8, %c0_9] : memref<1x16x16x8xbf16, #tpu.memory_space<vmem>>, vector<1x16x16x8xbf16>
    %5 = vector.shape_cast %4 : vector<1x16x16x8xbf16> to vector<16x16x8xbf16>
    %6 = arith.extf %5 : vector<16x16x8xbf16> to vector<16x16x8xf32>
    %c0_10 = arith.constant 0 : index
    %c0_11 = arith.constant 0 : index
    %7 = vector.load %arg3[%c0_10, %c0_11] : memref<1x8xf32, #tpu.memory_space<vmem>>, vector<1x8xf32>
    %8 = vector.shape_cast %7 : vector<1x8xf32> to vector<1x1x8xf32>
    %9 = vector.broadcast %8 : vector<1x1x8xf32> to vector<16x16x8xf32>
    %10 = arith.mulf %6, %9 : vector<16x16x8xf32>
    %c0_12 = arith.constant 0 : index
    %c0_13 = arith.constant 0 : index
    %11 = vector.load %arg4[%c0_12, %c0_13] : memref<1x8xf32, #tpu.memory_space<vmem>>, vector<1x8xf32>
    %12 = vector.shape_cast %11 : vector<1x8xf32> to vector<1x1x8xf32>
    %13 = vector.broadcast %12 : vector<1x1x8xf32> to vector<16x16x8xf32>
    %14 = arith.addf %10, %13 : vector<16x16x8xf32>
    %cst_14 = arith.constant 0.000000e+00 : f32
    %15 = vector.broadcast %cst_14 : f32 to vector<16x16x8xf32>
    %16 = arith.maximumf %14, %15 : vector<16x16x8xf32>
    %17 = arith.truncf %16 : vector<16x16x8xf32> to vector<16x16x8xbf16>
    %c1 = arith.constant 1 : index
    %c1_15 = arith.constant 1 : index
    %c0_16 = arith.constant 0 : index
    %18 = vector.load %arg9[%c1, %c1_15, %c0_16] : memref<18x18x8xbf16, #tpu.memory_space<vmem>>, vector<16x16x8xbf16>
    tpu.vector_store %arg9[%c1, %c1_15, %c0_16], %17 {strides = array<i32>} : memref<18x18x8xbf16, #tpu.memory_space<vmem>>, vector<16x16x8xbf16>,
    %c0_17 = arith.constant 0 : index
    %c0_18 = arith.constant 0 : index
    %c0_19 = arith.constant 0 : index
    %c0_20 = arith.constant 0 : index
    %19 = vector.load %arg2[%c0_17, %c0_18, %c0_19, %c0_20] : memref<1x16x16x8xbf16, #tpu.memory_space<vmem>>, vector<1x16x16x8xbf16>
    %20 = vector.shape_cast %19 : vector<1x16x16x8xbf16> to vector<16x16x8xbf16>
    %c1_21 = arith.constant 1 : index
    %c1_22 = arith.constant 1 : index
    %c0_23 = arith.constant 0 : index
    %21 = vector.load %arg10[%c1_21, %c1_22, %c0_23] : memref<18x18x8xbf16, #tpu.memory_space<vmem>>, vector<16x16x8xbf16>
    tpu.vector_store %arg10[%c1_21, %c1_22, %c0_23], %20 {strides = array<i32>} : memref<18x18x8xbf16, #tpu.memory_space<vmem>>, vector<16x16x8xbf16>,
    %cst_24 = arith.constant 0.000000e+00 : f32
    %22 = vector.broadcast %cst_24 : f32 to vector<256x8xf32>
    %c0_25 = arith.constant 0 : index
    %c0_26 = arith.constant 0 : index
    %c0_27 = arith.constant 0 : index
    %23 = vector.load %arg9[%c0_25, %c0_26, %c0_27] : memref<18x18x8xbf16, #tpu.memory_space<vmem>>, vector<18x18x8xbf16>
    %24 = vector.extract_strided_slice %23 {offsets = [0, 0, 0], sizes = [16, 16, 8], strides = [1, 1, 1]} : vector<18x18x8xbf16> to vector<16x16x8xbf16>
    %25 = vector.shape_cast %24 : vector<16x16x8xbf16> to vector<256x8xbf16>
    %c0_28 = arith.constant 0 : index
    %c0_29 = arith.constant 0 : index
    %c0_30 = arith.constant 0 : index
    %c0_31 = arith.constant 0 : index
    %26 = vector.load %arg5[%c0_28, %c0_29, %c0_30, %c0_31] : memref<3x3x8x8xbf16, #tpu.memory_space<vmem>>, vector<1x1x8x8xbf16>
    %27 = vector.shape_cast %26 : vector<1x1x8x8xbf16> to vector<8x8xbf16>
    %cst_32 = arith.constant dense<0.000000e+00> : vector<256x8xf32>
    %28 = tpu.matmul %25, %27, %cst_32 {dimension_numbers = #tpu.dot_dimension_numbers<[1], [0], [0], [1], [0, 0, 1, 1], [], []>} : vector<256x8xbf16>, vector<8x8xbf16>, vector<256x8xf32> -> vector<256x8xf32>
    %29 = arith.addf %22, %28 : vector<256x8xf32>
    %30 = vector.extract_strided_slice %23 {offsets = [0, 1, 0], sizes = [16, 16, 8], strides = [1, 1, 1]} : vector<18x18x8xbf16> to vector<16x16x8xbf16>
    %31 = vector.shape_cast %30 : vector<16x16x8xbf16> to vector<256x8xbf16>
    %c0_33 = arith.constant 0 : index
    %c1_34 = arith.constant 1 : index
    %c0_35 = arith.constant 0 : index
    %c0_36 = arith.constant 0 : index
    %32 = vector.load %arg5[%c0_33, %c1_34, %c0_35, %c0_36] : memref<3x3x8x8xbf16, #tpu.memory_space<vmem>>, vector<1x1x8x8xbf16>
    %33 = vector.shape_cast %32 : vector<1x1x8x8xbf16> to vector<8x8xbf16>
    %cst_37 = arith.constant dense<0.000000e+00> : vector<256x8xf32>
    %34 = tpu.matmul %31, %33, %cst_37 {dimension_numbers = #tpu.dot_dimension_numbers<[1], [0], [0], [1], [0, 0, 1, 1], [], []>} : vector<256x8xbf16>, vector<8x8xbf16>, vector<256x8xf32> -> vector<256x8xf32>
    %35 = arith.addf %29, %34 : vector<256x8xf32>
    %36 = vector.extract_strided_slice %23 {offsets = [0, 2, 0], sizes = [16, 16, 8], strides = [1, 1, 1]} : vector<18x18x8xbf16> to vector<16x16x8xbf16>
    %37 = vector.shape_cast %36 : vector<16x16x8xbf16> to vector<256x8xbf16>
    %c0_38 = arith.constant 0 : index
    %c2 = arith.constant 2 : index
    %c0_39 = arith.constant 0 : index
    %c0_40 = arith.constant 0 : index
    %38 = vector.load %arg5[%c0_38, %c2, %c0_39, %c0_40] : memref<3x3x8x8xbf16, #tpu.memory_space<vmem>>, vector<1x1x8x8xbf16>
    %39 = vector.shape_cast %38 : vector<1x1x8x8xbf16> to vector<8x8xbf16>
    %cst_41 = arith.constant dense<0.000000e+00> : vector<256x8xf32>
    %40 = tpu.matmul %37, %39, %cst_41 {dimension_numbers = #tpu.dot_dimension_numbers<[1], [0], [0], [1], [0, 0, 1, 1], [], []>} : vector<256x8xbf16>, vector<8x8xbf16>, vector<256x8xf32> -> vector<256x8xf32>
    %41 = arith.addf %35, %40 : vector<256x8xf32>
    %42 = vector.extract_strided_slice %23 {offsets = [1, 0, 0], sizes = [16, 16, 8], strides = [1, 1, 1]} : vector<18x18x8xbf16> to vector<16x16x8xbf16>
    %43 = vector.shape_cast %42 : vector<16x16x8xbf16> to vector<256x8xbf16>
    %c1_42 = arith.constant 1 : index
    %c0_43 = arith.constant 0 : index
    %c0_44 = arith.constant 0 : index
    %c0_45 = arith.constant 0 : index
    %44 = vector.load %arg5[%c1_42, %c0_43, %c0_44, %c0_45] : memref<3x3x8x8xbf16, #tpu.memory_space<vmem>>, vector<1x1x8x8xbf16>
    %45 = vector.shape_cast %44 : vector<1x1x8x8xbf16> to vector<8x8xbf16>
    %cst_46 = arith.constant dense<0.000000e+00> : vector<256x8xf32>
    %46 = tpu.matmul %43, %45, %cst_46 {dimension_numbers = #tpu.dot_dimension_numbers<[1], [0], [0], [1], [0, 0, 1, 1], [], []>} : vector<256x8xbf16>, vector<8x8xbf16>, vector<256x8xf32> -> vector<256x8xf32>
    %47 = arith.addf %41, %46 : vector<256x8xf32>
    %48 = vector.extract_strided_slice %23 {offsets = [1, 1, 0], sizes = [16, 16, 8], strides = [1, 1, 1]} : vector<18x18x8xbf16> to vector<16x16x8xbf16>
    %49 = vector.shape_cast %48 : vector<16x16x8xbf16> to vector<256x8xbf16>
    %c1_47 = arith.constant 1 : index
    %c1_48 = arith.constant 1 : index
    %c0_49 = arith.constant 0 : index
    %c0_50 = arith.constant 0 : index
    %50 = vector.load %arg5[%c1_47, %c1_48, %c0_49, %c0_50] : memref<3x3x8x8xbf16, #tpu.memory_space<vmem>>, vector<1x1x8x8xbf16>
    %51 = vector.shape_cast %50 : vector<1x1x8x8xbf16> to vector<8x8xbf16>
    %cst_51 = arith.constant dense<0.000000e+00> : vector<256x8xf32>
    %52 = tpu.matmul %49, %51, %cst_51 {dimension_numbers = #tpu.dot_dimension_numbers<[1], [0], [0], [1], [0, 0, 1, 1], [], []>} : vector<256x8xbf16>, vector<8x8xbf16>, vector<256x8xf32> -> vector<256x8xf32>
    %53 = arith.addf %47, %52 : vector<256x8xf32>
    %54 = vector.extract_strided_slice %23 {offsets = [1, 2, 0], sizes = [16, 16, 8], strides = [1, 1, 1]} : vector<18x18x8xbf16> to vector<16x16x8xbf16>
    %55 = vector.shape_cast %54 : vector<16x16x8xbf16> to vector<256x8xbf16>
    %c1_52 = arith.constant 1 : index
    %c2_53 = arith.constant 2 : index
    %c0_54 = arith.constant 0 : index
    %c0_55 = arith.constant 0 : index
    %56 = vector.load %arg5[%c1_52, %c2_53, %c0_54, %c0_55] : memref<3x3x8x8xbf16, #tpu.memory_space<vmem>>, vector<1x1x8x8xbf16>
    %57 = vector.shape_cast %56 : vector<1x1x8x8xbf16> to vector<8x8xbf16>
    %cst_56 = arith.constant dense<0.000000e+00> : vector<256x8xf32>
    %58 = tpu.matmul %55, %57, %cst_56 {dimension_numbers = #tpu.dot_dimension_numbers<[1], [0], [0], [1], [0, 0, 1, 1], [], []>} : vector<256x8xbf16>, vector<8x8xbf16>, vector<256x8xf32> -> vector<256x8xf32>
    %59 = arith.addf %53, %58 : vector<256x8xf32>
    %60 = vector.extract_strided_slice %23 {offsets = [2, 0, 0], sizes = [16, 16, 8], strides = [1, 1, 1]} : vector<18x18x8xbf16> to vector<16x16x8xbf16>
    %61 = vector.shape_cast %60 : vector<16x16x8xbf16> to vector<256x8xbf16>
    %c2_57 = arith.constant 2 : index
    %c0_58 = arith.constant 0 : index
    %c0_59 = arith.constant 0 : index
    %c0_60 = arith.constant 0 : index
    %62 = vector.load %arg5[%c2_57, %c0_58, %c0_59, %c0_60] : memref<3x3x8x8xbf16, #tpu.memory_space<vmem>>, vector<1x1x8x8xbf16>
    %63 = vector.shape_cast %62 : vector<1x1x8x8xbf16> to vector<8x8xbf16>
    %cst_61 = arith.constant dense<0.000000e+00> : vector<256x8xf32>
    %64 = tpu.matmul %61, %63, %cst_61 {dimension_numbers = #tpu.dot_dimension_numbers<[1], [0], [0], [1], [0, 0, 1, 1], [], []>} : vector<256x8xbf16>, vector<8x8xbf16>, vector<256x8xf32> -> vector<256x8xf32>
    %65 = arith.addf %59, %64 : vector<256x8xf32>
    %66 = vector.extract_strided_slice %23 {offsets = [2, 1, 0], sizes = [16, 16, 8], strides = [1, 1, 1]} : vector<18x18x8xbf16> to vector<16x16x8xbf16>
    %67 = vector.shape_cast %66 : vector<16x16x8xbf16> to vector<256x8xbf16>
    %c2_62 = arith.constant 2 : index
    %c1_63 = arith.constant 1 : index
    %c0_64 = arith.constant 0 : index
    %c0_65 = arith.constant 0 : index
    %68 = vector.load %arg5[%c2_62, %c1_63, %c0_64, %c0_65] : memref<3x3x8x8xbf16, #tpu.memory_space<vmem>>, vector<1x1x8x8xbf16>
    %69 = vector.shape_cast %68 : vector<1x1x8x8xbf16> to vector<8x8xbf16>
    %cst_66 = arith.constant dense<0.000000e+00> : vector<256x8xf32>
    %70 = tpu.matmul %67, %69, %cst_66 {dimension_numbers = #tpu.dot_dimension_numbers<[1], [0], [0], [1], [0, 0, 1, 1], [], []>} : vector<256x8xbf16>, vector<8x8xbf16>, vector<256x8xf32> -> vector<256x8xf32>
    %71 = arith.addf %65, %70 : vector<256x8xf32>
    %72 = vector.extract_strided_slice %23 {offsets = [2, 2, 0], sizes = [16, 16, 8], strides = [1, 1, 1]} : vector<18x18x8xbf16> to vector<16x16x8xbf16>
    %73 = vector.shape_cast %72 : vector<16x16x8xbf16> to vector<256x8xbf16>
    %c2_67 = arith.constant 2 : index
    %c2_68 = arith.constant 2 : index
    %c0_69 = arith.constant 0 : index
    %c0_70 = arith.constant 0 : index
    %74 = vector.load %arg5[%c2_67, %c2_68, %c0_69, %c0_70] : memref<3x3x8x8xbf16, #tpu.memory_space<vmem>>, vector<1x1x8x8xbf16>
    %75 = vector.shape_cast %74 : vector<1x1x8x8xbf16> to vector<8x8xbf16>
    %cst_71 = arith.constant dense<0.000000e+00> : vector<256x8xf32>
    %76 = tpu.matmul %73, %75, %cst_71 {dimension_numbers = #tpu.dot_dimension_numbers<[1], [0], [0], [1], [0, 0, 1, 1], [], []>} : vector<256x8xbf16>, vector<8x8xbf16>, vector<256x8xf32> -> vector<256x8xf32>
    %77 = arith.addf %71, %76 : vector<256x8xf32>
    %c0_72 = arith.constant 0 : index
    %c0_73 = arith.constant 0 : index
    %c0_74 = arith.constant 0 : index
    %78 = vector.load %arg10[%c0_72, %c0_73, %c0_74] : memref<18x18x8xbf16, #tpu.memory_space<vmem>>, vector<18x18x8xbf16>
    %79 = vector.extract_strided_slice %78 {offsets = [0, 0, 0], sizes = [16, 16, 8], strides = [1, 1, 1]} : vector<18x18x8xbf16> to vector<16x16x8xbf16>
    %80 = vector.shape_cast %79 : vector<16x16x8xbf16> to vector<256x8xbf16>
    %c0_75 = arith.constant 0 : index
    %c0_76 = arith.constant 0 : index
    %c0_77 = arith.constant 0 : index
    %c0_78 = arith.constant 0 : index
    %81 = vector.load %arg6[%c0_75, %c0_76, %c0_77, %c0_78] : memref<3x3x8x8xbf16, #tpu.memory_space<vmem>>, vector<1x1x8x8xbf16>
    %82 = vector.shape_cast %81 : vector<1x1x8x8xbf16> to vector<8x8xbf16>
    %cst_79 = arith.constant dense<0.000000e+00> : vector<256x8xf32>
    %83 = tpu.matmul %80, %82, %cst_79 {dimension_numbers = #tpu.dot_dimension_numbers<[1], [0], [0], [1], [0, 0, 1, 1], [], []>} : vector<256x8xbf16>, vector<8x8xbf16>, vector<256x8xf32> -> vector<256x8xf32>
    %84 = arith.addf %77, %83 : vector<256x8xf32>
    %85 = vector.extract_strided_slice %78 {offsets = [0, 1, 0], sizes = [16, 16, 8], strides = [1, 1, 1]} : vector<18x18x8xbf16> to vector<16x16x8xbf16>
    %86 = vector.shape_cast %85 : vector<16x16x8xbf16> to vector<256x8xbf16>
    %c0_80 = arith.constant 0 : index
    %c1_81 = arith.constant 1 : index
    %c0_82 = arith.constant 0 : index
    %c0_83 = arith.constant 0 : index
    %87 = vector.load %arg6[%c0_80, %c1_81, %c0_82, %c0_83] : memref<3x3x8x8xbf16, #tpu.memory_space<vmem>>, vector<1x1x8x8xbf16>
    %88 = vector.shape_cast %87 : vector<1x1x8x8xbf16> to vector<8x8xbf16>
    %cst_84 = arith.constant dense<0.000000e+00> : vector<256x8xf32>
    %89 = tpu.matmul %86, %88, %cst_84 {dimension_numbers = #tpu.dot_dimension_numbers<[1], [0], [0], [1], [0, 0, 1, 1], [], []>} : vector<256x8xbf16>, vector<8x8xbf16>, vector<256x8xf32> -> vector<256x8xf32>
    %90 = arith.addf %84, %89 : vector<256x8xf32>
    %91 = vector.extract_strided_slice %78 {offsets = [0, 2, 0], sizes = [16, 16, 8], strides = [1, 1, 1]} : vector<18x18x8xbf16> to vector<16x16x8xbf16>
    %92 = vector.shape_cast %91 : vector<16x16x8xbf16> to vector<256x8xbf16>
    %c0_85 = arith.constant 0 : index
    %c2_86 = arith.constant 2 : index
    %c0_87 = arith.constant 0 : index
    %c0_88 = arith.constant 0 : index
    %93 = vector.load %arg6[%c0_85, %c2_86, %c0_87, %c0_88] : memref<3x3x8x8xbf16, #tpu.memory_space<vmem>>, vector<1x1x8x8xbf16>
    %94 = vector.shape_cast %93 : vector<1x1x8x8xbf16> to vector<8x8xbf16>
    %cst_89 = arith.constant dense<0.000000e+00> : vector<256x8xf32>
    %95 = tpu.matmul %92, %94, %cst_89 {dimension_numbers = #tpu.dot_dimension_numbers<[1], [0], [0], [1], [0, 0, 1, 1], [], []>} : vector<256x8xbf16>, vector<8x8xbf16>, vector<256x8xf32> -> vector<256x8xf32>
    %96 = arith.addf %90, %95 : vector<256x8xf32>
    %97 = vector.extract_strided_slice %78 {offsets = [1, 0, 0], sizes = [16, 16, 8], strides = [1, 1, 1]} : vector<18x18x8xbf16> to vector<16x16x8xbf16>
    %98 = vector.shape_cast %97 : vector<16x16x8xbf16> to vector<256x8xbf16>
    %c1_90 = arith.constant 1 : index
    %c0_91 = arith.constant 0 : index
    %c0_92 = arith.constant 0 : index
    %c0_93 = arith.constant 0 : index
    %99 = vector.load %arg6[%c1_90, %c0_91, %c0_92, %c0_93] : memref<3x3x8x8xbf16, #tpu.memory_space<vmem>>, vector<1x1x8x8xbf16>
    %100 = vector.shape_cast %99 : vector<1x1x8x8xbf16> to vector<8x8xbf16>
    %cst_94 = arith.constant dense<0.000000e+00> : vector<256x8xf32>
    %101 = tpu.matmul %98, %100, %cst_94 {dimension_numbers = #tpu.dot_dimension_numbers<[1], [0], [0], [1], [0, 0, 1, 1], [], []>} : vector<256x8xbf16>, vector<8x8xbf16>, vector<256x8xf32> -> vector<256x8xf32>
    %102 = arith.addf %96, %101 : vector<256x8xf32>
    %103 = vector.extract_strided_slice %78 {offsets = [1, 1, 0], sizes = [16, 16, 8], strides = [1, 1, 1]} : vector<18x18x8xbf16> to vector<16x16x8xbf16>
    %104 = vector.shape_cast %103 : vector<16x16x8xbf16> to vector<256x8xbf16>
    %c1_95 = arith.constant 1 : index
    %c1_96 = arith.constant 1 : index
    %c0_97 = arith.constant 0 : index
    %c0_98 = arith.constant 0 : index
    %105 = vector.load %arg6[%c1_95, %c1_96, %c0_97, %c0_98] : memref<3x3x8x8xbf16, #tpu.memory_space<vmem>>, vector<1x1x8x8xbf16>
    %106 = vector.shape_cast %105 : vector<1x1x8x8xbf16> to vector<8x8xbf16>
    %cst_99 = arith.constant dense<0.000000e+00> : vector<256x8xf32>
    %107 = tpu.matmul %104, %106, %cst_99 {dimension_numbers = #tpu.dot_dimension_numbers<[1], [0], [0], [1], [0, 0, 1, 1], [], []>} : vector<256x8xbf16>, vector<8x8xbf16>, vector<256x8xf32> -> vector<256x8xf32>
    %108 = arith.addf %102, %107 : vector<256x8xf32>
    %109 = vector.extract_strided_slice %78 {offsets = [1, 2, 0], sizes = [16, 16, 8], strides = [1, 1, 1]} : vector<18x18x8xbf16> to vector<16x16x8xbf16>
    %110 = vector.shape_cast %109 : vector<16x16x8xbf16> to vector<256x8xbf16>
    %c1_100 = arith.constant 1 : index
    %c2_101 = arith.constant 2 : index
    %c0_102 = arith.constant 0 : index
    %c0_103 = arith.constant 0 : index
    %111 = vector.load %arg6[%c1_100, %c2_101, %c0_102, %c0_103] : memref<3x3x8x8xbf16, #tpu.memory_space<vmem>>, vector<1x1x8x8xbf16>
    %112 = vector.shape_cast %111 : vector<1x1x8x8xbf16> to vector<8x8xbf16>
    %cst_104 = arith.constant dense<0.000000e+00> : vector<256x8xf32>
    %113 = tpu.matmul %110, %112, %cst_104 {dimension_numbers = #tpu.dot_dimension_numbers<[1], [0], [0], [1], [0, 0, 1, 1], [], []>} : vector<256x8xbf16>, vector<8x8xbf16>, vector<256x8xf32> -> vector<256x8xf32>
    %114 = arith.addf %108, %113 : vector<256x8xf32>
    %115 = vector.extract_strided_slice %78 {offsets = [2, 0, 0], sizes = [16, 16, 8], strides = [1, 1, 1]} : vector<18x18x8xbf16> to vector<16x16x8xbf16>
    %116 = vector.shape_cast %115 : vector<16x16x8xbf16> to vector<256x8xbf16>
    %c2_105 = arith.constant 2 : index
    %c0_106 = arith.constant 0 : index
    %c0_107 = arith.constant 0 : index
    %c0_108 = arith.constant 0 : index
    %117 = vector.load %arg6[%c2_105, %c0_106, %c0_107, %c0_108] : memref<3x3x8x8xbf16, #tpu.memory_space<vmem>>, vector<1x1x8x8xbf16>
    %118 = vector.shape_cast %117 : vector<1x1x8x8xbf16> to vector<8x8xbf16>
    %cst_109 = arith.constant dense<0.000000e+00> : vector<256x8xf32>
    %119 = tpu.matmul %116, %118, %cst_109 {dimension_numbers = #tpu.dot_dimension_numbers<[1], [0], [0], [1], [0, 0, 1, 1], [], []>} : vector<256x8xbf16>, vector<8x8xbf16>, vector<256x8xf32> -> vector<256x8xf32>
    %120 = arith.addf %114, %119 : vector<256x8xf32>
    %121 = vector.extract_strided_slice %78 {offsets = [2, 1, 0], sizes = [16, 16, 8], strides = [1, 1, 1]} : vector<18x18x8xbf16> to vector<16x16x8xbf16>
    %122 = vector.shape_cast %121 : vector<16x16x8xbf16> to vector<256x8xbf16>
    %c2_110 = arith.constant 2 : index
    %c1_111 = arith.constant 1 : index
    %c0_112 = arith.constant 0 : index
    %c0_113 = arith.constant 0 : index
    %123 = vector.load %arg6[%c2_110, %c1_111, %c0_112, %c0_113] : memref<3x3x8x8xbf16, #tpu.memory_space<vmem>>, vector<1x1x8x8xbf16>
    %124 = vector.shape_cast %123 : vector<1x1x8x8xbf16> to vector<8x8xbf16>
    %cst_114 = arith.constant dense<0.000000e+00> : vector<256x8xf32>
    %125 = tpu.matmul %122, %124, %cst_114 {dimension_numbers = #tpu.dot_dimension_numbers<[1], [0], [0], [1], [0, 0, 1, 1], [], []>} : vector<256x8xbf16>, vector<8x8xbf16>, vector<256x8xf32> -> vector<256x8xf32>
    %126 = arith.addf %120, %125 : vector<256x8xf32>
    %127 = vector.extract_strided_slice %78 {offsets = [2, 2, 0], sizes = [16, 16, 8], strides = [1, 1, 1]} : vector<18x18x8xbf16> to vector<16x16x8xbf16>
    %128 = vector.shape_cast %127 : vector<16x16x8xbf16> to vector<256x8xbf16>
    %c2_115 = arith.constant 2 : index
    %c2_116 = arith.constant 2 : index
    %c0_117 = arith.constant 0 : index
    %c0_118 = arith.constant 0 : index
    %129 = vector.load %arg6[%c2_115, %c2_116, %c0_117, %c0_118] : memref<3x3x8x8xbf16, #tpu.memory_space<vmem>>, vector<1x1x8x8xbf16>
    %130 = vector.shape_cast %129 : vector<1x1x8x8xbf16> to vector<8x8xbf16>
    %cst_119 = arith.constant dense<0.000000e+00> : vector<256x8xf32>
    %131 = tpu.matmul %128, %130, %cst_119 {dimension_numbers = #tpu.dot_dimension_numbers<[1], [0], [0], [1], [0, 0, 1, 1], [], []>} : vector<256x8xbf16>, vector<8x8xbf16>, vector<256x8xf32> -> vector<256x8xf32>
    %132 = arith.addf %126, %131 : vector<256x8xf32>
    %133 = vector.shape_cast %132 : vector<256x8xf32> to vector<16x16x8xf32>
    %134 = arith.truncf %133 : vector<16x16x8xf32> to vector<16x16x8xbf16>
    %c0_120 = arith.constant 0 : index
    %c0_121 = arith.constant 0 : index
    %c0_122 = arith.constant 0 : index
    %c0_123 = arith.constant 0 : index
    %135 = vector.load %arg7[%c0_120, %c0_121, %c0_122, %c0_123] : memref<1x16x16x8xbf16, #tpu.memory_space<vmem>>, vector<1x16x16x8xbf16>
    %136 = vector.shape_cast %135 : vector<1x16x16x8xbf16> to vector<16x16x8xbf16>
    %137 = vector.shape_cast %134 : vector<16x16x8xbf16> to vector<1x16x16x8xbf16>
    tpu.vector_store %arg7[%c0_120, %c0_121, %c0_122, %c0_123], %137 {strides = array<i32>} : memref<1x16x16x8xbf16, #tpu.memory_space<vmem>>, vector<1x16x16x8xbf16>,
    %cst_124 = arith.constant dense<0.000000e+00> : vector<8xf32>
    %138 = vector.multi_reduction <add>, %132, %cst_124 [0] : vector<256x8xf32> to vector<8xf32>
    %139 = vector.shape_cast %138 : vector<8xf32> to vector<1x8xf32>
    %cst_125 = arith.constant 3.906250e-03 : f32
    %140 = vector.broadcast %cst_125 : f32 to vector<1x8xf32>
    %141 = arith.mulf %139, %140 : vector<1x8xf32>
    %142 = vector.broadcast %141 : vector<1x8xf32> to vector<256x8xf32>
    %143 = arith.subf %132, %142 : vector<256x8xf32>
    %c0_126 = arith.constant 0 : index
    %c0_127 = arith.constant 0 : index
    %c0_128 = arith.constant 0 : index
    %144 = vector.load %arg8[%c0_126, %c0_127, %c0_128] : memref<1x2x8xf32, #tpu.memory_space<vmem>>, vector<1x1x8xf32>
    %145 = vector.shape_cast %144 : vector<1x1x8xf32> to vector<1x8xf32>
    %146 = vector.shape_cast %139 : vector<1x8xf32> to vector<1x1x8xf32>
    tpu.vector_store %arg8[%c0_126, %c0_127, %c0_128], %146 {strides = array<i32>} : memref<1x2x8xf32, #tpu.memory_space<vmem>>, vector<1x1x8xf32>,
    %147 = arith.mulf %143, %143 : vector<256x8xf32>
    %cst_129 = arith.constant dense<0.000000e+00> : vector<8xf32>
    %148 = vector.multi_reduction <add>, %147, %cst_129 [0] : vector<256x8xf32> to vector<8xf32>
    %149 = vector.shape_cast %148 : vector<8xf32> to vector<1x8xf32>
    %c0_130 = arith.constant 0 : index
    %c1_131 = arith.constant 1 : index
    %c0_132 = arith.constant 0 : index
    %150 = vector.load %arg8[%c0_130, %c1_131, %c0_132] : memref<1x2x8xf32, #tpu.memory_space<vmem>>, vector<1x1x8xf32>
    %151 = vector.shape_cast %150 : vector<1x1x8xf32> to vector<1x8xf32>
    %152 = vector.shape_cast %149 : vector<1x8xf32> to vector<1x1x8xf32>
    tpu.vector_store %arg8[%c0_130, %c1_131, %c0_132], %152 {strides = array<i32>} : memref<1x2x8xf32, #tpu.memory_space<vmem>>, vector<1x1x8xf32>,
    return
  }
  func.func @transform_0(%arg0: i32) -> (i32, i32, i32, i32) {
    %c0_i32 = arith.constant 0 : i32
    %c0_i32_0 = arith.constant 0 : i32
    %c0_i32_1 = arith.constant 0 : i32
    %c0_i32_2 = arith.constant 0 : i32
    return %arg0, %c0_i32, %c0_i32_0, %c0_i32_1 : i32, i32, i32, i32
  }
  func.func @transform_1(%arg0: i32) -> (i32, i32, i32, i32) {
    %c0_i32 = arith.constant 0 : i32
    %c0_i32_0 = arith.constant 0 : i32
    %c0_i32_1 = arith.constant 0 : i32
    %c0_i32_2 = arith.constant 0 : i32
    return %arg0, %c0_i32, %c0_i32_0, %c0_i32_1 : i32, i32, i32, i32
  }
  func.func @transform_2(%arg0: i32) -> (i32, i32) {
    %c0_i32 = arith.constant 0 : i32
    %c0_i32_0 = arith.constant 0 : i32
    %c0_i32_1 = arith.constant 0 : i32
    return %c0_i32, %c0_i32_0 : i32, i32
  }
  func.func @transform_3(%arg0: i32) -> (i32, i32) {
    %c0_i32 = arith.constant 0 : i32
    %c0_i32_0 = arith.constant 0 : i32
    %c0_i32_1 = arith.constant 0 : i32
    return %c0_i32, %c0_i32_0 : i32, i32
  }
  func.func @transform_4(%arg0: i32) -> (i32, i32, i32, i32) {
    %c0_i32 = arith.constant 0 : i32
    %c0_i32_0 = arith.constant 0 : i32
    %c0_i32_1 = arith.constant 0 : i32
    %c0_i32_2 = arith.constant 0 : i32
    %c0_i32_3 = arith.constant 0 : i32
    return %c0_i32, %c0_i32_0, %c0_i32_1, %c0_i32_2 : i32, i32, i32, i32
  }
  func.func @transform_5(%arg0: i32) -> (i32, i32, i32, i32) {
    %c0_i32 = arith.constant 0 : i32
    %c0_i32_0 = arith.constant 0 : i32
    %c0_i32_1 = arith.constant 0 : i32
    %c0_i32_2 = arith.constant 0 : i32
    %c0_i32_3 = arith.constant 0 : i32
    return %c0_i32, %c0_i32_0, %c0_i32_1, %c0_i32_2 : i32, i32, i32, i32
  }
  func.func @transform_6(%arg0: i32) -> (i32, i32, i32, i32) {
    %c0_i32 = arith.constant 0 : i32
    %c0_i32_0 = arith.constant 0 : i32
    %c0_i32_1 = arith.constant 0 : i32
    %c0_i32_2 = arith.constant 0 : i32
    return %arg0, %c0_i32, %c0_i32_0, %c0_i32_1 : i32, i32, i32, i32
  }
  func.func @transform_7(%arg0: i32) -> (i32, i32, i32) {
    %c0_i32 = arith.constant 0 : i32
    %c0_i32_0 = arith.constant 0 : i32
    %c0_i32_1 = arith.constant 0 : i32
    return %arg0, %c0_i32, %c0_i32_0 : i32, i32, i32
  }
}

module attributes {stable_mosaic.version = 11 : i64} {
  func.func @_conv3x3_fused_kernel(%arg0: i32, %arg1: memref<1x16x16x8xbf16, #tpu.memory_space<vmem>>, %arg2: memref<1x8xf32, #tpu.memory_space<vmem>>, %arg3: memref<1x8xf32, #tpu.memory_space<vmem>>, %arg4: memref<3x3x8x8xbf16, #tpu.memory_space<vmem>>, %arg5: memref<1x16x16x8xf32, #tpu.memory_space<vmem>>, %arg6: memref<1x2x8xf32, #tpu.memory_space<vmem>>, %arg7: memref<18x18x8xbf16, #tpu.memory_space<vmem>>) attributes {dimension_semantics = [#tpu.dimension_semantics<parallel>], iteration_bounds = array<i64: 2>, scalar_prefetch = 0 : i64, scratch_operands = 1 : i64, tpu.core_type = #tpu.core_type<tc>, window_params = [{transform_indices = @transform_0, window_bounds = array<i64: 1, 16, 16, 8>}, {pipeline_mode = #tpu.pipeline_mode<synchronous>, transform_indices = @transform_1, window_bounds = array<i64: 1, 8>}, {pipeline_mode = #tpu.pipeline_mode<synchronous>, transform_indices = @transform_2, window_bounds = array<i64: 1, 8>}, {pipeline_mode = #tpu.pipeline_mode<synchronous>, transform_indices = @transform_3, window_bounds = array<i64: 3, 3, 8, 8>}, {transform_indices = @transform_4, window_bounds = array<i64: 1, 16, 16, 8>}, {transform_indices = @transform_5, window_bounds = array<i64: 1, 2, 8>}]} {
    %cst = arith.constant 0.000000e+00 : bf16
    %0 = vector.broadcast %cst : bf16 to vector<18x18x8xbf16>
    %c0 = arith.constant 0 : index
    %c0_0 = arith.constant 0 : index
    %c0_1 = arith.constant 0 : index
    %1 = vector.load %arg7[%c0, %c0_0, %c0_1] : memref<18x18x8xbf16, #tpu.memory_space<vmem>>, vector<18x18x8xbf16>
    tpu.vector_store %arg7[%c0, %c0_0, %c0_1], %0 {strides = array<i32>} : memref<18x18x8xbf16, #tpu.memory_space<vmem>>, vector<18x18x8xbf16>,
    %c0_2 = arith.constant 0 : index
    %c0_3 = arith.constant 0 : index
    %c0_4 = arith.constant 0 : index
    %c0_5 = arith.constant 0 : index
    %2 = vector.load %arg1[%c0_2, %c0_3, %c0_4, %c0_5] : memref<1x16x16x8xbf16, #tpu.memory_space<vmem>>, vector<1x16x16x8xbf16>
    %3 = vector.shape_cast %2 : vector<1x16x16x8xbf16> to vector<16x16x8xbf16>
    %4 = arith.extf %3 : vector<16x16x8xbf16> to vector<16x16x8xf32>
    %c0_6 = arith.constant 0 : index
    %c0_7 = arith.constant 0 : index
    %5 = vector.load %arg2[%c0_6, %c0_7] : memref<1x8xf32, #tpu.memory_space<vmem>>, vector<1x8xf32>
    %6 = vector.shape_cast %5 : vector<1x8xf32> to vector<1x1x8xf32>
    %7 = vector.broadcast %6 : vector<1x1x8xf32> to vector<16x16x8xf32>
    %8 = arith.mulf %4, %7 : vector<16x16x8xf32>
    %c0_8 = arith.constant 0 : index
    %c0_9 = arith.constant 0 : index
    %9 = vector.load %arg3[%c0_8, %c0_9] : memref<1x8xf32, #tpu.memory_space<vmem>>, vector<1x8xf32>
    %10 = vector.shape_cast %9 : vector<1x8xf32> to vector<1x1x8xf32>
    %11 = vector.broadcast %10 : vector<1x1x8xf32> to vector<16x16x8xf32>
    %12 = arith.addf %8, %11 : vector<16x16x8xf32>
    %cst_10 = arith.constant 0.000000e+00 : f32
    %13 = vector.broadcast %cst_10 : f32 to vector<16x16x8xf32>
    %14 = arith.maximumf %12, %13 : vector<16x16x8xf32>
    %15 = arith.truncf %14 : vector<16x16x8xf32> to vector<16x16x8xbf16>
    %c1 = arith.constant 1 : index
    %c1_11 = arith.constant 1 : index
    %c0_12 = arith.constant 0 : index
    %16 = vector.load %arg7[%c1, %c1_11, %c0_12] : memref<18x18x8xbf16, #tpu.memory_space<vmem>>, vector<16x16x8xbf16>
    tpu.vector_store %arg7[%c1, %c1_11, %c0_12], %15 {strides = array<i32>} : memref<18x18x8xbf16, #tpu.memory_space<vmem>>, vector<16x16x8xbf16>,
    %cst_13 = arith.constant 0.000000e+00 : f32
    %17 = vector.broadcast %cst_13 : f32 to vector<256x8xf32>
    %c0_14 = arith.constant 0 : index
    %c0_15 = arith.constant 0 : index
    %c0_16 = arith.constant 0 : index
    %18 = vector.load %arg7[%c0_14, %c0_15, %c0_16] : memref<18x18x8xbf16, #tpu.memory_space<vmem>>, vector<18x18x8xbf16>
    %19 = vector.extract_strided_slice %18 {offsets = [0, 0, 0], sizes = [16, 16, 8], strides = [1, 1, 1]} : vector<18x18x8xbf16> to vector<16x16x8xbf16>
    %20 = vector.shape_cast %19 : vector<16x16x8xbf16> to vector<256x8xbf16>
    %c0_17 = arith.constant 0 : index
    %c0_18 = arith.constant 0 : index
    %c0_19 = arith.constant 0 : index
    %c0_20 = arith.constant 0 : index
    %21 = vector.load %arg4[%c0_17, %c0_18, %c0_19, %c0_20] : memref<3x3x8x8xbf16, #tpu.memory_space<vmem>>, vector<1x1x8x8xbf16>
    %22 = vector.shape_cast %21 : vector<1x1x8x8xbf16> to vector<8x8xbf16>
    %cst_21 = arith.constant dense<0.000000e+00> : vector<256x8xf32>
    %23 = tpu.matmul %20, %22, %cst_21 {dimension_numbers = #tpu.dot_dimension_numbers<[1], [0], [0], [1], [0, 0, 1, 1], [], []>} : vector<256x8xbf16>, vector<8x8xbf16>, vector<256x8xf32> -> vector<256x8xf32>
    %24 = arith.addf %17, %23 : vector<256x8xf32>
    %25 = vector.extract_strided_slice %18 {offsets = [0, 1, 0], sizes = [16, 16, 8], strides = [1, 1, 1]} : vector<18x18x8xbf16> to vector<16x16x8xbf16>
    %26 = vector.shape_cast %25 : vector<16x16x8xbf16> to vector<256x8xbf16>
    %c0_22 = arith.constant 0 : index
    %c1_23 = arith.constant 1 : index
    %c0_24 = arith.constant 0 : index
    %c0_25 = arith.constant 0 : index
    %27 = vector.load %arg4[%c0_22, %c1_23, %c0_24, %c0_25] : memref<3x3x8x8xbf16, #tpu.memory_space<vmem>>, vector<1x1x8x8xbf16>
    %28 = vector.shape_cast %27 : vector<1x1x8x8xbf16> to vector<8x8xbf16>
    %cst_26 = arith.constant dense<0.000000e+00> : vector<256x8xf32>
    %29 = tpu.matmul %26, %28, %cst_26 {dimension_numbers = #tpu.dot_dimension_numbers<[1], [0], [0], [1], [0, 0, 1, 1], [], []>} : vector<256x8xbf16>, vector<8x8xbf16>, vector<256x8xf32> -> vector<256x8xf32>
    %30 = arith.addf %24, %29 : vector<256x8xf32>
    %31 = vector.extract_strided_slice %18 {offsets = [0, 2, 0], sizes = [16, 16, 8], strides = [1, 1, 1]} : vector<18x18x8xbf16> to vector<16x16x8xbf16>
    %32 = vector.shape_cast %31 : vector<16x16x8xbf16> to vector<256x8xbf16>
    %c0_27 = arith.constant 0 : index
    %c2 = arith.constant 2 : index
    %c0_28 = arith.constant 0 : index
    %c0_29 = arith.constant 0 : index
    %33 = vector.load %arg4[%c0_27, %c2, %c0_28, %c0_29] : memref<3x3x8x8xbf16, #tpu.memory_space<vmem>>, vector<1x1x8x8xbf16>
    %34 = vector.shape_cast %33 : vector<1x1x8x8xbf16> to vector<8x8xbf16>
    %cst_30 = arith.constant dense<0.000000e+00> : vector<256x8xf32>
    %35 = tpu.matmul %32, %34, %cst_30 {dimension_numbers = #tpu.dot_dimension_numbers<[1], [0], [0], [1], [0, 0, 1, 1], [], []>} : vector<256x8xbf16>, vector<8x8xbf16>, vector<256x8xf32> -> vector<256x8xf32>
    %36 = arith.addf %30, %35 : vector<256x8xf32>
    %37 = vector.extract_strided_slice %18 {offsets = [1, 0, 0], sizes = [16, 16, 8], strides = [1, 1, 1]} : vector<18x18x8xbf16> to vector<16x16x8xbf16>
    %38 = vector.shape_cast %37 : vector<16x16x8xbf16> to vector<256x8xbf16>
    %c1_31 = arith.constant 1 : index
    %c0_32 = arith.constant 0 : index
    %c0_33 = arith.constant 0 : index
    %c0_34 = arith.constant 0 : index
    %39 = vector.load %arg4[%c1_31, %c0_32, %c0_33, %c0_34] : memref<3x3x8x8xbf16, #tpu.memory_space<vmem>>, vector<1x1x8x8xbf16>
    %40 = vector.shape_cast %39 : vector<1x1x8x8xbf16> to vector<8x8xbf16>
    %cst_35 = arith.constant dense<0.000000e+00> : vector<256x8xf32>
    %41 = tpu.matmul %38, %40, %cst_35 {dimension_numbers = #tpu.dot_dimension_numbers<[1], [0], [0], [1], [0, 0, 1, 1], [], []>} : vector<256x8xbf16>, vector<8x8xbf16>, vector<256x8xf32> -> vector<256x8xf32>
    %42 = arith.addf %36, %41 : vector<256x8xf32>
    %43 = vector.extract_strided_slice %18 {offsets = [1, 1, 0], sizes = [16, 16, 8], strides = [1, 1, 1]} : vector<18x18x8xbf16> to vector<16x16x8xbf16>
    %44 = vector.shape_cast %43 : vector<16x16x8xbf16> to vector<256x8xbf16>
    %c1_36 = arith.constant 1 : index
    %c1_37 = arith.constant 1 : index
    %c0_38 = arith.constant 0 : index
    %c0_39 = arith.constant 0 : index
    %45 = vector.load %arg4[%c1_36, %c1_37, %c0_38, %c0_39] : memref<3x3x8x8xbf16, #tpu.memory_space<vmem>>, vector<1x1x8x8xbf16>
    %46 = vector.shape_cast %45 : vector<1x1x8x8xbf16> to vector<8x8xbf16>
    %cst_40 = arith.constant dense<0.000000e+00> : vector<256x8xf32>
    %47 = tpu.matmul %44, %46, %cst_40 {dimension_numbers = #tpu.dot_dimension_numbers<[1], [0], [0], [1], [0, 0, 1, 1], [], []>} : vector<256x8xbf16>, vector<8x8xbf16>, vector<256x8xf32> -> vector<256x8xf32>
    %48 = arith.addf %42, %47 : vector<256x8xf32>
    %49 = vector.extract_strided_slice %18 {offsets = [1, 2, 0], sizes = [16, 16, 8], strides = [1, 1, 1]} : vector<18x18x8xbf16> to vector<16x16x8xbf16>
    %50 = vector.shape_cast %49 : vector<16x16x8xbf16> to vector<256x8xbf16>
    %c1_41 = arith.constant 1 : index
    %c2_42 = arith.constant 2 : index
    %c0_43 = arith.constant 0 : index
    %c0_44 = arith.constant 0 : index
    %51 = vector.load %arg4[%c1_41, %c2_42, %c0_43, %c0_44] : memref<3x3x8x8xbf16, #tpu.memory_space<vmem>>, vector<1x1x8x8xbf16>
    %52 = vector.shape_cast %51 : vector<1x1x8x8xbf16> to vector<8x8xbf16>
    %cst_45 = arith.constant dense<0.000000e+00> : vector<256x8xf32>
    %53 = tpu.matmul %50, %52, %cst_45 {dimension_numbers = #tpu.dot_dimension_numbers<[1], [0], [0], [1], [0, 0, 1, 1], [], []>} : vector<256x8xbf16>, vector<8x8xbf16>, vector<256x8xf32> -> vector<256x8xf32>
    %54 = arith.addf %48, %53 : vector<256x8xf32>
    %55 = vector.extract_strided_slice %18 {offsets = [2, 0, 0], sizes = [16, 16, 8], strides = [1, 1, 1]} : vector<18x18x8xbf16> to vector<16x16x8xbf16>
    %56 = vector.shape_cast %55 : vector<16x16x8xbf16> to vector<256x8xbf16>
    %c2_46 = arith.constant 2 : index
    %c0_47 = arith.constant 0 : index
    %c0_48 = arith.constant 0 : index
    %c0_49 = arith.constant 0 : index
    %57 = vector.load %arg4[%c2_46, %c0_47, %c0_48, %c0_49] : memref<3x3x8x8xbf16, #tpu.memory_space<vmem>>, vector<1x1x8x8xbf16>
    %58 = vector.shape_cast %57 : vector<1x1x8x8xbf16> to vector<8x8xbf16>
    %cst_50 = arith.constant dense<0.000000e+00> : vector<256x8xf32>
    %59 = tpu.matmul %56, %58, %cst_50 {dimension_numbers = #tpu.dot_dimension_numbers<[1], [0], [0], [1], [0, 0, 1, 1], [], []>} : vector<256x8xbf16>, vector<8x8xbf16>, vector<256x8xf32> -> vector<256x8xf32>
    %60 = arith.addf %54, %59 : vector<256x8xf32>
    %61 = vector.extract_strided_slice %18 {offsets = [2, 1, 0], sizes = [16, 16, 8], strides = [1, 1, 1]} : vector<18x18x8xbf16> to vector<16x16x8xbf16>
    %62 = vector.shape_cast %61 : vector<16x16x8xbf16> to vector<256x8xbf16>
    %c2_51 = arith.constant 2 : index
    %c1_52 = arith.constant 1 : index
    %c0_53 = arith.constant 0 : index
    %c0_54 = arith.constant 0 : index
    %63 = vector.load %arg4[%c2_51, %c1_52, %c0_53, %c0_54] : memref<3x3x8x8xbf16, #tpu.memory_space<vmem>>, vector<1x1x8x8xbf16>
    %64 = vector.shape_cast %63 : vector<1x1x8x8xbf16> to vector<8x8xbf16>
    %cst_55 = arith.constant dense<0.000000e+00> : vector<256x8xf32>
    %65 = tpu.matmul %62, %64, %cst_55 {dimension_numbers = #tpu.dot_dimension_numbers<[1], [0], [0], [1], [0, 0, 1, 1], [], []>} : vector<256x8xbf16>, vector<8x8xbf16>, vector<256x8xf32> -> vector<256x8xf32>
    %66 = arith.addf %60, %65 : vector<256x8xf32>
    %67 = vector.extract_strided_slice %18 {offsets = [2, 2, 0], sizes = [16, 16, 8], strides = [1, 1, 1]} : vector<18x18x8xbf16> to vector<16x16x8xbf16>
    %68 = vector.shape_cast %67 : vector<16x16x8xbf16> to vector<256x8xbf16>
    %c2_56 = arith.constant 2 : index
    %c2_57 = arith.constant 2 : index
    %c0_58 = arith.constant 0 : index
    %c0_59 = arith.constant 0 : index
    %69 = vector.load %arg4[%c2_56, %c2_57, %c0_58, %c0_59] : memref<3x3x8x8xbf16, #tpu.memory_space<vmem>>, vector<1x1x8x8xbf16>
    %70 = vector.shape_cast %69 : vector<1x1x8x8xbf16> to vector<8x8xbf16>
    %cst_60 = arith.constant dense<0.000000e+00> : vector<256x8xf32>
    %71 = tpu.matmul %68, %70, %cst_60 {dimension_numbers = #tpu.dot_dimension_numbers<[1], [0], [0], [1], [0, 0, 1, 1], [], []>} : vector<256x8xbf16>, vector<8x8xbf16>, vector<256x8xf32> -> vector<256x8xf32>
    %72 = arith.addf %66, %71 : vector<256x8xf32>
    %73 = vector.shape_cast %72 : vector<256x8xf32> to vector<16x16x8xf32>
    %c0_61 = arith.constant 0 : index
    %c0_62 = arith.constant 0 : index
    %c0_63 = arith.constant 0 : index
    %c0_64 = arith.constant 0 : index
    %74 = vector.load %arg5[%c0_61, %c0_62, %c0_63, %c0_64] : memref<1x16x16x8xf32, #tpu.memory_space<vmem>>, vector<1x16x16x8xf32>
    %75 = vector.shape_cast %74 : vector<1x16x16x8xf32> to vector<16x16x8xf32>
    %76 = vector.shape_cast %73 : vector<16x16x8xf32> to vector<1x16x16x8xf32>
    tpu.vector_store %arg5[%c0_61, %c0_62, %c0_63, %c0_64], %76 {strides = array<i32>} : memref<1x16x16x8xf32, #tpu.memory_space<vmem>>, vector<1x16x16x8xf32>,
    %cst_65 = arith.constant dense<0.000000e+00> : vector<8xf32>
    %77 = vector.multi_reduction <add>, %72, %cst_65 [0] : vector<256x8xf32> to vector<8xf32>
    %78 = vector.shape_cast %77 : vector<8xf32> to vector<1x8xf32>
    %cst_66 = arith.constant 3.906250e-03 : f32
    %79 = vector.broadcast %cst_66 : f32 to vector<1x8xf32>
    %80 = arith.mulf %78, %79 : vector<1x8xf32>
    %81 = vector.broadcast %80 : vector<1x8xf32> to vector<256x8xf32>
    %82 = arith.subf %72, %81 : vector<256x8xf32>
    %c0_67 = arith.constant 0 : index
    %c0_68 = arith.constant 0 : index
    %c0_69 = arith.constant 0 : index
    %83 = vector.load %arg6[%c0_67, %c0_68, %c0_69] : memref<1x2x8xf32, #tpu.memory_space<vmem>>, vector<1x1x8xf32>
    %84 = vector.shape_cast %83 : vector<1x1x8xf32> to vector<1x8xf32>
    %85 = vector.shape_cast %78 : vector<1x8xf32> to vector<1x1x8xf32>
    tpu.vector_store %arg6[%c0_67, %c0_68, %c0_69], %85 {strides = array<i32>} : memref<1x2x8xf32, #tpu.memory_space<vmem>>, vector<1x1x8xf32>,
    %86 = arith.mulf %82, %82 : vector<256x8xf32>
    %cst_70 = arith.constant dense<0.000000e+00> : vector<8xf32>
    %87 = vector.multi_reduction <add>, %86, %cst_70 [0] : vector<256x8xf32> to vector<8xf32>
    %88 = vector.shape_cast %87 : vector<8xf32> to vector<1x8xf32>
    %c0_71 = arith.constant 0 : index
    %c1_72 = arith.constant 1 : index
    %c0_73 = arith.constant 0 : index
    %89 = vector.load %arg6[%c0_71, %c1_72, %c0_73] : memref<1x2x8xf32, #tpu.memory_space<vmem>>, vector<1x1x8xf32>
    %90 = vector.shape_cast %89 : vector<1x1x8xf32> to vector<1x8xf32>
    %91 = vector.shape_cast %88 : vector<1x8xf32> to vector<1x1x8xf32>
    tpu.vector_store %arg6[%c0_71, %c1_72, %c0_73], %91 {strides = array<i32>} : memref<1x2x8xf32, #tpu.memory_space<vmem>>, vector<1x1x8xf32>,
    return
  }
  func.func @transform_0(%arg0: i32) -> (i32, i32, i32, i32) {
    %c0_i32 = arith.constant 0 : i32
    %c0_i32_0 = arith.constant 0 : i32
    %c0_i32_1 = arith.constant 0 : i32
    %c0_i32_2 = arith.constant 0 : i32
    return %arg0, %c0_i32, %c0_i32_0, %c0_i32_1 : i32, i32, i32, i32
  }
  func.func @transform_1(%arg0: i32) -> (i32, i32) {
    %c0_i32 = arith.constant 0 : i32
    %c0_i32_0 = arith.constant 0 : i32
    %c0_i32_1 = arith.constant 0 : i32
    return %c0_i32, %c0_i32_0 : i32, i32
  }
  func.func @transform_2(%arg0: i32) -> (i32, i32) {
    %c0_i32 = arith.constant 0 : i32
    %c0_i32_0 = arith.constant 0 : i32
    %c0_i32_1 = arith.constant 0 : i32
    return %c0_i32, %c0_i32_0 : i32, i32
  }
  func.func @transform_3(%arg0: i32) -> (i32, i32, i32, i32) {
    %c0_i32 = arith.constant 0 : i32
    %c0_i32_0 = arith.constant 0 : i32
    %c0_i32_1 = arith.constant 0 : i32
    %c0_i32_2 = arith.constant 0 : i32
    %c0_i32_3 = arith.constant 0 : i32
    return %c0_i32, %c0_i32_0, %c0_i32_1, %c0_i32_2 : i32, i32, i32, i32
  }
  func.func @transform_4(%arg0: i32) -> (i32, i32, i32, i32) {
    %c0_i32 = arith.constant 0 : i32
    %c0_i32_0 = arith.constant 0 : i32
    %c0_i32_1 = arith.constant 0 : i32
    %c0_i32_2 = arith.constant 0 : i32
    return %arg0, %c0_i32, %c0_i32_0, %c0_i32_1 : i32, i32, i32, i32
  }
  func.func @transform_5(%arg0: i32) -> (i32, i32, i32) {
    %c0_i32 = arith.constant 0 : i32
    %c0_i32_0 = arith.constant 0 : i32
    %c0_i32_1 = arith.constant 0 : i32
    return %arg0, %c0_i32, %c0_i32_0 : i32, i32, i32
  }
}

</mosaic_0001>

<llo_original>
// kernel: tile.8
$region0: #{tile.8}
  #allocation2 [shape = 's32[1]{0}', space=sflag, size = 0x4, scoped, tag = 'scoped memory for tile.8']
  %s0 = inlined_call_operand.hbm [shape: f32[8], index: 0, kind: input, shape index: {}]
  %s1 = inlined_call_operand.vmem [shape: f32[2,8], index: 1, kind: output, shape index: {}]
  $region1: #{tile.8} parent=0
    #allocation0 [shape = 'u8[512]{0}', space=vmem, size = 0x400, scoped, tag = 'operand span for operand 0']
    #allocation1 [shape = 's32[1]{0}', space=sflag, size = 0x4, scoped, tag = 'scoped memory for tile.8']
    %2 = vsyncpa [#allocation1], 0
    // Predicated region
    $region2: #{tile.8} parent=1 // pred_check
      _
    $region3: #{tile.8} parent=1 // pred_check_branch
      %4 = sbr.rel (0) target = $region5
    $region4: #{tile.8} parent=1 // pred_region
      %6 = vsyncadd [#allocation1], 0
      %s8 = sshll.u32 %s0, 4
      %s9 = int_to_ptr.hbm [resolvable:$true] %s8
      %s10 = sshll.u32 [#allocation0], 4
      %s11 = int_to_ptr.vmem [resolvable:$true] %s10
      %13 = dma.hbm_to_vmem [thread:$0]  %s9, 16, %s11, [#allocation1]
    $region5: #{tile.8} parent=1 // pred_fallthru
      _
    // Predicated region
    $region6: #{tile.8} parent=1 // pred_check
      _
    $region7: #{tile.8} parent=1 // pred_check_branch
      %15 = sbr.rel (0) target = $region9
    $region8: #{tile.8} parent=1 // pred_region
      %17 = dma.done [#allocation1], 16
    $region9: #{tile.8} parent=1 // pred_fallthru
      _
    %v18 = vld [vmem:[#allocation0] ss:$0 sm:$0xff]
    %19 = vst [vmem:[%s1] sm:$0x3] %v18
    %20 = vsyncpa [#allocation1], 1

// kernel: tile.9
$region0: #{tile.9}
  %s0 = inlined_call_operand.vmem [shape: f32[2,8], index: 0, kind: input, shape index: {}]
  %s1 = inlined_call_operand.vmem [shape: f32[1,16], index: 1, kind: output, shape index: {}]
  $region1: #{tile.9} parent=0
    #allocation0 [shape = 'u8[4096]{0}', space=vmem, size = 0x1000, scoped, tag = 'scoped mem for output reshape']
    #allocation1 [shape = 'u8[4096]{0}', space=vmem, size = 0x1000, scoped, tag = 'scoped mem for input reshape']
    %s3 = ssub.s32 4, 1
    %v4 = vld [vmem:[%s0] sm:%s3]
    %5 = vst [vmem:[#allocation1] sm:%s3] %v4
    %v6 = vld [vmem:[#allocation1] sm:$0x1]
    %vm7 = vcmask 64512
    %8 = vst.msk [vmem:[#allocation0] sm:$0x1] %vm7, %v6
    %s9 = scalar_lea.vmem [#allocation1], 1
    %v10 = vld [vmem:[%s9] sm:$0x1]
    %11 = vrot.lane.b32.xlu0 %v10, 8
    %v12 = vpop.permute.xlu0 %11
    %vm13 = vcmask 130112
    %14 = vst.msk [vmem:[#allocation0] sm:$0x1] %vm13, %v12
    %s16 = ssub.s32 2, 1
    %v17 = vld [vmem:[#allocation0] sm:%s16]
    %s19 = ssub.s32 2, 1
    %20 = vst [vmem:[%s1] sm:%s19] %v17

// kernel: upsampling_block.5
$region0: #{upsampling_block.5}
  #allocation0 [shape = 'u32[]', space=smem, size = 0x4, offset = 0x4, fixed_abs, tag = 'smem constant byte address 0x4 - core index']
  #allocation1 [shape = 'u32[72,128]{1,0:T(1,128)}', space=vmem, size = 0x9000, scoped, tag = 'internal scratch']
  %s0 = inlined_call_operand.vmem [shape: bf16[16,8,8], index: 0, kind: input, shape index: {}]
  %s1 = inlined_call_operand.vmem [shape: bf16[2,8,16], index: 1, kind: input, shape index: {}]
  %s2 = inlined_call_operand.vmem [shape: f32[1,16], index: 2, kind: input, shape index: {}]
  %s3 = inlined_call_operand.vmem [shape: bf16[16,2,8,16], index: 3, kind: output, shape index: {}]
  %s4 = sld [smem:[#allocation0]]
  $region22: #{upsampling_block.5} parent=0
    _
  %s6 = ssub.s32 1, %s4
  %s7 = scalar_select 0, %s6, %s4
  // Predicated region
  $region2: #{upsampling_block.5} parent=0 // pred_check
    _
  $region3: #{upsampling_block.5} parent=0 // pred_check_branch
    %9 = sbr.rel (0) target = $region5
  $region4: #{upsampling_block.5} parent=0 // pred_region
    _
  $region5: #{upsampling_block.5} parent=0 // pred_fallthru
    _
  // Predicated region
  $region6: #{upsampling_block.5} parent=0 // pred_check
    _
  $region7: #{upsampling_block.5} parent=0 // pred_check_branch
    %11 = sbr.rel (0) target = $region9
  $region8: #{upsampling_block.5} parent=0 // pred_region
    _
  $region9: #{upsampling_block.5} parent=0 // pred_fallthru
    _
  // Predicated region
  $region10: #{upsampling_block.5} parent=0 // pred_check
    _
  $region11: #{upsampling_block.5} parent=0 // pred_check_branch
    %13 = sbr.rel (0) target = $region13
  $region12: #{upsampling_block.5} parent=0 // pred_region
    _
  $region13: #{upsampling_block.5} parent=0 // pred_fallthru
    _
  %v15 = vld [vmem:[%s0] sm:$0xf]
  %v16 = vld [vmem:[%s0 + $0x4] sm:$0xf]
  %v17 = vld [vmem:[%s0 + $0x8] sm:$0xf]
  %v18 = vld [vmem:[%s0 + $0xc] sm:$0xf]
  %v19 = vld [vmem:[%s0 + $0x10] sm:$0xf]
  %v20 = vld [vmem:[%s0 + $0x14] sm:$0xf]
  %v21 = vld [vmem:[%s0 + $0x18] sm:$0xf]
  %v22 = vld [vmem:[%s0 + $0x1c] sm:$0xf]
  %v23 = vld [vmem:[%s0 + $0x20] sm:$0xf]
  %v24 = vld [vmem:[%s0 + $0x24] sm:$0xf]
  %v25 = vld [vmem:[%s0 + $0x28] sm:$0xf]
  %v26 = vld [vmem:[%s0 + $0x2c] sm:$0xf]
  %v27 = vld [vmem:[%s0 + $0x30] sm:$0xf]
  %v28 = vld [vmem:[%s0 + $0x34] sm:$0xf]
  %v29 = vld [vmem:[%s0 + $0x38] sm:$0xf]
  %v30 = vld [vmem:[%s0 + $0x3c] sm:$0xf]
  %v31 = vld [vmem:[%s1] sm:$0xf]
  %v32 = vld [vmem:[%s2] sm:$0x1]
  %v34 = vperm.slane %v32, 0
  %v52 = vunpack.c.l.b16 %v15
  %v53 = vunpack.c.l.b16 %v16
  %v54 = vunpack.c.l.b16 %v17
  %v55 = vunpack.c.l.b16 %v18
  %v56 = vunpack.c.l.b16 %v19
  %v57 = vunpack.c.l.b16 %v20
  %v58 = vunpack.c.l.b16 %v21
  %v59 = vunpack.c.l.b16 %v22
  %v60 = vunpack.c.l.b16 %v23
  %v61 = vunpack.c.l.b16 %v24
  %v62 = vunpack.c.l.b16 %v25
  %v63 = vunpack.c.l.b16 %v26
  %v64 = vunpack.c.l.b16 %v27
  %v65 = vunpack.c.l.b16 %v28
  %v66 = vunpack.c.l.b16 %v29
  %v67 = vunpack.c.l.b16 %v30
  %v68 = vpack.c.b16 %v53, %v52
  %v69 = vpack.c.b16 %v55, %v54
  %v70 = vpack.c.b16 %v57, %v56
  %v71 = vpack.c.b16 %v59, %v58
  %v72 = vpack.c.b16 %v61, %v60
  %v73 = vpack.c.b16 %v63, %v62
  %v74 = vpack.c.b16 %v65, %v64
  %v75 = vpack.c.b16 %v67, %v66
  %vm76 = vcmask 64512
  %v78 = vsel %vm76, %v68, 0
  %v81 = vsel %vm76, %v69, 0
  %v84 = vsel %vm76, %v70, 0
  %v87 = vsel %vm76, %v71, 0
  %v90 = vsel %vm76, %v72, 0
  %v93 = vsel %vm76, %v73, 0
  %v96 = vsel %vm76, %v74, 0
  %v99 = vsel %vm76, %v75, 0
  %vm101 = vcmask 1043456
  %v103 = vsel %vm101, %v31, 0
  %105 = vmatpush.bf16.msra.mxu0 0
  %106 = vmatpush.bf16.msra.mxu0 0
  %107 = vmatpush.bf16.msra.mxu0 0
  %108 = vmatpush.bf16.msra.mxu0 0
  %109 = vmatpush.bf16.msra.mxu0 0
  %110 = vmatpush.bf16.msra.mxu0 0
  %111 = vmatpush.bf16.msra.mxu0 0
  %112 = vmatpush.bf16.msra.mxu0 %v103
  %113 = vmatmul.bf16.gmra.mxu0 %v78
  %v114 = vpop.f32.mrf.mxu0
  %v115 = vadd.f32 %v34, %v114
  %v116 = vpop.f32.mrf.mxu0
  %v117 = vadd.f32 %v34, %v116
  %118 = vmatmul.bf16.gmra.mxu0 %v81
  %v119 = vpop.f32.mrf.mxu0
  %v120 = vadd.f32 %v34, %v119
  %v121 = vpop.f32.mrf.mxu0
  %v122 = vadd.f32 %v34, %v121
  %123 = vmatmul.bf16.gmra.mxu0 %v84
  %v124 = vpop.f32.mrf.mxu0
  %v125 = vadd.f32 %v34, %v124
  %v126 = vpop.f32.mrf.mxu0
  %v127 = vadd.f32 %v34, %v126
  %128 = vmatmul.bf16.gmra.mxu0 %v87
  %v129 = vpop.f32.mrf.mxu0
  %v130 = vadd.f32 %v34, %v129
  %v131 = vpop.f32.mrf.mxu0
  %v132 = vadd.f32 %v34, %v131
  %133 = vmatmul.bf16.gmra.mxu0 %v90
  %v134 = vpop.f32.mrf.mxu0
  %v135 = vadd.f32 %v34, %v134
  %v136 = vpop.f32.mrf.mxu0
  %v137 = vadd.f32 %v34, %v136
  %138 = vmatmul.bf16.gmra.mxu0 %v93
  %v139 = vpop.f32.mrf.mxu0
  %v140 = vadd.f32 %v34, %v139
  %v141 = vpop.f32.mrf.mxu0
  %v142 = vadd.f32 %v34, %v141
  %143 = vmatmul.bf16.gmra.mxu0 %v96
  %v144 = vpop.f32.mrf.mxu0
  %v145 = vadd.f32 %v34, %v144
  %v146 = vpop.f32.mrf.mxu0
  %v147 = vadd.f32 %v34, %v146
  %148 = vmatmul.bf16.gmra.mxu0 %v99
  %v149 = vpop.f32.mrf.mxu0
  %v150 = vadd.f32 %v34, %v149
  %v151 = vpop.f32.mrf.mxu0
  %v152 = vadd.f32 %v34, %v151
  %153 = vdwg.mxu0
  %v154 = vpack.c.bf16 %v115, %v115
  %v155 = vpack.c.bf16 %v117, %v117
  %v156 = vpack.c.bf16 %v120, %v120
  %v157 = vpack.c.bf16 %v122, %v122
  %v158 = vpack.c.bf16 %v125, %v125
  %v159 = vpack.c.bf16 %v127, %v127
  %v160 = vpack.c.bf16 %v130, %v130
  %v161 = vpack.c.bf16 %v132, %v132
  %v162 = vpack.c.bf16 %v135, %v135
  %v163 = vpack.c.bf16 %v137, %v137
  %v164 = vpack.c.bf16 %v140, %v140
  %v165 = vpack.c.bf16 %v142, %v142
  %v166 = vpack.c.bf16 %v145, %v145
  %v167 = vpack.c.bf16 %v147, %v147
  %v168 = vpack.c.bf16 %v150, %v150
  %v169 = vpack.c.bf16 %v152, %v152
  %vm170 = vcmask 125952
  %171 = vst.msk [vmem:[%s3] sm:$0xf] %vm170, %v154
  %172 = vst.msk [vmem:[%s3 + $0x8] sm:$0xf] %vm170, %v155
  %173 = vst.msk [vmem:[%s3 + $0x10] sm:$0xf] %vm170, %v156
  %174 = vst.msk [vmem:[%s3 + $0x18] sm:$0xf] %vm170, %v157
  %175 = vst.msk [vmem:[%s3 + $0x20] sm:$0xf] %vm170, %v158
  %176 = vst.msk [vmem:[%s3 + $0x28] sm:$0xf] %vm170, %v159
  %177 = vst.msk [vmem:[%s3 + $0x30] sm:$0xf] %vm170, %v160
  %178 = vst.msk [vmem:[%s3 + $0x38] sm:$0xf] %vm170, %v161
  %179 = vst.msk [vmem:[%s3 + $0x40] sm:$0xf] %vm170, %v162
  %180 = vst.msk [vmem:[%s3 + $0x48] sm:$0xf] %vm170, %v163
  %181 = vst.msk [vmem:[%s3 + $0x50] sm:$0xf] %vm170, %v164
  %182 = vst.msk [vmem:[%s3 + $0x58] sm:$0xf] %vm170, %v165
  %183 = vst.msk [vmem:[%s3 + $0x60] sm:$0xf] %vm170, %v166
  %184 = vst.msk [vmem:[%s3 + $0x68] sm:$0xf] %vm170, %v167
  %185 = vst.msk [vmem:[%s3 + $0x70] sm:$0xf] %vm170, %v168
  %186 = vst.msk [vmem:[%s3 + $0x78] sm:$0xf] %vm170, %v169
  %s187 = scalar_lea.vmem %s1, 4
  %v188 = vld [vmem:[%s187] sm:$0xf]
  %v189 = vld [vmem:[%s2] sm:$0x1]
  %v191 = vperm.slane %v189, 0
  %v194 = vsel %vm101, %v188, 0
  %196 = vmatpush.bf16.msra.mxu0 0
  %197 = vmatpush.bf16.msra.mxu0 0
  %198 = vmatpush.bf16.msra.mxu0 0
  %199 = vmatpush.bf16.msra.mxu0 0
  %200 = vmatpush.bf16.msra.mxu0 0
  %201 = vmatpush.bf16.msra.mxu0 0
  %202 = vmatpush.bf16.msra.mxu0 0
  %203 = vmatpush.bf16.msra.mxu0 %v194
  %204 = vmatmul.bf16.gmra.mxu0 %v78
  %v205 = vpop.f32.mrf.mxu0
  %v206 = vadd.f32 %v191, %v205
  %v207 = vpop.f32.mrf.mxu0
  %v208 = vadd.f32 %v191, %v207
  %209 = vmatmul.bf16.gmra.mxu0 %v81
  %v210 = vpop.f32.mrf.mxu0
  %v211 = vadd.f32 %v191, %v210
  %v212 = vpop.f32.mrf.mxu0
  %v213 = vadd.f32 %v191, %v212
  %214 = vmatmul.bf16.gmra.mxu0 %v84
  %v215 = vpop.f32.mrf.mxu0
  %v216 = vadd.f32 %v191, %v215
  %v217 = vpop.f32.mrf.mxu0
  %v218 = vadd.f32 %v191, %v217
  %219 = vmatmul.bf16.gmra.mxu0 %v87
  %v220 = vpop.f32.mrf.mxu0
  %v221 = vadd.f32 %v191, %v220
  %v222 = vpop.f32.mrf.mxu0
  %v223 = vadd.f32 %v191, %v222
  %224 = vmatmul.bf16.gmra.mxu0 %v90
  %v225 = vpop.f32.mrf.mxu0
  %v226 = vadd.f32 %v191, %v225
  %v227 = vpop.f32.mrf.mxu0
  %v228 = vadd.f32 %v191, %v227
  %229 = vmatmul.bf16.gmra.mxu0 %v93
  %v230 = vpop.f32.mrf.mxu0
  %v231 = vadd.f32 %v191, %v230
  %v232 = vpop.f32.mrf.mxu0
  %v233 = vadd.f32 %v191, %v232
  %234 = vmatmul.bf16.gmra.mxu0 %v96
  %v235 = vpop.f32.mrf.mxu0
  %v236 = vadd.f32 %v191, %v235
  %v237 = vpop.f32.mrf.mxu0
  %v238 = vadd.f32 %v191, %v237
  %239 = vmatmul.bf16.gmra.mxu0 %v99
  %v240 = vpop.f32.mrf.mxu0
  %v241 = vadd.f32 %v191, %v240
  %v242 = vpop.f32.mrf.mxu0
  %v243 = vadd.f32 %v191, %v242
  %244 = vdwg.mxu0
  %v245 = vpack.c.bf16 %v206, %v206
  %v246 = vpack.c.bf16 %v208, %v208
  %v247 = vpack.c.bf16 %v211, %v211
  %v248 = vpack.c.bf16 %v213, %v213
  %v249 = vpack.c.bf16 %v216, %v216
  %v250 = vpack.c.bf16 %v218, %v218
  %v251 = vpack.c.bf16 %v221, %v221
  %v252 = vpack.c.bf16 %v223, %v223
  %v253 = vpack.c.bf16 %v226, %v226
  %v254 = vpack.c.bf16 %v228, %v228
  %v255 = vpack.c.bf16 %v231, %v231
  %v256 = vpack.c.bf16 %v233, %v233
  %v257 = vpack.c.bf16 %v236, %v236
  %v258 = vpack.c.bf16 %v238, %v238
  %v259 = vpack.c.bf16 %v241, %v241
  %v260 = vpack.c.bf16 %v243, %v243
  %s261 = scalar_lea.vmem %s3, 4
  %262 = vst.msk [vmem:[%s261] sm:$0xf] %vm170, %v245
  %263 = vst.msk [vmem:[%s261 + $0x8] sm:$0xf] %vm170, %v246
  %264 = vst.msk [vmem:[%s261 + $0x10] sm:$0xf] %vm170, %v247
  %265 = vst.msk [vmem:[%s261 + $0x18] sm:$0xf] %vm170, %v248
  %266 = vst.msk [vmem:[%s261 + $0x20] sm:$0xf] %vm170, %v249
  %267 = vst.msk [vmem:[%s261 + $0x28] sm:$0xf] %vm170, %v250
  %268 = vst.msk [vmem:[%s261 + $0x30] sm:$0xf] %vm170, %v251
  %269 = vst.msk [vmem:[%s261 + $0x38] sm:$0xf] %vm170, %v252
  %270 = vst.msk [vmem:[%s261 + $0x40] sm:$0xf] %vm170, %v253
  %271 = vst.msk [vmem:[%s261 + $0x48] sm:$0xf] %vm170, %v254
  %272 = vst.msk [vmem:[%s261 + $0x50] sm:$0xf] %vm170, %v255
  %273 = vst.msk [vmem:[%s261 + $0x58] sm:$0xf] %vm170, %v256
  %274 = vst.msk [vmem:[%s261 + $0x60] sm:$0xf] %vm170, %v257
  %275 = vst.msk [vmem:[%s261 + $0x68] sm:$0xf] %vm170, %v258
  %276 = vst.msk [vmem:[%s261 + $0x70] sm:$0xf] %vm170, %v259
  %277 = vst.msk [vmem:[%s261 + $0x78] sm:$0xf] %vm170, %v260
  // Predicated region
  $region14: #{upsampling_block.5} parent=0 // pred_check
    _
  $region15: #{upsampling_block.5} parent=0 // pred_check_branch
    %279 = sbr.rel (0) target = $region17
  $region16: #{upsampling_block.5} parent=0 // pred_region
    _
  $region17: #{upsampling_block.5} parent=0 // pred_fallthru
    _
  // Predicated region
  $region18: #{upsampling_block.5} parent=0 // pred_check
    _
  $region19: #{upsampling_block.5} parent=0 // pred_check_branch
    %281 = sbr.rel (0) target = $region21
  $region20: #{upsampling_block.5} parent=0 // pred_region
    _
  $region21: #{upsampling_block.5} parent=0 // pred_fallthru
    _

// kernel: upsampling_block.4
$region0: #{upsampling_block.4}
  #allocation0 [shape = 'u32[]', space=smem, size = 0x4, offset = 0x4, fixed_abs, tag = 'smem constant byte address 0x4 - core index']
  #allocation1 [shape = 'u32[72,128]{1,0:T(1,128)}', space=vmem, size = 0x9000, scoped, tag = 'internal scratch']
  %s0 = inlined_call_operand.vmem [shape: bf16[512,4], index: 0, kind: input, shape index: {}]
  %s1 = inlined_call_operand.vmem [shape: bf16[4,8], index: 1, kind: input, shape index: {}]
  %s2 = inlined_call_operand.vmem [shape: bf16[512,8], index: 2, kind: output, shape index: {0}]
  %s3 = inlined_call_operand.vmem [shape: f32[1,2,8], index: 3, kind: output, shape index: {1}]
  %4 = xla_tuple %s2, %s3
  %s5 = sld [smem:[#allocation0]]
  $region26: #{upsampling_block.4} parent=0
    _
  %s7 = ssub.s32 1, %s5
  %s8 = scalar_select 0, %s7, %s5
  // Predicated region
  $region2: #{upsampling_block.4} parent=0 // pred_check
    _
  $region3: #{upsampling_block.4} parent=0 // pred_check_branch
    %10 = sbr.rel (0) target = $region5
  $region4: #{upsampling_block.4} parent=0 // pred_region
    _
  $region5: #{upsampling_block.4} parent=0 // pred_fallthru
    _
  // Predicated region
  $region6: #{upsampling_block.4} parent=0 // pred_check
    _
  $region7: #{upsampling_block.4} parent=0 // pred_check_branch
    %12 = sbr.rel (0) target = $region9
  $region8: #{upsampling_block.4} parent=0 // pred_region
    _
  $region9: #{upsampling_block.4} parent=0 // pred_fallthru
    _
  %v14 = vld [vmem:[%s0] sm:$0xf]
  %v15 = vld [vmem:[%s0 + $0x4] sm:$0xf]
  %v16 = vld [vmem:[%s0 + $0x8] sm:$0xf]
  %v17 = vld [vmem:[%s0 + $0xc] sm:$0xf]
  %v18 = vld [vmem:[%s0 + $0x10] sm:$0xf]
  %v19 = vld [vmem:[%s0 + $0x14] sm:$0xf]
  %v20 = vld [vmem:[%s0 + $0x18] sm:$0xf]
  %v21 = vld [vmem:[%s0 + $0x1c] sm:$0xf]
  %v22 = vld [vmem:[%s0 + $0x20] sm:$0xf]
  %v23 = vld [vmem:[%s0 + $0x24] sm:$0xf]
  %v24 = vld [vmem:[%s0 + $0x28] sm:$0xf]
  %v25 = vld [vmem:[%s0 + $0x2c] sm:$0xf]
  %v26 = vld [vmem:[%s0 + $0x30] sm:$0xf]
  %v27 = vld [vmem:[%s0 + $0x34] sm:$0xf]
  %v28 = vld [vmem:[%s0 + $0x38] sm:$0xf]
  %v29 = vld [vmem:[%s0 + $0x3c] sm:$0xf]
  %v30 = vld [vmem:[%s0 + $0x40] sm:$0xf]
  %v31 = vld [vmem:[%s0 + $0x44] sm:$0xf]
  %v32 = vld [vmem:[%s0 + $0x48] sm:$0xf]
  %v33 = vld [vmem:[%s0 + $0x4c] sm:$0xf]
  %v34 = vld [vmem:[%s0 + $0x50] sm:$0xf]
  %v35 = vld [vmem:[%s0 + $0x54] sm:$0xf]
  %v36 = vld [vmem:[%s0 + $0x58] sm:$0xf]
  %v37 = vld [vmem:[%s0 + $0x5c] sm:$0xf]
  %v38 = vld [vmem:[%s0 + $0x60] sm:$0xf]
  %v39 = vld [vmem:[%s0 + $0x64] sm:$0xf]
  %v40 = vld [vmem:[%s0 + $0x68] sm:$0xf]
  %v41 = vld [vmem:[%s0 + $0x6c] sm:$0xf]
  %v42 = vld [vmem:[%s0 + $0x70] sm:$0xf]
  %v43 = vld [vmem:[%s0 + $0x74] sm:$0xf]
  %v44 = vld [vmem:[%s0 + $0x78] sm:$0xf]
  %v45 = vld [vmem:[%s0 + $0x7c] sm:$0xf]
  %v46 = vld [vmem:[%s0 + $0x80] sm:$0xf]
  %v47 = vld [vmem:[%s0 + $0x84] sm:$0xf]
  %v48 = vld [vmem:[%s0 + $0x88] sm:$0xf]
  %v49 = vld [vmem:[%s0 + $0x8c] sm:$0xf]
  %v50 = vld [vmem:[%s0 + $0x90] sm:$0xf]
  %v51 = vld [vmem:[%s0 + $0x94] sm:$0xf]
  %v52 = vld [vmem:[%s0 + $0x98] sm:$0xf]
  %v53 = vld [vmem:[%s0 + $0x9c] sm:$0xf]
  %v54 = vld [vmem:[%s0 + $0xa0] sm:$0xf]
  %v55 = vld [vmem:[%s0 + $0xa4] sm:$0xf]
  %v56 = vld [vmem:[%s0 + $0xa8] sm:$0xf]
  %v57 = vld [vmem:[%s0 + $0xac] sm:$0xf]
  %v58 = vld [vmem:[%s0 + $0xb0] sm:$0xf]
  %v59 = vld [vmem:[%s0 + $0xb4] sm:$0xf]
  %v60 = vld [vmem:[%s0 + $0xb8] sm:$0xf]
  %v61 = vld [vmem:[%s0 + $0xbc] sm:$0xf]
  %v62 = vld [vmem:[%s0 + $0xc0] sm:$0xf]
  %v63 = vld [vmem:[%s0 + $0xc4] sm:$0xf]
  %v64 = vld [vmem:[%s0 + $0xc8] sm:$0xf]
  %v65 = vld [vmem:[%s0 + $0xcc] sm:$0xf]
  %v66 = vld [vmem:[%s0 + $0xd0] sm:$0xf]
  %v67 = vld [vmem:[%s0 + $0xd4] sm:$0xf]
  %v68 = vld [vmem:[%s0 + $0xd8] sm:$0xf]
  %v69 = vld [vmem:[%s0 + $0xdc] sm:$0xf]
  %v70 = vld [vmem:[%s0 + $0xe0] sm:$0xf]
  %v71 = vld [vmem:[%s0 + $0xe4] sm:$0xf]
  %v72 = vld [vmem:[%s0 + $0xe8] sm:$0xf]
  %v73 = vld [vmem:[%s0 + $0xec] sm:$0xf]
  %v74 = vld [vmem:[%s0 + $0xf0] sm:$0xf]
  %v75 = vld [vmem:[%s0 + $0xf4] sm:$0xf]
  %v76 = vld [vmem:[%s0 + $0xf8] sm:$0xf]
  %v77 = vld [vmem:[%s0 + $0xfc] sm:$0xf]
  %v78 = vld [vmem:[%s1] sm:$0x3]
  %v143 = vunpack.c.l.b16 %v14
  %v144 = vunpack.c.l.b16 %v15
  %v145 = vunpack.c.l.b16 %v16
  %v146 = vunpack.c.l.b16 %v17
  %v147 = vunpack.c.l.b16 %v18
  %v148 = vunpack.c.l.b16 %v19
  %v149 = vunpack.c.l.b16 %v20
  %v150 = vunpack.c.l.b16 %v21
  %v151 = vunpack.c.l.b16 %v22
  %v152 = vunpack.c.l.b16 %v23
  %v153 = vunpack.c.l.b16 %v24
  %v154 = vunpack.c.l.b16 %v25
  %v155 = vunpack.c.l.b16 %v26
  %v156 = vunpack.c.l.b16 %v27
  %v157 = vunpack.c.l.b16 %v28
  %v158 = vunpack.c.l.b16 %v29
  %v159 = vunpack.c.l.b16 %v30
  %v160 = vunpack.c.l.b16 %v31
  %v161 = vunpack.c.l.b16 %v32
  %v162 = vunpack.c.l.b16 %v33
  %v163 = vunpack.c.l.b16 %v34
  %v164 = vunpack.c.l.b16 %v35
  %v165 = vunpack.c.l.b16 %v36
  %v166 = vunpack.c.l.b16 %v37
  %v167 = vunpack.c.l.b16 %v38
  %v168 = vunpack.c.l.b16 %v39
  %v169 = vunpack.c.l.b16 %v40
  %v170 = vunpack.c.l.b16 %v41
  %v171 = vunpack.c.l.b16 %v42
  %v172 = vunpack.c.l.b16 %v43
  %v173 = vunpack.c.l.b16 %v44
  %v174 = vunpack.c.l.b16 %v45
  %v175 = vunpack.c.l.b16 %v46
  %v176 = vunpack.c.l.b16 %v47
  %v177 = vunpack.c.l.b16 %v48
  %v178 = vunpack.c.l.b16 %v49
  %v179 = vunpack.c.l.b16 %v50
  %v180 = vunpack.c.l.b16 %v51
  %v181 = vunpack.c.l.b16 %v52
  %v182 = vunpack.c.l.b16 %v53
  %v183 = vunpack.c.l.b16 %v54
  %v184 = vunpack.c.l.b16 %v55
  %v185 = vunpack.c.l.b16 %v56
  %v186 = vunpack.c.l.b16 %v57
  %v187 = vunpack.c.l.b16 %v58
  %v188 = vunpack.c.l.b16 %v59
  %v189 = vunpack.c.l.b16 %v60
  %v190 = vunpack.c.l.b16 %v61
  %v191 = vunpack.c.l.b16 %v62
  %v192 = vunpack.c.l.b16 %v63
  %v193 = vunpack.c.l.b16 %v64
  %v194 = vunpack.c.l.b16 %v65
  %v195 = vunpack.c.l.b16 %v66
  %v196 = vunpack.c.l.b16 %v67
  %v197 = vunpack.c.l.b16 %v68
  %v198 = vunpack.c.l.b16 %v69
  %v199 = vunpack.c.l.b16 %v70
  %v200 = vunpack.c.l.b16 %v71
  %v201 = vunpack.c.l.b16 %v72
  %v202 = vunpack.c.l.b16 %v73
  %v203 = vunpack.c.l.b16 %v74
  %v204 = vunpack.c.l.b16 %v75
  %v205 = vunpack.c.l.b16 %v76
  %v206 = vunpack.c.l.b16 %v77
  %v207 = vpack.c.b16 %v144, %v143
  %v208 = vpack.c.b16 %v146, %v145
  %v209 = vpack.c.b16 %v148, %v147
  %v210 = vpack.c.b16 %v150, %v149
  %v211 = vpack.c.b16 %v152, %v151
  %v212 = vpack.c.b16 %v154, %v153
  %v213 = vpack.c.b16 %v156, %v155
  %v214 = vpack.c.b16 %v158, %v157
  %v215 = vpack.c.b16 %v160, %v159
  %v216 = vpack.c.b16 %v162, %v161
  %v217 = vpack.c.b16 %v164, %v163
  %v218 = vpack.c.b16 %v166, %v165
  %v219 = vpack.c.b16 %v168, %v167
  %v220 = vpack.c.b16 %v170, %v169
  %v221 = vpack.c.b16 %v172, %v171
  %v222 = vpack.c.b16 %v174, %v173
  %v223 = vpack.c.b16 %v176, %v175
  %v224 = vpack.c.b16 %v178, %v177
  %v225 = vpack.c.b16 %v180, %v179
  %v226 = vpack.c.b16 %v182, %v181
  %v227 = vpack.c.b16 %v184, %v183
  %v228 = vpack.c.b16 %v186, %v185
  %v229 = vpack.c.b16 %v188, %v187
  %v230 = vpack.c.b16 %v190, %v189
  %v231 = vpack.c.b16 %v192, %v191
  %v232 = vpack.c.b16 %v194, %v193
  %v233 = vpack.c.b16 %v196, %v195
  %v234 = vpack.c.b16 %v198, %v197
  %v235 = vpack.c.b16 %v200, %v199
  %v236 = vpack.c.b16 %v202, %v201
  %v237 = vpack.c.b16 %v204, %v203
  %v238 = vpack.c.b16 %v206, %v205
  %vm239 = vcmask 31744
  %v241 = vsel %vm239, %v207, 0
  %v244 = vsel %vm239, %v208, 0
  %v247 = vsel %vm239, %v209, 0
  %v250 = vsel %vm239, %v210, 0
  %v253 = vsel %vm239, %v211, 0
  %v256 = vsel %vm239, %v212, 0
  %v259 = vsel %vm239, %v213, 0
  %v262 = vsel %vm239, %v214, 0
  %v265 = vsel %vm239, %v215, 0
  %v268 = vsel %vm239, %v216, 0
  %v271 = vsel %vm239, %v217, 0
  %v274 = vsel %vm239, %v218, 0
  %v277 = vsel %vm239, %v219, 0
  %v280 = vsel %vm239, %v220, 0
  %v283 = vsel %vm239, %v221, 0
  %v286 = vsel %vm239, %v222, 0
  %v289 = vsel %vm239, %v223, 0
  %v292 = vsel %vm239, %v224, 0
  %v295 = vsel %vm239, %v225, 0
  %v298 = vsel %vm239, %v226, 0
  %v301 = vsel %vm239, %v227, 0
  %v304 = vsel %vm239, %v228, 0
  %v307 = vsel %vm239, %v229, 0
  %v310 = vsel %vm239, %v230, 0
  %v313 = vsel %vm239, %v231, 0
  %v316 = vsel %vm239, %v232, 0
  %v319 = vsel %vm239, %v233, 0
  %v322 = vsel %vm239, %v234, 0
  %v325 = vsel %vm239, %v235, 0
  %v328 = vsel %vm239, %v236, 0
  %v331 = vsel %vm239, %v237, 0
  %v334 = vsel %vm239, %v238, 0
  %vm336 = vcmask 1041408
  %v338 = vsel %vm336, %v78, 0
  %340 = vmatpush.bf16.msra.mxu0 0
  %341 = vmatpush.bf16.msra.mxu0 0
  %342 = vmatpush.bf16.msra.mxu0 0
  %343 = vmatpush.bf16.msra.mxu0 0
  %344 = vmatpush.bf16.msra.mxu0 0
  %345 = vmatpush.bf16.msra.mxu0 0
  %346 = vmatpush.bf16.msra.mxu0 0
  %347 = vmatpush.bf16.msra.mxu0 %v338
  %348 = vmatmul.bf16.gmra.mxu0 %v241
  %v349 = vpop.f32.mrf.mxu0
  %v350 = vadd.f32 0.0, %v349
  %v351 = vpop.f32.mrf.mxu0
  %v352 = vadd.f32 0.0, %v351
  %353 = vmatmul.bf16.gmra.mxu0 %v244
  %v354 = vpop.f32.mrf.mxu0
  %v355 = vadd.f32 0.0, %v354
  %v356 = vpop.f32.mrf.mxu0
  %v357 = vadd.f32 0.0, %v356
  %358 = vmatmul.bf16.gmra.mxu0 %v247
  %v359 = vpop.f32.mrf.mxu0
  %v360 = vadd.f32 0.0, %v359
  %v361 = vpop.f32.mrf.mxu0
  %v362 = vadd.f32 0.0, %v361
  %363 = vmatmul.bf16.gmra.mxu0 %v250
  %v364 = vpop.f32.mrf.mxu0
  %v365 = vadd.f32 0.0, %v364
  %v366 = vpop.f32.mrf.mxu0
  %v367 = vadd.f32 0.0, %v366
  %368 = vmatmul.bf16.gmra.mxu0 %v253
  %v369 = vpop.f32.mrf.mxu0
  %v370 = vadd.f32 0.0, %v369
  %v371 = vpop.f32.mrf.mxu0
  %v372 = vadd.f32 0.0, %v371
  %373 = vmatmul.bf16.gmra.mxu0 %v256
  %v374 = vpop.f32.mrf.mxu0
  %v375 = vadd.f32 0.0, %v374
  %v376 = vpop.f32.mrf.mxu0
  %v377 = vadd.f32 0.0, %v376
  %378 = vmatmul.bf16.gmra.mxu0 %v259
  %v379 = vpop.f32.mrf.mxu0
  %v380 = vadd.f32 0.0, %v379
  %v381 = vpop.f32.mrf.mxu0
  %v382 = vadd.f32 0.0, %v381
  %383 = vmatmul.bf16.gmra.mxu0 %v262
  %v384 = vpop.f32.mrf.mxu0
  %v385 = vadd.f32 0.0, %v384
  %v386 = vpop.f32.mrf.mxu0
  %v387 = vadd.f32 0.0, %v386
  %388 = vmatmul.bf16.gmra.mxu0 %v265
  %v389 = vpop.f32.mrf.mxu0
  %v390 = vadd.f32 0.0, %v389
  %v391 = vpop.f32.mrf.mxu0
  %v392 = vadd.f32 0.0, %v391
  %393 = vmatmul.bf16.gmra.mxu0 %v268
  %v394 = vpop.f32.mrf.mxu0
  %v395 = vadd.f32 0.0, %v394
  %v396 = vpop.f32.mrf.mxu0
  %v397 = vadd.f32 0.0, %v396
  %398 = vmatmul.bf16.gmra.mxu0 %v271
  %v399 = vpop.f32.mrf.mxu0
  %v400 = vadd.f32 0.0, %v399
  %v401 = vpop.f32.mrf.mxu0
  %v402 = vadd.f32 0.0, %v401
  %403 = vmatmul.bf16.gmra.mxu0 %v274
  %v404 = vpop.f32.mrf.mxu0
  %v405 = vadd.f32 0.0, %v404
  %v406 = vpop.f32.mrf.mxu0
  %v407 = vadd.f32 0.0, %v406
  %408 = vmatmul.bf16.gmra.mxu0 %v277
  %v409 = vpop.f32.mrf.mxu0
  %v410 = vadd.f32 0.0, %v409
  %v411 = vpop.f32.mrf.mxu0
  %v412 = vadd.f32 0.0, %v411
  %413 = vmatmul.bf16.gmra.mxu0 %v280
  %v414 = vpop.f32.mrf.mxu0
  %v415 = vadd.f32 0.0, %v414
  %v416 = vpop.f32.mrf.mxu0
  %v417 = vadd.f32 0.0, %v416
  %418 = vmatmul.bf16.gmra.mxu0 %v283
  %v419 = vpop.f32.mrf.mxu0
  %v420 = vadd.f32 0.0, %v419
  %v421 = vpop.f32.mrf.mxu0
  %v422 = vadd.f32 0.0, %v421
  %423 = vmatmul.bf16.gmra.mxu0 %v286
  %v424 = vpop.f32.mrf.mxu0
  %v425 = vadd.f32 0.0, %v424
  %v426 = vpop.f32.mrf.mxu0
  %v427 = vadd.f32 0.0, %v426
  %428 = vmatmul.bf16.gmra.mxu0 %v289
  %v429 = vpop.f32.mrf.mxu0
  %v430 = vadd.f32 0.0, %v429
  %v431 = vpop.f32.mrf.mxu0
  %v432 = vadd.f32 0.0, %v431
  %433 = vmatmul.bf16.gmra.mxu0 %v292
  %v434 = vpop.f32.mrf.mxu0
  %v435 = vadd.f32 0.0, %v434
  %v436 = vpop.f32.mrf.mxu0
  %v437 = vadd.f32 0.0, %v436
  %438 = vmatmul.bf16.gmra.mxu0 %v295
  %v439 = vpop.f32.mrf.mxu0
  %v440 = vadd.f32 0.0, %v439
  %v441 = vpop.f32.mrf.mxu0
  %v442 = vadd.f32 0.0, %v441
  %443 = vmatmul.bf16.gmra.mxu0 %v298
  %v444 = vpop.f32.mrf.mxu0
  %v445 = vadd.f32 0.0, %v444
  %v446 = vpop.f32.mrf.mxu0
  %v447 = vadd.f32 0.0, %v446
  %448 = vmatmul.bf16.gmra.mxu0 %v301
  %v449 = vpop.f32.mrf.mxu0
  %v450 = vadd.f32 0.0, %v449
  %v451 = vpop.f32.mrf.mxu0
  %v452 = vadd.f32 0.0, %v451
  %453 = vmatmul.bf16.gmra.mxu0 %v304
  %v454 = vpop.f32.mrf.mxu0
  %v455 = vadd.f32 0.0, %v454
  %v456 = vpop.f32.mrf.mxu0
  %v457 = vadd.f32 0.0, %v456
  %458 = vmatmul.bf16.gmra.mxu0 %v307
  %v459 = vpop.f32.mrf.mxu0
  %v460 = vadd.f32 0.0, %v459
  %v461 = vpop.f32.mrf.mxu0
  %v462 = vadd.f32 0.0, %v461
  %463 = vmatmul.bf16.gmra.mxu0 %v310
  %v464 = vpop.f32.mrf.mxu0
  %v465 = vadd.f32 0.0, %v464
  %v466 = vpop.f32.mrf.mxu0
  %v467 = vadd.f32 0.0, %v466
  %468 = vmatmul.bf16.gmra.mxu0 %v313
  %v469 = vpop.f32.mrf.mxu0
  %v470 = vadd.f32 0.0, %v469
  %v471 = vpop.f32.mrf.mxu0
  %v472 = vadd.f32 0.0, %v471
  %473 = vmatmul.bf16.gmra.mxu0 %v316
  %v474 = vpop.f32.mrf.mxu0
  %v475 = vadd.f32 0.0, %v474
  %v476 = vpop.f32.mrf.mxu0
  %v477 = vadd.f32 0.0, %v476
  %478 = vmatmul.bf16.gmra.mxu0 %v319
  %v479 = vpop.f32.mrf.mxu0
  %v480 = vadd.f32 0.0, %v479
  %v481 = vpop.f32.mrf.mxu0
  %v482 = vadd.f32 0.0, %v481
  %483 = vmatmul.bf16.gmra.mxu0 %v322
  %v484 = vpop.f32.mrf.mxu0
  %v485 = vadd.f32 0.0, %v484
  %v486 = vpop.f32.mrf.mxu0
  %v487 = vadd.f32 0.0, %v486
  %488 = vmatmul.bf16.gmra.mxu0 %v325
  %v489 = vpop.f32.mrf.mxu0
  %v490 = vadd.f32 0.0, %v489
  %v491 = vpop.f32.mrf.mxu0
  %v492 = vadd.f32 0.0, %v491
  %493 = vmatmul.bf16.gmra.mxu0 %v328
  %v494 = vpop.f32.mrf.mxu0
  %v495 = vadd.f32 0.0, %v494
  %v496 = vpop.f32.mrf.mxu0
  %v497 = vadd.f32 0.0, %v496
  %498 = vmatmul.bf16.gmra.mxu0 %v331
  %v499 = vpop.f32.mrf.mxu0
  %v500 = vadd.f32 0.0, %v499
  %v501 = vpop.f32.mrf.mxu0
  %v502 = vadd.f32 0.0, %v501
  %503 = vmatmul.bf16.gmra.mxu0 %v334
  %v504 = vpop.f32.mrf.mxu0
  %v505 = vadd.f32 0.0, %v504
  %v506 = vpop.f32.mrf.mxu0
  %v507 = vadd.f32 0.0, %v506
  %508 = vdwg.mxu0
  %v509 = vpack.c.bf16 %v350, %v350
  %v510 = vpack.c.bf16 %v352, %v352
  %v511 = vpack.c.bf16 %v355, %v355
  %v512 = vpack.c.bf16 %v357, %v357
  %v513 = vpack.c.bf16 %v360, %v360
  %v514 = vpack.c.bf16 %v362, %v362
  %v515 = vpack.c.bf16 %v365, %v365
  %v516 = vpack.c.bf16 %v367, %v367
  %v517 = vpack.c.bf16 %v370, %v370
  %v518 = vpack.c.bf16 %v372, %v372
  %v519 = vpack.c.bf16 %v375, %v375
  %v520 = vpack.c.bf16 %v377, %v377
  %v521 = vpack.c.bf16 %v380, %v380
  %v522 = vpack.c.bf16 %v382, %v382
  %v523 = vpack.c.bf16 %v385, %v385
  %v524 = vpack.c.bf16 %v387, %v387
  %v525 = vpack.c.bf16 %v390, %v390
  %v526 = vpack.c.bf16 %v392, %v392
  %v527 = vpack.c.bf16 %v395, %v395
  %v528 = vpack.c.bf16 %v397, %v397
  %v529 = vpack.c.bf16 %v400, %v400
  %v530 = vpack.c.bf16 %v402, %v402
  %v531 = vpack.c.bf16 %v405, %v405
  %v532 = vpack.c.bf16 %v407, %v407
  %v533 = vpack.c.bf16 %v410, %v410
  %v534 = vpack.c.bf16 %v412, %v412
  %v535 = vpack.c.bf16 %v415, %v415
  %v536 = vpack.c.bf16 %v417, %v417
  %v537 = vpack.c.bf16 %v420, %v420
  %v538 = vpack.c.bf16 %v422, %v422
  %v539 = vpack.c.bf16 %v425, %v425
  %v540 = vpack.c.bf16 %v427, %v427
  %v541 = vpack.c.bf16 %v430, %v430
  %v542 = vpack.c.bf16 %v432, %v432
  %v543 = vpack.c.bf16 %v435, %v435
  %v544 = vpack.c.bf16 %v437, %v437
  %v545 = vpack.c.bf16 %v440, %v440
  %v546 = vpack.c.bf16 %v442, %v442
  %v547 = vpack.c.bf16 %v445, %v445
  %v548 = vpack.c.bf16 %v447, %v447
  %v549 = vpack.c.bf16 %v450, %v450
  %v550 = vpack.c.bf16 %v452, %v452
  %v551 = vpack.c.bf16 %v455, %v455
  %v552 = vpack.c.bf16 %v457, %v457
  %v553 = vpack.c.bf16 %v460, %v460
  %v554 = vpack.c.bf16 %v462, %v462
  %v555 = vpack.c.bf16 %v465, %v465
  %v556 = vpack.c.bf16 %v467, %v467
  %v557 = vpack.c.bf16 %v470, %v470
  %v558 = vpack.c.bf16 %v472, %v472
  %v559 = vpack.c.bf16 %v475, %v475
  %v560 = vpack.c.bf16 %v477, %v477
  %v561 = vpack.c.bf16 %v480, %v480
  %v562 = vpack.c.bf16 %v482, %v482
  %v563 = vpack.c.bf16 %v485, %v485
  %v564 = vpack.c.bf16 %v487, %v487
  %v565 = vpack.c.bf16 %v490, %v490
  %v566 = vpack.c.bf16 %v492, %v492
  %v567 = vpack.c.bf16 %v495, %v495
  %v568 = vpack.c.bf16 %v497, %v497
  %v569 = vpack.c.bf16 %v500, %v500
  %v570 = vpack.c.bf16 %v502, %v502
  %v571 = vpack.c.bf16 %v505, %v505
  %v572 = vpack.c.bf16 %v507, %v507
  %vm573 = vcmask 60416
  %574 = vst.msk [vmem:[%s2] sm:$0xf] %vm573, %v509
  %575 = vst.msk [vmem:[%s2 + $0x4] sm:$0xf] %vm573, %v510
  %576 = vst.msk [vmem:[%s2 + $0x8] sm:$0xf] %vm573, %v511
  %577 = vst.msk [vmem:[%s2 + $0xc] sm:$0xf] %vm573, %v512
  %578 = vst.msk [vmem:[%s2 + $0x10] sm:$0xf] %vm573, %v513
  %579 = vst.msk [vmem:[%s2 + $0x14] sm:$0xf] %vm573, %v514
  %580 = vst.msk [vmem:[%s2 + $0x18] sm:$0xf] %vm573, %v515
  %581 = vst.msk [vmem:[%s2 + $0x1c] sm:$0xf] %vm573, %v516
  %582 = vst.msk [vmem:[%s2 + $0x20] sm:$0xf] %vm573, %v517
  %583 = vst.msk [vmem:[%s2 + $0x24] sm:$0xf] %vm573, %v518
  %584 = vst.msk [vmem:[%s2 + $0x28] sm:$0xf] %vm573, %v519
  %585 = vst.msk [vmem:[%s2 + $0x2c] sm:$0xf] %vm573, %v520
  %586 = vst.msk [vmem:[%s2 + $0x30] sm:$0xf] %vm573, %v521
  %587 = vst.msk [vmem:[%s2 + $0x34] sm:$0xf] %vm573, %v522
  %588 = vst.msk [vmem:[%s2 + $0x38] sm:$0xf] %vm573, %v523
  %589 = vst.msk [vmem:[%s2 + $0x3c] sm:$0xf] %vm573, %v524
  %590 = vst.msk [vmem:[%s2 + $0x40] sm:$0xf] %vm573, %v525
  %591 = vst.msk [vmem:[%s2 + $0x44] sm:$0xf] %vm573, %v526
  %592 = vst.msk [vmem:[%s2 + $0x48] sm:$0xf] %vm573, %v527
  %593 = vst.msk [vmem:[%s2 + $0x4c] sm:$0xf] %vm573, %v528
  %594 = vst.msk [vmem:[%s2 + $0x50] sm:$0xf] %vm573, %v529
  %595 = vst.msk [vmem:[%s2 + $0x54] sm:$0xf] %vm573, %v530
  %596 = vst.msk [vmem:[%s2 + $0x58] sm:$0xf] %vm573, %v531
  %597 = vst.msk [vmem:[%s2 + $0x5c] sm:$0xf] %vm573, %v532
  %598 = vst.msk [vmem:[%s2 + $0x60] sm:$0xf] %vm573, %v533
  %599 = vst.msk [vmem:[%s2 + $0x64] sm:$0xf] %vm573, %v534
  %600 = vst.msk [vmem:[%s2 + $0x68] sm:$0xf] %vm573, %v535
  %601 = vst.msk [vmem:[%s2 + $0x6c] sm:$0xf] %vm573, %v536
  %602 = vst.msk [vmem:[%s2 + $0x70] sm:$0xf] %vm573, %v537
  %603 = vst.msk [vmem:[%s2 + $0x74] sm:$0xf] %vm573, %v538
  %604 = vst.msk [vmem:[%s2 + $0x78] sm:$0xf] %vm573, %v539
  %605 = vst.msk [vmem:[%s2 + $0x7c] sm:$0xf] %vm573, %v540
  %606 = vst.msk [vmem:[%s2 + $0x80] sm:$0xf] %vm573, %v541
  %607 = vst.msk [vmem:[%s2 + $0x84] sm:$0xf] %vm573, %v542
  %608 = vst.msk [vmem:[%s2 + $0x88] sm:$0xf] %vm573, %v543
  %609 = vst.msk [vmem:[%s2 + $0x8c] sm:$0xf] %vm573, %v544
  %610 = vst.msk [vmem:[%s2 + $0x90] sm:$0xf] %vm573, %v545
  %611 = vst.msk [vmem:[%s2 + $0x94] sm:$0xf] %vm573, %v546
  %612 = vst.msk [vmem:[%s2 + $0x98] sm:$0xf] %vm573, %v547
  %613 = vst.msk [vmem:[%s2 + $0x9c] sm:$0xf] %vm573, %v548
  %614 = vst.msk [vmem:[%s2 + $0xa0] sm:$0xf] %vm573, %v549
  %615 = vst.msk [vmem:[%s2 + $0xa4] sm:$0xf] %vm573, %v550
  %616 = vst.msk [vmem:[%s2 + $0xa8] sm:$0xf] %vm573, %v551
  %617 = vst.msk [vmem:[%s2 + $0xac] sm:$0xf] %vm573, %v552
  %618 = vst.msk [vmem:[%s2 + $0xb0] sm:$0xf] %vm573, %v553
  %619 = vst.msk [vmem:[%s2 + $0xb4] sm:$0xf] %vm573, %v554
  %620 = vst.msk [vmem:[%s2 + $0xb8] sm:$0xf] %vm573, %v555
  %621 = vst.msk [vmem:[%s2 + $0xbc] sm:$0xf] %vm573, %v556
  %622 = vst.msk [vmem:[%s2 + $0xc0] sm:$0xf] %vm573, %v557
  %623 = vst.msk [vmem:[%s2 + $0xc4] sm:$0xf] %vm573, %v558
  %624 = vst.msk [vmem:[%s2 + $0xc8] sm:$0xf] %vm573, %v559
  %625 = vst.msk [vmem:[%s2 + $0xcc] sm:$0xf] %vm573, %v560
  %626 = vst.msk [vmem:[%s2 + $0xd0] sm:$0xf] %vm573, %v561
  %627 = vst.msk [vmem:[%s2 + $0xd4] sm:$0xf] %vm573, %v562
  %628 = vst.msk [vmem:[%s2 + $0xd8] sm:$0xf] %vm573, %v563
  %629 = vst.msk [vmem:[%s2 + $0xdc] sm:$0xf] %vm573, %v564
  %630 = vst.msk [vmem:[%s2 + $0xe0] sm:$0xf] %vm573, %v565
  %631 = vst.msk [vmem:[%s2 + $0xe4] sm:$0xf] %vm573, %v566
  %632 = vst.msk [vmem:[%s2 + $0xe8] sm:$0xf] %vm573, %v567
  %633 = vst.msk [vmem:[%s2 + $0xec] sm:$0xf] %vm573, %v568
  %634 = vst.msk [vmem:[%s2 + $0xf0] sm:$0xf] %vm573, %v569
  %635 = vst.msk [vmem:[%s2 + $0xf4] sm:$0xf] %vm573, %v570
  %636 = vst.msk [vmem:[%s2 + $0xf8] sm:$0xf] %vm573, %v571
  %637 = vst.msk [vmem:[%s2 + $0xfc] sm:$0xf] %vm573, %v572
  %vm638 = vcmask 64512
  %v639 = vsel %vm638, %v350, 0.0
  %v640 = vsel %vm638, %v352, 0.0
  %v641 = vadd.f32 %v639, %v640
  %v642 = vsel %vm638, %v355, 0.0
  %v643 = vadd.f32 %v641, %v642
  %v644 = vsel %vm638, %v357, 0.0
  %v645 = vadd.f32 %v643, %v644
  %v646 = vsel %vm638, %v360, 0.0
  %v647 = vadd.f32 %v645, %v646
  %v648 = vsel %vm638, %v362, 0.0
  %v649 = vadd.f32 %v647, %v648
  %v650 = vsel %vm638, %v365, 0.0
  %v651 = vadd.f32 %v649, %v650
  %v652 = vsel %vm638, %v367, 0.0
  %v653 = vadd.f32 %v651, %v652
  %v654 = vsel %vm638, %v370, 0.0
  %v655 = vadd.f32 %v653, %v654
  %v656 = vsel %vm638, %v372, 0.0
  %v657 = vadd.f32 %v655, %v656
  %v658 = vsel %vm638, %v375, 0.0
  %v659 = vadd.f32 %v657, %v658
  %v660 = vsel %vm638, %v377, 0.0
  %v661 = vadd.f32 %v659, %v660
  %v662 = vsel %vm638, %v380, 0.0
  %v663 = vadd.f32 %v661, %v662
  %v664 = vsel %vm638, %v382, 0.0
  %v665 = vadd.f32 %v663, %v664
  %v666 = vsel %vm638, %v385, 0.0
  %v667 = vadd.f32 %v665, %v666
  %v668 = vsel %vm638, %v387, 0.0
  %v669 = vadd.f32 %v667, %v668
  %v670 = vsel %vm638, %v390, 0.0
  %v671 = vadd.f32 %v669, %v670
  %v672 = vsel %vm638, %v392, 0.0
  %v673 = vadd.f32 %v671, %v672
  %v674 = vsel %vm638, %v395, 0.0
  %v675 = vadd.f32 %v673, %v674
  %v676 = vsel %vm638, %v397, 0.0
  %v677 = vadd.f32 %v675, %v676
  %v678 = vsel %vm638, %v400, 0.0
  %v679 = vadd.f32 %v677, %v678
  %v680 = vsel %vm638, %v402, 0.0
  %v681 = vadd.f32 %v679, %v680
  %v682 = vsel %vm638, %v405, 0.0
  %v683 = vadd.f32 %v681, %v682
  %v684 = vsel %vm638, %v407, 0.0
  %v685 = vadd.f32 %v683, %v684
  %v686 = vsel %vm638, %v410, 0.0
  %v687 = vadd.f32 %v685, %v686
  %v688 = vsel %vm638, %v412, 0.0
  %v689 = vadd.f32 %v687, %v688
  %v690 = vsel %vm638, %v415, 0.0
  %v691 = vadd.f32 %v689, %v690
  %v692 = vsel %vm638, %v417, 0.0
  %v693 = vadd.f32 %v691, %v692
  %v694 = vsel %vm638, %v420, 0.0
  %v695 = vadd.f32 %v693, %v694
  %v696 = vsel %vm638, %v422, 0.0
  %v697 = vadd.f32 %v695, %v696
  %v698 = vsel %vm638, %v425, 0.0
  %v699 = vadd.f32 %v697, %v698
  %v700 = vsel %vm638, %v427, 0.0
  %v701 = vadd.f32 %v699, %v700
  %v702 = vsel %vm638, %v430, 0.0
  %v703 = vadd.f32 %v701, %v702
  %v704 = vsel %vm638, %v432, 0.0
  %v705 = vadd.f32 %v703, %v704
  %v706 = vsel %vm638, %v435, 0.0
  %v707 = vadd.f32 %v705, %v706
  %v708 = vsel %vm638, %v437, 0.0
  %v709 = vadd.f32 %v707, %v708
  %v710 = vsel %vm638, %v440, 0.0
  %v711 = vadd.f32 %v709, %v710
  %v712 = vsel %vm638, %v442, 0.0
  %v713 = vadd.f32 %v711, %v712
  %v714 = vsel %vm638, %v445, 0.0
  %v715 = vadd.f32 %v713, %v714
  %v716 = vsel %vm638, %v447, 0.0
  %v717 = vadd.f32 %v715, %v716
  %v718 = vsel %vm638, %v450, 0.0
  %v719 = vadd.f32 %v717, %v718
  %v720 = vsel %vm638, %v452, 0.0
  %v721 = vadd.f32 %v719, %v720
  %v722 = vsel %vm638, %v455, 0.0
  %v723 = vadd.f32 %v721, %v722
  %v724 = vsel %vm638, %v457, 0.0
  %v725 = vadd.f32 %v723, %v724
  %v726 = vsel %vm638, %v460, 0.0
  %v727 = vadd.f32 %v725, %v726
  %v728 = vsel %vm638, %v462, 0.0
  %v729 = vadd.f32 %v727, %v728
  %v730 = vsel %vm638, %v465, 0.0
  %v731 = vadd.f32 %v729, %v730
  %v732 = vsel %vm638, %v467, 0.0
  %v733 = vadd.f32 %v731, %v732
  %v734 = vsel %vm638, %v470, 0.0
  %v735 = vadd.f32 %v733, %v734
  %v736 = vsel %vm638, %v472, 0.0
  %v737 = vadd.f32 %v735, %v736
  %v738 = vsel %vm638, %v475, 0.0
  %v739 = vadd.f32 %v737, %v738
  %v740 = vsel %vm638, %v477, 0.0
  %v741 = vadd.f32 %v739, %v740
  %v742 = vsel %vm638, %v480, 0.0
  %v743 = vadd.f32 %v741, %v742
  %v744 = vsel %vm638, %v482, 0.0
  %v745 = vadd.f32 %v743, %v744
  %v746 = vsel %vm638, %v485, 0.0
  %v747 = vadd.f32 %v745, %v746
  %v748 = vsel %vm638, %v487, 0.0
  %v749 = vadd.f32 %v747, %v748
  %v750 = vsel %vm638, %v490, 0.0
  %v751 = vadd.f32 %v749, %v750
  %v752 = vsel %vm638, %v492, 0.0
  %v753 = vadd.f32 %v751, %v752
  %v754 = vsel %vm638, %v495, 0.0
  %v755 = vadd.f32 %v753, %v754
  %v756 = vsel %vm638, %v497, 0.0
  %v757 = vadd.f32 %v755, %v756
  %v758 = vsel %vm638, %v500, 0.0
  %v759 = vadd.f32 %v757, %v758
  %v760 = vsel %vm638, %v502, 0.0
  %v761 = vadd.f32 %v759, %v760
  %v762 = vsel %vm638, %v505, 0.0
  %v763 = vadd.f32 %v761, %v762
  %v764 = vsel %vm638, %v507, 0.0
  %v765 = vadd.f32 %v763, %v764
  %v766 = vrot.slane %v765, 4
  %v767 = vadd.f32 %v765, %v766
  %v768 = vrot.slane %v767, 2
  %v769 = vadd.f32 %v767, %v768
  %v770 = vrot.slane %v769, 1
  %v771 = vadd.f32 %v769, %v770
  %v772 = vmul.f32 %v771, 0.001953125
  %v773 = vsub.f32 %v350, %v772
  %v774 = vsub.f32 %v352, %v772
  %v775 = vsub.f32 %v355, %v772
  %v776 = vsub.f32 %v357, %v772
  %v777 = vsub.f32 %v360, %v772
  %v778 = vsub.f32 %v362, %v772
  %v779 = vsub.f32 %v365, %v772
  %v780 = vsub.f32 %v367, %v772
  %v781 = vsub.f32 %v370, %v772
  %v782 = vsub.f32 %v372, %v772
  %v783 = vsub.f32 %v375, %v772
  %v784 = vsub.f32 %v377, %v772
  %v785 = vsub.f32 %v380, %v772
  %v786 = vsub.f32 %v382, %v772
  %v787 = vsub.f32 %v385, %v772
  %v788 = vsub.f32 %v387, %v772
  %v789 = vsub.f32 %v390, %v772
  %v790 = vsub.f32 %v392, %v772
  %v791 = vsub.f32 %v395, %v772
  %v792 = vsub.f32 %v397, %v772
  %v793 = vsub.f32 %v400, %v772
  %v794 = vsub.f32 %v402, %v772
  %v795 = vsub.f32 %v405, %v772
  %v796 = vsub.f32 %v407, %v772
  %v797 = vsub.f32 %v410, %v772
  %v798 = vsub.f32 %v412, %v772
  %v799 = vsub.f32 %v415, %v772
  %v800 = vsub.f32 %v417, %v772
  %v801 = vsub.f32 %v420, %v772
  %v802 = vsub.f32 %v422, %v772
  %v803 = vsub.f32 %v425, %v772
  %v804 = vsub.f32 %v427, %v772
  %v805 = vsub.f32 %v430, %v772
  %v806 = vsub.f32 %v432, %v772
  %v807 = vsub.f32 %v435, %v772
  %v808 = vsub.f32 %v437, %v772
  %v809 = vsub.f32 %v440, %v772
  %v810 = vsub.f32 %v442, %v772
  %v811 = vsub.f32 %v445, %v772
  %v812 = vsub.f32 %v447, %v772
  %v813 = vsub.f32 %v450, %v772
  %v814 = vsub.f32 %v452, %v772
  %v815 = vsub.f32 %v455, %v772
  %v816 = vsub.f32 %v457, %v772
  %v817 = vsub.f32 %v460, %v772
  %v818 = vsub.f32 %v462, %v772
  %v819 = vsub.f32 %v465, %v772
  %v820 = vsub.f32 %v467, %v772
  %v821 = vsub.f32 %v470, %v772
  %v822 = vsub.f32 %v472, %v772
  %v823 = vsub.f32 %v475, %v772
  %v824 = vsub.f32 %v477, %v772
  %v825 = vsub.f32 %v480, %v772
  %v826 = vsub.f32 %v482, %v772
  %v827 = vsub.f32 %v485, %v772
  %v828 = vsub.f32 %v487, %v772
  %v829 = vsub.f32 %v490, %v772
  %v830 = vsub.f32 %v492, %v772
  %v831 = vsub.f32 %v495, %v772
  %v832 = vsub.f32 %v497, %v772
  %v833 = vsub.f32 %v500, %v772
  %v834 = vsub.f32 %v502, %v772
  %v835 = vsub.f32 %v505, %v772
  %v836 = vsub.f32 %v507, %v772
  %vm837 = vcmask 57344
  %838 = vst.msk [vmem:[%s3] sm:$0x1] %vm837, %v771
  %v839 = vmul.f32 %v773, %v773
  %v840 = vmul.f32 %v774, %v774
  %v841 = vmul.f32 %v775, %v775
  %v842 = vmul.f32 %v776, %v776
  %v843 = vmul.f32 %v777, %v777
  %v844 = vmul.f32 %v778, %v778
  %v845 = vmul.f32 %v779, %v779
  %v846 = vmul.f32 %v780, %v780
  %v847 = vmul.f32 %v781, %v781
  %v848 = vmul.f32 %v782, %v782
  %v849 = vmul.f32 %v783, %v783
  %v850 = vmul.f32 %v784, %v784
  %v851 = vmul.f32 %v785, %v785
  %v852 = vmul.f32 %v786, %v786
  %v853 = vmul.f32 %v787, %v787
  %v854 = vmul.f32 %v788, %v788
  %v855 = vmul.f32 %v789, %v789
  %v856 = vmul.f32 %v790, %v790
  %v857 = vmul.f32 %v791, %v791
  %v858 = vmul.f32 %v792, %v792
  %v859 = vmul.f32 %v793, %v793
  %v860 = vmul.f32 %v794, %v794
  %v861 = vmul.f32 %v795, %v795
  %v862 = vmul.f32 %v796, %v796
  %v863 = vmul.f32 %v797, %v797
  %v864 = vmul.f32 %v798, %v798
  %v865 = vmul.f32 %v799, %v799
  %v866 = vmul.f32 %v800, %v800
  %v867 = vmul.f32 %v801, %v801
  %v868 = vmul.f32 %v802, %v802
  %v869 = vmul.f32 %v803, %v803
  %v870 = vmul.f32 %v804, %v804
  %v871 = vmul.f32 %v805, %v805
  %v872 = vmul.f32 %v806, %v806
  %v873 = vmul.f32 %v807, %v807
  %v874 = vmul.f32 %v808, %v808
  %v875 = vmul.f32 %v809, %v809
  %v876 = vmul.f32 %v810, %v810
  %v877 = vmul.f32 %v811, %v811
  %v878 = vmul.f32 %v812, %v812
  %v879 = vmul.f32 %v813, %v813
  %v880 = vmul.f32 %v814, %v814
  %v881 = vmul.f32 %v815, %v815
  %v882 = vmul.f32 %v816, %v816
  %v883 = vmul.f32 %v817, %v817
  %v884 = vmul.f32 %v818, %v818
  %v885 = vmul.f32 %v819, %v819
  %v886 = vmul.f32 %v820, %v820
  %v887 = vmul.f32 %v821, %v821
  %v888 = vmul.f32 %v822, %v822
  %v889 = vmul.f32 %v823, %v823
  %v890 = vmul.f32 %v824, %v824
  %v891 = vmul.f32 %v825, %v825
  %v892 = vmul.f32 %v826, %v826
  %v893 = vmul.f32 %v827, %v827
  %v894 = vmul.f32 %v828, %v828
  %v895 = vmul.f32 %v829, %v829
  %v896 = vmul.f32 %v830, %v830
  %v897 = vmul.f32 %v831, %v831
  %v898 = vmul.f32 %v832, %v832
  %v899 = vmul.f32 %v833, %v833
  %v900 = vmul.f32 %v834, %v834
  %v901 = vmul.f32 %v835, %v835
  %v902 = vmul.f32 %v836, %v836
  %v903 = vsel %vm638, %v839, 0.0
  %v904 = vsel %vm638, %v840, 0.0
  %v905 = vadd.f32 %v903, %v904
  %v906 = vsel %vm638, %v841, 0.0
  %v907 = vadd.f32 %v905, %v906
  %v908 = vsel %vm638, %v842, 0.0
  %v909 = vadd.f32 %v907, %v908
  %v910 = vsel %vm638, %v843, 0.0
  %v911 = vadd.f32 %v909, %v910
  %v912 = vsel %vm638, %v844, 0.0
  %v913 = vadd.f32 %v911, %v912
  %v914 = vsel %vm638, %v845, 0.0
  %v915 = vadd.f32 %v913, %v914
  %v916 = vsel %vm638, %v846, 0.0
  %v917 = vadd.f32 %v915, %v916
  %v918 = vsel %vm638, %v847, 0.0
  %v919 = vadd.f32 %v917, %v918
  %v920 = vsel %vm638, %v848, 0.0
  %v921 = vadd.f32 %v919, %v920
  %v922 = vsel %vm638, %v849, 0.0
  %v923 = vadd.f32 %v921, %v922
  %v924 = vsel %vm638, %v850, 0.0
  %v925 = vadd.f32 %v923, %v924
  %v926 = vsel %vm638, %v851, 0.0
  %v927 = vadd.f32 %v925, %v926
  %v928 = vsel %vm638, %v852, 0.0
  %v929 = vadd.f32 %v927, %v928
  %v930 = vsel %vm638, %v853, 0.0
  %v931 = vadd.f32 %v929, %v930
  %v932 = vsel %vm638, %v854, 0.0
  %v933 = vadd.f32 %v931, %v932
  %v934 = vsel %vm638, %v855, 0.0
  %v935 = vadd.f32 %v933, %v934
  %v936 = vsel %vm638, %v856, 0.0
  %v937 = vadd.f32 %v935, %v936
  %v938 = vsel %vm638, %v857, 0.0
  %v939 = vadd.f32 %v937, %v938
  %v940 = vsel %vm638, %v858, 0.0
  %v941 = vadd.f32 %v939, %v940
  %v942 = vsel %vm638, %v859, 0.0
  %v943 = vadd.f32 %v941, %v942
  %v944 = vsel %vm638, %v860, 0.0
  %v945 = vadd.f32 %v943, %v944
  %v946 = vsel %vm638, %v861, 0.0
  %v947 = vadd.f32 %v945, %v946
  %v948 = vsel %vm638, %v862, 0.0
  %v949 = vadd.f32 %v947, %v948
  %v950 = vsel %vm638, %v863, 0.0
  %v951 = vadd.f32 %v949, %v950
  %v952 = vsel %vm638, %v864, 0.0
  %v953 = vadd.f32 %v951, %v952
  %v954 = vsel %vm638, %v865, 0.0
  %v955 = vadd.f32 %v953, %v954
  %v956 = vsel %vm638, %v866, 0.0
  %v957 = vadd.f32 %v955, %v956
  %v958 = vsel %vm638, %v867, 0.0
  %v959 = vadd.f32 %v957, %v958
  %v960 = vsel %vm638, %v868, 0.0
  %v961 = vadd.f32 %v959, %v960
  %v962 = vsel %vm638, %v869, 0.0
  %v963 = vadd.f32 %v961, %v962
  %v964 = vsel %vm638, %v870, 0.0
  %v965 = vadd.f32 %v963, %v964
  %v966 = vsel %vm638, %v871, 0.0
  %v967 = vadd.f32 %v965, %v966
  %v968 = vsel %vm638, %v872, 0.0
  %v969 = vadd.f32 %v967, %v968
  %v970 = vsel %vm638, %v873, 0.0
  %v971 = vadd.f32 %v969, %v970
  %v972 = vsel %vm638, %v874, 0.0
  %v973 = vadd.f32 %v971, %v972
  %v974 = vsel %vm638, %v875, 0.0
  %v975 = vadd.f32 %v973, %v974
  %v976 = vsel %vm638, %v876, 0.0
  %v977 = vadd.f32 %v975, %v976
  %v978 = vsel %vm638, %v877, 0.0
  %v979 = vadd.f32 %v977, %v978
  %v980 = vsel %vm638, %v878, 0.0
  %v981 = vadd.f32 %v979, %v980
  %v982 = vsel %vm638, %v879, 0.0
  %v983 = vadd.f32 %v981, %v982
  %v984 = vsel %vm638, %v880, 0.0
  %v985 = vadd.f32 %v983, %v984
  %v986 = vsel %vm638, %v881, 0.0
  %v987 = vadd.f32 %v985, %v986
  %v988 = vsel %vm638, %v882, 0.0
  %v989 = vadd.f32 %v987, %v988
  %v990 = vsel %vm638, %v883, 0.0
  %v991 = vadd.f32 %v989, %v990
  %v992 = vsel %vm638, %v884, 0.0
  %v993 = vadd.f32 %v991, %v992
  %v994 = vsel %vm638, %v885, 0.0
  %v995 = vadd.f32 %v993, %v994
  %v996 = vsel %vm638, %v886, 0.0
  %v997 = vadd.f32 %v995, %v996
  %v998 = vsel %vm638, %v887, 0.0
  %v999 = vadd.f32 %v997, %v998
  %v1000 = vsel %vm638, %v888, 0.0
  %v1001 = vadd.f32 %v999, %v1000
  %v1002 = vsel %vm638, %v889, 0.0
  %v1003 = vadd.f32 %v1001, %v1002
  %v1004 = vsel %vm638, %v890, 0.0
  %v1005 = vadd.f32 %v1003, %v1004
  %v1006 = vsel %vm638, %v891, 0.0
  %v1007 = vadd.f32 %v1005, %v1006
  %v1008 = vsel %vm638, %v892, 0.0
  %v1009 = vadd.f32 %v1007, %v1008
  %v1010 = vsel %vm638, %v893, 0.0
  %v1011 = vadd.f32 %v1009, %v1010
  %v1012 = vsel %vm638, %v894, 0.0
  %v1013 = vadd.f32 %v1011, %v1012
  %v1014 = vsel %vm638, %v895, 0.0
  %v1015 = vadd.f32 %v1013, %v1014
  %v1016 = vsel %vm638, %v896, 0.0
  %v1017 = vadd.f32 %v1015, %v1016
  %v1018 = vsel %vm638, %v897, 0.0
  %v1019 = vadd.f32 %v1017, %v1018
  %v1020 = vsel %vm638, %v898, 0.0
  %v1021 = vadd.f32 %v1019, %v1020
  %v1022 = vsel %vm638, %v899, 0.0
  %v1023 = vadd.f32 %v1021, %v1022
  %v1024 = vsel %vm638, %v900, 0.0
  %v1025 = vadd.f32 %v1023, %v1024
  %v1026 = vsel %vm638, %v901, 0.0
  %v1027 = vadd.f32 %v1025, %v1026
  %v1028 = vsel %vm638, %v902, 0.0
  %v1029 = vadd.f32 %v1027, %v1028
  %v1030 = vrot.slane %v1029, 4
  %v1031 = vadd.f32 %v1029, %v1030
  %v1032 = vrot.slane %v1031, 2
  %v1033 = vadd.f32 %v1031, %v1032
  %v1034 = vrot.slane %v1033, 1
  %v1035 = vadd.f32 %v1033, %v1034
  %1036 = vst.msk [vmem:[%s3 + $0x1] sm:$0x1] %vm837, %v1035
  // Predicated region
  $region10: #{upsampling_block.4} parent=0 // pred_check
    _
  $region11: #{upsampling_block.4} parent=0 // pred_check_branch
    %1038 = sbr.rel (0) target = $region13
  $region12: #{upsampling_block.4} parent=0 // pred_region
    _
  $region13: #{upsampling_block.4} parent=0 // pred_fallthru
    _
  // Predicated region
  $region14: #{upsampling_block.4} parent=0 // pred_check
    _
  $region15: #{upsampling_block.4} parent=0 // pred_check_branch
    %1040 = sbr.rel (0) target = $region17
  $region16: #{upsampling_block.4} parent=0 // pred_region
    _
  $region17: #{upsampling_block.4} parent=0 // pred_fallthru
    _
  // Predicated region
  $region18: #{upsampling_block.4} parent=0 // pred_check
    _
  $region19: #{upsampling_block.4} parent=0 // pred_check_branch
    %1042 = sbr.rel (0) target = $region21
  $region20: #{upsampling_block.4} parent=0 // pred_region
    _
  $region21: #{upsampling_block.4} parent=0 // pred_fallthru
    _
  // Predicated region
  $region22: #{upsampling_block.4} parent=0 // pred_check
    _
  $region23: #{upsampling_block.4} parent=0 // pred_check_branch
    %1044 = sbr.rel (0) target = $region25
  $region24: #{upsampling_block.4} parent=0 // pred_region
    _
  $region25: #{upsampling_block.4} parent=0 // pred_fallthru
    _

// kernel: upsampling_block.7
$region0: #{upsampling_block.7}
  #allocation0 [shape = 'u32[]', space=smem, size = 0x4, offset = 0x4, fixed_abs, tag = 'smem constant byte address 0x4 - core index']
  #allocation1 [shape = 'u32[72,128]{1,0:T(1,128)}', space=vmem, size = 0x9000, scoped, tag = 'internal scratch']
  #allocation2 [shape = 'bf16[18,18,8]{2,1,0:T(8,128)(2,1)}', space=vmem, size = 0x1b000, scoped, tag = 'scratch operand']
  %s0 = inlined_call_operand.vmem [shape: bf16[2,16,16,8], index: 0, kind: input, shape index: {}]
  %s1 = inlined_call_operand.vmem [shape: f32[1,8], index: 1, kind: input, shape index: {}]
  %s2 = inlined_call_operand.vmem [shape: f32[1,8], index: 2, kind: input, shape index: {}]
  %s3 = inlined_call_operand.vmem [shape: bf16[3,3,8,8], index: 3, kind: input, shape index: {}]
  %s4 = inlined_call_operand.vmem [shape: f32[2,16,16,8], index: 4, kind: output, shape index: {0}]
  %s5 = inlined_call_operand.vmem [shape: f32[2,2,8], index: 5, kind: output, shape index: {1}]
  %6 = xla_tuple %s4, %s5
  %s7 = sld [smem:[#allocation0]]
  $region57: #{upsampling_block.7} parent=0
    _
  %s9 = ssub.s32 1, %s7
  %s10 = scalar_select 0, %s9, %s7
  loop: start=0, step=1, limit=4
  $region2: #{upsampling_block.7} parent=0 // loop_pre_header
    _
  $region3: #{upsampling_block.7} parent=0 // loop_header
    %s12 = sphi 0, %s16
    %p13 = scmp.ge.s32.totalorder %s12, 4
    %s22 = sphi 0, %s24
    %s25 = sphi 0, %s22
    %s26 = sphi 0, %s25
    %s42 = sphi 0, %s26
    %s46 = sphi 0, %s46
    %s48 = sphi 0, %s46
    %s49 = sphi 0, %s48
    %s63 = sphi 0, %s49
    %s67 = sphi 0, %s67
    %s69 = sphi 0, %s67
    %s70 = sphi 0, %s69
    %s84 = sphi 0, %s70
    %s88 = sphi 0, %s88
    %s90 = sphi 0, %s88
    %s91 = sphi 0, %s90
    %s105 = sphi 0, %s91
    %s111 = sphi 0, %s113
    %s114 = sphi 0, %s111
    %s115 = sphi 0, %s114
    %s131 = sphi 0, %s115
    %s137 = sphi 0, %s139
    %s140 = sphi 0, %s137
    %s141 = sphi 0, %s140
    %s157 = sphi 0, %s141
  $region4: #{upsampling_block.7} parent=0 // loop_header_branch
    %15 = sbr.rel (%p13) target = $region8
  $region5: #{upsampling_block.7} parent=0 // loop_body
    %s17 = ssub.s32 %s12, 1
    %s18 = ssub.s32 %s12, 2
    %s19 = sadd.s32 %s12, 1
    %s20 = ssub.s32 %s12, %s19
    %p21 = scmp.eq.s32.totalorder %s20, 0
    %s23 = sadd.s32 %s22, 1
    %s24 = scalar_select %p21, %s22, %s23
    %p27 = pneg %p21
    %p28 = scmp.eq.s32.totalorder %s12, 1
    %p29 = por %p27, %p28
    %p30 = scmp.ne.s32.totalorder %s22, %s25
    %p31 = scmp.eq.s32.totalorder %s12, 0
    %p32 = por %p30, %p31
    %p33 = scmp.ne.s32.totalorder %s22, %s25
    %p34 = scmp.eq.s32.totalorder %s17, 1
    %p35 = por %p33, %p34
    %p36 = scmp.ne.s32.totalorder %s25, %s26
    %p37 = scmp.eq.s32.totalorder %s17, 0
    %p38 = por %p36, %p37
    %p39 = scmp.ne.s32.totalorder %s25, %s26
    %p40 = scmp.eq.s32.totalorder %s18, 1
    %p41 = por %p39, %p40
    %p43 = scmp.ne.s32.totalorder %s26, %s42
    %p44 = scmp.eq.s32.totalorder %s18, 0
    %p45 = por %p43, %p44
    %s47 = sadd.s32 %s46, 1
    %p50 = scmp.eq.s32.totalorder %s12, 1
    %p51 = scmp.ne.s32.totalorder %s46, %s48
    %p52 = scmp.eq.s32.totalorder %s12, 0
    %p53 = por %p51, %p52
    %p54 = scmp.ne.s32.totalorder %s46, %s48
    %p55 = scmp.eq.s32.totalorder %s17, 1
    %p56 = por %p54, %p55
    %p57 = scmp.ne.s32.totalorder %s48, %s49
    %p58 = scmp.eq.s32.totalorder %s17, 0
    %p59 = por %p57, %p58
    %p60 = scmp.ne.s32.totalorder %s48, %s49
    %p61 = scmp.eq.s32.totalorder %s18, 1
    %p62 = por %p60, %p61
    %p64 = scmp.ne.s32.totalorder %s49, %s63
    %p65 = scmp.eq.s32.totalorder %s18, 0
    %p66 = por %p64, %p65
    %s68 = sadd.s32 %s67, 1
    %p71 = scmp.eq.s32.totalorder %s12, 1
    %p72 = scmp.ne.s32.totalorder %s67, %s69
    %p73 = scmp.eq.s32.totalorder %s12, 0
    %p74 = por %p72, %p73
    %p75 = scmp.ne.s32.totalorder %s67, %s69
    %p76 = scmp.eq.s32.totalorder %s17, 1
    %p77 = por %p75, %p76
    %p78 = scmp.ne.s32.totalorder %s69, %s70
    %p79 = scmp.eq.s32.totalorder %s17, 0
    %p80 = por %p78, %p79
    %p81 = scmp.ne.s32.totalorder %s69, %s70
    %p82 = scmp.eq.s32.totalorder %s18, 1
    %p83 = por %p81, %p82
    %p85 = scmp.ne.s32.totalorder %s70, %s84
    %p86 = scmp.eq.s32.totalorder %s18, 0
    %p87 = por %p85, %p86
    %s89 = sadd.s32 %s88, 1
    %p92 = scmp.eq.s32.totalorder %s12, 1
    %p93 = scmp.ne.s32.totalorder %s88, %s90
    %p94 = scmp.eq.s32.totalorder %s12, 0
    %p95 = por %p93, %p94
    %p96 = scmp.ne.s32.totalorder %s88, %s90
    %p97 = scmp.eq.s32.totalorder %s17, 1
    %p98 = por %p96, %p97
    %p99 = scmp.ne.s32.totalorder %s90, %s91
    %p100 = scmp.eq.s32.totalorder %s17, 0
    %p101 = por %p99, %p100
    %p102 = scmp.ne.s32.totalorder %s90, %s91
    %p103 = scmp.eq.s32.totalorder %s18, 1
    %p104 = por %p102, %p103
    %p106 = scmp.ne.s32.totalorder %s91, %s105
    %p107 = scmp.eq.s32.totalorder %s18, 0
    %p108 = por %p106, %p107
    %s109 = ssub.s32 %s12, %s19
    %p110 = scmp.eq.s32.totalorder %s109, 0
    %s112 = sadd.s32 %s111, 1
    %s113 = scalar_select %p110, %s111, %s112
    %p116 = pneg %p110
    %p117 = scmp.eq.s32.totalorder %s12, 1
    %p118 = por %p116, %p117
    %p119 = scmp.ne.s32.totalorder %s111, %s114
    %p120 = scmp.eq.s32.totalorder %s12, 0
    %p121 = por %p119, %p120
    %p122 = scmp.ne.s32.totalorder %s111, %s114
    %p123 = scmp.eq.s32.totalorder %s17, 1
    %p124 = por %p122, %p123
    %p125 = scmp.ne.s32.totalorder %s114, %s115
    %p126 = scmp.eq.s32.totalorder %s17, 0
    %p127 = por %p125, %p126
    %p128 = scmp.ne.s32.totalorder %s114, %s115
    %p129 = scmp.eq.s32.totalorder %s18, 1
    %p130 = por %p128, %p129
    %p132 = scmp.ne.s32.totalorder %s115, %s131
    %p133 = scmp.eq.s32.totalorder %s18, 0
    %p134 = por %p132, %p133
    %s135 = ssub.s32 %s12, %s19
    %p136 = scmp.eq.s32.totalorder %s135, 0
    %s138 = sadd.s32 %s137, 1
    %s139 = scalar_select %p136, %s137, %s138
    %p142 = pneg %p136
    %p143 = scmp.eq.s32.totalorder %s12, 1
    %p144 = por %p142, %p143
    %p145 = scmp.ne.s32.totalorder %s137, %s140
    %p146 = scmp.eq.s32.totalorder %s12, 0
    %p147 = por %p145, %p146
    %p148 = scmp.ne.s32.totalorder %s137, %s140
    %p149 = scmp.eq.s32.totalorder %s17, 1
    %p150 = por %p148, %p149
    %p151 = scmp.ne.s32.totalorder %s140, %s141
    %p152 = scmp.eq.s32.totalorder %s17, 0
    %p153 = por %p151, %p152
    %p154 = scmp.ne.s32.totalorder %s140, %s141
    %p155 = scmp.eq.s32.totalorder %s18, 1
    %p156 = por %p154, %p155
    %p158 = scmp.ne.s32.totalorder %s141, %s157
    %p159 = scmp.eq.s32.totalorder %s18, 0
    %p160 = por %p158, %p159
    %p161 = scmp.le.s32.totalorder 1, %s12
    %p162 = scmp.lt.s32.totalorder %s12, 3
    %p163 = pnand %p161, %p162
    %p164 = pneg %p163
    // Predicated region
    $region9: #{upsampling_block.7} parent=5 // pred_check
      _
    $region10: #{upsampling_block.7} parent=5 // pred_check_branch
      %166 = sbr.rel (%p163) target = $region12
    $region11: #{upsampling_block.7} parent=5 // pred_region
      %s167 = ssub.s32 %s12, 1
      // Predicated region
      $region13: #{upsampling_block.7} parent=11 // pred_check
        %p168 = pneg %p59
      $region14: #{upsampling_block.7} parent=11 // pred_check_branch
        %170 = sbr.rel (%p168) target = $region16
      $region15: #{upsampling_block.7} parent=11 // pred_region
        _
      $region16: #{upsampling_block.7} parent=11 // pred_fallthru
        _
      // Predicated region
      $region17: #{upsampling_block.7} parent=11 // pred_check
        %p171 = pneg %p80
      $region18: #{upsampling_block.7} parent=11 // pred_check_branch
        %173 = sbr.rel (%p171) target = $region20
      $region19: #{upsampling_block.7} parent=11 // pred_region
        _
      $region20: #{upsampling_block.7} parent=11 // pred_fallthru
        _
      // Predicated region
      $region21: #{upsampling_block.7} parent=11 // pred_check
        %p174 = pneg %p101
      $region22: #{upsampling_block.7} parent=11 // pred_check_branch
        %176 = sbr.rel (%p174) target = $region24
      $region23: #{upsampling_block.7} parent=11 // pred_region
        _
      $region24: #{upsampling_block.7} parent=11 // pred_fallthru
        _
    $region12: #{upsampling_block.7} parent=5 // pred_fallthru
      _
    %p177 = scmp.lt.s32.totalorder %s12, 2
    // Predicated region
    $region25: #{upsampling_block.7} parent=5 // pred_check
      %p178 = pneg %p177
    $region26: #{upsampling_block.7} parent=5 // pred_check_branch
      %180 = sbr.rel (%p178) target = $region28
    $region27: #{upsampling_block.7} parent=5 // pred_region
      // Predicated region
      $region29: #{upsampling_block.7} parent=27 // pred_check
        %p181 = pneg %p32
      $region30: #{upsampling_block.7} parent=27 // pred_check_branch
        %183 = sbr.rel (%p181) target = $region32
      $region31: #{upsampling_block.7} parent=27 // pred_region
        %p184 = scmp.lt.s32.totalorder %s12, 1
        %s185 = scalar_select %p184, %s12, 1
        %s186 = smul.addr %s185, 32
        %s187 = smul.addr %s186, 4
        %s188 = scalar_lea.vmem %s0, %s187
      $region32: #{upsampling_block.7} parent=27 // pred_fallthru
        _
    $region28: #{upsampling_block.7} parent=5 // pred_fallthru
      _
    %p189 = scmp.le.s32.totalorder 1, %s12
    %p190 = scmp.lt.s32.totalorder %s12, 3
    %p191 = pnand %p189, %p190
    %p192 = pneg %p191
    // Predicated region
    $region33: #{upsampling_block.7} parent=5 // pred_check
      _
    $region34: #{upsampling_block.7} parent=5 // pred_check_branch
      %194 = sbr.rel (%p191) target = $region36
    $region35: #{upsampling_block.7} parent=5 // pred_region
      %s195 = ssub.s32 %s12, 1
      %p196 = scmp.lt.s32.totalorder %s17, 1
      %s197 = scalar_select %p196, %s17, 1
      %s198 = smul.addr %s197, 32
      %s199 = smul.addr %s198, 4
      %s200 = scalar_lea.vmem %s0, %s199
      %p201 = pneg %p38
      %p202 = pneg %p35
      %p203 = pneg %p59
      %p204 = pneg %p56
      %p205 = pneg %p80
      %p206 = pneg %p77
      %p207 = pneg %p101
      %p208 = pneg %p98
      %p209 = pneg %p127
      %p210 = pneg %p124
      %p211 = scmp.lt.s32.totalorder %s17, 1
      %s212 = scalar_select %p211, %s17, 1
      %s213 = smul.addr %s212, 32
      %s214 = smul.addr %s213, 8
      %s215 = scalar_lea.vmem %s4, %s214
      %p216 = pneg %p153
      %p217 = pneg %p150
      %p218 = scmp.lt.s32.totalorder %s17, 1
      %s219 = scalar_select %p218, %s17, 1
      %s220 = smul.addr %s219, 2
      %s221 = scalar_lea.vmem %s5, %s220
      %p222 = scmp.lt.s32.totalorder %s17, 1
      %s223 = scalar_select %p222, %s17, 1
      %s224 = smul.addr %s223, 32
      %s225 = smul.addr %s224, 4
      %s226 = scalar_lea.vmem %s0, %s225
      %p227 = scmp.lt.s32.totalorder %s17, 1
      %s228 = scalar_select %p227, %s17, 1
      %s229 = smul.addr %s228, 32
      %s230 = smul.addr %s229, 8
      %s231 = scalar_lea.vmem %s4, %s230
      %p232 = scmp.lt.s32.totalorder %s17, 1
      %s233 = scalar_select %p232, %s17, 1
      %s234 = smul.addr %s233, 2
      %s235 = scalar_lea.vmem %s5, %s234
      %vm237 = vcmask 60416
      %238 = vst.msk [vmem:[#allocation2] sm:$0xf] %vm237, 0
      %239 = vst.msk [vmem:[#allocation2 + $0x4] sm:$0xf] %vm237, 0
      %vm240 = vcmask 57344
      %241 = vst.msk [vmem:[#allocation2 + $0x8] sm:$0x1] %vm240, 0
      %242 = vst.msk [vmem:[#allocation2 + $0xc] sm:$0xf] %vm237, 0
      %243 = vst.msk [vmem:[#allocation2 + $0x10] sm:$0xf] %vm237, 0
      %244 = vst.msk [vmem:[#allocation2 + $0x14] sm:$0x1] %vm240, 0
      %245 = vst.msk [vmem:[#allocation2 + $0x18] sm:$0xf] %vm237, 0
      %246 = vst.msk [vmem:[#allocation2 + $0x1c] sm:$0xf] %vm237, 0
      %247 = vst.msk [vmem:[#allocation2 + $0x20] sm:$0x1] %vm240, 0
      %248 = vst.msk [vmem:[#allocation2 + $0x24] sm:$0xf] %vm237, 0
      %249 = vst.msk [vmem:[#allocation2 + $0x28] sm:$0xf] %vm237, 0
      %250 = vst.msk [vmem:[#allocation2 + $0x2c] sm:$0x1] %vm240, 0
      %251 = vst.msk [vmem:[#allocation2 + $0x30] sm:$0xf] %vm237, 0
      %252 = vst.msk [vmem:[#allocation2 + $0x34] sm:$0xf] %vm237, 0
      %253 = vst.msk [vmem:[#allocation2 + $0x38] sm:$0x1] %vm240, 0
      %254 = vst.msk [vmem:[#allocation2 + $0x3c] sm:$0xf] %vm237, 0
      %255 = vst.msk [vmem:[#allocation2 + $0x40] sm:$0xf] %vm237, 0
      %256 = vst.msk [vmem:[#allocation2 + $0x44] sm:$0x1] %vm240, 0
      %257 = vst.msk [vmem:[#allocation2 + $0x48] sm:$0xf] %vm237, 0
      %258 = vst.msk [vmem:[#allocation2 + $0x4c] sm:$0xf] %vm237, 0
      %259 = vst.msk [vmem:[#allocation2 + $0x50] sm:$0x1] %vm240, 0
      %260 = vst.msk [vmem:[#allocation2 + $0x54] sm:$0xf] %vm237, 0
      %261 = vst.msk [vmem:[#allocation2 + $0x58] sm:$0xf] %vm237, 0
      %262 = vst.msk [vmem:[#allocation2 + $0x5c] sm:$0x1] %vm240, 0
      %263 = vst.msk [vmem:[#allocation2 + $0x60] sm:$0xf] %vm237, 0
      %264 = vst.msk [vmem:[#allocation2 + $0x64] sm:$0xf] %vm237, 0
      %265 = vst.msk [vmem:[#allocation2 + $0x68] sm:$0x1] %vm240, 0
      %266 = vst.msk [vmem:[#allocation2 + $0x6c] sm:$0xf] %vm237, 0
      %267 = vst.msk [vmem:[#allocation2 + $0x70] sm:$0xf] %vm237, 0
      %268 = vst.msk [vmem:[#allocation2 + $0x74] sm:$0x1] %vm240, 0
      %269 = vst.msk [vmem:[#allocation2 + $0x78] sm:$0xf] %vm237, 0
      %270 = vst.msk [vmem:[#allocation2 + $0x7c] sm:$0xf] %vm237, 0
      %271 = vst.msk [vmem:[#allocation2 + $0x80] sm:$0x1] %vm240, 0
      %272 = vst.msk [vmem:[#allocation2 + $0x84] sm:$0xf] %vm237, 0
      %273 = vst.msk [vmem:[#allocation2 + $0x88] sm:$0xf] %vm237, 0
      %274 = vst.msk [vmem:[#allocation2 + $0x8c] sm:$0x1] %vm240, 0
      %275 = vst.msk [vmem:[#allocation2 + $0x90] sm:$0xf] %vm237, 0
      %276 = vst.msk [vmem:[#allocation2 + $0x94] sm:$0xf] %vm237, 0
      %277 = vst.msk [vmem:[#allocation2 + $0x98] sm:$0x1] %vm240, 0
      %278 = vst.msk [vmem:[#allocation2 + $0x9c] sm:$0xf] %vm237, 0
      %279 = vst.msk [vmem:[#allocation2 + $0xa0] sm:$0xf] %vm237, 0
      %280 = vst.msk [vmem:[#allocation2 + $0xa4] sm:$0x1] %vm240, 0
      %281 = vst.msk [vmem:[#allocation2 + $0xa8] sm:$0xf] %vm237, 0
      %282 = vst.msk [vmem:[#allocation2 + $0xac] sm:$0xf] %vm237, 0
      %283 = vst.msk [vmem:[#allocation2 + $0xb0] sm:$0x1] %vm240, 0
      %284 = vst.msk [vmem:[#allocation2 + $0xb4] sm:$0xf] %vm237, 0
      %285 = vst.msk [vmem:[#allocation2 + $0xb8] sm:$0xf] %vm237, 0
      %286 = vst.msk [vmem:[#allocation2 + $0xbc] sm:$0x1] %vm240, 0
      %287 = vst.msk [vmem:[#allocation2 + $0xc0] sm:$0xf] %vm237, 0
      %288 = vst.msk [vmem:[#allocation2 + $0xc4] sm:$0xf] %vm237, 0
      %289 = vst.msk [vmem:[#allocation2 + $0xc8] sm:$0x1] %vm240, 0
      %290 = vst.msk [vmem:[#allocation2 + $0xcc] sm:$0xf] %vm237, 0
      %291 = vst.msk [vmem:[#allocation2 + $0xd0] sm:$0xf] %vm237, 0
      %292 = vst.msk [vmem:[#allocation2 + $0xd4] sm:$0x1] %vm240, 0
      %v293 = vld [vmem:[%s226] sm:$0xf]
      %v294 = vld [vmem:[%s226 + $0x4] sm:$0xf]
      %v295 = vld [vmem:[%s226 + $0x8] sm:$0xf]
      %v296 = vld [vmem:[%s226 + $0xc] sm:$0xf]
      %v297 = vld [vmem:[%s226 + $0x10] sm:$0xf]
      %v298 = vld [vmem:[%s226 + $0x14] sm:$0xf]
      %v299 = vld [vmem:[%s226 + $0x18] sm:$0xf]
      %v300 = vld [vmem:[%s226 + $0x1c] sm:$0xf]
      %v301 = vld [vmem:[%s226 + $0x20] sm:$0xf]
      %v302 = vld [vmem:[%s226 + $0x24] sm:$0xf]
      %v303 = vld [vmem:[%s226 + $0x28] sm:$0xf]
      %v304 = vld [vmem:[%s226 + $0x2c] sm:$0xf]
      %v305 = vld [vmem:[%s226 + $0x30] sm:$0xf]
      %v306 = vld [vmem:[%s226 + $0x34] sm:$0xf]
      %v307 = vld [vmem:[%s226 + $0x38] sm:$0xf]
      %v308 = vld [vmem:[%s226 + $0x3c] sm:$0xf]
      %v309 = vld [vmem:[%s226 + $0x40] sm:$0xf]
      %v310 = vld [vmem:[%s226 + $0x44] sm:$0xf]
      %v311 = vld [vmem:[%s226 + $0x48] sm:$0xf]
      %v312 = vld [vmem:[%s226 + $0x4c] sm:$0xf]
      %v313 = vld [vmem:[%s226 + $0x50] sm:$0xf]
      %v314 = vld [vmem:[%s226 + $0x54] sm:$0xf]
      %v315 = vld [vmem:[%s226 + $0x58] sm:$0xf]
      %v316 = vld [vmem:[%s226 + $0x5c] sm:$0xf]
      %v317 = vld [vmem:[%s226 + $0x60] sm:$0xf]
      %v318 = vld [vmem:[%s226 + $0x64] sm:$0xf]
      %v319 = vld [vmem:[%s226 + $0x68] sm:$0xf]
      %v320 = vld [vmem:[%s226 + $0x6c] sm:$0xf]
      %v321 = vld [vmem:[%s226 + $0x70] sm:$0xf]
      %v322 = vld [vmem:[%s226 + $0x74] sm:$0xf]
      %v323 = vld [vmem:[%s226 + $0x78] sm:$0xf]
      %v324 = vld [vmem:[%s226 + $0x7c] sm:$0xf]
      %v325 = vunpack.c.l.bf16 %v293
      %v326 = vunpack.c.l.bf16 %v294
      %v327 = vunpack.c.l.bf16 %v295
      %v328 = vunpack.c.l.bf16 %v296
      %v329 = vunpack.c.l.bf16 %v297
      %v330 = vunpack.c.l.bf16 %v298
      %v331 = vunpack.c.l.bf16 %v299
      %v332 = vunpack.c.l.bf16 %v300
      %v333 = vunpack.c.l.bf16 %v301
      %v334 = vunpack.c.l.bf16 %v302
      %v335 = vunpack.c.l.bf16 %v303
      %v336 = vunpack.c.l.bf16 %v304
      %v337 = vunpack.c.l.bf16 %v305
      %v338 = vunpack.c.l.bf16 %v306
      %v339 = vunpack.c.l.bf16 %v307
      %v340 = vunpack.c.l.bf16 %v308
      %v341 = vunpack.c.l.bf16 %v309
      %v342 = vunpack.c.l.bf16 %v310
      %v343 = vunpack.c.l.bf16 %v311
      %v344 = vunpack.c.l.bf16 %v312
      %v345 = vunpack.c.l.bf16 %v313
      %v346 = vunpack.c.l.bf16 %v314
      %v347 = vunpack.c.l.bf16 %v315
      %v348 = vunpack.c.l.bf16 %v316
      %v349 = vunpack.c.l.bf16 %v317
      %v350 = vunpack.c.l.bf16 %v318
      %v351 = vunpack.c.l.bf16 %v319
      %v352 = vunpack.c.l.bf16 %v320
      %v353 = vunpack.c.l.bf16 %v321
      %v354 = vunpack.c.l.bf16 %v322
      %v355 = vunpack.c.l.bf16 %v323
      %v356 = vunpack.c.l.bf16 %v324
      %v357 = vld [vmem:[%s1] sm:$0x1]
      %v359 = vperm.slane %v357, 0
      %v361 = vmul.f32 %v325, %v359
      %v362 = vmul.f32 %v326, %v359
      %v363 = vmul.f32 %v327, %v359
      %v364 = vmul.f32 %v328, %v359
      %v365 = vmul.f32 %v329, %v359
      %v366 = vmul.f32 %v330, %v359
      %v367 = vmul.f32 %v331, %v359
      %v368 = vmul.f32 %v332, %v359
      %v369 = vmul.f32 %v333, %v359
      %v370 = vmul.f32 %v334, %v359
      %v371 = vmul.f32 %v335, %v359
      %v372 = vmul.f32 %v336, %v359
      %v373 = vmul.f32 %v337, %v359
      %v374 = vmul.f32 %v338, %v359
      %v375 = vmul.f32 %v339, %v359
      %v376 = vmul.f32 %v340, %v359
      %v377 = vmul.f32 %v341, %v359
      %v378 = vmul.f32 %v342, %v359
      %v379 = vmul.f32 %v343, %v359
      %v380 = vmul.f32 %v344, %v359
      %v381 = vmul.f32 %v345, %v359
      %v382 = vmul.f32 %v346, %v359
      %v383 = vmul.f32 %v347, %v359
      %v384 = vmul.f32 %v348, %v359
      %v385 = vmul.f32 %v349, %v359
      %v386 = vmul.f32 %v350, %v359
      %v387 = vmul.f32 %v351, %v359
      %v388 = vmul.f32 %v352, %v359
      %v389 = vmul.f32 %v353, %v359
      %v390 = vmul.f32 %v354, %v359
      %v391 = vmul.f32 %v355, %v359
      %v392 = vmul.f32 %v356, %v359
      %v393 = vld [vmem:[%s2] sm:$0x1]
      %v395 = vperm.slane %v393, 0
      %v397 = vadd.f32 %v361, %v395
      %v398 = vadd.f32 %v362, %v395
      %v399 = vadd.f32 %v363, %v395
      %v400 = vadd.f32 %v364, %v395
      %v401 = vadd.f32 %v365, %v395
      %v402 = vadd.f32 %v366, %v395
      %v403 = vadd.f32 %v367, %v395
      %v404 = vadd.f32 %v368, %v395
      %v405 = vadd.f32 %v369, %v395
      %v406 = vadd.f32 %v370, %v395
      %v407 = vadd.f32 %v371, %v395
      %v408 = vadd.f32 %v372, %v395
      %v409 = vadd.f32 %v373, %v395
      %v410 = vadd.f32 %v374, %v395
      %v411 = vadd.f32 %v375, %v395
      %v412 = vadd.f32 %v376, %v395
      %v413 = vadd.f32 %v377, %v395
      %v414 = vadd.f32 %v378, %v395
      %v415 = vadd.f32 %v379, %v395
      %v416 = vadd.f32 %v380, %v395
      %v417 = vadd.f32 %v381, %v395
      %v418 = vadd.f32 %v382, %v395
      %v419 = vadd.f32 %v383, %v395
      %v420 = vadd.f32 %v384, %v395
      %v421 = vadd.f32 %v385, %v395
      %v422 = vadd.f32 %v386, %v395
      %v423 = vadd.f32 %v387, %v395
      %v424 = vadd.f32 %v388, %v395
      %v425 = vadd.f32 %v389, %v395
      %v426 = vadd.f32 %v390, %v395
      %v427 = vadd.f32 %v391, %v395
      %v428 = vadd.f32 %v392, %v395
      %v429 = vmax.f32 %v397, 0.0
      %v430 = vmax.f32 %v398, 0.0
      %v431 = vmax.f32 %v399, 0.0
      %v432 = vmax.f32 %v400, 0.0
      %v433 = vmax.f32 %v401, 0.0
      %v434 = vmax.f32 %v402, 0.0
      %v435 = vmax.f32 %v403, 0.0
      %v436 = vmax.f32 %v404, 0.0
      %v437 = vmax.f32 %v405, 0.0
      %v438 = vmax.f32 %v406, 0.0
      %v439 = vmax.f32 %v407, 0.0
      %v440 = vmax.f32 %v408, 0.0
      %v441 = vmax.f32 %v409, 0.0
      %v442 = vmax.f32 %v410, 0.0
      %v443 = vmax.f32 %v411, 0.0
      %v444 = vmax.f32 %v412, 0.0
      %v445 = vmax.f32 %v413, 0.0
      %v446 = vmax.f32 %v414, 0.0
      %v447 = vmax.f32 %v415, 0.0
      %v448 = vmax.f32 %v416, 0.0
      %v449 = vmax.f32 %v417, 0.0
      %v450 = vmax.f32 %v418, 0.0
      %v451 = vmax.f32 %v419, 0.0
      %v452 = vmax.f32 %v420, 0.0
      %v453 = vmax.f32 %v421, 0.0
      %v454 = vmax.f32 %v422, 0.0
      %v455 = vmax.f32 %v423, 0.0
      %v456 = vmax.f32 %v424, 0.0
      %v457 = vmax.f32 %v425, 0.0
      %v458 = vmax.f32 %v426, 0.0
      %v459 = vmax.f32 %v427, 0.0
      %v460 = vmax.f32 %v428, 0.0
      %v461 = vpack.c.bf16 %v429, %v429
      %v462 = vpack.c.bf16 %v430, %v430
      %v463 = vpack.c.bf16 %v431, %v431
      %v464 = vpack.c.bf16 %v432, %v432
      %v465 = vpack.c.bf16 %v433, %v433
      %v466 = vpack.c.bf16 %v434, %v434
      %v467 = vpack.c.bf16 %v435, %v435
      %v468 = vpack.c.bf16 %v436, %v436
      %v469 = vpack.c.bf16 %v437, %v437
      %v470 = vpack.c.bf16 %v438, %v438
      %v471 = vpack.c.bf16 %v439, %v439
      %v472 = vpack.c.bf16 %v440, %v440
      %v473 = vpack.c.bf16 %v441, %v441
      %v474 = vpack.c.bf16 %v442, %v442
      %v475 = vpack.c.bf16 %v443, %v443
      %v476 = vpack.c.bf16 %v444, %v444
      %v477 = vpack.c.bf16 %v445, %v445
      %v478 = vpack.c.bf16 %v446, %v446
      %v479 = vpack.c.bf16 %v447, %v447
      %v480 = vpack.c.bf16 %v448, %v448
      %v481 = vpack.c.bf16 %v449, %v449
      %v482 = vpack.c.bf16 %v450, %v450
      %v483 = vpack.c.bf16 %v451, %v451
      %v484 = vpack.c.bf16 %v452, %v452
      %v485 = vpack.c.bf16 %v453, %v453
      %v486 = vpack.c.bf16 %v454, %v454
      %v487 = vpack.c.bf16 %v455, %v455
      %v488 = vpack.c.bf16 %v456, %v456
      %v489 = vpack.c.bf16 %v457, %v457
      %v490 = vpack.c.bf16 %v458, %v458
      %v491 = vpack.c.bf16 %v459, %v459
      %v492 = vpack.c.bf16 %v460, %v460
      %vm493 = vsmask.f32 256
      %vm494 = vsmask.f32 4368
      %vm495 = vmor %vm493, %vm494
      %v497 = vshrl.u32 %v461, 16
      %v499 = vrot.slane %v497, 7
      %v500 = vshll.u32 %v461, 16
      %v502 = vor.u32 %v499, %v500
      %v503 = vrot.slane %v499, 4
      %v505 = vshrl.u32 %v462, 16
      %v507 = vrot.slane %v505, 7
      %v508 = vshll.u32 %v462, 16
      %v510 = vor.u32 %v507, %v508
      %v511 = vsel %vm495, %v503, %v510
      %v512 = vrot.slane %v507, 4
      %v514 = vshrl.u32 %v463, 16
      %v516 = vrot.slane %v514, 7
      %v517 = vshll.u32 %v463, 16
      %v519 = vor.u32 %v516, %v517
      %v520 = vrot.slane %v516, 4
      %v522 = vshrl.u32 %v464, 16
      %v524 = vrot.slane %v522, 7
      %v525 = vshll.u32 %v464, 16
      %v527 = vor.u32 %v524, %v525
      %v528 = vsel %vm495, %v520, %v527
      %v529 = vrot.slane %v524, 4
      %v531 = vshrl.u32 %v465, 16
      %v533 = vrot.slane %v531, 7
      %v534 = vshll.u32 %v465, 16
      %v536 = vor.u32 %v533, %v534
      %v537 = vrot.slane %v533, 4
      %v539 = vshrl.u32 %v466, 16
      %v541 = vrot.slane %v539, 7
      %v542 = vshll.u32 %v466, 16
      %v544 = vor.u32 %v541, %v542
      %v545 = vsel %vm495, %v537, %v544
      %v546 = vrot.slane %v541, 4
      %v548 = vshrl.u32 %v467, 16
      %v550 = vrot.slane %v548, 7
      %v551 = vshll.u32 %v467, 16
      %v553 = vor.u32 %v550, %v551
      %v554 = vrot.slane %v550, 4
      %v556 = vshrl.u32 %v468, 16
      %v558 = vrot.slane %v556, 7
      %v559 = vshll.u32 %v468, 16
      %v561 = vor.u32 %v558, %v559
      %v562 = vsel %vm495, %v554, %v561
      %v563 = vrot.slane %v558, 4
      %v565 = vshrl.u32 %v469, 16
      %v567 = vrot.slane %v565, 7
      %v568 = vshll.u32 %v469, 16
      %v570 = vor.u32 %v567, %v568
      %v571 = vrot.slane %v567, 4
      %v573 = vshrl.u32 %v470, 16
      %v575 = vrot.slane %v573, 7
      %v576 = vshll.u32 %v470, 16
      %v578 = vor.u32 %v575, %v576
      %v579 = vsel %vm495, %v571, %v578
      %v580 = vrot.slane %v575, 4
      %v582 = vshrl.u32 %v471, 16
      %v584 = vrot.slane %v582, 7
      %v585 = vshll.u32 %v471, 16
      %v587 = vor.u32 %v584, %v585
      %v588 = vrot.slane %v584, 4
      %v590 = vshrl.u32 %v472, 16
      %v592 = vrot.slane %v590, 7
      %v593 = vshll.u32 %v472, 16
      %v595 = vor.u32 %v592, %v593
      %v596 = vsel %vm495, %v588, %v595
      %v597 = vrot.slane %v592, 4
      %v599 = vshrl.u32 %v473, 16
      %v601 = vrot.slane %v599, 7
      %v602 = vshll.u32 %v473, 16
      %v604 = vor.u32 %v601, %v602
      %v605 = vrot.slane %v601, 4
      %v607 = vshrl.u32 %v474, 16
      %v609 = vrot.slane %v607, 7
      %v610 = vshll.u32 %v474, 16
      %v612 = vor.u32 %v609, %v610
      %v613 = vsel %vm495, %v605, %v612
      %v614 = vrot.slane %v609, 4
      %v616 = vshrl.u32 %v475, 16
      %v618 = vrot.slane %v616, 7
      %v619 = vshll.u32 %v475, 16
      %v621 = vor.u32 %v618, %v619
      %v622 = vrot.slane %v618, 4
      %v624 = vshrl.u32 %v476, 16
      %v626 = vrot.slane %v624, 7
      %v627 = vshll.u32 %v476, 16
      %v629 = vor.u32 %v626, %v627
      %v630 = vsel %vm495, %v622, %v629
      %v631 = vrot.slane %v626, 4
      %v633 = vshrl.u32 %v477, 16
      %v635 = vrot.slane %v633, 7
      %v636 = vshll.u32 %v477, 16
      %v638 = vor.u32 %v635, %v636
      %v639 = vrot.slane %v635, 4
      %v641 = vshrl.u32 %v478, 16
      %v643 = vrot.slane %v641, 7
      %v644 = vshll.u32 %v478, 16
      %v646 = vor.u32 %v643, %v644
      %v647 = vsel %vm495, %v639, %v646
      %v648 = vrot.slane %v643, 4
      %v650 = vshrl.u32 %v479, 16
      %v652 = vrot.slane %v650, 7
      %v653 = vshll.u32 %v479, 16
      %v655 = vor.u32 %v652, %v653
      %v656 = vrot.slane %v652, 4
      %v658 = vshrl.u32 %v480, 16
      %v660 = vrot.slane %v658, 7
      %v661 = vshll.u32 %v480, 16
      %v663 = vor.u32 %v660, %v661
      %v664 = vsel %vm495, %v656, %v663
      %v665 = vrot.slane %v660, 4
      %v667 = vshrl.u32 %v481, 16
      %v669 = vrot.slane %v667, 7
      %v670 = vshll.u32 %v481, 16
      %v672 = vor.u32 %v669, %v670
      %v673 = vrot.slane %v669, 4
      %v675 = vshrl.u32 %v482, 16
      %v677 = vrot.slane %v675, 7
      %v678 = vshll.u32 %v482, 16
      %v680 = vor.u32 %v677, %v678
      %v681 = vsel %vm495, %v673, %v680
      %v682 = vrot.slane %v677, 4
      %v684 = vshrl.u32 %v483, 16
      %v686 = vrot.slane %v684, 7
      %v687 = vshll.u32 %v483, 16
      %v689 = vor.u32 %v686, %v687
      %v690 = vrot.slane %v686, 4
      %v692 = vshrl.u32 %v484, 16
      %v694 = vrot.slane %v692, 7
      %v695 = vshll.u32 %v484, 16
      %v697 = vor.u32 %v694, %v695
      %v698 = vsel %vm495, %v690, %v697
      %v699 = vrot.slane %v694, 4
      %v701 = vshrl.u32 %v485, 16
      %v703 = vrot.slane %v701, 7
      %v704 = vshll.u32 %v485, 16
      %v706 = vor.u32 %v703, %v704
      %v707 = vrot.slane %v703, 4
      %v709 = vshrl.u32 %v486, 16
      %v711 = vrot.slane %v709, 7
      %v712 = vshll.u32 %v486, 16
      %v714 = vor.u32 %v711, %v712
      %v715 = vsel %vm495, %v707, %v714
      %v716 = vrot.slane %v711, 4
      %v718 = vshrl.u32 %v487, 16
      %v720 = vrot.slane %v718, 7
      %v721 = vshll.u32 %v487, 16
      %v723 = vor.u32 %v720, %v721
      %v724 = vrot.slane %v720, 4
      %v726 = vshrl.u32 %v488, 16
      %v728 = vrot.slane %v726, 7
      %v729 = vshll.u32 %v488, 16
      %v731 = vor.u32 %v728, %v729
      %v732 = vsel %vm495, %v724, %v731
      %v733 = vrot.slane %v728, 4
      %v735 = vshrl.u32 %v489, 16
      %v737 = vrot.slane %v735, 7
      %v738 = vshll.u32 %v489, 16
      %v740 = vor.u32 %v737, %v738
      %v741 = vrot.slane %v737, 4
      %v743 = vshrl.u32 %v490, 16
      %v745 = vrot.slane %v743, 7
      %v746 = vshll.u32 %v490, 16
      %v748 = vor.u32 %v745, %v746
      %v749 = vsel %vm495, %v741, %v748
      %v750 = vrot.slane %v745, 4
      %v752 = vshrl.u32 %v491, 16
      %v754 = vrot.slane %v752, 7
      %v755 = vshll.u32 %v491, 16
      %v757 = vor.u32 %v754, %v755
      %v758 = vrot.slane %v754, 4
      %v760 = vshrl.u32 %v492, 16
      %v762 = vrot.slane %v760, 7
      %v763 = vshll.u32 %v492, 16
      %v765 = vor.u32 %v762, %v763
      %v766 = vsel %vm495, %v758, %v765
      %v767 = vrot.slane %v762, 4
      %s816 = scalar_lea.vmem [#allocation2], 12
      %vm817 = vcmask 60416
      %vm818 = vsmask.f32 7938
      %vm819 = vmand %vm817, %vm818
      %v820 = vld [vmem:[%s816] sm:$0xf]
      %v821 = vsel %vm819, %v502, %v820
      %822 = vst [vmem:[%s816] sm:$0xf] %v821
      %823 = vst.msk [vmem:[%s816 + $0x4] sm:$0xf] %vm237, %v511
      %vm824 = vcmask 57344
      %vm825 = vmand %vm824, %vm493
      %v826 = vld [vmem:[%s816 + $0x8] sm:$0x1]
      %v827 = vsel %vm825, %v512, %v826
      %828 = vst [vmem:[%s816 + $0x8] sm:$0x1] %v827
      %v829 = vld [vmem:[%s816 + $0xc] sm:$0xf]
      %v830 = vsel %vm819, %v519, %v829
      %831 = vst [vmem:[%s816 + $0xc] sm:$0xf] %v830
      %832 = vst.msk [vmem:[%s816 + $0x10] sm:$0xf] %vm237, %v528
      %v833 = vld [vmem:[%s816 + $0x14] sm:$0x1]
      %v834 = vsel %vm825, %v529, %v833
      %835 = vst [vmem:[%s816 + $0x14] sm:$0x1] %v834
      %v836 = vld [vmem:[%s816 + $0x18] sm:$0xf]
      %v837 = vsel %vm819, %v536, %v836
      %838 = vst [vmem:[%s816 + $0x18] sm:$0xf] %v837
      %839 = vst.msk [vmem:[%s816 + $0x1c] sm:$0xf] %vm237, %v545
      %v840 = vld [vmem:[%s816 + $0x20] sm:$0x1]
      %v841 = vsel %vm825, %v546, %v840
      %842 = vst [vmem:[%s816 + $0x20] sm:$0x1] %v841
      %v843 = vld [vmem:[%s816 + $0x24] sm:$0xf]
      %v844 = vsel %vm819, %v553, %v843
      %845 = vst [vmem:[%s816 + $0x24] sm:$0xf] %v844
      %846 = vst.msk [vmem:[%s816 + $0x28] sm:$0xf] %vm237, %v562
      %v847 = vld [vmem:[%s816 + $0x2c] sm:$0x1]
      %v848 = vsel %vm825, %v563, %v847
      %849 = vst [vmem:[%s816 + $0x2c] sm:$0x1] %v848
      %v850 = vld [vmem:[%s816 + $0x30] sm:$0xf]
      %v851 = vsel %vm819, %v570, %v850
      %852 = vst [vmem:[%s816 + $0x30] sm:$0xf] %v851
      %853 = vst.msk [vmem:[%s816 + $0x34] sm:$0xf] %vm237, %v579
      %v854 = vld [vmem:[%s816 + $0x38] sm:$0x1]
      %v855 = vsel %vm825, %v580, %v854
      %856 = vst [vmem:[%s816 + $0x38] sm:$0x1] %v855
      %v857 = vld [vmem:[%s816 + $0x3c] sm:$0xf]
      %v858 = vsel %vm819, %v587, %v857
      %859 = vst [vmem:[%s816 + $0x3c] sm:$0xf] %v858
      %860 = vst.msk [vmem:[%s816 + $0x40] sm:$0xf] %vm237, %v596
      %v861 = vld [vmem:[%s816 + $0x44] sm:$0x1]
      %v862 = vsel %vm825, %v597, %v861
      %863 = vst [vmem:[%s816 + $0x44] sm:$0x1] %v862
      %v864 = vld [vmem:[%s816 + $0x48] sm:$0xf]
      %v865 = vsel %vm819, %v604, %v864
      %866 = vst [vmem:[%s816 + $0x48] sm:$0xf] %v865
      %867 = vst.msk [vmem:[%s816 + $0x4c] sm:$0xf] %vm237, %v613
      %v868 = vld [vmem:[%s816 + $0x50] sm:$0x1]
      %v869 = vsel %vm825, %v614, %v868
      %870 = vst [vmem:[%s816 + $0x50] sm:$0x1] %v869
      %v871 = vld [vmem:[%s816 + $0x54] sm:$0xf]
      %v872 = vsel %vm819, %v621, %v871
      %873 = vst [vmem:[%s816 + $0x54] sm:$0xf] %v872
      %874 = vst.msk [vmem:[%s816 + $0x58] sm:$0xf] %vm237, %v630
      %v875 = vld [vmem:[%s816 + $0x5c] sm:$0x1]
      %v876 = vsel %vm825, %v631, %v875
      %877 = vst [vmem:[%s816 + $0x5c] sm:$0x1] %v876
      %v878 = vld [vmem:[%s816 + $0x60] sm:$0xf]
      %v879 = vsel %vm819, %v638, %v878
      %880 = vst [vmem:[%s816 + $0x60] sm:$0xf] %v879
      %881 = vst.msk [vmem:[%s816 + $0x64] sm:$0xf] %vm237, %v647
      %v882 = vld [vmem:[%s816 + $0x68] sm:$0x1]
      %v883 = vsel %vm825, %v648, %v882
      %884 = vst [vmem:[%s816 + $0x68] sm:$0x1] %v883
      %v885 = vld [vmem:[%s816 + $0x6c] sm:$0xf]
      %v886 = vsel %vm819, %v655, %v885
      %887 = vst [vmem:[%s816 + $0x6c] sm:$0xf] %v886
      %888 = vst.msk [vmem:[%s816 + $0x70] sm:$0xf] %vm237, %v664
      %v889 = vld [vmem:[%s816 + $0x74] sm:$0x1]
      %v890 = vsel %vm825, %v665, %v889
      %891 = vst [vmem:[%s816 + $0x74] sm:$0x1] %v890
      %v892 = vld [vmem:[%s816 + $0x78] sm:$0xf]
      %v893 = vsel %vm819, %v672, %v892
      %894 = vst [vmem:[%s816 + $0x78] sm:$0xf] %v893
      %895 = vst.msk [vmem:[%s816 + $0x7c] sm:$0xf] %vm237, %v681
      %v896 = vld [vmem:[%s816 + $0x80] sm:$0x1]
      %v897 = vsel %vm825, %v682, %v896
      %898 = vst [vmem:[%s816 + $0x80] sm:$0x1] %v897
      %v899 = vld [vmem:[%s816 + $0x84] sm:$0xf]
      %v900 = vsel %vm819, %v689, %v899
      %901 = vst [vmem:[%s816 + $0x84] sm:$0xf] %v900
      %902 = vst.msk [vmem:[%s816 + $0x88] sm:$0xf] %vm237, %v698
      %v903 = vld [vmem:[%s816 + $0x8c] sm:$0x1]
      %v904 = vsel %vm825, %v699, %v903
      %905 = vst [vmem:[%s816 + $0x8c] sm:$0x1] %v904
      %v906 = vld [vmem:[%s816 + $0x90] sm:$0xf]
      %v907 = vsel %vm819, %v706, %v906
      %908 = vst [vmem:[%s816 + $0x90] sm:$0xf] %v907
      %909 = vst.msk [vmem:[%s816 + $0x94] sm:$0xf] %vm237, %v715
      %v910 = vld [vmem:[%s816 + $0x98] sm:$0x1]
      %v911 = vsel %vm825, %v716, %v910
      %912 = vst [vmem:[%s816 + $0x98] sm:$0x1] %v911
      %v913 = vld [vmem:[%s816 + $0x9c] sm:$0xf]
      %v914 = vsel %vm819, %v723, %v913
      %915 = vst [vmem:[%s816 + $0x9c] sm:$0xf] %v914
      %916 = vst.msk [vmem:[%s816 + $0xa0] sm:$0xf] %vm237, %v732
      %v917 = vld [vmem:[%s816 + $0xa4] sm:$0x1]
      %v918 = vsel %vm825, %v733, %v917
      %919 = vst [vmem:[%s816 + $0xa4] sm:$0x1] %v918
      %v920 = vld [vmem:[%s816 + $0xa8] sm:$0xf]
      %v921 = vsel %vm819, %v740, %v920
      %922 = vst [vmem:[%s816 + $0xa8] sm:$0xf] %v921
      %923 = vst.msk [vmem:[%s816 + $0xac] sm:$0xf] %vm237, %v749
      %v924 = vld [vmem:[%s816 + $0xb0] sm:$0x1]
      %v925 = vsel %vm825, %v750, %v924
      %926 = vst [vmem:[%s816 + $0xb0] sm:$0x1] %v925
      %v927 = vld [vmem:[%s816 + $0xb4] sm:$0xf]
      %v928 = vsel %vm819, %v757, %v927
      %929 = vst [vmem:[%s816 + $0xb4] sm:$0xf] %v928
      %930 = vst.msk [vmem:[%s816 + $0xb8] sm:$0xf] %vm237, %v766
      %v931 = vld [vmem:[%s816 + $0xbc] sm:$0x1]
      %v932 = vsel %vm825, %v767, %v931
      %933 = vst [vmem:[%s816 + $0xbc] sm:$0x1] %v932
      %v934 = vld [vmem:[#allocation2] sm:$0xf]
      %v935 = vld [vmem:[#allocation2 + $0x4] sm:$0xf]
      %v936 = vld [vmem:[#allocation2 + $0x8] sm:$0x1]
      %v937 = vld [vmem:[#allocation2 + $0xc] sm:$0xf]
      %v938 = vld [vmem:[#allocation2 + $0x10] sm:$0xf]
      %v939 = vld [vmem:[#allocation2 + $0x14] sm:$0x1]
      %v940 = vld [vmem:[#allocation2 + $0x18] sm:$0xf]
      %v941 = vld [vmem:[#allocation2 + $0x1c] sm:$0xf]
      %v942 = vld [vmem:[#allocation2 + $0x20] sm:$0x1]
      %v943 = vld [vmem:[#allocation2 + $0x24] sm:$0xf]
      %v944 = vld [vmem:[#allocation2 + $0x28] sm:$0xf]
      %v945 = vld [vmem:[#allocation2 + $0x2c] sm:$0x1]
      %v946 = vld [vmem:[#allocation2 + $0x30] sm:$0xf]
      %v947 = vld [vmem:[#allocation2 + $0x34] sm:$0xf]
      %v948 = vld [vmem:[#allocation2 + $0x38] sm:$0x1]
      %v949 = vld [vmem:[#allocation2 + $0x3c] sm:$0xf]
      %v950 = vld [vmem:[#allocation2 + $0x40] sm:$0xf]
      %v951 = vld [vmem:[#allocation2 + $0x44] sm:$0x1]
      %v952 = vld [vmem:[#allocation2 + $0x48] sm:$0xf]
      %v953 = vld [vmem:[#allocation2 + $0x4c] sm:$0xf]
      %v954 = vld [vmem:[#allocation2 + $0x50] sm:$0x1]
      %v955 = vld [vmem:[#allocation2 + $0x54] sm:$0xf]
      %v956 = vld [vmem:[#allocation2 + $0x58] sm:$0xf]
      %v957 = vld [vmem:[#allocation2 + $0x5c] sm:$0x1]
      %v958 = vld [vmem:[#allocation2 + $0x60] sm:$0xf]
      %v959 = vld [vmem:[#allocation2 + $0x64] sm:$0xf]
      %v960 = vld [vmem:[#allocation2 + $0x68] sm:$0x1]
      %v961 = vld [vmem:[#allocation2 + $0x6c] sm:$0xf]
      %v962 = vld [vmem:[#allocation2 + $0x70] sm:$0xf]
      %v963 = vld [vmem:[#allocation2 + $0x74] sm:$0x1]
      %v964 = vld [vmem:[#allocation2 + $0x78] sm:$0xf]
      %v965 = vld [vmem:[#allocation2 + $0x7c] sm:$0xf]
      %v966 = vld [vmem:[#allocation2 + $0x80] sm:$0x1]
      %v967 = vld [vmem:[#allocation2 + $0x84] sm:$0xf]
      %v968 = vld [vmem:[#allocation2 + $0x88] sm:$0xf]
      %v969 = vld [vmem:[#allocation2 + $0x8c] sm:$0x1]
      %v970 = vld [vmem:[#allocation2 + $0x90] sm:$0xf]
      %v971 = vld [vmem:[#allocation2 + $0x94] sm:$0xf]
      %v972 = vld [vmem:[#allocation2 + $0x98] sm:$0x1]
      %v973 = vld [vmem:[#allocation2 + $0x9c] sm:$0xf]
      %v974 = vld [vmem:[#allocation2 + $0xa0] sm:$0xf]
      %v975 = vld [vmem:[#allocation2 + $0xa4] sm:$0x1]
      %v976 = vld [vmem:[#allocation2 + $0xa8] sm:$0xf]
      %v977 = vld [vmem:[#allocation2 + $0xac] sm:$0xf]
      %v978 = vld [vmem:[#allocation2 + $0xb0] sm:$0x1]
      %v979 = vld [vmem:[#allocation2 + $0xb4] sm:$0xf]
      %v980 = vld [vmem:[#allocation2 + $0xb8] sm:$0xf]
      %v981 = vld [vmem:[#allocation2 + $0xbc] sm:$0x1]
      %v982 = vld [vmem:[#allocation2 + $0xc0] sm:$0xf]
      %v983 = vld [vmem:[#allocation2 + $0xc4] sm:$0xf]
      %v984 = vld [vmem:[#allocation2 + $0xc8] sm:$0x1]
      %v985 = vld [vmem:[#allocation2 + $0xcc] sm:$0xf]
      %v986 = vld [vmem:[#allocation2 + $0xd0] sm:$0xf]
      %v987 = vld [vmem:[#allocation2 + $0xd4] sm:$0x1]
      %v988 = vld [vmem:[%s3] sm:$0xf]
      %vm989 = vsmask.f32 3328
      %vm990 = vsmask.f32 7440
      %vm991 = vmor %vm989, %vm990
      %v993 = vshrl.u32 %v934, 16
      %v995 = vrot.slane %v993, 4
      %v996 = vshll.u32 %v934, 16
      %v998 = vrot.slane %v996, 5
      %v999 = vor.u32 %v995, %v998
      %v1000 = vrot.slane %v999, 4
      %v1002 = vshll.u32 %v935, 16
      %v1004 = vrot.slane %v1002, 5
      %v1005 = vsel %vm991, %v1000, %v1004
      %v1006 = vshrl.u32 %v935, 16
      %v1008 = vrot.slane %v1006, 4
      %v1009 = vor.u32 %v1008, %v1004
      %v1010 = vrot.slane %v1009, 4
      %v1012 = vshll.u32 %v936, 16
      %v1014 = vrot.slane %v1012, 5
      %v1015 = vsel %vm991, %v1010, %v1014
      %v1017 = vshrl.u32 %v937, 16
      %v1019 = vrot.slane %v1017, 4
      %v1020 = vshll.u32 %v937, 16
      %v1022 = vrot.slane %v1020, 5
      %v1023 = vor.u32 %v1019, %v1022
      %v1024 = vrot.slane %v1023, 4
      %v1026 = vshll.u32 %v938, 16
      %v1028 = vrot.slane %v1026, 5
      %v1029 = vsel %vm991, %v1024, %v1028
      %v1030 = vshrl.u32 %v938, 16
      %v1032 = vrot.slane %v1030, 4
      %v1033 = vor.u32 %v1032, %v1028
      %v1034 = vrot.slane %v1033, 4
      %v1036 = vshll.u32 %v939, 16
      %v1038 = vrot.slane %v1036, 5
      %v1039 = vsel %vm991, %v1034, %v1038
      %v1041 = vshrl.u32 %v940, 16
      %v1043 = vrot.slane %v1041, 4
      %v1044 = vshll.u32 %v940, 16
      %v1046 = vrot.slane %v1044, 5
      %v1047 = vor.u32 %v1043, %v1046
      %v1048 = vrot.slane %v1047, 4
      %v1050 = vshll.u32 %v941, 16
      %v1052 = vrot.slane %v1050, 5
      %v1053 = vsel %vm991, %v1048, %v1052
      %v1054 = vshrl.u32 %v941, 16
      %v1056 = vrot.slane %v1054, 4
      %v1057 = vor.u32 %v1056, %v1052
      %v1058 = vrot.slane %v1057, 4
      %v1060 = vshll.u32 %v942, 16
      %v1062 = vrot.slane %v1060, 5
      %v1063 = vsel %vm991, %v1058, %v1062
      %v1065 = vshrl.u32 %v943, 16
      %v1067 = vrot.slane %v1065, 4
      %v1068 = vshll.u32 %v943, 16
      %v1070 = vrot.slane %v1068, 5
      %v1071 = vor.u32 %v1067, %v1070
      %v1072 = vrot.slane %v1071, 4
      %v1074 = vshll.u32 %v944, 16
      %v1076 = vrot.slane %v1074, 5
      %v1077 = vsel %vm991, %v1072, %v1076
      %v1078 = vshrl.u32 %v944, 16
      %v1080 = vrot.slane %v1078, 4
      %v1081 = vor.u32 %v1080, %v1076
      %v1082 = vrot.slane %v1081, 4
      %v1084 = vshll.u32 %v945, 16
      %v1086 = vrot.slane %v1084, 5
      %v1087 = vsel %vm991, %v1082, %v1086
      %v1089 = vshrl.u32 %v946, 16
      %v1091 = vrot.slane %v1089, 4
      %v1092 = vshll.u32 %v946, 16
      %v1094 = vrot.slane %v1092, 5
      %v1095 = vor.u32 %v1091, %v1094
      %v1096 = vrot.slane %v1095, 4
      %v1098 = vshll.u32 %v947, 16
      %v1100 = vrot.slane %v1098, 5
      %v1101 = vsel %vm991, %v1096, %v1100
      %v1102 = vshrl.u32 %v947, 16
      %v1104 = vrot.slane %v1102, 4
      %v1105 = vor.u32 %v1104, %v1100
      %v1106 = vrot.slane %v1105, 4
      %v1108 = vshll.u32 %v948, 16
      %v1110 = vrot.slane %v1108, 5
      %v1111 = vsel %vm991, %v1106, %v1110
      %v1113 = vshrl.u32 %v949, 16
      %v1115 = vrot.slane %v1113, 4
      %v1116 = vshll.u32 %v949, 16
      %v1118 = vrot.slane %v1116, 5
      %v1119 = vor.u32 %v1115, %v1118
      %v1120 = vrot.slane %v1119, 4
      %v1122 = vshll.u32 %v950, 16
      %v1124 = vrot.slane %v1122, 5
      %v1125 = vsel %vm991, %v1120, %v1124
      %v1126 = vshrl.u32 %v950, 16
      %v1128 = vrot.slane %v1126, 4
      %v1129 = vor.u32 %v1128, %v1124
      %v1130 = vrot.slane %v1129, 4
      %v1132 = vshll.u32 %v951, 16
      %v1134 = vrot.slane %v1132, 5
      %v1135 = vsel %vm991, %v1130, %v1134
      %v1137 = vshrl.u32 %v952, 16
      %v1139 = vrot.slane %v1137, 4
      %v1140 = vshll.u32 %v952, 16
      %v1142 = vrot.slane %v1140, 5
      %v1143 = vor.u32 %v1139, %v1142
      %v1144 = vrot.slane %v1143, 4
      %v1146 = vshll.u32 %v953, 16
      %v1148 = vrot.slane %v1146, 5
      %v1149 = vsel %vm991, %v1144, %v1148
      %v1150 = vshrl.u32 %v953, 16
      %v1152 = vrot.slane %v1150, 4
      %v1153 = vor.u32 %v1152, %v1148
      %v1154 = vrot.slane %v1153, 4
      %v1156 = vshll.u32 %v954, 16
      %v1158 = vrot.slane %v1156, 5
      %v1159 = vsel %vm991, %v1154, %v1158
      %v1161 = vshrl.u32 %v955, 16
      %v1163 = vrot.slane %v1161, 4
      %v1164 = vshll.u32 %v955, 16
      %v1166 = vrot.slane %v1164, 5
      %v1167 = vor.u32 %v1163, %v1166
      %v1168 = vrot.slane %v1167, 4
      %v1170 = vshll.u32 %v956, 16
      %v1172 = vrot.slane %v1170, 5
      %v1173 = vsel %vm991, %v1168, %v1172
      %v1174 = vshrl.u32 %v956, 16
      %v1176 = vrot.slane %v1174, 4
      %v1177 = vor.u32 %v1176, %v1172
      %v1178 = vrot.slane %v1177, 4
      %v1180 = vshll.u32 %v957, 16
      %v1182 = vrot.slane %v1180, 5
      %v1183 = vsel %vm991, %v1178, %v1182
      %v1185 = vshrl.u32 %v958, 16
      %v1187 = vrot.slane %v1185, 4
      %v1188 = vshll.u32 %v958, 16
      %v1190 = vrot.slane %v1188, 5
      %v1191 = vor.u32 %v1187, %v1190
      %v1192 = vrot.slane %v1191, 4
      %v1194 = vshll.u32 %v959, 16
      %v1196 = vrot.slane %v1194, 5
      %v1197 = vsel %vm991, %v1192, %v1196
      %v1198 = vshrl.u32 %v959, 16
      %v1200 = vrot.slane %v1198, 4
      %v1201 = vor.u32 %v1200, %v1196
      %v1202 = vrot.slane %v1201, 4
      %v1204 = vshll.u32 %v960, 16
      %v1206 = vrot.slane %v1204, 5
      %v1207 = vsel %vm991, %v1202, %v1206
      %v1209 = vshrl.u32 %v961, 16
      %v1211 = vrot.slane %v1209, 4
      %v1212 = vshll.u32 %v961, 16
      %v1214 = vrot.slane %v1212, 5
      %v1215 = vor.u32 %v1211, %v1214
      %v1216 = vrot.slane %v1215, 4
      %v1218 = vshll.u32 %v962, 16
      %v1220 = vrot.slane %v1218, 5
      %v1221 = vsel %vm991, %v1216, %v1220
      %v1222 = vshrl.u32 %v962, 16
      %v1224 = vrot.slane %v1222, 4
      %v1225 = vor.u32 %v1224, %v1220
      %v1226 = vrot.slane %v1225, 4
      %v1228 = vshll.u32 %v963, 16
      %v1230 = vrot.slane %v1228, 5
      %v1231 = vsel %vm991, %v1226, %v1230
      %v1233 = vshrl.u32 %v964, 16
      %v1235 = vrot.slane %v1233, 4
      %v1236 = vshll.u32 %v964, 16
      %v1238 = vrot.slane %v1236, 5
      %v1239 = vor.u32 %v1235, %v1238
      %v1240 = vrot.slane %v1239, 4
      %v1242 = vshll.u32 %v965, 16
      %v1244 = vrot.slane %v1242, 5
      %v1245 = vsel %vm991, %v1240, %v1244
      %v1246 = vshrl.u32 %v965, 16
      %v1248 = vrot.slane %v1246, 4
      %v1249 = vor.u32 %v1248, %v1244
      %v1250 = vrot.slane %v1249, 4
      %v1252 = vshll.u32 %v966, 16
      %v1254 = vrot.slane %v1252, 5
      %v1255 = vsel %vm991, %v1250, %v1254
      %v1257 = vshrl.u32 %v967, 16
      %v1259 = vrot.slane %v1257, 4
      %v1260 = vshll.u32 %v967, 16
      %v1262 = vrot.slane %v1260, 5
      %v1263 = vor.u32 %v1259, %v1262
      %v1264 = vrot.slane %v1263, 4
      %v1266 = vshll.u32 %v968, 16
      %v1268 = vrot.slane %v1266, 5
      %v1269 = vsel %vm991, %v1264, %v1268
      %v1270 = vshrl.u32 %v968, 16
      %v1272 = vrot.slane %v1270, 4
      %v1273 = vor.u32 %v1272, %v1268
      %v1274 = vrot.slane %v1273, 4
      %v1276 = vshll.u32 %v969, 16
      %v1278 = vrot.slane %v1276, 5
      %v1279 = vsel %vm991, %v1274, %v1278
      %v1281 = vshrl.u32 %v970, 16
      %v1283 = vrot.slane %v1281, 4
      %v1284 = vshll.u32 %v970, 16
      %v1286 = vrot.slane %v1284, 5
      %v1287 = vor.u32 %v1283, %v1286
      %v1288 = vrot.slane %v1287, 4
      %v1290 = vshll.u32 %v971, 16
      %v1292 = vrot.slane %v1290, 5
      %v1293 = vsel %vm991, %v1288, %v1292
      %v1294 = vshrl.u32 %v971, 16
      %v1296 = vrot.slane %v1294, 4
      %v1297 = vor.u32 %v1296, %v1292
      %v1298 = vrot.slane %v1297, 4
      %v1300 = vshll.u32 %v972, 16
      %v1302 = vrot.slane %v1300, 5
      %v1303 = vsel %vm991, %v1298, %v1302
      %v1305 = vshrl.u32 %v973, 16
      %v1307 = vrot.slane %v1305, 4
      %v1308 = vshll.u32 %v973, 16
      %v1310 = vrot.slane %v1308, 5
      %v1311 = vor.u32 %v1307, %v1310
      %v1312 = vrot.slane %v1311, 4
      %v1314 = vshll.u32 %v974, 16
      %v1316 = vrot.slane %v1314, 5
      %v1317 = vsel %vm991, %v1312, %v1316
      %v1318 = vshrl.u32 %v974, 16
      %v1320 = vrot.slane %v1318, 4
      %v1321 = vor.u32 %v1320, %v1316
      %v1322 = vrot.slane %v1321, 4
      %v1324 = vshll.u32 %v975, 16
      %v1326 = vrot.slane %v1324, 5
      %v1327 = vsel %vm991, %v1322, %v1326
      %v1329 = vshrl.u32 %v976, 16
      %v1331 = vrot.slane %v1329, 4
      %v1332 = vshll.u32 %v976, 16
      %v1334 = vrot.slane %v1332, 5
      %v1335 = vor.u32 %v1331, %v1334
      %v1336 = vrot.slane %v1335, 4
      %v1338 = vshll.u32 %v977, 16
      %v1340 = vrot.slane %v1338, 5
      %v1341 = vsel %vm991, %v1336, %v1340
      %v1342 = vshrl.u32 %v977, 16
      %v1344 = vrot.slane %v1342, 4
      %v1345 = vor.u32 %v1344, %v1340
      %v1346 = vrot.slane %v1345, 4
      %v1348 = vshll.u32 %v978, 16
      %v1350 = vrot.slane %v1348, 5
      %v1351 = vsel %vm991, %v1346, %v1350
      %v1353 = vshrl.u32 %v979, 16
      %v1355 = vrot.slane %v1353, 4
      %v1356 = vshll.u32 %v979, 16
      %v1358 = vrot.slane %v1356, 5
      %v1359 = vor.u32 %v1355, %v1358
      %v1360 = vrot.slane %v1359, 4
      %v1362 = vshll.u32 %v980, 16
      %v1364 = vrot.slane %v1362, 5
      %v1365 = vsel %vm991, %v1360, %v1364
      %v1366 = vshrl.u32 %v980, 16
      %v1368 = vrot.slane %v1366, 4
      %v1369 = vor.u32 %v1368, %v1364
      %v1370 = vrot.slane %v1369, 4
      %v1372 = vshll.u32 %v981, 16
      %v1374 = vrot.slane %v1372, 5
      %v1375 = vsel %vm991, %v1370, %v1374
      %s1376 = scalar_lea.vmem %s3, 4
      %v1377 = vld [vmem:[%s1376] sm:$0xf]
      %v1378 = vunpack.c.l.b16 %v1005
      %v1379 = vunpack.c.l.b16 %v1015
      %v1380 = vunpack.c.l.b16 %v1029
      %v1381 = vunpack.c.l.b16 %v1039
      %v1382 = vunpack.c.l.b16 %v1053
      %v1383 = vunpack.c.l.b16 %v1063
      %v1384 = vunpack.c.l.b16 %v1077
      %v1385 = vunpack.c.l.b16 %v1087
      %v1386 = vunpack.c.l.b16 %v1101
      %v1387 = vunpack.c.l.b16 %v1111
      %v1388 = vunpack.c.l.b16 %v1125
      %v1389 = vunpack.c.l.b16 %v1135
      %v1390 = vunpack.c.l.b16 %v1149
      %v1391 = vunpack.c.l.b16 %v1159
      %v1392 = vunpack.c.l.b16 %v1173
      %v1393 = vunpack.c.l.b16 %v1183
      %v1394 = vunpack.c.l.b16 %v1197
      %v1395 = vunpack.c.l.b16 %v1207
      %v1396 = vunpack.c.l.b16 %v1221
      %v1397 = vunpack.c.l.b16 %v1231
      %v1398 = vunpack.c.l.b16 %v1245
      %v1399 = vunpack.c.l.b16 %v1255
      %v1400 = vunpack.c.l.b16 %v1269
      %v1401 = vunpack.c.l.b16 %v1279
      %v1402 = vunpack.c.l.b16 %v1293
      %v1403 = vunpack.c.l.b16 %v1303
      %v1404 = vunpack.c.l.b16 %v1317
      %v1405 = vunpack.c.l.b16 %v1327
      %v1406 = vunpack.c.l.b16 %v1341
      %v1407 = vunpack.c.l.b16 %v1351
      %v1408 = vunpack.c.l.b16 %v1365
      %v1409 = vunpack.c.l.b16 %v1375
      %v1410 = vpack.c.b16 %v1379, %v1378
      %v1411 = vpack.c.b16 %v1381, %v1380
      %v1412 = vpack.c.b16 %v1383, %v1382
      %v1413 = vpack.c.b16 %v1385, %v1384
      %v1414 = vpack.c.b16 %v1387, %v1386
      %v1415 = vpack.c.b16 %v1389, %v1388
      %v1416 = vpack.c.b16 %v1391, %v1390
      %v1417 = vpack.c.b16 %v1393, %v1392
      %v1418 = vpack.c.b16 %v1395, %v1394
      %v1419 = vpack.c.b16 %v1397, %v1396
      %v1420 = vpack.c.b16 %v1399, %v1398
      %v1421 = vpack.c.b16 %v1401, %v1400
      %v1422 = vpack.c.b16 %v1403, %v1402
      %v1423 = vpack.c.b16 %v1405, %v1404
      %v1424 = vpack.c.b16 %v1407, %v1406
      %v1425 = vpack.c.b16 %v1409, %v1408
      %vm1426 = vcmask 64512
      %v1428 = vsel %vm1426, %v1410, 0
      %v1431 = vsel %vm1426, %v1411, 0
      %v1434 = vsel %vm1426, %v1412, 0
      %v1437 = vsel %vm1426, %v1413, 0
      %v1440 = vsel %vm1426, %v1414, 0
      %v1443 = vsel %vm1426, %v1415, 0
      %v1446 = vsel %vm1426, %v1416, 0
      %v1449 = vsel %vm1426, %v1417, 0
      %v1452 = vsel %vm1426, %v1418, 0
      %v1455 = vsel %vm1426, %v1419, 0
      %v1458 = vsel %vm1426, %v1420, 0
      %v1461 = vsel %vm1426, %v1421, 0
      %v1464 = vsel %vm1426, %v1422, 0
      %v1467 = vsel %vm1426, %v1423, 0
      %v1470 = vsel %vm1426, %v1424, 0
      %v1473 = vsel %vm1426, %v1425, 0
      %vm1475 = vcmask 1043456
      %v1477 = vsel %vm1475, %v1377, 0
      %1479 = vmatpush.bf16.msra.mxu0 0
      %1480 = vmatpush.bf16.msra.mxu0 0
      %1481 = vmatpush.bf16.msra.mxu0 0
      %1482 = vmatpush.bf16.msra.mxu0 0
      %1483 = vmatpush.bf16.msra.mxu0 0
      %1484 = vmatpush.bf16.msra.mxu0 0
      %1485 = vmatpush.bf16.msra.mxu0 0
      %1486 = vmatpush.bf16.msra.mxu0 %v1477
      %1487 = vmatmul.bf16.gmra.mxu0 %v1428
      %v1488 = vpop.f32.mrf.mxu0
      %v1489 = vadd.f32 0.0, %v1488
      %v1490 = vpop.f32.mrf.mxu0
      %v1491 = vadd.f32 0.0, %v1490
      %1492 = vmatmul.bf16.gmra.mxu0 %v1431
      %v1493 = vpop.f32.mrf.mxu0
      %v1494 = vadd.f32 0.0, %v1493
      %v1495 = vpop.f32.mrf.mxu0
      %v1496 = vadd.f32 0.0, %v1495
      %1497 = vmatmul.bf16.gmra.mxu0 %v1434
      %v1498 = vpop.f32.mrf.mxu0
      %v1499 = vadd.f32 0.0, %v1498
      %v1500 = vpop.f32.mrf.mxu0
      %v1501 = vadd.f32 0.0, %v1500
      %1502 = vmatmul.bf16.gmra.mxu0 %v1437
      %v1503 = vpop.f32.mrf.mxu0
      %v1504 = vadd.f32 0.0, %v1503
      %v1505 = vpop.f32.mrf.mxu0
      %v1506 = vadd.f32 0.0, %v1505
      %1507 = vmatmul.bf16.gmra.mxu0 %v1440
      %v1508 = vpop.f32.mrf.mxu0
      %v1509 = vadd.f32 0.0, %v1508
      %v1510 = vpop.f32.mrf.mxu0
      %v1511 = vadd.f32 0.0, %v1510
      %1512 = vmatmul.bf16.gmra.mxu0 %v1443
      %v1513 = vpop.f32.mrf.mxu0
      %v1514 = vadd.f32 0.0, %v1513
      %v1515 = vpop.f32.mrf.mxu0
      %v1516 = vadd.f32 0.0, %v1515
      %1517 = vmatmul.bf16.gmra.mxu0 %v1446
      %v1518 = vpop.f32.mrf.mxu0
      %v1519 = vadd.f32 0.0, %v1518
      %v1520 = vpop.f32.mrf.mxu0
      %v1521 = vadd.f32 0.0, %v1520
      %1522 = vmatmul.bf16.gmra.mxu0 %v1449
      %v1523 = vpop.f32.mrf.mxu0
      %v1524 = vadd.f32 0.0, %v1523
      %v1525 = vpop.f32.mrf.mxu0
      %v1526 = vadd.f32 0.0, %v1525
      %1527 = vmatmul.bf16.gmra.mxu0 %v1452
      %v1528 = vpop.f32.mrf.mxu0
      %v1529 = vadd.f32 0.0, %v1528
      %v1530 = vpop.f32.mrf.mxu0
      %v1531 = vadd.f32 0.0, %v1530
      %1532 = vmatmul.bf16.gmra.mxu0 %v1455
      %v1533 = vpop.f32.mrf.mxu0
      %v1534 = vadd.f32 0.0, %v1533
      %v1535 = vpop.f32.mrf.mxu0
      %v1536 = vadd.f32 0.0, %v1535
      %1537 = vmatmul.bf16.gmra.mxu0 %v1458
      %v1538 = vpop.f32.mrf.mxu0
      %v1539 = vadd.f32 0.0, %v1538
      %v1540 = vpop.f32.mrf.mxu0
      %v1541 = vadd.f32 0.0, %v1540
      %1542 = vmatmul.bf16.gmra.mxu0 %v1461
      %v1543 = vpop.f32.mrf.mxu0
      %v1544 = vadd.f32 0.0, %v1543
      %v1545 = vpop.f32.mrf.mxu0
      %v1546 = vadd.f32 0.0, %v1545
      %1547 = vmatmul.bf16.gmra.mxu0 %v1464
      %v1548 = vpop.f32.mrf.mxu0
      %v1549 = vadd.f32 0.0, %v1548
      %v1550 = vpop.f32.mrf.mxu0
      %v1551 = vadd.f32 0.0, %v1550
      %1552 = vmatmul.bf16.gmra.mxu0 %v1467
      %v1553 = vpop.f32.mrf.mxu0
      %v1554 = vadd.f32 0.0, %v1553
      %v1555 = vpop.f32.mrf.mxu0
      %v1556 = vadd.f32 0.0, %v1555
      %1557 = vmatmul.bf16.gmra.mxu0 %v1470
      %v1558 = vpop.f32.mrf.mxu0
      %v1559 = vadd.f32 0.0, %v1558
      %v1560 = vpop.f32.mrf.mxu0
      %v1561 = vadd.f32 0.0, %v1560
      %1562 = vmatmul.bf16.gmra.mxu0 %v1473
      %v1563 = vpop.f32.mrf.mxu0
      %v1564 = vadd.f32 0.0, %v1563
      %v1565 = vpop.f32.mrf.mxu0
      %v1566 = vadd.f32 0.0, %v1565
      %1567 = vdwg.mxu0
      %v1600 = vunpack.c.l.b16 %v934
      %v1601 = vunpack.c.l.b16 %v935
      %v1602 = vunpack.c.l.b16 %v937
      %v1603 = vunpack.c.l.b16 %v938
      %v1604 = vunpack.c.l.b16 %v940
      %v1605 = vunpack.c.l.b16 %v941
      %v1606 = vunpack.c.l.b16 %v943
      %v1607 = vunpack.c.l.b16 %v944
      %v1608 = vunpack.c.l.b16 %v946
      %v1609 = vunpack.c.l.b16 %v947
      %v1610 = vunpack.c.l.b16 %v949
      %v1611 = vunpack.c.l.b16 %v950
      %v1612 = vunpack.c.l.b16 %v952
      %v1613 = vunpack.c.l.b16 %v953
      %v1614 = vunpack.c.l.b16 %v955
      %v1615 = vunpack.c.l.b16 %v956
      %v1616 = vunpack.c.l.b16 %v958
      %v1617 = vunpack.c.l.b16 %v959
      %v1618 = vunpack.c.l.b16 %v961
      %v1619 = vunpack.c.l.b16 %v962
      %v1620 = vunpack.c.l.b16 %v964
      %v1621 = vunpack.c.l.b16 %v965
      %v1622 = vunpack.c.l.b16 %v967
      %v1623 = vunpack.c.l.b16 %v968
      %v1624 = vunpack.c.l.b16 %v970
      %v1625 = vunpack.c.l.b16 %v971
      %v1626 = vunpack.c.l.b16 %v973
      %v1627 = vunpack.c.l.b16 %v974
      %v1628 = vunpack.c.l.b16 %v976
      %v1629 = vunpack.c.l.b16 %v977
      %v1630 = vunpack.c.l.b16 %v979
      %v1631 = vunpack.c.l.b16 %v980
      %v1632 = vpack.c.b16 %v1601, %v1600
      %v1633 = vpack.c.b16 %v1603, %v1602
      %v1634 = vpack.c.b16 %v1605, %v1604
      %v1635 = vpack.c.b16 %v1607, %v1606
      %v1636 = vpack.c.b16 %v1609, %v1608
      %v1637 = vpack.c.b16 %v1611, %v1610
      %v1638 = vpack.c.b16 %v1613, %v1612
      %v1639 = vpack.c.b16 %v1615, %v1614
      %v1640 = vpack.c.b16 %v1617, %v1616
      %v1641 = vpack.c.b16 %v1619, %v1618
      %v1642 = vpack.c.b16 %v1621, %v1620
      %v1643 = vpack.c.b16 %v1623, %v1622
      %v1644 = vpack.c.b16 %v1625, %v1624
      %v1645 = vpack.c.b16 %v1627, %v1626
      %v1646 = vpack.c.b16 %v1629, %v1628
      %v1647 = vpack.c.b16 %v1631, %v1630
      %v1649 = vsel %vm1426, %v1632, 0
      %v1652 = vsel %vm1426, %v1633, 0
      %v1655 = vsel %vm1426, %v1634, 0
      %v1658 = vsel %vm1426, %v1635, 0
      %v1661 = vsel %vm1426, %v1636, 0
      %v1664 = vsel %vm1426, %v1637, 0
      %v1667 = vsel %vm1426, %v1638, 0
      %v1670 = vsel %vm1426, %v1639, 0
      %v1673 = vsel %vm1426, %v1640, 0
      %v1676 = vsel %vm1426, %v1641, 0
      %v1679 = vsel %vm1426, %v1642, 0
      %v1682 = vsel %vm1426, %v1643, 0
      %v1685 = vsel %vm1426, %v1644, 0
      %v1688 = vsel %vm1426, %v1645, 0
      %v1691 = vsel %vm1426, %v1646, 0
      %v1694 = vsel %vm1426, %v1647, 0
      %v1697 = vsel %vm1475, %v988, 0
      %1699 = vmatpush.bf16.msra.mxu0 0
      %1700 = vmatpush.bf16.msra.mxu0 0
      %1701 = vmatpush.bf16.msra.mxu0 0
      %1702 = vmatpush.bf16.msra.mxu0 0
      %1703 = vmatpush.bf16.msra.mxu0 0
      %1704 = vmatpush.bf16.msra.mxu0 0
      %1705 = vmatpush.bf16.msra.mxu0 0
      %1706 = vmatpush.bf16.msra.mxu0 %v1697
      %1707 = vmatmul.bf16.gmra.mxu0 %v1649
      %v1708 = vpop.f32.mrf.mxu0
      %v1709 = vadd.f32 %v1489, %v1708
      %v1710 = vpop.f32.mrf.mxu0
      %v1711 = vadd.f32 %v1491, %v1710
      %1712 = vmatmul.bf16.gmra.mxu0 %v1652
      %v1713 = vpop.f32.mrf.mxu0
      %v1714 = vadd.f32 %v1494, %v1713
      %v1715 = vpop.f32.mrf.mxu0
      %v1716 = vadd.f32 %v1496, %v1715
      %1717 = vmatmul.bf16.gmra.mxu0 %v1655
      %v1718 = vpop.f32.mrf.mxu0
      %v1719 = vadd.f32 %v1499, %v1718
      %v1720 = vpop.f32.mrf.mxu0
      %v1721 = vadd.f32 %v1501, %v1720
      %1722 = vmatmul.bf16.gmra.mxu0 %v1658
      %v1723 = vpop.f32.mrf.mxu0
      %v1724 = vadd.f32 %v1504, %v1723
      %v1725 = vpop.f32.mrf.mxu0
      %v1726 = vadd.f32 %v1506, %v1725
      %1727 = vmatmul.bf16.gmra.mxu0 %v1661
      %v1728 = vpop.f32.mrf.mxu0
      %v1729 = vadd.f32 %v1509, %v1728
      %v1730 = vpop.f32.mrf.mxu0
      %v1731 = vadd.f32 %v1511, %v1730
      %1732 = vmatmul.bf16.gmra.mxu0 %v1664
      %v1733 = vpop.f32.mrf.mxu0
      %v1734 = vadd.f32 %v1514, %v1733
      %v1735 = vpop.f32.mrf.mxu0
      %v1736 = vadd.f32 %v1516, %v1735
      %1737 = vmatmul.bf16.gmra.mxu0 %v1667
      %v1738 = vpop.f32.mrf.mxu0
      %v1739 = vadd.f32 %v1519, %v1738
      %v1740 = vpop.f32.mrf.mxu0
      %v1741 = vadd.f32 %v1521, %v1740
      %1742 = vmatmul.bf16.gmra.mxu0 %v1670
      %v1743 = vpop.f32.mrf.mxu0
      %v1744 = vadd.f32 %v1524, %v1743
      %v1745 = vpop.f32.mrf.mxu0
      %v1746 = vadd.f32 %v1526, %v1745
      %1747 = vmatmul.bf16.gmra.mxu0 %v1673
      %v1748 = vpop.f32.mrf.mxu0
      %v1749 = vadd.f32 %v1529, %v1748
      %v1750 = vpop.f32.mrf.mxu0
      %v1751 = vadd.f32 %v1531, %v1750
      %1752 = vmatmul.bf16.gmra.mxu0 %v1676
      %v1753 = vpop.f32.mrf.mxu0
      %v1754 = vadd.f32 %v1534, %v1753
      %v1755 = vpop.f32.mrf.mxu0
      %v1756 = vadd.f32 %v1536, %v1755
      %1757 = vmatmul.bf16.gmra.mxu0 %v1679
      %v1758 = vpop.f32.mrf.mxu0
      %v1759 = vadd.f32 %v1539, %v1758
      %v1760 = vpop.f32.mrf.mxu0
      %v1761 = vadd.f32 %v1541, %v1760
      %1762 = vmatmul.bf16.gmra.mxu0 %v1682
      %v1763 = vpop.f32.mrf.mxu0
      %v1764 = vadd.f32 %v1544, %v1763
      %v1765 = vpop.f32.mrf.mxu0
      %v1766 = vadd.f32 %v1546, %v1765
      %1767 = vmatmul.bf16.gmra.mxu0 %v1685
      %v1768 = vpop.f32.mrf.mxu0
      %v1769 = vadd.f32 %v1549, %v1768
      %v1770 = vpop.f32.mrf.mxu0
      %v1771 = vadd.f32 %v1551, %v1770
      %1772 = vmatmul.bf16.gmra.mxu0 %v1688
      %v1773 = vpop.f32.mrf.mxu0
      %v1774 = vadd.f32 %v1554, %v1773
      %v1775 = vpop.f32.mrf.mxu0
      %v1776 = vadd.f32 %v1556, %v1775
      %1777 = vmatmul.bf16.gmra.mxu0 %v1691
      %v1778 = vpop.f32.mrf.mxu0
      %v1779 = vadd.f32 %v1559, %v1778
      %v1780 = vpop.f32.mrf.mxu0
      %v1781 = vadd.f32 %v1561, %v1780
      %1782 = vmatmul.bf16.gmra.mxu0 %v1694
      %v1783 = vpop.f32.mrf.mxu0
      %v1784 = vadd.f32 %v1564, %v1783
      %v1785 = vpop.f32.mrf.mxu0
      %v1786 = vadd.f32 %v1566, %v1785
      %1787 = vdwg.mxu0
      %vm1804 = vcmask 1042432
      %vm1805 = vcmask 1046532
      %vm1806 = vmor %vm1804, %vm1805
      %v1807 = vrot.slane %v934, 5
      %v1808 = vrot.slane %v1807, 4
      %v1809 = vrot.slane %v935, 5
      %v1810 = vsel %vm1806, %v1808, %v1809
      %v1811 = vrot.slane %v1809, 4
      %v1812 = vrot.slane %v936, 5
      %v1813 = vsel %vm1806, %v1811, %v1812
      %v1814 = vrot.slane %v937, 5
      %v1815 = vrot.slane %v1814, 4
      %v1816 = vrot.slane %v938, 5
      %v1817 = vsel %vm1806, %v1815, %v1816
      %v1818 = vrot.slane %v1816, 4
      %v1819 = vrot.slane %v939, 5
      %v1820 = vsel %vm1806, %v1818, %v1819
      %v1821 = vrot.slane %v940, 5
      %v1822 = vrot.slane %v1821, 4
      %v1823 = vrot.slane %v941, 5
      %v1824 = vsel %vm1806, %v1822, %v1823
      %v1825 = vrot.slane %v1823, 4
      %v1826 = vrot.slane %v942, 5
      %v1827 = vsel %vm1806, %v1825, %v1826
      %v1828 = vrot.slane %v943, 5
      %v1829 = vrot.slane %v1828, 4
      %v1830 = vrot.slane %v944, 5
      %v1831 = vsel %vm1806, %v1829, %v1830
      %v1832 = vrot.slane %v1830, 4
      %v1833 = vrot.slane %v945, 5
      %v1834 = vsel %vm1806, %v1832, %v1833
      %v1835 = vrot.slane %v946, 5
      %v1836 = vrot.slane %v1835, 4
      %v1837 = vrot.slane %v947, 5
      %v1838 = vsel %vm1806, %v1836, %v1837
      %v1839 = vrot.slane %v1837, 4
      %v1840 = vrot.slane %v948, 5
      %v1841 = vsel %vm1806, %v1839, %v1840
      %v1842 = vrot.slane %v949, 5
      %v1843 = vrot.slane %v1842, 4
      %v1844 = vrot.slane %v950, 5
      %v1845 = vsel %vm1806, %v1843, %v1844
      %v1846 = vrot.slane %v1844, 4
      %v1847 = vrot.slane %v951, 5
      %v1848 = vsel %vm1806, %v1846, %v1847
      %v1849 = vrot.slane %v952, 5
      %v1850 = vrot.slane %v1849, 4
      %v1851 = vrot.slane %v953, 5
      %v1852 = vsel %vm1806, %v1850, %v1851
      %v1853 = vrot.slane %v1851, 4
      %v1854 = vrot.slane %v954, 5
      %v1855 = vsel %vm1806, %v1853, %v1854
      %v1856 = vrot.slane %v955, 5
      %v1857 = vrot.slane %v1856, 4
      %v1858 = vrot.slane %v956, 5
      %v1859 = vsel %vm1806, %v1857, %v1858
      %v1860 = vrot.slane %v1858, 4
      %v1861 = vrot.slane %v957, 5
      %v1862 = vsel %vm1806, %v1860, %v1861
      %v1863 = vrot.slane %v958, 5
      %v1864 = vrot.slane %v1863, 4
      %v1865 = vrot.slane %v959, 5
      %v1866 = vsel %vm1806, %v1864, %v1865
      %v1867 = vrot.slane %v1865, 4
      %v1868 = vrot.slane %v960, 5
      %v1869 = vsel %vm1806, %v1867, %v1868
      %v1870 = vrot.slane %v961, 5
      %v1871 = vrot.slane %v1870, 4
      %v1872 = vrot.slane %v962, 5
      %v1873 = vsel %vm1806, %v1871, %v1872
      %v1874 = vrot.slane %v1872, 4
      %v1875 = vrot.slane %v963, 5
      %v1876 = vsel %vm1806, %v1874, %v1875
      %v1877 = vrot.slane %v964, 5
      %v1878 = vrot.slane %v1877, 4
      %v1879 = vrot.slane %v965, 5
      %v1880 = vsel %vm1806, %v1878, %v1879
      %v1881 = vrot.slane %v1879, 4
      %v1882 = vrot.slane %v966, 5
      %v1883 = vsel %vm1806, %v1881, %v1882
      %v1884 = vrot.slane %v967, 5
      %v1885 = vrot.slane %v1884, 4
      %v1886 = vrot.slane %v968, 5
      %v1887 = vsel %vm1806, %v1885, %v1886
      %v1888 = vrot.slane %v1886, 4
      %v1889 = vrot.slane %v969, 5
      %v1890 = vsel %vm1806, %v1888, %v1889
      %v1891 = vrot.slane %v970, 5
      %v1892 = vrot.slane %v1891, 4
      %v1893 = vrot.slane %v971, 5
      %v1894 = vsel %vm1806, %v1892, %v1893
      %v1895 = vrot.slane %v1893, 4
      %v1896 = vrot.slane %v972, 5
      %v1897 = vsel %vm1806, %v1895, %v1896
      %v1898 = vrot.slane %v973, 5
      %v1899 = vrot.slane %v1898, 4
      %v1900 = vrot.slane %v974, 5
      %v1901 = vsel %vm1806, %v1899, %v1900
      %v1902 = vrot.slane %v1900, 4
      %v1903 = vrot.slane %v975, 5
      %v1904 = vsel %vm1806, %v1902, %v1903
      %v1905 = vrot.slane %v976, 5
      %v1906 = vrot.slane %v1905, 4
      %v1907 = vrot.slane %v977, 5
      %v1908 = vsel %vm1806, %v1906, %v1907
      %v1909 = vrot.slane %v1907, 4
      %v1910 = vrot.slane %v978, 5
      %v1911 = vsel %vm1806, %v1909, %v1910
      %v1912 = vrot.slane %v979, 5
      %v1913 = vrot.slane %v1912, 4
      %v1914 = vrot.slane %v980, 5
      %v1915 = vsel %vm1806, %v1913, %v1914
      %v1916 = vrot.slane %v1914, 4
      %v1917 = vrot.slane %v981, 5
      %v1918 = vsel %vm1806, %v1916, %v1917
      %s1919 = scalar_lea.vmem %s3, 8
      %v1920 = vld [vmem:[%s1919] sm:$0xf]
      %v1921 = vunpack.c.l.b16 %v1810
      %v1922 = vunpack.c.l.b16 %v1813
      %v1923 = vunpack.c.l.b16 %v1817
      %v1924 = vunpack.c.l.b16 %v1820
      %v1925 = vunpack.c.l.b16 %v1824
      %v1926 = vunpack.c.l.b16 %v1827
      %v1927 = vunpack.c.l.b16 %v1831
      %v1928 = vunpack.c.l.b16 %v1834
      %v1929 = vunpack.c.l.b16 %v1838
      %v1930 = vunpack.c.l.b16 %v1841
      %v1931 = vunpack.c.l.b16 %v1845
      %v1932 = vunpack.c.l.b16 %v1848
      %v1933 = vunpack.c.l.b16 %v1852
      %v1934 = vunpack.c.l.b16 %v1855
      %v1935 = vunpack.c.l.b16 %v1859
      %v1936 = vunpack.c.l.b16 %v1862
      %v1937 = vunpack.c.l.b16 %v1866
      %v1938 = vunpack.c.l.b16 %v1869
      %v1939 = vunpack.c.l.b16 %v1873
      %v1940 = vunpack.c.l.b16 %v1876
      %v1941 = vunpack.c.l.b16 %v1880
      %v1942 = vunpack.c.l.b16 %v1883
      %v1943 = vunpack.c.l.b16 %v1887
      %v1944 = vunpack.c.l.b16 %v1890
      %v1945 = vunpack.c.l.b16 %v1894
      %v1946 = vunpack.c.l.b16 %v1897
      %v1947 = vunpack.c.l.b16 %v1901
      %v1948 = vunpack.c.l.b16 %v1904
      %v1949 = vunpack.c.l.b16 %v1908
      %v1950 = vunpack.c.l.b16 %v1911
      %v1951 = vunpack.c.l.b16 %v1915
      %v1952 = vunpack.c.l.b16 %v1918
      %v1953 = vpack.c.b16 %v1922, %v1921
      %v1954 = vpack.c.b16 %v1924, %v1923
      %v1955 = vpack.c.b16 %v1926, %v1925
      %v1956 = vpack.c.b16 %v1928, %v1927
      %v1957 = vpack.c.b16 %v1930, %v1929
      %v1958 = vpack.c.b16 %v1932, %v1931
      %v1959 = vpack.c.b16 %v1934, %v1933
      %v1960 = vpack.c.b16 %v1936, %v1935
      %v1961 = vpack.c.b16 %v1938, %v1937
      %v1962 = vpack.c.b16 %v1940, %v1939
      %v1963 = vpack.c.b16 %v1942, %v1941
      %v1964 = vpack.c.b16 %v1944, %v1943
      %v1965 = vpack.c.b16 %v1946, %v1945
      %v1966 = vpack.c.b16 %v1948, %v1947
      %v1967 = vpack.c.b16 %v1950, %v1949
      %v1968 = vpack.c.b16 %v1952, %v1951
      %v1970 = vsel %vm1426, %v1953, 0
      %v1973 = vsel %vm1426, %v1954, 0
      %v1976 = vsel %vm1426, %v1955, 0
      %v1979 = vsel %vm1426, %v1956, 0
      %v1982 = vsel %vm1426, %v1957, 0
      %v1985 = vsel %vm1426, %v1958, 0
      %v1988 = vsel %vm1426, %v1959, 0
      %v1991 = vsel %vm1426, %v1960, 0
      %v1994 = vsel %vm1426, %v1961, 0
      %v1997 = vsel %vm1426, %v1962, 0
      %v2000 = vsel %vm1426, %v1963, 0
      %v2003 = vsel %vm1426, %v1964, 0
      %v2006 = vsel %vm1426, %v1965, 0
      %v2009 = vsel %vm1426, %v1966, 0
      %v2012 = vsel %vm1426, %v1967, 0
      %v2015 = vsel %vm1426, %v1968, 0
      %v2018 = vsel %vm1475, %v1920, 0
      %2020 = vmatpush.bf16.msra.mxu0 0
      %2021 = vmatpush.bf16.msra.mxu0 0
      %2022 = vmatpush.bf16.msra.mxu0 0
      %2023 = vmatpush.bf16.msra.mxu0 0
      %2024 = vmatpush.bf16.msra.mxu0 0
      %2025 = vmatpush.bf16.msra.mxu0 0
      %2026 = vmatpush.bf16.msra.mxu0 0
      %2027 = vmatpush.bf16.msra.mxu0 %v2018
      %2028 = vmatmul.bf16.gmra.mxu0 %v1970
      %v2029 = vpop.f32.mrf.mxu0
      %v2030 = vadd.f32 0.0, %v2029
      %v2031 = vpop.f32.mrf.mxu0
      %v2032 = vadd.f32 0.0, %v2031
      %2033 = vmatmul.bf16.gmra.mxu0 %v1973
      %v2034 = vpop.f32.mrf.mxu0
      %v2035 = vadd.f32 0.0, %v2034
      %v2036 = vpop.f32.mrf.mxu0
      %v2037 = vadd.f32 0.0, %v2036
      %2038 = vmatmul.bf16.gmra.mxu0 %v1976
      %v2039 = vpop.f32.mrf.mxu0
      %v2040 = vadd.f32 0.0, %v2039
      %v2041 = vpop.f32.mrf.mxu0
      %v2042 = vadd.f32 0.0, %v2041
      %2043 = vmatmul.bf16.gmra.mxu0 %v1979
      %v2044 = vpop.f32.mrf.mxu0
      %v2045 = vadd.f32 0.0, %v2044
      %v2046 = vpop.f32.mrf.mxu0
      %v2047 = vadd.f32 0.0, %v2046
      %2048 = vmatmul.bf16.gmra.mxu0 %v1982
      %v2049 = vpop.f32.mrf.mxu0
      %v2050 = vadd.f32 0.0, %v2049
      %v2051 = vpop.f32.mrf.mxu0
      %v2052 = vadd.f32 0.0, %v2051
      %2053 = vmatmul.bf16.gmra.mxu0 %v1985
      %v2054 = vpop.f32.mrf.mxu0
      %v2055 = vadd.f32 0.0, %v2054
      %v2056 = vpop.f32.mrf.mxu0
      %v2057 = vadd.f32 0.0, %v2056
      %2058 = vmatmul.bf16.gmra.mxu0 %v1988
      %v2059 = vpop.f32.mrf.mxu0
      %v2060 = vadd.f32 0.0, %v2059
      %v2061 = vpop.f32.mrf.mxu0
      %v2062 = vadd.f32 0.0, %v2061
      %2063 = vmatmul.bf16.gmra.mxu0 %v1991
      %v2064 = vpop.f32.mrf.mxu0
      %v2065 = vadd.f32 0.0, %v2064
      %v2066 = vpop.f32.mrf.mxu0
      %v2067 = vadd.f32 0.0, %v2066
      %2068 = vmatmul.bf16.gmra.mxu0 %v1994
      %v2069 = vpop.f32.mrf.mxu0
      %v2070 = vadd.f32 0.0, %v2069
      %v2071 = vpop.f32.mrf.mxu0
      %v2072 = vadd.f32 0.0, %v2071
      %2073 = vmatmul.bf16.gmra.mxu0 %v1997
      %v2074 = vpop.f32.mrf.mxu0
      %v2075 = vadd.f32 0.0, %v2074
      %v2076 = vpop.f32.mrf.mxu0
      %v2077 = vadd.f32 0.0, %v2076
      %2078 = vmatmul.bf16.gmra.mxu0 %v2000
      %v2079 = vpop.f32.mrf.mxu0
      %v2080 = vadd.f32 0.0, %v2079
      %v2081 = vpop.f32.mrf.mxu0
      %v2082 = vadd.f32 0.0, %v2081
      %2083 = vmatmul.bf16.gmra.mxu0 %v2003
      %v2084 = vpop.f32.mrf.mxu0
      %v2085 = vadd.f32 0.0, %v2084
      %v2086 = vpop.f32.mrf.mxu0
      %v2087 = vadd.f32 0.0, %v2086
      %2088 = vmatmul.bf16.gmra.mxu0 %v2006
      %v2089 = vpop.f32.mrf.mxu0
      %v2090 = vadd.f32 0.0, %v2089
      %v2091 = vpop.f32.mrf.mxu0
      %v2092 = vadd.f32 0.0, %v2091
      %2093 = vmatmul.bf16.gmra.mxu0 %v2009
      %v2094 = vpop.f32.mrf.mxu0
      %v2095 = vadd.f32 0.0, %v2094
      %v2096 = vpop.f32.mrf.mxu0
      %v2097 = vadd.f32 0.0, %v2096
      %2098 = vmatmul.bf16.gmra.mxu0 %v2012
      %v2099 = vpop.f32.mrf.mxu0
      %v2100 = vadd.f32 0.0, %v2099
      %v2101 = vpop.f32.mrf.mxu0
      %v2102 = vadd.f32 0.0, %v2101
      %2103 = vmatmul.bf16.gmra.mxu0 %v2015
      %v2104 = vpop.f32.mrf.mxu0
      %v2105 = vadd.f32 0.0, %v2104
      %v2106 = vpop.f32.mrf.mxu0
      %v2107 = vadd.f32 0.0, %v2106
      %2108 = vdwg.mxu0
      %v2109 = vadd.f32 %v1709, %v2030
      %v2110 = vadd.f32 %v1711, %v2032
      %v2111 = vadd.f32 %v1714, %v2035
      %v2112 = vadd.f32 %v1716, %v2037
      %v2113 = vadd.f32 %v1719, %v2040
      %v2114 = vadd.f32 %v1721, %v2042
      %v2115 = vadd.f32 %v1724, %v2045
      %v2116 = vadd.f32 %v1726, %v2047
      %v2117 = vadd.f32 %v1729, %v2050
      %v2118 = vadd.f32 %v1731, %v2052
      %v2119 = vadd.f32 %v1734, %v2055
      %v2120 = vadd.f32 %v1736, %v2057
      %v2121 = vadd.f32 %v1739, %v2060
      %v2122 = vadd.f32 %v1741, %v2062
      %v2123 = vadd.f32 %v1744, %v2065
      %v2124 = vadd.f32 %v1746, %v2067
      %v2125 = vadd.f32 %v1749, %v2070
      %v2126 = vadd.f32 %v1751, %v2072
      %v2127 = vadd.f32 %v1754, %v2075
      %v2128 = vadd.f32 %v1756, %v2077
      %v2129 = vadd.f32 %v1759, %v2080
      %v2130 = vadd.f32 %v1761, %v2082
      %v2131 = vadd.f32 %v1764, %v2085
      %v2132 = vadd.f32 %v1766, %v2087
      %v2133 = vadd.f32 %v1769, %v2090
      %v2134 = vadd.f32 %v1771, %v2092
      %v2135 = vadd.f32 %v1774, %v2095
      %v2136 = vadd.f32 %v1776, %v2097
      %v2137 = vadd.f32 %v1779, %v2100
      %v2138 = vadd.f32 %v1781, %v2102
      %v2139 = vadd.f32 %v1784, %v2105
      %v2140 = vadd.f32 %v1786, %v2107
      %s2141 = scalar_lea.vmem %s3, 12
      %v2142 = vld [vmem:[%s2141] sm:$0xf]
      %v2145 = vunpack.c.l.b16 %v982
      %v2146 = vunpack.c.l.b16 %v983
      %v2147 = vpack.c.b16 %v2146, %v2145
      %v2149 = vsel %vm1426, %v2147, 0
      %v2152 = vsel %vm1475, %v2142, 0
      %2154 = vmatpush.bf16.msra.mxu0 0
      %2155 = vmatpush.bf16.msra.mxu0 0
      %2156 = vmatpush.bf16.msra.mxu0 0
      %2157 = vmatpush.bf16.msra.mxu0 0
      %2158 = vmatpush.bf16.msra.mxu0 0
      %2159 = vmatpush.bf16.msra.mxu0 0
      %2160 = vmatpush.bf16.msra.mxu0 0
      %2161 = vmatpush.bf16.msra.mxu0 %v2152
      %2162 = vmatmul.bf16.gmra.mxu0 %v1652
      %v2163 = vpop.f32.mrf.mxu0
      %v2164 = vadd.f32 0.0, %v2163
      %v2165 = vpop.f32.mrf.mxu0
      %v2166 = vadd.f32 0.0, %v2165
      %2167 = vmatmul.bf16.gmra.mxu0 %v1655
      %v2168 = vpop.f32.mrf.mxu0
      %v2169 = vadd.f32 0.0, %v2168
      %v2170 = vpop.f32.mrf.mxu0
      %v2171 = vadd.f32 0.0, %v2170
      %2172 = vmatmul.bf16.gmra.mxu0 %v1658
      %v2173 = vpop.f32.mrf.mxu0
      %v2174 = vadd.f32 0.0, %v2173
      %v2175 = vpop.f32.mrf.mxu0
      %v2176 = vadd.f32 0.0, %v2175
      %2177 = vmatmul.bf16.gmra.mxu0 %v1661
      %v2178 = vpop.f32.mrf.mxu0
      %v2179 = vadd.f32 0.0, %v2178
      %v2180 = vpop.f32.mrf.mxu0
      %v2181 = vadd.f32 0.0, %v2180
      %2182 = vmatmul.bf16.gmra.mxu0 %v1664
      %v2183 = vpop.f32.mrf.mxu0
      %v2184 = vadd.f32 0.0, %v2183
      %v2185 = vpop.f32.mrf.mxu0
      %v2186 = vadd.f32 0.0, %v2185
      %2187 = vmatmul.bf16.gmra.mxu0 %v1667
      %v2188 = vpop.f32.mrf.mxu0
      %v2189 = vadd.f32 0.0, %v2188
      %v2190 = vpop.f32.mrf.mxu0
      %v2191 = vadd.f32 0.0, %v2190
      %2192 = vmatmul.bf16.gmra.mxu0 %v1670
      %v2193 = vpop.f32.mrf.mxu0
      %v2194 = vadd.f32 0.0, %v2193
      %v2195 = vpop.f32.mrf.mxu0
      %v2196 = vadd.f32 0.0, %v2195
      %2197 = vmatmul.bf16.gmra.mxu0 %v1673
      %v2198 = vpop.f32.mrf.mxu0
      %v2199 = vadd.f32 0.0, %v2198
      %v2200 = vpop.f32.mrf.mxu0
      %v2201 = vadd.f32 0.0, %v2200
      %2202 = vmatmul.bf16.gmra.mxu0 %v1676
      %v2203 = vpop.f32.mrf.mxu0
      %v2204 = vadd.f32 0.0, %v2203
      %v2205 = vpop.f32.mrf.mxu0
      %v2206 = vadd.f32 0.0, %v2205
      %2207 = vmatmul.bf16.gmra.mxu0 %v1679
      %v2208 = vpop.f32.mrf.mxu0
      %v2209 = vadd.f32 0.0, %v2208
      %v2210 = vpop.f32.mrf.mxu0
      %v2211 = vadd.f32 0.0, %v2210
      %2212 = vmatmul.bf16.gmra.mxu0 %v1682
      %v2213 = vpop.f32.mrf.mxu0
      %v2214 = vadd.f32 0.0, %v2213
      %v2215 = vpop.f32.mrf.mxu0
      %v2216 = vadd.f32 0.0, %v2215
      %2217 = vmatmul.bf16.gmra.mxu0 %v1685
      %v2218 = vpop.f32.mrf.mxu0
      %v2219 = vadd.f32 0.0, %v2218
      %v2220 = vpop.f32.mrf.mxu0
      %v2221 = vadd.f32 0.0, %v2220
      %2222 = vmatmul.bf16.gmra.mxu0 %v1688
      %v2223 = vpop.f32.mrf.mxu0
      %v2224 = vadd.f32 0.0, %v2223
      %v2225 = vpop.f32.mrf.mxu0
      %v2226 = vadd.f32 0.0, %v2225
      %2227 = vmatmul.bf16.gmra.mxu0 %v1691
      %v2228 = vpop.f32.mrf.mxu0
      %v2229 = vadd.f32 0.0, %v2228
      %v2230 = vpop.f32.mrf.mxu0
      %v2231 = vadd.f32 0.0, %v2230
      %2232 = vmatmul.bf16.gmra.mxu0 %v1694
      %v2233 = vpop.f32.mrf.mxu0
      %v2234 = vadd.f32 0.0, %v2233
      %v2235 = vpop.f32.mrf.mxu0
      %v2236 = vadd.f32 0.0, %v2235
      %2237 = vmatmul.bf16.gmra.mxu0 %v2149
      %v2238 = vpop.f32.mrf.mxu0
      %v2239 = vadd.f32 0.0, %v2238
      %v2240 = vpop.f32.mrf.mxu0
      %v2241 = vadd.f32 0.0, %v2240
      %2242 = vdwg.mxu0
      %v2243 = vadd.f32 %v2109, %v2164
      %v2244 = vadd.f32 %v2110, %v2166
      %v2245 = vadd.f32 %v2111, %v2169
      %v2246 = vadd.f32 %v2112, %v2171
      %v2247 = vadd.f32 %v2113, %v2174
      %v2248 = vadd.f32 %v2114, %v2176
      %v2249 = vadd.f32 %v2115, %v2179
      %v2250 = vadd.f32 %v2116, %v2181
      %v2251 = vadd.f32 %v2117, %v2184
      %v2252 = vadd.f32 %v2118, %v2186
      %v2253 = vadd.f32 %v2119, %v2189
      %v2254 = vadd.f32 %v2120, %v2191
      %v2255 = vadd.f32 %v2121, %v2194
      %v2256 = vadd.f32 %v2122, %v2196
      %v2257 = vadd.f32 %v2123, %v2199
      %v2258 = vadd.f32 %v2124, %v2201
      %v2259 = vadd.f32 %v2125, %v2204
      %v2260 = vadd.f32 %v2126, %v2206
      %v2261 = vadd.f32 %v2127, %v2209
      %v2262 = vadd.f32 %v2128, %v2211
      %v2263 = vadd.f32 %v2129, %v2214
      %v2264 = vadd.f32 %v2130, %v2216
      %v2265 = vadd.f32 %v2131, %v2219
      %v2266 = vadd.f32 %v2132, %v2221
      %v2267 = vadd.f32 %v2133, %v2224
      %v2268 = vadd.f32 %v2134, %v2226
      %v2269 = vadd.f32 %v2135, %v2229
      %v2270 = vadd.f32 %v2136, %v2231
      %v2271 = vadd.f32 %v2137, %v2234
      %v2272 = vadd.f32 %v2138, %v2236
      %v2273 = vadd.f32 %v2139, %v2239
      %v2274 = vadd.f32 %v2140, %v2241
      %v2276 = vshrl.u32 %v982, 16
      %v2278 = vrot.slane %v2276, 4
      %v2279 = vshll.u32 %v982, 16
      %v2281 = vrot.slane %v2279, 5
      %v2282 = vor.u32 %v2278, %v2281
      %v2283 = vrot.slane %v2282, 4
      %v2285 = vshll.u32 %v983, 16
      %v2287 = vrot.slane %v2285, 5
      %v2288 = vsel %vm991, %v2283, %v2287
      %v2289 = vshrl.u32 %v983, 16
      %v2291 = vrot.slane %v2289, 4
      %v2292 = vor.u32 %v2291, %v2287
      %v2293 = vrot.slane %v2292, 4
      %v2295 = vshll.u32 %v984, 16
      %v2297 = vrot.slane %v2295, 5
      %v2298 = vsel %vm991, %v2293, %v2297
      %s2299 = scalar_lea.vmem %s3, 16
      %v2300 = vld [vmem:[%s2299] sm:$0xf]
      %v2301 = vunpack.c.l.b16 %v2288
      %v2302 = vunpack.c.l.b16 %v2298
      %v2303 = vpack.c.b16 %v2302, %v2301
      %v2305 = vsel %vm1426, %v2303, 0
      %v2308 = vsel %vm1475, %v2300, 0
      %2310 = vmatpush.bf16.msra.mxu0 0
      %2311 = vmatpush.bf16.msra.mxu0 0
      %2312 = vmatpush.bf16.msra.mxu0 0
      %2313 = vmatpush.bf16.msra.mxu0 0
      %2314 = vmatpush.bf16.msra.mxu0 0
      %2315 = vmatpush.bf16.msra.mxu0 0
      %2316 = vmatpush.bf16.msra.mxu0 0
      %2317 = vmatpush.bf16.msra.mxu0 %v2308
      %2318 = vmatmul.bf16.gmra.mxu0 %v1431
      %v2319 = vpop.f32.mrf.mxu0
      %v2320 = vadd.f32 0.0, %v2319
      %v2321 = vpop.f32.mrf.mxu0
      %v2322 = vadd.f32 0.0, %v2321
      %2323 = vmatmul.bf16.gmra.mxu0 %v1434
      %v2324 = vpop.f32.mrf.mxu0
      %v2325 = vadd.f32 0.0, %v2324
      %v2326 = vpop.f32.mrf.mxu0
      %v2327 = vadd.f32 0.0, %v2326
      %2328 = vmatmul.bf16.gmra.mxu0 %v1437
      %v2329 = vpop.f32.mrf.mxu0
      %v2330 = vadd.f32 0.0, %v2329
      %v2331 = vpop.f32.mrf.mxu0
      %v2332 = vadd.f32 0.0, %v2331
      %2333 = vmatmul.bf16.gmra.mxu0 %v1440
      %v2334 = vpop.f32.mrf.mxu0
      %v2335 = vadd.f32 0.0, %v2334
      %v2336 = vpop.f32.mrf.mxu0
      %v2337 = vadd.f32 0.0, %v2336
      %2338 = vmatmul.bf16.gmra.mxu0 %v1443
      %v2339 = vpop.f32.mrf.mxu0
      %v2340 = vadd.f32 0.0, %v2339
      %v2341 = vpop.f32.mrf.mxu0
      %v2342 = vadd.f32 0.0, %v2341
      %2343 = vmatmul.bf16.gmra.mxu0 %v1446
      %v2344 = vpop.f32.mrf.mxu0
      %v2345 = vadd.f32 0.0, %v2344
      %v2346 = vpop.f32.mrf.mxu0
      %v2347 = vadd.f32 0.0, %v2346
      %2348 = vmatmul.bf16.gmra.mxu0 %v1449
      %v2349 = vpop.f32.mrf.mxu0
      %v2350 = vadd.f32 0.0, %v2349
      %v2351 = vpop.f32.mrf.mxu0
      %v2352 = vadd.f32 0.0, %v2351
      %2353 = vmatmul.bf16.gmra.mxu0 %v1452
      %v2354 = vpop.f32.mrf.mxu0
      %v2355 = vadd.f32 0.0, %v2354
      %v2356 = vpop.f32.mrf.mxu0
      %v2357 = vadd.f32 0.0, %v2356
      %2358 = vmatmul.bf16.gmra.mxu0 %v1455
      %v2359 = vpop.f32.mrf.mxu0
      %v2360 = vadd.f32 0.0, %v2359
      %v2361 = vpop.f32.mrf.mxu0
      %v2362 = vadd.f32 0.0, %v2361
      %2363 = vmatmul.bf16.gmra.mxu0 %v1458
      %v2364 = vpop.f32.mrf.mxu0
      %v2365 = vadd.f32 0.0, %v2364
      %v2366 = vpop.f32.mrf.mxu0
      %v2367 = vadd.f32 0.0, %v2366
      %2368 = vmatmul.bf16.gmra.mxu0 %v1461
      %v2369 = vpop.f32.mrf.mxu0
      %v2370 = vadd.f32 0.0, %v2369
      %v2371 = vpop.f32.mrf.mxu0
      %v2372 = vadd.f32 0.0, %v2371
      %2373 = vmatmul.bf16.gmra.mxu0 %v1464
      %v2374 = vpop.f32.mrf.mxu0
      %v2375 = vadd.f32 0.0, %v2374
      %v2376 = vpop.f32.mrf.mxu0
      %v2377 = vadd.f32 0.0, %v2376
      %2378 = vmatmul.bf16.gmra.mxu0 %v1467
      %v2379 = vpop.f32.mrf.mxu0
      %v2380 = vadd.f32 0.0, %v2379
      %v2381 = vpop.f32.mrf.mxu0
      %v2382 = vadd.f32 0.0, %v2381
      %2383 = vmatmul.bf16.gmra.mxu0 %v1470
      %v2384 = vpop.f32.mrf.mxu0
      %v2385 = vadd.f32 0.0, %v2384
      %v2386 = vpop.f32.mrf.mxu0
      %v2387 = vadd.f32 0.0, %v2386
      %2388 = vmatmul.bf16.gmra.mxu0 %v1473
      %v2389 = vpop.f32.mrf.mxu0
      %v2390 = vadd.f32 0.0, %v2389
      %v2391 = vpop.f32.mrf.mxu0
      %v2392 = vadd.f32 0.0, %v2391
      %2393 = vmatmul.bf16.gmra.mxu0 %v2305
      %v2394 = vpop.f32.mrf.mxu0
      %v2395 = vadd.f32 0.0, %v2394
      %v2396 = vpop.f32.mrf.mxu0
      %v2397 = vadd.f32 0.0, %v2396
      %2398 = vdwg.mxu0
      %v2399 = vadd.f32 %v2243, %v2320
      %v2400 = vadd.f32 %v2244, %v2322
      %v2401 = vadd.f32 %v2245, %v2325
      %v2402 = vadd.f32 %v2246, %v2327
      %v2403 = vadd.f32 %v2247, %v2330
      %v2404 = vadd.f32 %v2248, %v2332
      %v2405 = vadd.f32 %v2249, %v2335
      %v2406 = vadd.f32 %v2250, %v2337
      %v2407 = vadd.f32 %v2251, %v2340
      %v2408 = vadd.f32 %v2252, %v2342
      %v2409 = vadd.f32 %v2253, %v2345
      %v2410 = vadd.f32 %v2254, %v2347
      %v2411 = vadd.f32 %v2255, %v2350
      %v2412 = vadd.f32 %v2256, %v2352
      %v2413 = vadd.f32 %v2257, %v2355
      %v2414 = vadd.f32 %v2258, %v2357
      %v2415 = vadd.f32 %v2259, %v2360
      %v2416 = vadd.f32 %v2260, %v2362
      %v2417 = vadd.f32 %v2261, %v2365
      %v2418 = vadd.f32 %v2262, %v2367
      %v2419 = vadd.f32 %v2263, %v2370
      %v2420 = vadd.f32 %v2264, %v2372
      %v2421 = vadd.f32 %v2265, %v2375
      %v2422 = vadd.f32 %v2266, %v2377
      %v2423 = vadd.f32 %v2267, %v2380
      %v2424 = vadd.f32 %v2268, %v2382
      %v2425 = vadd.f32 %v2269, %v2385
      %v2426 = vadd.f32 %v2270, %v2387
      %v2427 = vadd.f32 %v2271, %v2390
      %v2428 = vadd.f32 %v2272, %v2392
      %v2429 = vadd.f32 %v2273, %v2395
      %v2430 = vadd.f32 %v2274, %v2397
      %v2432 = vrot.slane %v982, 5
      %v2433 = vrot.slane %v2432, 4
      %v2434 = vrot.slane %v983, 5
      %v2435 = vsel %vm1806, %v2433, %v2434
      %v2436 = vrot.slane %v2434, 4
      %v2437 = vrot.slane %v984, 5
      %v2438 = vsel %vm1806, %v2436, %v2437
      %s2439 = scalar_lea.vmem %s3, 20
      %v2440 = vld [vmem:[%s2439] sm:$0xf]
      %v2441 = vunpack.c.l.b16 %v2435
      %v2442 = vunpack.c.l.b16 %v2438
      %v2443 = vpack.c.b16 %v2442, %v2441
      %v2445 = vsel %vm1426, %v2443, 0
      %v2448 = vsel %vm1475, %v2440, 0
      %2450 = vmatpush.bf16.msra.mxu0 0
      %2451 = vmatpush.bf16.msra.mxu0 0
      %2452 = vmatpush.bf16.msra.mxu0 0
      %2453 = vmatpush.bf16.msra.mxu0 0
      %2454 = vmatpush.bf16.msra.mxu0 0
      %2455 = vmatpush.bf16.msra.mxu0 0
      %2456 = vmatpush.bf16.msra.mxu0 0
      %2457 = vmatpush.bf16.msra.mxu0 %v2448
      %2458 = vmatmul.bf16.gmra.mxu0 %v1973
      %v2459 = vpop.f32.mrf.mxu0
      %v2460 = vadd.f32 0.0, %v2459
      %v2461 = vpop.f32.mrf.mxu0
      %v2462 = vadd.f32 0.0, %v2461
      %2463 = vmatmul.bf16.gmra.mxu0 %v1976
      %v2464 = vpop.f32.mrf.mxu0
      %v2465 = vadd.f32 0.0, %v2464
      %v2466 = vpop.f32.mrf.mxu0
      %v2467 = vadd.f32 0.0, %v2466
      %2468 = vmatmul.bf16.gmra.mxu0 %v1979
      %v2469 = vpop.f32.mrf.mxu0
      %v2470 = vadd.f32 0.0, %v2469
      %v2471 = vpop.f32.mrf.mxu0
      %v2472 = vadd.f32 0.0, %v2471
      %2473 = vmatmul.bf16.gmra.mxu0 %v1982
      %v2474 = vpop.f32.mrf.mxu0
      %v2475 = vadd.f32 0.0, %v2474
      %v2476 = vpop.f32.mrf.mxu0
      %v2477 = vadd.f32 0.0, %v2476
      %2478 = vmatmul.bf16.gmra.mxu0 %v1985
      %v2479 = vpop.f32.mrf.mxu0
      %v2480 = vadd.f32 0.0, %v2479
      %v2481 = vpop.f32.mrf.mxu0
      %v2482 = vadd.f32 0.0, %v2481
      %2483 = vmatmul.bf16.gmra.mxu0 %v1988
      %v2484 = vpop.f32.mrf.mxu0
      %v2485 = vadd.f32 0.0, %v2484
      %v2486 = vpop.f32.mrf.mxu0
      %v2487 = vadd.f32 0.0, %v2486
      %2488 = vmatmul.bf16.gmra.mxu0 %v1991
      %v2489 = vpop.f32.mrf.mxu0
      %v2490 = vadd.f32 0.0, %v2489
      %v2491 = vpop.f32.mrf.mxu0
      %v2492 = vadd.f32 0.0, %v2491
      %2493 = vmatmul.bf16.gmra.mxu0 %v1994
      %v2494 = vpop.f32.mrf.mxu0
      %v2495 = vadd.f32 0.0, %v2494
      %v2496 = vpop.f32.mrf.mxu0
      %v2497 = vadd.f32 0.0, %v2496
      %2498 = vmatmul.bf16.gmra.mxu0 %v1997
      %v2499 = vpop.f32.mrf.mxu0
      %v2500 = vadd.f32 0.0, %v2499
      %v2501 = vpop.f32.mrf.mxu0
      %v2502 = vadd.f32 0.0, %v2501
      %2503 = vmatmul.bf16.gmra.mxu0 %v2000
      %v2504 = vpop.f32.mrf.mxu0
      %v2505 = vadd.f32 0.0, %v2504
      %v2506 = vpop.f32.mrf.mxu0
      %v2507 = vadd.f32 0.0, %v2506
      %2508 = vmatmul.bf16.gmra.mxu0 %v2003
      %v2509 = vpop.f32.mrf.mxu0
      %v2510 = vadd.f32 0.0, %v2509
      %v2511 = vpop.f32.mrf.mxu0
      %v2512 = vadd.f32 0.0, %v2511
      %2513 = vmatmul.bf16.gmra.mxu0 %v2006
      %v2514 = vpop.f32.mrf.mxu0
      %v2515 = vadd.f32 0.0, %v2514
      %v2516 = vpop.f32.mrf.mxu0
      %v2517 = vadd.f32 0.0, %v2516
      %2518 = vmatmul.bf16.gmra.mxu0 %v2009
      %v2519 = vpop.f32.mrf.mxu0
      %v2520 = vadd.f32 0.0, %v2519
      %v2521 = vpop.f32.mrf.mxu0
      %v2522 = vadd.f32 0.0, %v2521
      %2523 = vmatmul.bf16.gmra.mxu0 %v2012
      %v2524 = vpop.f32.mrf.mxu0
      %v2525 = vadd.f32 0.0, %v2524
      %v2526 = vpop.f32.mrf.mxu0
      %v2527 = vadd.f32 0.0, %v2526
      %2528 = vmatmul.bf16.gmra.mxu0 %v2015
      %v2529 = vpop.f32.mrf.mxu0
      %v2530 = vadd.f32 0.0, %v2529
      %v2531 = vpop.f32.mrf.mxu0
      %v2532 = vadd.f32 0.0, %v2531
      %2533 = vmatmul.bf16.gmra.mxu0 %v2445
      %v2534 = vpop.f32.mrf.mxu0
      %v2535 = vadd.f32 0.0, %v2534
      %v2536 = vpop.f32.mrf.mxu0
      %v2537 = vadd.f32 0.0, %v2536
      %2538 = vdwg.mxu0
      %v2539 = vadd.f32 %v2399, %v2460
      %v2540 = vadd.f32 %v2400, %v2462
      %v2541 = vadd.f32 %v2401, %v2465
      %v2542 = vadd.f32 %v2402, %v2467
      %v2543 = vadd.f32 %v2403, %v2470
      %v2544 = vadd.f32 %v2404, %v2472
      %v2545 = vadd.f32 %v2405, %v2475
      %v2546 = vadd.f32 %v2406, %v2477
      %v2547 = vadd.f32 %v2407, %v2480
      %v2548 = vadd.f32 %v2408, %v2482
      %v2549 = vadd.f32 %v2409, %v2485
      %v2550 = vadd.f32 %v2410, %v2487
      %v2551 = vadd.f32 %v2411, %v2490
      %v2552 = vadd.f32 %v2412, %v2492
      %v2553 = vadd.f32 %v2413, %v2495
      %v2554 = vadd.f32 %v2414, %v2497
      %v2555 = vadd.f32 %v2415, %v2500
      %v2556 = vadd.f32 %v2416, %v2502
      %v2557 = vadd.f32 %v2417, %v2505
      %v2558 = vadd.f32 %v2418, %v2507
      %v2559 = vadd.f32 %v2419, %v2510
      %v2560 = vadd.f32 %v2420, %v2512
      %v2561 = vadd.f32 %v2421, %v2515
      %v2562 = vadd.f32 %v2422, %v2517
      %v2563 = vadd.f32 %v2423, %v2520
      %v2564 = vadd.f32 %v2424, %v2522
      %v2565 = vadd.f32 %v2425, %v2525
      %v2566 = vadd.f32 %v2426, %v2527
      %v2567 = vadd.f32 %v2427, %v2530
      %v2568 = vadd.f32 %v2428, %v2532
      %v2569 = vadd.f32 %v2429, %v2535
      %v2570 = vadd.f32 %v2430, %v2537
      %s2571 = scalar_lea.vmem %s3, 24
      %v2572 = vld [vmem:[%s2571] sm:$0xf]
      %v2575 = vunpack.c.l.b16 %v985
      %v2576 = vunpack.c.l.b16 %v986
      %v2577 = vpack.c.b16 %v2576, %v2575
      %v2579 = vsel %vm1426, %v2577, 0
      %v2582 = vsel %vm1475, %v2572, 0
      %2584 = vmatpush.bf16.msra.mxu0 0
      %2585 = vmatpush.bf16.msra.mxu0 0
      %2586 = vmatpush.bf16.msra.mxu0 0
      %2587 = vmatpush.bf16.msra.mxu0 0
      %2588 = vmatpush.bf16.msra.mxu0 0
      %2589 = vmatpush.bf16.msra.mxu0 0
      %2590 = vmatpush.bf16.msra.mxu0 0
      %2591 = vmatpush.bf16.msra.mxu0 %v2582
      %2592 = vmatmul.bf16.gmra.mxu0 %v1655
      %v2593 = vpop.f32.mrf.mxu0
      %v2594 = vadd.f32 0.0, %v2593
      %v2595 = vpop.f32.mrf.mxu0
      %v2596 = vadd.f32 0.0, %v2595
      %2597 = vmatmul.bf16.gmra.mxu0 %v1658
      %v2598 = vpop.f32.mrf.mxu0
      %v2599 = vadd.f32 0.0, %v2598
      %v2600 = vpop.f32.mrf.mxu0
      %v2601 = vadd.f32 0.0, %v2600
      %2602 = vmatmul.bf16.gmra.mxu0 %v1661
      %v2603 = vpop.f32.mrf.mxu0
      %v2604 = vadd.f32 0.0, %v2603
      %v2605 = vpop.f32.mrf.mxu0
      %v2606 = vadd.f32 0.0, %v2605
      %2607 = vmatmul.bf16.gmra.mxu0 %v1664
      %v2608 = vpop.f32.mrf.mxu0
      %v2609 = vadd.f32 0.0, %v2608
      %v2610 = vpop.f32.mrf.mxu0
      %v2611 = vadd.f32 0.0, %v2610
      %2612 = vmatmul.bf16.gmra.mxu0 %v1667
      %v2613 = vpop.f32.mrf.mxu0
      %v2614 = vadd.f32 0.0, %v2613
      %v2615 = vpop.f32.mrf.mxu0
      %v2616 = vadd.f32 0.0, %v2615
      %2617 = vmatmul.bf16.gmra.mxu0 %v1670
      %v2618 = vpop.f32.mrf.mxu0
      %v2619 = vadd.f32 0.0, %v2618
      %v2620 = vpop.f32.mrf.mxu0
      %v2621 = vadd.f32 0.0, %v2620
      %2622 = vmatmul.bf16.gmra.mxu0 %v1673
      %v2623 = vpop.f32.mrf.mxu0
      %v2624 = vadd.f32 0.0, %v2623
      %v2625 = vpop.f32.mrf.mxu0
      %v2626 = vadd.f32 0.0, %v2625
      %2627 = vmatmul.bf16.gmra.mxu0 %v1676
      %v2628 = vpop.f32.mrf.mxu0
      %v2629 = vadd.f32 0.0, %v2628
      %v2630 = vpop.f32.mrf.mxu0
      %v2631 = vadd.f32 0.0, %v2630
      %2632 = vmatmul.bf16.gmra.mxu0 %v1679
      %v2633 = vpop.f32.mrf.mxu0
      %v2634 = vadd.f32 0.0, %v2633
      %v2635 = vpop.f32.mrf.mxu0
      %v2636 = vadd.f32 0.0, %v2635
      %2637 = vmatmul.bf16.gmra.mxu0 %v1682
      %v2638 = vpop.f32.mrf.mxu0
      %v2639 = vadd.f32 0.0, %v2638
      %v2640 = vpop.f32.mrf.mxu0
      %v2641 = vadd.f32 0.0, %v2640
      %2642 = vmatmul.bf16.gmra.mxu0 %v1685
      %v2643 = vpop.f32.mrf.mxu0
      %v2644 = vadd.f32 0.0, %v2643
      %v2645 = vpop.f32.mrf.mxu0
      %v2646 = vadd.f32 0.0, %v2645
      %2647 = vmatmul.bf16.gmra.mxu0 %v1688
      %v2648 = vpop.f32.mrf.mxu0
      %v2649 = vadd.f32 0.0, %v2648
      %v2650 = vpop.f32.mrf.mxu0
      %v2651 = vadd.f32 0.0, %v2650
      %2652 = vmatmul.bf16.gmra.mxu0 %v1691
      %v2653 = vpop.f32.mrf.mxu0
      %v2654 = vadd.f32 0.0, %v2653
      %v2655 = vpop.f32.mrf.mxu0
      %v2656 = vadd.f32 0.0, %v2655
      %2657 = vmatmul.bf16.gmra.mxu0 %v1694
      %v2658 = vpop.f32.mrf.mxu0
      %v2659 = vadd.f32 0.0, %v2658
      %v2660 = vpop.f32.mrf.mxu0
      %v2661 = vadd.f32 0.0, %v2660
      %2662 = vmatmul.bf16.gmra.mxu0 %v2149
      %v2663 = vpop.f32.mrf.mxu0
      %v2664 = vadd.f32 0.0, %v2663
      %v2665 = vpop.f32.mrf.mxu0
      %v2666 = vadd.f32 0.0, %v2665
      %2667 = vmatmul.bf16.gmra.mxu0 %v2579
      %v2668 = vpop.f32.mrf.mxu0
      %v2669 = vadd.f32 0.0, %v2668
      %v2670 = vpop.f32.mrf.mxu0
      %v2671 = vadd.f32 0.0, %v2670
      %2672 = vdwg.mxu0
      %v2673 = vadd.f32 %v2539, %v2594
      %v2674 = vadd.f32 %v2540, %v2596
      %v2675 = vadd.f32 %v2541, %v2599
      %v2676 = vadd.f32 %v2542, %v2601
      %v2677 = vadd.f32 %v2543, %v2604
      %v2678 = vadd.f32 %v2544, %v2606
      %v2679 = vadd.f32 %v2545, %v2609
      %v2680 = vadd.f32 %v2546, %v2611
      %v2681 = vadd.f32 %v2547, %v2614
      %v2682 = vadd.f32 %v2548, %v2616
      %v2683 = vadd.f32 %v2549, %v2619
      %v2684 = vadd.f32 %v2550, %v2621
      %v2685 = vadd.f32 %v2551, %v2624
      %v2686 = vadd.f32 %v2552, %v2626
      %v2687 = vadd.f32 %v2553, %v2629
      %v2688 = vadd.f32 %v2554, %v2631
      %v2689 = vadd.f32 %v2555, %v2634
      %v2690 = vadd.f32 %v2556, %v2636
      %v2691 = vadd.f32 %v2557, %v2639
      %v2692 = vadd.f32 %v2558, %v2641
      %v2693 = vadd.f32 %v2559, %v2644
      %v2694 = vadd.f32 %v2560, %v2646
      %v2695 = vadd.f32 %v2561, %v2649
      %v2696 = vadd.f32 %v2562, %v2651
      %v2697 = vadd.f32 %v2563, %v2654
      %v2698 = vadd.f32 %v2564, %v2656
      %v2699 = vadd.f32 %v2565, %v2659
      %v2700 = vadd.f32 %v2566, %v2661
      %v2701 = vadd.f32 %v2567, %v2664
      %v2702 = vadd.f32 %v2568, %v2666
      %v2703 = vadd.f32 %v2569, %v2669
      %v2704 = vadd.f32 %v2570, %v2671
      %v2706 = vshrl.u32 %v985, 16
      %v2708 = vrot.slane %v2706, 4
      %v2709 = vshll.u32 %v985, 16
      %v2711 = vrot.slane %v2709, 5
      %v2712 = vor.u32 %v2708, %v2711
      %v2713 = vrot.slane %v2712, 4
      %v2715 = vshll.u32 %v986, 16
      %v2717 = vrot.slane %v2715, 5
      %v2718 = vsel %vm991, %v2713, %v2717
      %v2719 = vshrl.u32 %v986, 16
      %v2721 = vrot.slane %v2719, 4
      %v2722 = vor.u32 %v2721, %v2717
      %v2723 = vrot.slane %v2722, 4
      %v2725 = vshll.u32 %v987, 16
      %v2727 = vrot.slane %v2725, 5
      %v2728 = vsel %vm991, %v2723, %v2727
      %s2729 = scalar_lea.vmem %s3, 28
      %v2730 = vld [vmem:[%s2729] sm:$0xf]
      %v2731 = vunpack.c.l.b16 %v2718
      %v2732 = vunpack.c.l.b16 %v2728
      %v2733 = vpack.c.b16 %v2732, %v2731
      %v2735 = vsel %vm1426, %v2733, 0
      %v2738 = vsel %vm1475, %v2730, 0
      %2740 = vmatpush.bf16.msra.mxu0 0
      %2741 = vmatpush.bf16.msra.mxu0 0
      %2742 = vmatpush.bf16.msra.mxu0 0
      %2743 = vmatpush.bf16.msra.mxu0 0
      %2744 = vmatpush.bf16.msra.mxu0 0
      %2745 = vmatpush.bf16.msra.mxu0 0
      %2746 = vmatpush.bf16.msra.mxu0 0
      %2747 = vmatpush.bf16.msra.mxu0 %v2738
      %2748 = vmatmul.bf16.gmra.mxu0 %v1434
      %v2749 = vpop.f32.mrf.mxu0
      %v2750 = vadd.f32 0.0, %v2749
      %v2751 = vpop.f32.mrf.mxu0
      %v2752 = vadd.f32 0.0, %v2751
      %2753 = vmatmul.bf16.gmra.mxu0 %v1437
      %v2754 = vpop.f32.mrf.mxu0
      %v2755 = vadd.f32 0.0, %v2754
      %v2756 = vpop.f32.mrf.mxu0
      %v2757 = vadd.f32 0.0, %v2756
      %2758 = vmatmul.bf16.gmra.mxu0 %v1440
      %v2759 = vpop.f32.mrf.mxu0
      %v2760 = vadd.f32 0.0, %v2759
      %v2761 = vpop.f32.mrf.mxu0
      %v2762 = vadd.f32 0.0, %v2761
      %2763 = vmatmul.bf16.gmra.mxu0 %v1443
      %v2764 = vpop.f32.mrf.mxu0
      %v2765 = vadd.f32 0.0, %v2764
      %v2766 = vpop.f32.mrf.mxu0
      %v2767 = vadd.f32 0.0, %v2766
      %2768 = vmatmul.bf16.gmra.mxu0 %v1446
      %v2769 = vpop.f32.mrf.mxu0
      %v2770 = vadd.f32 0.0, %v2769
      %v2771 = vpop.f32.mrf.mxu0
      %v2772 = vadd.f32 0.0, %v2771
      %2773 = vmatmul.bf16.gmra.mxu0 %v1449
      %v2774 = vpop.f32.mrf.mxu0
      %v2775 = vadd.f32 0.0, %v2774
      %v2776 = vpop.f32.mrf.mxu0
      %v2777 = vadd.f32 0.0, %v2776
      %2778 = vmatmul.bf16.gmra.mxu0 %v1452
      %v2779 = vpop.f32.mrf.mxu0
      %v2780 = vadd.f32 0.0, %v2779
      %v2781 = vpop.f32.mrf.mxu0
      %v2782 = vadd.f32 0.0, %v2781
      %2783 = vmatmul.bf16.gmra.mxu0 %v1455
      %v2784 = vpop.f32.mrf.mxu0
      %v2785 = vadd.f32 0.0, %v2784
      %v2786 = vpop.f32.mrf.mxu0
      %v2787 = vadd.f32 0.0, %v2786
      %2788 = vmatmul.bf16.gmra.mxu0 %v1458
      %v2789 = vpop.f32.mrf.mxu0
      %v2790 = vadd.f32 0.0, %v2789
      %v2791 = vpop.f32.mrf.mxu0
      %v2792 = vadd.f32 0.0, %v2791
      %2793 = vmatmul.bf16.gmra.mxu0 %v1461
      %v2794 = vpop.f32.mrf.mxu0
      %v2795 = vadd.f32 0.0, %v2794
      %v2796 = vpop.f32.mrf.mxu0
      %v2797 = vadd.f32 0.0, %v2796
      %2798 = vmatmul.bf16.gmra.mxu0 %v1464
      %v2799 = vpop.f32.mrf.mxu0
      %v2800 = vadd.f32 0.0, %v2799
      %v2801 = vpop.f32.mrf.mxu0
      %v2802 = vadd.f32 0.0, %v2801
      %2803 = vmatmul.bf16.gmra.mxu0 %v1467
      %v2804 = vpop.f32.mrf.mxu0
      %v2805 = vadd.f32 0.0, %v2804
      %v2806 = vpop.f32.mrf.mxu0
      %v2807 = vadd.f32 0.0, %v2806
      %2808 = vmatmul.bf16.gmra.mxu0 %v1470
      %v2809 = vpop.f32.mrf.mxu0
      %v2810 = vadd.f32 0.0, %v2809
      %v2811 = vpop.f32.mrf.mxu0
      %v2812 = vadd.f32 0.0, %v2811
      %2813 = vmatmul.bf16.gmra.mxu0 %v1473
      %v2814 = vpop.f32.mrf.mxu0
      %v2815 = vadd.f32 0.0, %v2814
      %v2816 = vpop.f32.mrf.mxu0
      %v2817 = vadd.f32 0.0, %v2816
      %2818 = vmatmul.bf16.gmra.mxu0 %v2305
      %v2819 = vpop.f32.mrf.mxu0
      %v2820 = vadd.f32 0.0, %v2819
      %v2821 = vpop.f32.mrf.mxu0
      %v2822 = vadd.f32 0.0, %v2821
      %2823 = vmatmul.bf16.gmra.mxu0 %v2735
      %v2824 = vpop.f32.mrf.mxu0
      %v2825 = vadd.f32 0.0, %v2824
      %v2826 = vpop.f32.mrf.mxu0
      %v2827 = vadd.f32 0.0, %v2826
      %2828 = vdwg.mxu0
      %v2829 = vadd.f32 %v2673, %v2750
      %v2830 = vadd.f32 %v2674, %v2752
      %v2831 = vadd.f32 %v2675, %v2755
      %v2832 = vadd.f32 %v2676, %v2757
      %v2833 = vadd.f32 %v2677, %v2760
      %v2834 = vadd.f32 %v2678, %v2762
      %v2835 = vadd.f32 %v2679, %v2765
      %v2836 = vadd.f32 %v2680, %v2767
      %v2837 = vadd.f32 %v2681, %v2770
      %v2838 = vadd.f32 %v2682, %v2772
      %v2839 = vadd.f32 %v2683, %v2775
      %v2840 = vadd.f32 %v2684, %v2777
      %v2841 = vadd.f32 %v2685, %v2780
      %v2842 = vadd.f32 %v2686, %v2782
      %v2843 = vadd.f32 %v2687, %v2785
      %v2844 = vadd.f32 %v2688, %v2787
      %v2845 = vadd.f32 %v2689, %v2790
      %v2846 = vadd.f32 %v2690, %v2792
      %v2847 = vadd.f32 %v2691, %v2795
      %v2848 = vadd.f32 %v2692, %v2797
      %v2849 = vadd.f32 %v2693, %v2800
      %v2850 = vadd.f32 %v2694, %v2802
      %v2851 = vadd.f32 %v2695, %v2805
      %v2852 = vadd.f32 %v2696, %v2807
      %v2853 = vadd.f32 %v2697, %v2810
      %v2854 = vadd.f32 %v2698, %v2812
      %v2855 = vadd.f32 %v2699, %v2815
      %v2856 = vadd.f32 %v2700, %v2817
      %v2857 = vadd.f32 %v2701, %v2820
      %v2858 = vadd.f32 %v2702, %v2822
      %v2859 = vadd.f32 %v2703, %v2825
      %v2860 = vadd.f32 %v2704, %v2827
      %v2862 = vrot.slane %v985, 5
      %v2863 = vrot.slane %v2862, 4
      %v2864 = vrot.slane %v986, 5
      %v2865 = vsel %vm1806, %v2863, %v2864
      %v2866 = vrot.slane %v2864, 4
      %v2867 = vrot.slane %v987, 5
      %v2868 = vsel %vm1806, %v2866, %v2867
      %s2869 = scalar_lea.vmem %s3, 32
      %v2870 = vld [vmem:[%s2869] sm:$0xf]
      %v2871 = vunpack.c.l.b16 %v2865
      %v2872 = vunpack.c.l.b16 %v2868
      %v2873 = vpack.c.b16 %v2872, %v2871
      %v2875 = vsel %vm1426, %v2873, 0
      %v2878 = vsel %vm1475, %v2870, 0
      %2880 = vmatpush.bf16.msra.mxu0 0
      %2881 = vmatpush.bf16.msra.mxu0 0
      %2882 = vmatpush.bf16.msra.mxu0 0
      %2883 = vmatpush.bf16.msra.mxu0 0
      %2884 = vmatpush.bf16.msra.mxu0 0
      %2885 = vmatpush.bf16.msra.mxu0 0
      %2886 = vmatpush.bf16.msra.mxu0 0
      %2887 = vmatpush.bf16.msra.mxu0 %v2878
      %2888 = vmatmul.bf16.gmra.mxu0 %v1976
      %v2889 = vpop.f32.mrf.mxu0
      %v2890 = vadd.f32 0.0, %v2889
      %v2891 = vpop.f32.mrf.mxu0
      %v2892 = vadd.f32 0.0, %v2891
      %2893 = vmatmul.bf16.gmra.mxu0 %v1979
      %v2894 = vpop.f32.mrf.mxu0
      %v2895 = vadd.f32 0.0, %v2894
      %v2896 = vpop.f32.mrf.mxu0
      %v2897 = vadd.f32 0.0, %v2896
      %2898 = vmatmul.bf16.gmra.mxu0 %v1982
      %v2899 = vpop.f32.mrf.mxu0
      %v2900 = vadd.f32 0.0, %v2899
      %v2901 = vpop.f32.mrf.mxu0
      %v2902 = vadd.f32 0.0, %v2901
      %2903 = vmatmul.bf16.gmra.mxu0 %v1985
      %v2904 = vpop.f32.mrf.mxu0
      %v2905 = vadd.f32 0.0, %v2904
      %v2906 = vpop.f32.mrf.mxu0
      %v2907 = vadd.f32 0.0, %v2906
      %2908 = vmatmul.bf16.gmra.mxu0 %v1988
      %v2909 = vpop.f32.mrf.mxu0
      %v2910 = vadd.f32 0.0, %v2909
      %v2911 = vpop.f32.mrf.mxu0
      %v2912 = vadd.f32 0.0, %v2911
      %2913 = vmatmul.bf16.gmra.mxu0 %v1991
      %v2914 = vpop.f32.mrf.mxu0
      %v2915 = vadd.f32 0.0, %v2914
      %v2916 = vpop.f32.mrf.mxu0
      %v2917 = vadd.f32 0.0, %v2916
      %2918 = vmatmul.bf16.gmra.mxu0 %v1994
      %v2919 = vpop.f32.mrf.mxu0
      %v2920 = vadd.f32 0.0, %v2919
      %v2921 = vpop.f32.mrf.mxu0
      %v2922 = vadd.f32 0.0, %v2921
      %2923 = vmatmul.bf16.gmra.mxu0 %v1997
      %v2924 = vpop.f32.mrf.mxu0
      %v2925 = vadd.f32 0.0, %v2924
      %v2926 = vpop.f32.mrf.mxu0
      %v2927 = vadd.f32 0.0, %v2926
      %2928 = vmatmul.bf16.gmra.mxu0 %v2000
      %v2929 = vpop.f32.mrf.mxu0
      %v2930 = vadd.f32 0.0, %v2929
      %v2931 = vpop.f32.mrf.mxu0
      %v2932 = vadd.f32 0.0, %v2931
      %2933 = vmatmul.bf16.gmra.mxu0 %v2003
      %v2934 = vpop.f32.mrf.mxu0
      %v2935 = vadd.f32 0.0, %v2934
      %v2936 = vpop.f32.mrf.mxu0
      %v2937 = vadd.f32 0.0, %v2936
      %2938 = vmatmul.bf16.gmra.mxu0 %v2006
      %v2939 = vpop.f32.mrf.mxu0
      %v2940 = vadd.f32 0.0, %v2939
      %v2941 = vpop.f32.mrf.mxu0
      %v2942 = vadd.f32 0.0, %v2941
      %2943 = vmatmul.bf16.gmra.mxu0 %v2009
      %v2944 = vpop.f32.mrf.mxu0
      %v2945 = vadd.f32 0.0, %v2944
      %v2946 = vpop.f32.mrf.mxu0
      %v2947 = vadd.f32 0.0, %v2946
      %2948 = vmatmul.bf16.gmra.mxu0 %v2012
      %v2949 = vpop.f32.mrf.mxu0
      %v2950 = vadd.f32 0.0, %v2949
      %v2951 = vpop.f32.mrf.mxu0
      %v2952 = vadd.f32 0.0, %v2951
      %2953 = vmatmul.bf16.gmra.mxu0 %v2015
      %v2954 = vpop.f32.mrf.mxu0
      %v2955 = vadd.f32 0.0, %v2954
      %v2956 = vpop.f32.mrf.mxu0
      %v2957 = vadd.f32 0.0, %v2956
      %2958 = vmatmul.bf16.gmra.mxu0 %v2445
      %v2959 = vpop.f32.mrf.mxu0
      %v2960 = vadd.f32 0.0, %v2959
      %v2961 = vpop.f32.mrf.mxu0
      %v2962 = vadd.f32 0.0, %v2961
      %2963 = vmatmul.bf16.gmra.mxu0 %v2875
      %v2964 = vpop.f32.mrf.mxu0
      %v2965 = vadd.f32 0.0, %v2964
      %v2966 = vpop.f32.mrf.mxu0
      %v2967 = vadd.f32 0.0, %v2966
      %2968 = vdwg.mxu0
      %v2969 = vadd.f32 %v2829, %v2890
      %v2970 = vadd.f32 %v2830, %v2892
      %v2971 = vadd.f32 %v2831, %v2895
      %v2972 = vadd.f32 %v2832, %v2897
      %v2973 = vadd.f32 %v2833, %v2900
      %v2974 = vadd.f32 %v2834, %v2902
      %v2975 = vadd.f32 %v2835, %v2905
      %v2976 = vadd.f32 %v2836, %v2907
      %v2977 = vadd.f32 %v2837, %v2910
      %v2978 = vadd.f32 %v2838, %v2912
      %v2979 = vadd.f32 %v2839, %v2915
      %v2980 = vadd.f32 %v2840, %v2917
      %v2981 = vadd.f32 %v2841, %v2920
      %v2982 = vadd.f32 %v2842, %v2922
      %v2983 = vadd.f32 %v2843, %v2925
      %v2984 = vadd.f32 %v2844, %v2927
      %v2985 = vadd.f32 %v2845, %v2930
      %v2986 = vadd.f32 %v2846, %v2932
      %v2987 = vadd.f32 %v2847, %v2935
      %v2988 = vadd.f32 %v2848, %v2937
      %v2989 = vadd.f32 %v2849, %v2940
      %v2990 = vadd.f32 %v2850, %v2942
      %v2991 = vadd.f32 %v2851, %v2945
      %v2992 = vadd.f32 %v2852, %v2947
      %v2993 = vadd.f32 %v2853, %v2950
      %v2994 = vadd.f32 %v2854, %v2952
      %v2995 = vadd.f32 %v2855, %v2955
      %v2996 = vadd.f32 %v2856, %v2957
      %v2997 = vadd.f32 %v2857, %v2960
      %v2998 = vadd.f32 %v2858, %v2962
      %v2999 = vadd.f32 %v2859, %v2965
      %v3000 = vadd.f32 %v2860, %v2967
      %3001 = vst.msk [vmem:[%s231] sm:$0xff] %vm1426, %v2969
      %3002 = vst.msk [vmem:[%s231 + $0x8] sm:$0xff] %vm1426, %v2970
      %3003 = vst.msk [vmem:[%s231 + $0x10] sm:$0xff] %vm1426, %v2971
      %3004 = vst.msk [vmem:[%s231 + $0x18] sm:$0xff] %vm1426, %v2972
      %3005 = vst.msk [vmem:[%s231 + $0x20] sm:$0xff] %vm1426, %v2973
      %3006 = vst.msk [vmem:[%s231 + $0x28] sm:$0xff] %vm1426, %v2974
      %3007 = vst.msk [vmem:[%s231 + $0x30] sm:$0xff] %vm1426, %v2975
      %3008 = vst.msk [vmem:[%s231 + $0x38] sm:$0xff] %vm1426, %v2976
      %3009 = vst.msk [vmem:[%s231 + $0x40] sm:$0xff] %vm1426, %v2977
      %3010 = vst.msk [vmem:[%s231 + $0x48] sm:$0xff] %vm1426, %v2978
      %3011 = vst.msk [vmem:[%s231 + $0x50] sm:$0xff] %vm1426, %v2979
      %3012 = vst.msk [vmem:[%s231 + $0x58] sm:$0xff] %vm1426, %v2980
      %3013 = vst.msk [vmem:[%s231 + $0x60] sm:$0xff] %vm1426, %v2981
      %3014 = vst.msk [vmem:[%s231 + $0x68] sm:$0xff] %vm1426, %v2982
      %3015 = vst.msk [vmem:[%s231 + $0x70] sm:$0xff] %vm1426, %v2983
      %3016 = vst.msk [vmem:[%s231 + $0x78] sm:$0xff] %vm1426, %v2984
      %3017 = vst.msk [vmem:[%s231 + $0x80] sm:$0xff] %vm1426, %v2985
      %3018 = vst.msk [vmem:[%s231 + $0x88] sm:$0xff] %vm1426, %v2986
      %3019 = vst.msk [vmem:[%s231 + $0x90] sm:$0xff] %vm1426, %v2987
      %3020 = vst.msk [vmem:[%s231 + $0x98] sm:$0xff] %vm1426, %v2988
      %3021 = vst.msk [vmem:[%s231 + $0xa0] sm:$0xff] %vm1426, %v2989
      %3022 = vst.msk [vmem:[%s231 + $0xa8] sm:$0xff] %vm1426, %v2990
      %3023 = vst.msk [vmem:[%s231 + $0xb0] sm:$0xff] %vm1426, %v2991
      %3024 = vst.msk [vmem:[%s231 + $0xb8] sm:$0xff] %vm1426, %v2992
      %3025 = vst.msk [vmem:[%s231 + $0xc0] sm:$0xff] %vm1426, %v2993
      %3026 = vst.msk [vmem:[%s231 + $0xc8] sm:$0xff] %vm1426, %v2994
      %3027 = vst.msk [vmem:[%s231 + $0xd0] sm:$0xff] %vm1426, %v2995
      %3028 = vst.msk [vmem:[%s231 + $0xd8] sm:$0xff] %vm1426, %v2996
      %3029 = vst.msk [vmem:[%s231 + $0xe0] sm:$0xff] %vm1426, %v2997
      %3030 = vst.msk [vmem:[%s231 + $0xe8] sm:$0xff] %vm1426, %v2998
      %3031 = vst.msk [vmem:[%s231 + $0xf0] sm:$0xff] %vm1426, %v2999
      %3032 = vst.msk [vmem:[%s231 + $0xf8] sm:$0xff] %vm1426, %v3000
      %v3033 = vsel %vm1426, %v2969, 0.0
      %v3034 = vsel %vm1426, %v2970, 0.0
      %v3035 = vadd.f32 %v3033, %v3034
      %v3036 = vsel %vm1426, %v2971, 0.0
      %v3037 = vadd.f32 %v3035, %v3036
      %v3038 = vsel %vm1426, %v2972, 0.0
      %v3039 = vadd.f32 %v3037, %v3038
      %v3040 = vsel %vm1426, %v2973, 0.0
      %v3041 = vadd.f32 %v3039, %v3040
      %v3042 = vsel %vm1426, %v2974, 0.0
      %v3043 = vadd.f32 %v3041, %v3042
      %v3044 = vsel %vm1426, %v2975, 0.0
      %v3045 = vadd.f32 %v3043, %v3044
      %v3046 = vsel %vm1426, %v2976, 0.0
      %v3047 = vadd.f32 %v3045, %v3046
      %v3048 = vsel %vm1426, %v2977, 0.0
      %v3049 = vadd.f32 %v3047, %v3048
      %v3050 = vsel %vm1426, %v2978, 0.0
      %v3051 = vadd.f32 %v3049, %v3050
      %v3052 = vsel %vm1426, %v2979, 0.0
      %v3053 = vadd.f32 %v3051, %v3052
      %v3054 = vsel %vm1426, %v2980, 0.0
      %v3055 = vadd.f32 %v3053, %v3054
      %v3056 = vsel %vm1426, %v2981, 0.0
      %v3057 = vadd.f32 %v3055, %v3056
      %v3058 = vsel %vm1426, %v2982, 0.0
      %v3059 = vadd.f32 %v3057, %v3058
      %v3060 = vsel %vm1426, %v2983, 0.0
      %v3061 = vadd.f32 %v3059, %v3060
      %v3062 = vsel %vm1426, %v2984, 0.0
      %v3063 = vadd.f32 %v3061, %v3062
      %v3064 = vsel %vm1426, %v2985, 0.0
      %v3065 = vadd.f32 %v3063, %v3064
      %v3066 = vsel %vm1426, %v2986, 0.0
      %v3067 = vadd.f32 %v3065, %v3066
      %v3068 = vsel %vm1426, %v2987, 0.0
      %v3069 = vadd.f32 %v3067, %v3068
      %v3070 = vsel %vm1426, %v2988, 0.0
      %v3071 = vadd.f32 %v3069, %v3070
      %v3072 = vsel %vm1426, %v2989, 0.0
      %v3073 = vadd.f32 %v3071, %v3072
      %v3074 = vsel %vm1426, %v2990, 0.0
      %v3075 = vadd.f32 %v3073, %v3074
      %v3076 = vsel %vm1426, %v2991, 0.0
      %v3077 = vadd.f32 %v3075, %v3076
      %v3078 = vsel %vm1426, %v2992, 0.0
      %v3079 = vadd.f32 %v3077, %v3078
      %v3080 = vsel %vm1426, %v2993, 0.0
      %v3081 = vadd.f32 %v3079, %v3080
      %v3082 = vsel %vm1426, %v2994, 0.0
      %v3083 = vadd.f32 %v3081, %v3082
      %v3084 = vsel %vm1426, %v2995, 0.0
      %v3085 = vadd.f32 %v3083, %v3084
      %v3086 = vsel %vm1426, %v2996, 0.0
      %v3087 = vadd.f32 %v3085, %v3086
      %v3088 = vsel %vm1426, %v2997, 0.0
      %v3089 = vadd.f32 %v3087, %v3088
      %v3090 = vsel %vm1426, %v2998, 0.0
      %v3091 = vadd.f32 %v3089, %v3090
      %v3092 = vsel %vm1426, %v2999, 0.0
      %v3093 = vadd.f32 %v3091, %v3092
      %v3094 = vsel %vm1426, %v3000, 0.0
      %v3095 = vadd.f32 %v3093, %v3094
      %v3096 = vrot.slane %v3095, 4
      %v3097 = vadd.f32 %v3095, %v3096
      %v3098 = vrot.slane %v3097, 2
      %v3099 = vadd.f32 %v3097, %v3098
      %v3100 = vrot.slane %v3099, 1
      %v3101 = vadd.f32 %v3099, %v3100
      %v3102 = vmul.f32 %v3101, 0.00390625
      %v3103 = vsub.f32 %v2969, %v3102
      %v3104 = vsub.f32 %v2970, %v3102
      %v3105 = vsub.f32 %v2971, %v3102
      %v3106 = vsub.f32 %v2972, %v3102
      %v3107 = vsub.f32 %v2973, %v3102
      %v3108 = vsub.f32 %v2974, %v3102
      %v3109 = vsub.f32 %v2975, %v3102
      %v3110 = vsub.f32 %v2976, %v3102
      %v3111 = vsub.f32 %v2977, %v3102
      %v3112 = vsub.f32 %v2978, %v3102
      %v3113 = vsub.f32 %v2979, %v3102
      %v3114 = vsub.f32 %v2980, %v3102
      %v3115 = vsub.f32 %v2981, %v3102
      %v3116 = vsub.f32 %v2982, %v3102
      %v3117 = vsub.f32 %v2983, %v3102
      %v3118 = vsub.f32 %v2984, %v3102
      %v3119 = vsub.f32 %v2985, %v3102
      %v3120 = vsub.f32 %v2986, %v3102
      %v3121 = vsub.f32 %v2987, %v3102
      %v3122 = vsub.f32 %v2988, %v3102
      %v3123 = vsub.f32 %v2989, %v3102
      %v3124 = vsub.f32 %v2990, %v3102
      %v3125 = vsub.f32 %v2991, %v3102
      %v3126 = vsub.f32 %v2992, %v3102
      %v3127 = vsub.f32 %v2993, %v3102
      %v3128 = vsub.f32 %v2994, %v3102
      %v3129 = vsub.f32 %v2995, %v3102
      %v3130 = vsub.f32 %v2996, %v3102
      %v3131 = vsub.f32 %v2997, %v3102
      %v3132 = vsub.f32 %v2998, %v3102
      %v3133 = vsub.f32 %v2999, %v3102
      %v3134 = vsub.f32 %v3000, %v3102
      %3135 = vst.msk [vmem:[%s235] sm:$0x1] %vm240, %v3101
      %v3136 = vmul.f32 %v3103, %v3103
      %v3137 = vmul.f32 %v3104, %v3104
      %v3138 = vmul.f32 %v3105, %v3105
      %v3139 = vmul.f32 %v3106, %v3106
      %v3140 = vmul.f32 %v3107, %v3107
      %v3141 = vmul.f32 %v3108, %v3108
      %v3142 = vmul.f32 %v3109, %v3109
      %v3143 = vmul.f32 %v3110, %v3110
      %v3144 = vmul.f32 %v3111, %v3111
      %v3145 = vmul.f32 %v3112, %v3112
      %v3146 = vmul.f32 %v3113, %v3113
      %v3147 = vmul.f32 %v3114, %v3114
      %v3148 = vmul.f32 %v3115, %v3115
      %v3149 = vmul.f32 %v3116, %v3116
      %v3150 = vmul.f32 %v3117, %v3117
      %v3151 = vmul.f32 %v3118, %v3118
      %v3152 = vmul.f32 %v3119, %v3119
      %v3153 = vmul.f32 %v3120, %v3120
      %v3154 = vmul.f32 %v3121, %v3121
      %v3155 = vmul.f32 %v3122, %v3122
      %v3156 = vmul.f32 %v3123, %v3123
      %v3157 = vmul.f32 %v3124, %v3124
      %v3158 = vmul.f32 %v3125, %v3125
      %v3159 = vmul.f32 %v3126, %v3126
      %v3160 = vmul.f32 %v3127, %v3127
      %v3161 = vmul.f32 %v3128, %v3128
      %v3162 = vmul.f32 %v3129, %v3129
      %v3163 = vmul.f32 %v3130, %v3130
      %v3164 = vmul.f32 %v3131, %v3131
      %v3165 = vmul.f32 %v3132, %v3132
      %v3166 = vmul.f32 %v3133, %v3133
      %v3167 = vmul.f32 %v3134, %v3134
      %v3168 = vsel %vm1426, %v3136, 0.0
      %v3169 = vsel %vm1426, %v3137, 0.0
      %v3170 = vadd.f32 %v3168, %v3169
      %v3171 = vsel %vm1426, %v3138, 0.0
      %v3172 = vadd.f32 %v3170, %v3171
      %v3173 = vsel %vm1426, %v3139, 0.0
      %v3174 = vadd.f32 %v3172, %v3173
      %v3175 = vsel %vm1426, %v3140, 0.0
      %v3176 = vadd.f32 %v3174, %v3175
      %v3177 = vsel %vm1426, %v3141, 0.0
      %v3178 = vadd.f32 %v3176, %v3177
      %v3179 = vsel %vm1426, %v3142, 0.0
      %v3180 = vadd.f32 %v3178, %v3179
      %v3181 = vsel %vm1426, %v3143, 0.0
      %v3182 = vadd.f32 %v3180, %v3181
      %v3183 = vsel %vm1426, %v3144, 0.0
      %v3184 = vadd.f32 %v3182, %v3183
      %v3185 = vsel %vm1426, %v3145, 0.0
      %v3186 = vadd.f32 %v3184, %v3185
      %v3187 = vsel %vm1426, %v3146, 0.0
      %v3188 = vadd.f32 %v3186, %v3187
      %v3189 = vsel %vm1426, %v3147, 0.0
      %v3190 = vadd.f32 %v3188, %v3189
      %v3191 = vsel %vm1426, %v3148, 0.0
      %v3192 = vadd.f32 %v3190, %v3191
      %v3193 = vsel %vm1426, %v3149, 0.0
      %v3194 = vadd.f32 %v3192, %v3193
      %v3195 = vsel %vm1426, %v3150, 0.0
      %v3196 = vadd.f32 %v3194, %v3195
      %v3197 = vsel %vm1426, %v3151, 0.0
      %v3198 = vadd.f32 %v3196, %v3197
      %v3199 = vsel %vm1426, %v3152, 0.0
      %v3200 = vadd.f32 %v3198, %v3199
      %v3201 = vsel %vm1426, %v3153, 0.0
      %v3202 = vadd.f32 %v3200, %v3201
      %v3203 = vsel %vm1426, %v3154, 0.0
      %v3204 = vadd.f32 %v3202, %v3203
      %v3205 = vsel %vm1426, %v3155, 0.0
      %v3206 = vadd.f32 %v3204, %v3205
      %v3207 = vsel %vm1426, %v3156, 0.0
      %v3208 = vadd.f32 %v3206, %v3207
      %v3209 = vsel %vm1426, %v3157, 0.0
      %v3210 = vadd.f32 %v3208, %v3209
      %v3211 = vsel %vm1426, %v3158, 0.0
      %v3212 = vadd.f32 %v3210, %v3211
      %v3213 = vsel %vm1426, %v3159, 0.0
      %v3214 = vadd.f32 %v3212, %v3213
      %v3215 = vsel %vm1426, %v3160, 0.0
      %v3216 = vadd.f32 %v3214, %v3215
      %v3217 = vsel %vm1426, %v3161, 0.0
      %v3218 = vadd.f32 %v3216, %v3217
      %v3219 = vsel %vm1426, %v3162, 0.0
      %v3220 = vadd.f32 %v3218, %v3219
      %v3221 = vsel %vm1426, %v3163, 0.0
      %v3222 = vadd.f32 %v3220, %v3221
      %v3223 = vsel %vm1426, %v3164, 0.0
      %v3224 = vadd.f32 %v3222, %v3223
      %v3225 = vsel %vm1426, %v3165, 0.0
      %v3226 = vadd.f32 %v3224, %v3225
      %v3227 = vsel %vm1426, %v3166, 0.0
      %v3228 = vadd.f32 %v3226, %v3227
      %v3229 = vsel %vm1426, %v3167, 0.0
      %v3230 = vadd.f32 %v3228, %v3229
      %v3231 = vrot.slane %v3230, 4
      %v3232 = vadd.f32 %v3230, %v3231
      %v3233 = vrot.slane %v3232, 2
      %v3234 = vadd.f32 %v3232, %v3233
      %v3235 = vrot.slane %v3234, 1
      %v3236 = vadd.f32 %v3234, %v3235
      %3237 = vst.msk [vmem:[%s235 + $0x1] sm:$0x1] %vm240, %v3236
      %p3238 = scmp.lt.s32.totalorder %s17, 1
      %s3239 = scalar_select %p3238, %s17, 1
      %s3240 = smul.addr %s3239, 32
      %s3241 = smul.addr %s3240, 8
      %s3242 = scalar_lea.vmem %s4, %s3241
      %p3243 = scmp.lt.s32.totalorder %s17, 1
      %s3244 = scalar_select %p3243, %s17, 1
      %s3245 = smul.addr %s3244, 2
      %s3246 = scalar_lea.vmem %s5, %s3245
      // Predicated region
      $region37: #{upsampling_block.7} parent=35 // pred_check
        %p3247 = pneg %p124
      $region38: #{upsampling_block.7} parent=35 // pred_check_branch
        %3249 = sbr.rel (%p3247) target = $region40
      $region39: #{upsampling_block.7} parent=35 // pred_region
        _
      $region40: #{upsampling_block.7} parent=35 // pred_fallthru
        _
      // Predicated region
      $region41: #{upsampling_block.7} parent=35 // pred_check
        %p3250 = pneg %p150
      $region42: #{upsampling_block.7} parent=35 // pred_check_branch
        %3252 = sbr.rel (%p3250) target = $region44
      $region43: #{upsampling_block.7} parent=35 // pred_region
        _
      $region44: #{upsampling_block.7} parent=35 // pred_fallthru
        _
    $region36: #{upsampling_block.7} parent=5 // pred_fallthru
      _
    %p3253 = scmp.le.s32.totalorder 2, %s12
    // Predicated region
    $region45: #{upsampling_block.7} parent=5 // pred_check
      %p3254 = pneg %p3253
    $region46: #{upsampling_block.7} parent=5 // pred_check_branch
      %3256 = sbr.rel (%p3254) target = $region48
    $region47: #{upsampling_block.7} parent=5 // pred_region
      %s3257 = ssub.s32 %s12, 2
      // Predicated region
      $region49: #{upsampling_block.7} parent=47 // pred_check
        %p3258 = pneg %p130
      $region50: #{upsampling_block.7} parent=47 // pred_check_branch
        %3260 = sbr.rel (%p3258) target = $region52
      $region51: #{upsampling_block.7} parent=47 // pred_region
        %p3261 = scmp.lt.s32.totalorder %s18, 1
        %s3262 = scalar_select %p3261, %s18, 1
        %s3263 = smul.addr %s3262, 32
        %s3264 = smul.addr %s3263, 8
        %s3265 = scalar_lea.vmem %s4, %s3264
      $region52: #{upsampling_block.7} parent=47 // pred_fallthru
        _
      // Predicated region
      $region53: #{upsampling_block.7} parent=47 // pred_check
        %p3266 = pneg %p156
      $region54: #{upsampling_block.7} parent=47 // pred_check_branch
        %3268 = sbr.rel (%p3266) target = $region56
      $region55: #{upsampling_block.7} parent=47 // pred_region
        %p3269 = scmp.lt.s32.totalorder %s18, 1
        %s3270 = scalar_select %p3269, %s18, 1
        %s3271 = smul.addr %s3270, 2
        %s3272 = scalar_lea.vmem %s5, %s3271
      $region56: #{upsampling_block.7} parent=47 // pred_fallthru
        _
    $region48: #{upsampling_block.7} parent=5 // pred_fallthru
      _
  $region6: #{upsampling_block.7} parent=0 // loop_footer
    %s16 = sadd.s32 1, %s12
  $region7: #{upsampling_block.7} parent=0 // loop_footer_branch
    %11 = sbr.rel target = $region3
  $region8: #{upsampling_block.7} parent=0 // loop_exit
    _

// kernel: upsampling_block.6
$region0: #{upsampling_block.6}
  #allocation0 [shape = 'u32[]', space=smem, size = 0x4, offset = 0x4, fixed_abs, tag = 'smem constant byte address 0x4 - core index']
  #allocation1 [shape = 'u32[72,128]{1,0:T(1,128)}', space=vmem, size = 0x9000, scoped, tag = 'internal scratch']
  #allocation2 [shape = 'bf16[18,18,8]{2,1,0:T(8,128)(2,1)}', space=vmem, size = 0x1b000, scoped, tag = 'scratch operand']
  #allocation3 [shape = 'bf16[18,18,8]{2,1,0:T(8,128)(2,1)}', space=vmem, size = 0x1b000, scoped, tag = 'scratch operand']
  %s0 = inlined_call_operand.vmem [shape: bf16[2,16,16,8], index: 0, kind: input, shape index: {}]
  %s1 = inlined_call_operand.vmem [shape: bf16[2,16,16,8], index: 1, kind: input, shape index: {}]
  %s2 = inlined_call_operand.vmem [shape: f32[1,8], index: 2, kind: input, shape index: {}]
  %s3 = inlined_call_operand.vmem [shape: f32[1,8], index: 3, kind: input, shape index: {}]
  %s4 = inlined_call_operand.vmem [shape: bf16[3,3,8,8], index: 4, kind: input, shape index: {}]
  %s5 = inlined_call_operand.vmem [shape: bf16[3,3,8,8], index: 5, kind: input, shape index: {}]
  %s6 = inlined_call_operand.vmem [shape: bf16[2,16,16,8], index: 6, kind: output, shape index: {0}]
  %s7 = inlined_call_operand.vmem [shape: f32[2,2,8], index: 7, kind: output, shape index: {1}]
  %8 = xla_tuple %s6, %s7
  %s9 = sld [smem:[#allocation0]]
  $region65: #{upsampling_block.6} parent=0
    _
  %s11 = ssub.s32 1, %s9
  %s12 = scalar_select 0, %s11, %s9
  loop: start=0, step=1, limit=4
  $region2: #{upsampling_block.6} parent=0 // loop_pre_header
    _
  $region3: #{upsampling_block.6} parent=0 // loop_header
    %s14 = sphi 0, %s18
    %p15 = scmp.ge.s32.totalorder %s14, 4
    %s24 = sphi 0, %s26
    %s27 = sphi 0, %s24
    %s28 = sphi 0, %s27
    %s44 = sphi 0, %s28
    %s50 = sphi 0, %s52
    %s53 = sphi 0, %s50
    %s54 = sphi 0, %s53
    %s70 = sphi 0, %s54
    %s74 = sphi 0, %s74
    %s76 = sphi 0, %s74
    %s77 = sphi 0, %s76
    %s91 = sphi 0, %s77
    %s95 = sphi 0, %s95
    %s97 = sphi 0, %s95
    %s98 = sphi 0, %s97
    %s112 = sphi 0, %s98
    %s116 = sphi 0, %s116
    %s118 = sphi 0, %s116
    %s119 = sphi 0, %s118
    %s133 = sphi 0, %s119
    %s137 = sphi 0, %s137
    %s139 = sphi 0, %s137
    %s140 = sphi 0, %s139
    %s154 = sphi 0, %s140
    %s160 = sphi 0, %s162
    %s163 = sphi 0, %s160
    %s164 = sphi 0, %s163
    %s180 = sphi 0, %s164
    %s186 = sphi 0, %s188
    %s189 = sphi 0, %s186
    %s190 = sphi 0, %s189
    %s206 = sphi 0, %s190
  $region4: #{upsampling_block.6} parent=0 // loop_header_branch
    %17 = sbr.rel (%p15) target = $region8
  $region5: #{upsampling_block.6} parent=0 // loop_body
    %s19 = ssub.s32 %s14, 1
    %s20 = ssub.s32 %s14, 2
    %s21 = sadd.s32 %s14, 1
    %s22 = ssub.s32 %s14, %s21
    %p23 = scmp.eq.s32.totalorder %s22, 0
    %s25 = sadd.s32 %s24, 1
    %s26 = scalar_select %p23, %s24, %s25
    %p29 = pneg %p23
    %p30 = scmp.eq.s32.totalorder %s14, 1
    %p31 = por %p29, %p30
    %p32 = scmp.ne.s32.totalorder %s24, %s27
    %p33 = scmp.eq.s32.totalorder %s14, 0
    %p34 = por %p32, %p33
    %p35 = scmp.ne.s32.totalorder %s24, %s27
    %p36 = scmp.eq.s32.totalorder %s19, 1
    %p37 = por %p35, %p36
    %p38 = scmp.ne.s32.totalorder %s27, %s28
    %p39 = scmp.eq.s32.totalorder %s19, 0
    %p40 = por %p38, %p39
    %p41 = scmp.ne.s32.totalorder %s27, %s28
    %p42 = scmp.eq.s32.totalorder %s20, 1
    %p43 = por %p41, %p42
    %p45 = scmp.ne.s32.totalorder %s28, %s44
    %p46 = scmp.eq.s32.totalorder %s20, 0
    %p47 = por %p45, %p46
    %s48 = ssub.s32 %s14, %s21
    %p49 = scmp.eq.s32.totalorder %s48, 0
    %s51 = sadd.s32 %s50, 1
    %s52 = scalar_select %p49, %s50, %s51
    %p55 = pneg %p49
    %p56 = scmp.eq.s32.totalorder %s14, 1
    %p57 = por %p55, %p56
    %p58 = scmp.ne.s32.totalorder %s50, %s53
    %p59 = scmp.eq.s32.totalorder %s14, 0
    %p60 = por %p58, %p59
    %p61 = scmp.ne.s32.totalorder %s50, %s53
    %p62 = scmp.eq.s32.totalorder %s19, 1
    %p63 = por %p61, %p62
    %p64 = scmp.ne.s32.totalorder %s53, %s54
    %p65 = scmp.eq.s32.totalorder %s19, 0
    %p66 = por %p64, %p65
    %p67 = scmp.ne.s32.totalorder %s53, %s54
    %p68 = scmp.eq.s32.totalorder %s20, 1
    %p69 = por %p67, %p68
    %p71 = scmp.ne.s32.totalorder %s54, %s70
    %p72 = scmp.eq.s32.totalorder %s20, 0
    %p73 = por %p71, %p72
    %s75 = sadd.s32 %s74, 1
    %p78 = scmp.eq.s32.totalorder %s14, 1
    %p79 = scmp.ne.s32.totalorder %s74, %s76
    %p80 = scmp.eq.s32.totalorder %s14, 0
    %p81 = por %p79, %p80
    %p82 = scmp.ne.s32.totalorder %s74, %s76
    %p83 = scmp.eq.s32.totalorder %s19, 1
    %p84 = por %p82, %p83
    %p85 = scmp.ne.s32.totalorder %s76, %s77
    %p86 = scmp.eq.s32.totalorder %s19, 0
    %p87 = por %p85, %p86
    %p88 = scmp.ne.s32.totalorder %s76, %s77
    %p89 = scmp.eq.s32.totalorder %s20, 1
    %p90 = por %p88, %p89
    %p92 = scmp.ne.s32.totalorder %s77, %s91
    %p93 = scmp.eq.s32.totalorder %s20, 0
    %p94 = por %p92, %p93
    %s96 = sadd.s32 %s95, 1
    %p99 = scmp.eq.s32.totalorder %s14, 1
    %p100 = scmp.ne.s32.totalorder %s95, %s97
    %p101 = scmp.eq.s32.totalorder %s14, 0
    %p102 = por %p100, %p101
    %p103 = scmp.ne.s32.totalorder %s95, %s97
    %p104 = scmp.eq.s32.totalorder %s19, 1
    %p105 = por %p103, %p104
    %p106 = scmp.ne.s32.totalorder %s97, %s98
    %p107 = scmp.eq.s32.totalorder %s19, 0
    %p108 = por %p106, %p107
    %p109 = scmp.ne.s32.totalorder %s97, %s98
    %p110 = scmp.eq.s32.totalorder %s20, 1
    %p111 = por %p109, %p110
    %p113 = scmp.ne.s32.totalorder %s98, %s112
    %p114 = scmp.eq.s32.totalorder %s20, 0
    %p115 = por %p113, %p114
    %s117 = sadd.s32 %s116, 1
    %p120 = scmp.eq.s32.totalorder %s14, 1
    %p121 = scmp.ne.s32.totalorder %s116, %s118
    %p122 = scmp.eq.s32.totalorder %s14, 0
    %p123 = por %p121, %p122
    %p124 = scmp.ne.s32.totalorder %s116, %s118
    %p125 = scmp.eq.s32.totalorder %s19, 1
    %p126 = por %p124, %p125
    %p127 = scmp.ne.s32.totalorder %s118, %s119
    %p128 = scmp.eq.s32.totalorder %s19, 0
    %p129 = por %p127, %p128
    %p130 = scmp.ne.s32.totalorder %s118, %s119
    %p131 = scmp.eq.s32.totalorder %s20, 1
    %p132 = por %p130, %p131
    %p134 = scmp.ne.s32.totalorder %s119, %s133
    %p135 = scmp.eq.s32.totalorder %s20, 0
    %p136 = por %p134, %p135
    %s138 = sadd.s32 %s137, 1
    %p141 = scmp.eq.s32.totalorder %s14, 1
    %p142 = scmp.ne.s32.totalorder %s137, %s139
    %p143 = scmp.eq.s32.totalorder %s14, 0
    %p144 = por %p142, %p143
    %p145 = scmp.ne.s32.totalorder %s137, %s139
    %p146 = scmp.eq.s32.totalorder %s19, 1
    %p147 = por %p145, %p146
    %p148 = scmp.ne.s32.totalorder %s139, %s140
    %p149 = scmp.eq.s32.totalorder %s19, 0
    %p150 = por %p148, %p149
    %p151 = scmp.ne.s32.totalorder %s139, %s140
    %p152 = scmp.eq.s32.totalorder %s20, 1
    %p153 = por %p151, %p152
    %p155 = scmp.ne.s32.totalorder %s140, %s154
    %p156 = scmp.eq.s32.totalorder %s20, 0
    %p157 = por %p155, %p156
    %s158 = ssub.s32 %s14, %s21
    %p159 = scmp.eq.s32.totalorder %s158, 0
    %s161 = sadd.s32 %s160, 1
    %s162 = scalar_select %p159, %s160, %s161
    %p165 = pneg %p159
    %p166 = scmp.eq.s32.totalorder %s14, 1
    %p167 = por %p165, %p166
    %p168 = scmp.ne.s32.totalorder %s160, %s163
    %p169 = scmp.eq.s32.totalorder %s14, 0
    %p170 = por %p168, %p169
    %p171 = scmp.ne.s32.totalorder %s160, %s163
    %p172 = scmp.eq.s32.totalorder %s19, 1
    %p173 = por %p171, %p172
    %p174 = scmp.ne.s32.totalorder %s163, %s164
    %p175 = scmp.eq.s32.totalorder %s19, 0
    %p176 = por %p174, %p175
    %p177 = scmp.ne.s32.totalorder %s163, %s164
    %p178 = scmp.eq.s32.totalorder %s20, 1
    %p179 = por %p177, %p178
    %p181 = scmp.ne.s32.totalorder %s164, %s180
    %p182 = scmp.eq.s32.totalorder %s20, 0
    %p183 = por %p181, %p182
    %s184 = ssub.s32 %s14, %s21
    %p185 = scmp.eq.s32.totalorder %s184, 0
    %s187 = sadd.s32 %s186, 1
    %s188 = scalar_select %p185, %s186, %s187
    %p191 = pneg %p185
    %p192 = scmp.eq.s32.totalorder %s14, 1
    %p193 = por %p191, %p192
    %p194 = scmp.ne.s32.totalorder %s186, %s189
    %p195 = scmp.eq.s32.totalorder %s14, 0
    %p196 = por %p194, %p195
    %p197 = scmp.ne.s32.totalorder %s186, %s189
    %p198 = scmp.eq.s32.totalorder %s19, 1
    %p199 = por %p197, %p198
    %p200 = scmp.ne.s32.totalorder %s189, %s190
    %p201 = scmp.eq.s32.totalorder %s19, 0
    %p202 = por %p200, %p201
    %p203 = scmp.ne.s32.totalorder %s189, %s190
    %p204 = scmp.eq.s32.totalorder %s20, 1
    %p205 = por %p203, %p204
    %p207 = scmp.ne.s32.totalorder %s190, %s206
    %p208 = scmp.eq.s32.totalorder %s20, 0
    %p209 = por %p207, %p208
    %p210 = scmp.le.s32.totalorder 1, %s14
    %p211 = scmp.lt.s32.totalorder %s14, 3
    %p212 = pnand %p210, %p211
    %p213 = pneg %p212
    // Predicated region
    $region9: #{upsampling_block.6} parent=5 // pred_check
      _
    $region10: #{upsampling_block.6} parent=5 // pred_check_branch
      %215 = sbr.rel (%p212) target = $region12
    $region11: #{upsampling_block.6} parent=5 // pred_region
      %s216 = ssub.s32 %s14, 1
      // Predicated region
      $region13: #{upsampling_block.6} parent=11 // pred_check
        %p217 = pneg %p87
      $region14: #{upsampling_block.6} parent=11 // pred_check_branch
        %219 = sbr.rel (%p217) target = $region16
      $region15: #{upsampling_block.6} parent=11 // pred_region
        _
      $region16: #{upsampling_block.6} parent=11 // pred_fallthru
        _
      // Predicated region
      $region17: #{upsampling_block.6} parent=11 // pred_check
        %p220 = pneg %p108
      $region18: #{upsampling_block.6} parent=11 // pred_check_branch
        %222 = sbr.rel (%p220) target = $region20
      $region19: #{upsampling_block.6} parent=11 // pred_region
        _
      $region20: #{upsampling_block.6} parent=11 // pred_fallthru
        _
      // Predicated region
      $region21: #{upsampling_block.6} parent=11 // pred_check
        %p223 = pneg %p129
      $region22: #{upsampling_block.6} parent=11 // pred_check_branch
        %225 = sbr.rel (%p223) target = $region24
      $region23: #{upsampling_block.6} parent=11 // pred_region
        _
      $region24: #{upsampling_block.6} parent=11 // pred_fallthru
        _
      // Predicated region
      $region25: #{upsampling_block.6} parent=11 // pred_check
        %p226 = pneg %p150
      $region26: #{upsampling_block.6} parent=11 // pred_check_branch
        %228 = sbr.rel (%p226) target = $region28
      $region27: #{upsampling_block.6} parent=11 // pred_region
        _
      $region28: #{upsampling_block.6} parent=11 // pred_fallthru
        _
    $region12: #{upsampling_block.6} parent=5 // pred_fallthru
      _
    %p229 = scmp.lt.s32.totalorder %s14, 2
    // Predicated region
    $region29: #{upsampling_block.6} parent=5 // pred_check
      %p230 = pneg %p229
    $region30: #{upsampling_block.6} parent=5 // pred_check_branch
      %232 = sbr.rel (%p230) target = $region32
    $region31: #{upsampling_block.6} parent=5 // pred_region
      // Predicated region
      $region33: #{upsampling_block.6} parent=31 // pred_check
        %p233 = pneg %p34
      $region34: #{upsampling_block.6} parent=31 // pred_check_branch
        %235 = sbr.rel (%p233) target = $region36
      $region35: #{upsampling_block.6} parent=31 // pred_region
        %p236 = scmp.lt.s32.totalorder %s14, 1
        %s237 = scalar_select %p236, %s14, 1
        %s238 = smul.addr %s237, 32
        %s239 = smul.addr %s238, 4
        %s240 = scalar_lea.vmem %s0, %s239
      $region36: #{upsampling_block.6} parent=31 // pred_fallthru
        _
      // Predicated region
      $region37: #{upsampling_block.6} parent=31 // pred_check
        %p241 = pneg %p60
      $region38: #{upsampling_block.6} parent=31 // pred_check_branch
        %243 = sbr.rel (%p241) target = $region40
      $region39: #{upsampling_block.6} parent=31 // pred_region
        %p244 = scmp.lt.s32.totalorder %s14, 1
        %s245 = scalar_select %p244, %s14, 1
        %s246 = smul.addr %s245, 32
        %s247 = smul.addr %s246, 4
        %s248 = scalar_lea.vmem %s1, %s247
      $region40: #{upsampling_block.6} parent=31 // pred_fallthru
        _
    $region32: #{upsampling_block.6} parent=5 // pred_fallthru
      _
    %p249 = scmp.le.s32.totalorder 1, %s14
    %p250 = scmp.lt.s32.totalorder %s14, 3
    %p251 = pnand %p249, %p250
    %p252 = pneg %p251
    // Predicated region
    $region41: #{upsampling_block.6} parent=5 // pred_check
      _
    $region42: #{upsampling_block.6} parent=5 // pred_check_branch
      %254 = sbr.rel (%p251) target = $region44
    $region43: #{upsampling_block.6} parent=5 // pred_region
      %s255 = ssub.s32 %s14, 1
      %p256 = scmp.lt.s32.totalorder %s19, 1
      %s257 = scalar_select %p256, %s19, 1
      %s258 = smul.addr %s257, 32
      %s259 = smul.addr %s258, 4
      %s260 = scalar_lea.vmem %s0, %s259
      %p261 = pneg %p40
      %p262 = pneg %p37
      %p263 = scmp.lt.s32.totalorder %s19, 1
      %s264 = scalar_select %p263, %s19, 1
      %s265 = smul.addr %s264, 32
      %s266 = smul.addr %s265, 4
      %s267 = scalar_lea.vmem %s1, %s266
      %p268 = pneg %p66
      %p269 = pneg %p63
      %p270 = pneg %p87
      %p271 = pneg %p84
      %p272 = pneg %p108
      %p273 = pneg %p105
      %p274 = pneg %p129
      %p275 = pneg %p126
      %p276 = pneg %p150
      %p277 = pneg %p147
      %p278 = pneg %p176
      %p279 = pneg %p173
      %p280 = scmp.lt.s32.totalorder %s19, 1
      %s281 = scalar_select %p280, %s19, 1
      %s282 = smul.addr %s281, 32
      %s283 = smul.addr %s282, 4
      %s284 = scalar_lea.vmem %s6, %s283
      %p285 = pneg %p202
      %p286 = pneg %p199
      %p287 = scmp.lt.s32.totalorder %s19, 1
      %s288 = scalar_select %p287, %s19, 1
      %s289 = smul.addr %s288, 2
      %s290 = scalar_lea.vmem %s7, %s289
      %p291 = scmp.lt.s32.totalorder %s19, 1
      %s292 = scalar_select %p291, %s19, 1
      %s293 = smul.addr %s292, 32
      %s294 = smul.addr %s293, 4
      %s295 = scalar_lea.vmem %s0, %s294
      %p296 = scmp.lt.s32.totalorder %s19, 1
      %s297 = scalar_select %p296, %s19, 1
      %s298 = smul.addr %s297, 32
      %s299 = smul.addr %s298, 4
      %s300 = scalar_lea.vmem %s1, %s299
      %p301 = scmp.lt.s32.totalorder %s19, 1
      %s302 = scalar_select %p301, %s19, 1
      %s303 = smul.addr %s302, 32
      %s304 = smul.addr %s303, 4
      %s305 = scalar_lea.vmem %s6, %s304
      %p306 = scmp.lt.s32.totalorder %s19, 1
      %s307 = scalar_select %p306, %s19, 1
      %s308 = smul.addr %s307, 2
      %s309 = scalar_lea.vmem %s7, %s308
      %vm311 = vcmask 60416
      %312 = vst.msk [vmem:[#allocation2] sm:$0xf] %vm311, 0
      %313 = vst.msk [vmem:[#allocation2 + $0x4] sm:$0xf] %vm311, 0
      %vm314 = vcmask 57344
      %315 = vst.msk [vmem:[#allocation2 + $0x8] sm:$0x1] %vm314, 0
      %316 = vst.msk [vmem:[#allocation2 + $0xc] sm:$0xf] %vm311, 0
      %317 = vst.msk [vmem:[#allocation2 + $0x10] sm:$0xf] %vm311, 0
      %318 = vst.msk [vmem:[#allocation2 + $0x14] sm:$0x1] %vm314, 0
      %319 = vst.msk [vmem:[#allocation2 + $0x18] sm:$0xf] %vm311, 0
      %320 = vst.msk [vmem:[#allocation2 + $0x1c] sm:$0xf] %vm311, 0
      %321 = vst.msk [vmem:[#allocation2 + $0x20] sm:$0x1] %vm314, 0
      %322 = vst.msk [vmem:[#allocation2 + $0x24] sm:$0xf] %vm311, 0
      %323 = vst.msk [vmem:[#allocation2 + $0x28] sm:$0xf] %vm311, 0
      %324 = vst.msk [vmem:[#allocation2 + $0x2c] sm:$0x1] %vm314, 0
      %325 = vst.msk [vmem:[#allocation2 + $0x30] sm:$0xf] %vm311, 0
      %326 = vst.msk [vmem:[#allocation2 + $0x34] sm:$0xf] %vm311, 0
      %327 = vst.msk [vmem:[#allocation2 + $0x38] sm:$0x1] %vm314, 0
      %328 = vst.msk [vmem:[#allocation2 + $0x3c] sm:$0xf] %vm311, 0
      %329 = vst.msk [vmem:[#allocation2 + $0x40] sm:$0xf] %vm311, 0
      %330 = vst.msk [vmem:[#allocation2 + $0x44] sm:$0x1] %vm314, 0
      %331 = vst.msk [vmem:[#allocation2 + $0x48] sm:$0xf] %vm311, 0
      %332 = vst.msk [vmem:[#allocation2 + $0x4c] sm:$0xf] %vm311, 0
      %333 = vst.msk [vmem:[#allocation2 + $0x50] sm:$0x1] %vm314, 0
      %334 = vst.msk [vmem:[#allocation2 + $0x54] sm:$0xf] %vm311, 0
      %335 = vst.msk [vmem:[#allocation2 + $0x58] sm:$0xf] %vm311, 0
      %336 = vst.msk [vmem:[#allocation2 + $0x5c] sm:$0x1] %vm314, 0
      %337 = vst.msk [vmem:[#allocation2 + $0x60] sm:$0xf] %vm311, 0
      %338 = vst.msk [vmem:[#allocation2 + $0x64] sm:$0xf] %vm311, 0
      %339 = vst.msk [vmem:[#allocation2 + $0x68] sm:$0x1] %vm314, 0
      %340 = vst.msk [vmem:[#allocation2 + $0x6c] sm:$0xf] %vm311, 0
      %341 = vst.msk [vmem:[#allocation2 + $0x70] sm:$0xf] %vm311, 0
      %342 = vst.msk [vmem:[#allocation2 + $0x74] sm:$0x1] %vm314, 0
      %343 = vst.msk [vmem:[#allocation2 + $0x78] sm:$0xf] %vm311, 0
      %344 = vst.msk [vmem:[#allocation2 + $0x7c] sm:$0xf] %vm311, 0
      %345 = vst.msk [vmem:[#allocation2 + $0x80] sm:$0x1] %vm314, 0
      %346 = vst.msk [vmem:[#allocation2 + $0x84] sm:$0xf] %vm311, 0
      %347 = vst.msk [vmem:[#allocation2 + $0x88] sm:$0xf] %vm311, 0
      %348 = vst.msk [vmem:[#allocation2 + $0x8c] sm:$0x1] %vm314, 0
      %349 = vst.msk [vmem:[#allocation2 + $0x90] sm:$0xf] %vm311, 0
      %350 = vst.msk [vmem:[#allocation2 + $0x94] sm:$0xf] %vm311, 0
      %351 = vst.msk [vmem:[#allocation2 + $0x98] sm:$0x1] %vm314, 0
      %352 = vst.msk [vmem:[#allocation2 + $0x9c] sm:$0xf] %vm311, 0
      %353 = vst.msk [vmem:[#allocation2 + $0xa0] sm:$0xf] %vm311, 0
      %354 = vst.msk [vmem:[#allocation2 + $0xa4] sm:$0x1] %vm314, 0
      %355 = vst.msk [vmem:[#allocation2 + $0xa8] sm:$0xf] %vm311, 0
      %356 = vst.msk [vmem:[#allocation2 + $0xac] sm:$0xf] %vm311, 0
      %357 = vst.msk [vmem:[#allocation2 + $0xb0] sm:$0x1] %vm314, 0
      %358 = vst.msk [vmem:[#allocation2 + $0xb4] sm:$0xf] %vm311, 0
      %359 = vst.msk [vmem:[#allocation2 + $0xb8] sm:$0xf] %vm311, 0
      %360 = vst.msk [vmem:[#allocation2 + $0xbc] sm:$0x1] %vm314, 0
      %361 = vst.msk [vmem:[#allocation2 + $0xc0] sm:$0xf] %vm311, 0
      %362 = vst.msk [vmem:[#allocation2 + $0xc4] sm:$0xf] %vm311, 0
      %363 = vst.msk [vmem:[#allocation2 + $0xc8] sm:$0x1] %vm314, 0
      %364 = vst.msk [vmem:[#allocation2 + $0xcc] sm:$0xf] %vm311, 0
      %365 = vst.msk [vmem:[#allocation2 + $0xd0] sm:$0xf] %vm311, 0
      %366 = vst.msk [vmem:[#allocation2 + $0xd4] sm:$0x1] %vm314, 0
      %367 = vst.msk [vmem:[#allocation3] sm:$0xf] %vm311, 0
      %368 = vst.msk [vmem:[#allocation3 + $0x4] sm:$0xf] %vm311, 0
      %369 = vst.msk [vmem:[#allocation3 + $0x8] sm:$0x1] %vm314, 0
      %370 = vst.msk [vmem:[#allocation3 + $0xc] sm:$0xf] %vm311, 0
      %371 = vst.msk [vmem:[#allocation3 + $0x10] sm:$0xf] %vm311, 0
      %372 = vst.msk [vmem:[#allocation3 + $0x14] sm:$0x1] %vm314, 0
      %373 = vst.msk [vmem:[#allocation3 + $0x18] sm:$0xf] %vm311, 0
      %374 = vst.msk [vmem:[#allocation3 + $0x1c] sm:$0xf] %vm311, 0
      %375 = vst.msk [vmem:[#allocation3 + $0x20] sm:$0x1] %vm314, 0
      %376 = vst.msk [vmem:[#allocation3 + $0x24] sm:$0xf] %vm311, 0
      %377 = vst.msk [vmem:[#allocation3 + $0x28] sm:$0xf] %vm311, 0
      %378 = vst.msk [vmem:[#allocation3 + $0x2c] sm:$0x1] %vm314, 0
      %379 = vst.msk [vmem:[#allocation3 + $0x30] sm:$0xf] %vm311, 0
      %380 = vst.msk [vmem:[#allocation3 + $0x34] sm:$0xf] %vm311, 0
      %381 = vst.msk [vmem:[#allocation3 + $0x38] sm:$0x1] %vm314, 0
      %382 = vst.msk [vmem:[#allocation3 + $0x3c] sm:$0xf] %vm311, 0
      %383 = vst.msk [vmem:[#allocation3 + $0x40] sm:$0xf] %vm311, 0
      %384 = vst.msk [vmem:[#allocation3 + $0x44] sm:$0x1] %vm314, 0
      %385 = vst.msk [vmem:[#allocation3 + $0x48] sm:$0xf] %vm311, 0
      %386 = vst.msk [vmem:[#allocation3 + $0x4c] sm:$0xf] %vm311, 0
      %387 = vst.msk [vmem:[#allocation3 + $0x50] sm:$0x1] %vm314, 0
      %388 = vst.msk [vmem:[#allocation3 + $0x54] sm:$0xf] %vm311, 0
      %389 = vst.msk [vmem:[#allocation3 + $0x58] sm:$0xf] %vm311, 0
      %390 = vst.msk [vmem:[#allocation3 + $0x5c] sm:$0x1] %vm314, 0
      %391 = vst.msk [vmem:[#allocation3 + $0x60] sm:$0xf] %vm311, 0
      %392 = vst.msk [vmem:[#allocation3 + $0x64] sm:$0xf] %vm311, 0
      %393 = vst.msk [vmem:[#allocation3 + $0x68] sm:$0x1] %vm314, 0
      %394 = vst.msk [vmem:[#allocation3 + $0x6c] sm:$0xf] %vm311, 0
      %395 = vst.msk [vmem:[#allocation3 + $0x70] sm:$0xf] %vm311, 0
      %396 = vst.msk [vmem:[#allocation3 + $0x74] sm:$0x1] %vm314, 0
      %397 = vst.msk [vmem:[#allocation3 + $0x78] sm:$0xf] %vm311, 0
      %398 = vst.msk [vmem:[#allocation3 + $0x7c] sm:$0xf] %vm311, 0
      %399 = vst.msk [vmem:[#allocation3 + $0x80] sm:$0x1] %vm314, 0
      %400 = vst.msk [vmem:[#allocation3 + $0x84] sm:$0xf] %vm311, 0
      %401 = vst.msk [vmem:[#allocation3 + $0x88] sm:$0xf] %vm311, 0
      %402 = vst.msk [vmem:[#allocation3 + $0x8c] sm:$0x1] %vm314, 0
      %403 = vst.msk [vmem:[#allocation3 + $0x90] sm:$0xf] %vm311, 0
      %404 = vst.msk [vmem:[#allocation3 + $0x94] sm:$0xf] %vm311, 0
      %405 = vst.msk [vmem:[#allocation3 + $0x98] sm:$0x1] %vm314, 0
      %406 = vst.msk [vmem:[#allocation3 + $0x9c] sm:$0xf] %vm311, 0
      %407 = vst.msk [vmem:[#allocation3 + $0xa0] sm:$0xf] %vm311, 0
      %408 = vst.msk [vmem:[#allocation3 + $0xa4] sm:$0x1] %vm314, 0
      %409 = vst.msk [vmem:[#allocation3 + $0xa8] sm:$0xf] %vm311, 0
      %410 = vst.msk [vmem:[#allocation3 + $0xac] sm:$0xf] %vm311, 0
      %411 = vst.msk [vmem:[#allocation3 + $0xb0] sm:$0x1] %vm314, 0
      %412 = vst.msk [vmem:[#allocation3 + $0xb4] sm:$0xf] %vm311, 0
      %413 = vst.msk [vmem:[#allocation3 + $0xb8] sm:$0xf] %vm311, 0
      %414 = vst.msk [vmem:[#allocation3 + $0xbc] sm:$0x1] %vm314, 0
      %415 = vst.msk [vmem:[#allocation3 + $0xc0] sm:$0xf] %vm311, 0
      %416 = vst.msk [vmem:[#allocation3 + $0xc4] sm:$0xf] %vm311, 0
      %417 = vst.msk [vmem:[#allocation3 + $0xc8] sm:$0x1] %vm314, 0
      %418 = vst.msk [vmem:[#allocation3 + $0xcc] sm:$0xf] %vm311, 0
      %419 = vst.msk [vmem:[#allocation3 + $0xd0] sm:$0xf] %vm311, 0
      %420 = vst.msk [vmem:[#allocation3 + $0xd4] sm:$0x1] %vm314, 0
      %v421 = vld [vmem:[%s295] sm:$0xf]
      %v422 = vld [vmem:[%s295 + $0x4] sm:$0xf]
      %v423 = vld [vmem:[%s295 + $0x8] sm:$0xf]
      %v424 = vld [vmem:[%s295 + $0xc] sm:$0xf]
      %v425 = vld [vmem:[%s295 + $0x10] sm:$0xf]
      %v426 = vld [vmem:[%s295 + $0x14] sm:$0xf]
      %v427 = vld [vmem:[%s295 + $0x18] sm:$0xf]
      %v428 = vld [vmem:[%s295 + $0x1c] sm:$0xf]
      %v429 = vld [vmem:[%s295 + $0x20] sm:$0xf]
      %v430 = vld [vmem:[%s295 + $0x24] sm:$0xf]
      %v431 = vld [vmem:[%s295 + $0x28] sm:$0xf]
      %v432 = vld [vmem:[%s295 + $0x2c] sm:$0xf]
      %v433 = vld [vmem:[%s295 + $0x30] sm:$0xf]
      %v434 = vld [vmem:[%s295 + $0x34] sm:$0xf]
      %v435 = vld [vmem:[%s295 + $0x38] sm:$0xf]
      %v436 = vld [vmem:[%s295 + $0x3c] sm:$0xf]
      %v437 = vld [vmem:[%s295 + $0x40] sm:$0xf]
      %v438 = vld [vmem:[%s295 + $0x44] sm:$0xf]
      %v439 = vld [vmem:[%s295 + $0x48] sm:$0xf]
      %v440 = vld [vmem:[%s295 + $0x4c] sm:$0xf]
      %v441 = vld [vmem:[%s295 + $0x50] sm:$0xf]
      %v442 = vld [vmem:[%s295 + $0x54] sm:$0xf]
      %v443 = vld [vmem:[%s295 + $0x58] sm:$0xf]
      %v444 = vld [vmem:[%s295 + $0x5c] sm:$0xf]
      %v445 = vld [vmem:[%s295 + $0x60] sm:$0xf]
      %v446 = vld [vmem:[%s295 + $0x64] sm:$0xf]
      %v447 = vld [vmem:[%s295 + $0x68] sm:$0xf]
      %v448 = vld [vmem:[%s295 + $0x6c] sm:$0xf]
      %v449 = vld [vmem:[%s295 + $0x70] sm:$0xf]
      %v450 = vld [vmem:[%s295 + $0x74] sm:$0xf]
      %v451 = vld [vmem:[%s295 + $0x78] sm:$0xf]
      %v452 = vld [vmem:[%s295 + $0x7c] sm:$0xf]
      %v453 = vunpack.c.l.bf16 %v421
      %v454 = vunpack.c.l.bf16 %v422
      %v455 = vunpack.c.l.bf16 %v423
      %v456 = vunpack.c.l.bf16 %v424
      %v457 = vunpack.c.l.bf16 %v425
      %v458 = vunpack.c.l.bf16 %v426
      %v459 = vunpack.c.l.bf16 %v427
      %v460 = vunpack.c.l.bf16 %v428
      %v461 = vunpack.c.l.bf16 %v429
      %v462 = vunpack.c.l.bf16 %v430
      %v463 = vunpack.c.l.bf16 %v431
      %v464 = vunpack.c.l.bf16 %v432
      %v465 = vunpack.c.l.bf16 %v433
      %v466 = vunpack.c.l.bf16 %v434
      %v467 = vunpack.c.l.bf16 %v435
      %v468 = vunpack.c.l.bf16 %v436
      %v469 = vunpack.c.l.bf16 %v437
      %v470 = vunpack.c.l.bf16 %v438
      %v471 = vunpack.c.l.bf16 %v439
      %v472 = vunpack.c.l.bf16 %v440
      %v473 = vunpack.c.l.bf16 %v441
      %v474 = vunpack.c.l.bf16 %v442
      %v475 = vunpack.c.l.bf16 %v443
      %v476 = vunpack.c.l.bf16 %v444
      %v477 = vunpack.c.l.bf16 %v445
      %v478 = vunpack.c.l.bf16 %v446
      %v479 = vunpack.c.l.bf16 %v447
      %v480 = vunpack.c.l.bf16 %v448
      %v481 = vunpack.c.l.bf16 %v449
      %v482 = vunpack.c.l.bf16 %v450
      %v483 = vunpack.c.l.bf16 %v451
      %v484 = vunpack.c.l.bf16 %v452
      %v485 = vld [vmem:[%s2] sm:$0x1]
      %v487 = vperm.slane %v485, 0
      %v489 = vmul.f32 %v453, %v487
      %v490 = vmul.f32 %v454, %v487
      %v491 = vmul.f32 %v455, %v487
      %v492 = vmul.f32 %v456, %v487
      %v493 = vmul.f32 %v457, %v487
      %v494 = vmul.f32 %v458, %v487
      %v495 = vmul.f32 %v459, %v487
      %v496 = vmul.f32 %v460, %v487
      %v497 = vmul.f32 %v461, %v487
      %v498 = vmul.f32 %v462, %v487
      %v499 = vmul.f32 %v463, %v487
      %v500 = vmul.f32 %v464, %v487
      %v501 = vmul.f32 %v465, %v487
      %v502 = vmul.f32 %v466, %v487
      %v503 = vmul.f32 %v467, %v487
      %v504 = vmul.f32 %v468, %v487
      %v505 = vmul.f32 %v469, %v487
      %v506 = vmul.f32 %v470, %v487
      %v507 = vmul.f32 %v471, %v487
      %v508 = vmul.f32 %v472, %v487
      %v509 = vmul.f32 %v473, %v487
      %v510 = vmul.f32 %v474, %v487
      %v511 = vmul.f32 %v475, %v487
      %v512 = vmul.f32 %v476, %v487
      %v513 = vmul.f32 %v477, %v487
      %v514 = vmul.f32 %v478, %v487
      %v515 = vmul.f32 %v479, %v487
      %v516 = vmul.f32 %v480, %v487
      %v517 = vmul.f32 %v481, %v487
      %v518 = vmul.f32 %v482, %v487
      %v519 = vmul.f32 %v483, %v487
      %v520 = vmul.f32 %v484, %v487
      %v521 = vld [vmem:[%s3] sm:$0x1]
      %v523 = vperm.slane %v521, 0
      %v525 = vadd.f32 %v489, %v523
      %v526 = vadd.f32 %v490, %v523
      %v527 = vadd.f32 %v491, %v523
      %v528 = vadd.f32 %v492, %v523
      %v529 = vadd.f32 %v493, %v523
      %v530 = vadd.f32 %v494, %v523
      %v531 = vadd.f32 %v495, %v523
      %v532 = vadd.f32 %v496, %v523
      %v533 = vadd.f32 %v497, %v523
      %v534 = vadd.f32 %v498, %v523
      %v535 = vadd.f32 %v499, %v523
      %v536 = vadd.f32 %v500, %v523
      %v537 = vadd.f32 %v501, %v523
      %v538 = vadd.f32 %v502, %v523
      %v539 = vadd.f32 %v503, %v523
      %v540 = vadd.f32 %v504, %v523
      %v541 = vadd.f32 %v505, %v523
      %v542 = vadd.f32 %v506, %v523
      %v543 = vadd.f32 %v507, %v523
      %v544 = vadd.f32 %v508, %v523
      %v545 = vadd.f32 %v509, %v523
      %v546 = vadd.f32 %v510, %v523
      %v547 = vadd.f32 %v511, %v523
      %v548 = vadd.f32 %v512, %v523
      %v549 = vadd.f32 %v513, %v523
      %v550 = vadd.f32 %v514, %v523
      %v551 = vadd.f32 %v515, %v523
      %v552 = vadd.f32 %v516, %v523
      %v553 = vadd.f32 %v517, %v523
      %v554 = vadd.f32 %v518, %v523
      %v555 = vadd.f32 %v519, %v523
      %v556 = vadd.f32 %v520, %v523
      %v557 = vmax.f32 %v525, 0.0
      %v558 = vmax.f32 %v526, 0.0
      %v559 = vmax.f32 %v527, 0.0
      %v560 = vmax.f32 %v528, 0.0
      %v561 = vmax.f32 %v529, 0.0
      %v562 = vmax.f32 %v530, 0.0
      %v563 = vmax.f32 %v531, 0.0
      %v564 = vmax.f32 %v532, 0.0
      %v565 = vmax.f32 %v533, 0.0
      %v566 = vmax.f32 %v534, 0.0
      %v567 = vmax.f32 %v535, 0.0
      %v568 = vmax.f32 %v536, 0.0
      %v569 = vmax.f32 %v537, 0.0
      %v570 = vmax.f32 %v538, 0.0
      %v571 = vmax.f32 %v539, 0.0
      %v572 = vmax.f32 %v540, 0.0
      %v573 = vmax.f32 %v541, 0.0
      %v574 = vmax.f32 %v542, 0.0
      %v575 = vmax.f32 %v543, 0.0
      %v576 = vmax.f32 %v544, 0.0
      %v577 = vmax.f32 %v545, 0.0
      %v578 = vmax.f32 %v546, 0.0
      %v579 = vmax.f32 %v547, 0.0
      %v580 = vmax.f32 %v548, 0.0
      %v581 = vmax.f32 %v549, 0.0
      %v582 = vmax.f32 %v550, 0.0
      %v583 = vmax.f32 %v551, 0.0
      %v584 = vmax.f32 %v552, 0.0
      %v585 = vmax.f32 %v553, 0.0
      %v586 = vmax.f32 %v554, 0.0
      %v587 = vmax.f32 %v555, 0.0
      %v588 = vmax.f32 %v556, 0.0
      %v589 = vpack.c.bf16 %v557, %v557
      %v590 = vpack.c.bf16 %v558, %v558
      %v591 = vpack.c.bf16 %v559, %v559
      %v592 = vpack.c.bf16 %v560, %v560
      %v593 = vpack.c.bf16 %v561, %v561
      %v594 = vpack.c.bf16 %v562, %v562
      %v595 = vpack.c.bf16 %v563, %v563
      %v596 = vpack.c.bf16 %v564, %v564
      %v597 = vpack.c.bf16 %v565, %v565
      %v598 = vpack.c.bf16 %v566, %v566
      %v599 = vpack.c.bf16 %v567, %v567
      %v600 = vpack.c.bf16 %v568, %v568
      %v601 = vpack.c.bf16 %v569, %v569
      %v602 = vpack.c.bf16 %v570, %v570
      %v603 = vpack.c.bf16 %v571, %v571
      %v604 = vpack.c.bf16 %v572, %v572
      %v605 = vpack.c.bf16 %v573, %v573
      %v606 = vpack.c.bf16 %v574, %v574
      %v607 = vpack.c.bf16 %v575, %v575
      %v608 = vpack.c.bf16 %v576, %v576
      %v609 = vpack.c.bf16 %v577, %v577
      %v610 = vpack.c.bf16 %v578, %v578
      %v611 = vpack.c.bf16 %v579, %v579
      %v612 = vpack.c.bf16 %v580, %v580
      %v613 = vpack.c.bf16 %v581, %v581
      %v614 = vpack.c.bf16 %v582, %v582
      %v615 = vpack.c.bf16 %v583, %v583
      %v616 = vpack.c.bf16 %v584, %v584
      %v617 = vpack.c.bf16 %v585, %v585
      %v618 = vpack.c.bf16 %v586, %v586
      %v619 = vpack.c.bf16 %v587, %v587
      %v620 = vpack.c.bf16 %v588, %v588
      %vm621 = vsmask.f32 256
      %vm622 = vsmask.f32 4368
      %vm623 = vmor %vm621, %vm622
      %v625 = vshrl.u32 %v589, 16
      %v627 = vrot.slane %v625, 7
      %v628 = vshll.u32 %v589, 16
      %v630 = vor.u32 %v627, %v628
      %v631 = vrot.slane %v627, 4
      %v633 = vshrl.u32 %v590, 16
      %v635 = vrot.slane %v633, 7
      %v636 = vshll.u32 %v590, 16
      %v638 = vor.u32 %v635, %v636
      %v639 = vsel %vm623, %v631, %v638
      %v640 = vrot.slane %v635, 4
      %v642 = vshrl.u32 %v591, 16
      %v644 = vrot.slane %v642, 7
      %v645 = vshll.u32 %v591, 16
      %v647 = vor.u32 %v644, %v645
      %v648 = vrot.slane %v644, 4
      %v650 = vshrl.u32 %v592, 16
      %v652 = vrot.slane %v650, 7
      %v653 = vshll.u32 %v592, 16
      %v655 = vor.u32 %v652, %v653
      %v656 = vsel %vm623, %v648, %v655
      %v657 = vrot.slane %v652, 4
      %v659 = vshrl.u32 %v593, 16
      %v661 = vrot.slane %v659, 7
      %v662 = vshll.u32 %v593, 16
      %v664 = vor.u32 %v661, %v662
      %v665 = vrot.slane %v661, 4
      %v667 = vshrl.u32 %v594, 16
      %v669 = vrot.slane %v667, 7
      %v670 = vshll.u32 %v594, 16
      %v672 = vor.u32 %v669, %v670
      %v673 = vsel %vm623, %v665, %v672
      %v674 = vrot.slane %v669, 4
      %v676 = vshrl.u32 %v595, 16
      %v678 = vrot.slane %v676, 7
      %v679 = vshll.u32 %v595, 16
      %v681 = vor.u32 %v678, %v679
      %v682 = vrot.slane %v678, 4
      %v684 = vshrl.u32 %v596, 16
      %v686 = vrot.slane %v684, 7
      %v687 = vshll.u32 %v596, 16
      %v689 = vor.u32 %v686, %v687
      %v690 = vsel %vm623, %v682, %v689
      %v691 = vrot.slane %v686, 4
      %v693 = vshrl.u32 %v597, 16
      %v695 = vrot.slane %v693, 7
      %v696 = vshll.u32 %v597, 16
      %v698 = vor.u32 %v695, %v696
      %v699 = vrot.slane %v695, 4
      %v701 = vshrl.u32 %v598, 16
      %v703 = vrot.slane %v701, 7
      %v704 = vshll.u32 %v598, 16
      %v706 = vor.u32 %v703, %v704
      %v707 = vsel %vm623, %v699, %v706
      %v708 = vrot.slane %v703, 4
      %v710 = vshrl.u32 %v599, 16
      %v712 = vrot.slane %v710, 7
      %v713 = vshll.u32 %v599, 16
      %v715 = vor.u32 %v712, %v713
      %v716 = vrot.slane %v712, 4
      %v718 = vshrl.u32 %v600, 16
      %v720 = vrot.slane %v718, 7
      %v721 = vshll.u32 %v600, 16
      %v723 = vor.u32 %v720, %v721
      %v724 = vsel %vm623, %v716, %v723
      %v725 = vrot.slane %v720, 4
      %v727 = vshrl.u32 %v601, 16
      %v729 = vrot.slane %v727, 7
      %v730 = vshll.u32 %v601, 16
      %v732 = vor.u32 %v729, %v730
      %v733 = vrot.slane %v729, 4
      %v735 = vshrl.u32 %v602, 16
      %v737 = vrot.slane %v735, 7
      %v738 = vshll.u32 %v602, 16
      %v740 = vor.u32 %v737, %v738
      %v741 = vsel %vm623, %v733, %v740
      %v742 = vrot.slane %v737, 4
      %v744 = vshrl.u32 %v603, 16
      %v746 = vrot.slane %v744, 7
      %v747 = vshll.u32 %v603, 16
      %v749 = vor.u32 %v746, %v747
      %v750 = vrot.slane %v746, 4
      %v752 = vshrl.u32 %v604, 16
      %v754 = vrot.slane %v752, 7
      %v755 = vshll.u32 %v604, 16
      %v757 = vor.u32 %v754, %v755
      %v758 = vsel %vm623, %v750, %v757
      %v759 = vrot.slane %v754, 4
      %v761 = vshrl.u32 %v605, 16
      %v763 = vrot.slane %v761, 7
      %v764 = vshll.u32 %v605, 16
      %v766 = vor.u32 %v763, %v764
      %v767 = vrot.slane %v763, 4
      %v769 = vshrl.u32 %v606, 16
      %v771 = vrot.slane %v769, 7
      %v772 = vshll.u32 %v606, 16
      %v774 = vor.u32 %v771, %v772
      %v775 = vsel %vm623, %v767, %v774
      %v776 = vrot.slane %v771, 4
      %v778 = vshrl.u32 %v607, 16
      %v780 = vrot.slane %v778, 7
      %v781 = vshll.u32 %v607, 16
      %v783 = vor.u32 %v780, %v781
      %v784 = vrot.slane %v780, 4
      %v786 = vshrl.u32 %v608, 16
      %v788 = vrot.slane %v786, 7
      %v789 = vshll.u32 %v608, 16
      %v791 = vor.u32 %v788, %v789
      %v792 = vsel %vm623, %v784, %v791
      %v793 = vrot.slane %v788, 4
      %v795 = vshrl.u32 %v609, 16
      %v797 = vrot.slane %v795, 7
      %v798 = vshll.u32 %v609, 16
      %v800 = vor.u32 %v797, %v798
      %v801 = vrot.slane %v797, 4
      %v803 = vshrl.u32 %v610, 16
      %v805 = vrot.slane %v803, 7
      %v806 = vshll.u32 %v610, 16
      %v808 = vor.u32 %v805, %v806
      %v809 = vsel %vm623, %v801, %v808
      %v810 = vrot.slane %v805, 4
      %v812 = vshrl.u32 %v611, 16
      %v814 = vrot.slane %v812, 7
      %v815 = vshll.u32 %v611, 16
      %v817 = vor.u32 %v814, %v815
      %v818 = vrot.slane %v814, 4
      %v820 = vshrl.u32 %v612, 16
      %v822 = vrot.slane %v820, 7
      %v823 = vshll.u32 %v612, 16
      %v825 = vor.u32 %v822, %v823
      %v826 = vsel %vm623, %v818, %v825
      %v827 = vrot.slane %v822, 4
      %v829 = vshrl.u32 %v613, 16
      %v831 = vrot.slane %v829, 7
      %v832 = vshll.u32 %v613, 16
      %v834 = vor.u32 %v831, %v832
      %v835 = vrot.slane %v831, 4
      %v837 = vshrl.u32 %v614, 16
      %v839 = vrot.slane %v837, 7
      %v840 = vshll.u32 %v614, 16
      %v842 = vor.u32 %v839, %v840
      %v843 = vsel %vm623, %v835, %v842
      %v844 = vrot.slane %v839, 4
      %v846 = vshrl.u32 %v615, 16
      %v848 = vrot.slane %v846, 7
      %v849 = vshll.u32 %v615, 16
      %v851 = vor.u32 %v848, %v849
      %v852 = vrot.slane %v848, 4
      %v854 = vshrl.u32 %v616, 16
      %v856 = vrot.slane %v854, 7
      %v857 = vshll.u32 %v616, 16
      %v859 = vor.u32 %v856, %v857
      %v860 = vsel %vm623, %v852, %v859
      %v861 = vrot.slane %v856, 4
      %v863 = vshrl.u32 %v617, 16
      %v865 = vrot.slane %v863, 7
      %v866 = vshll.u32 %v617, 16
      %v868 = vor.u32 %v865, %v866
      %v869 = vrot.slane %v865, 4
      %v871 = vshrl.u32 %v618, 16
      %v873 = vrot.slane %v871, 7
      %v874 = vshll.u32 %v618, 16
      %v876 = vor.u32 %v873, %v874
      %v877 = vsel %vm623, %v869, %v876
      %v878 = vrot.slane %v873, 4
      %v880 = vshrl.u32 %v619, 16
      %v882 = vrot.slane %v880, 7
      %v883 = vshll.u32 %v619, 16
      %v885 = vor.u32 %v882, %v883
      %v886 = vrot.slane %v882, 4
      %v888 = vshrl.u32 %v620, 16
      %v890 = vrot.slane %v888, 7
      %v891 = vshll.u32 %v620, 16
      %v893 = vor.u32 %v890, %v891
      %v894 = vsel %vm623, %v886, %v893
      %v895 = vrot.slane %v890, 4
      %s944 = scalar_lea.vmem [#allocation2], 12
      %vm945 = vcmask 60416
      %vm946 = vsmask.f32 7938
      %vm947 = vmand %vm945, %vm946
      %v948 = vld [vmem:[%s944] sm:$0xf]
      %v949 = vsel %vm947, %v630, %v948
      %950 = vst [vmem:[%s944] sm:$0xf] %v949
      %951 = vst.msk [vmem:[%s944 + $0x4] sm:$0xf] %vm311, %v639
      %vm952 = vcmask 57344
      %vm953 = vmand %vm952, %vm621
      %v954 = vld [vmem:[%s944 + $0x8] sm:$0x1]
      %v955 = vsel %vm953, %v640, %v954
      %956 = vst [vmem:[%s944 + $0x8] sm:$0x1] %v955
      %v957 = vld [vmem:[%s944 + $0xc] sm:$0xf]
      %v958 = vsel %vm947, %v647, %v957
      %959 = vst [vmem:[%s944 + $0xc] sm:$0xf] %v958
      %960 = vst.msk [vmem:[%s944 + $0x10] sm:$0xf] %vm311, %v656
      %v961 = vld [vmem:[%s944 + $0x14] sm:$0x1]
      %v962 = vsel %vm953, %v657, %v961
      %963 = vst [vmem:[%s944 + $0x14] sm:$0x1] %v962
      %v964 = vld [vmem:[%s944 + $0x18] sm:$0xf]
      %v965 = vsel %vm947, %v664, %v964
      %966 = vst [vmem:[%s944 + $0x18] sm:$0xf] %v965
      %967 = vst.msk [vmem:[%s944 + $0x1c] sm:$0xf] %vm311, %v673
      %v968 = vld [vmem:[%s944 + $0x20] sm:$0x1]
      %v969 = vsel %vm953, %v674, %v968
      %970 = vst [vmem:[%s944 + $0x20] sm:$0x1] %v969
      %v971 = vld [vmem:[%s944 + $0x24] sm:$0xf]
      %v972 = vsel %vm947, %v681, %v971
      %973 = vst [vmem:[%s944 + $0x24] sm:$0xf] %v972
      %974 = vst.msk [vmem:[%s944 + $0x28] sm:$0xf] %vm311, %v690
      %v975 = vld [vmem:[%s944 + $0x2c] sm:$0x1]
      %v976 = vsel %vm953, %v691, %v975
      %977 = vst [vmem:[%s944 + $0x2c] sm:$0x1] %v976
      %v978 = vld [vmem:[%s944 + $0x30] sm:$0xf]
      %v979 = vsel %vm947, %v698, %v978
      %980 = vst [vmem:[%s944 + $0x30] sm:$0xf] %v979
      %981 = vst.msk [vmem:[%s944 + $0x34] sm:$0xf] %vm311, %v707
      %v982 = vld [vmem:[%s944 + $0x38] sm:$0x1]
      %v983 = vsel %vm953, %v708, %v982
      %984 = vst [vmem:[%s944 + $0x38] sm:$0x1] %v983
      %v985 = vld [vmem:[%s944 + $0x3c] sm:$0xf]
      %v986 = vsel %vm947, %v715, %v985
      %987 = vst [vmem:[%s944 + $0x3c] sm:$0xf] %v986
      %988 = vst.msk [vmem:[%s944 + $0x40] sm:$0xf] %vm311, %v724
      %v989 = vld [vmem:[%s944 + $0x44] sm:$0x1]
      %v990 = vsel %vm953, %v725, %v989
      %991 = vst [vmem:[%s944 + $0x44] sm:$0x1] %v990
      %v992 = vld [vmem:[%s944 + $0x48] sm:$0xf]
      %v993 = vsel %vm947, %v732, %v992
      %994 = vst [vmem:[%s944 + $0x48] sm:$0xf] %v993
      %995 = vst.msk [vmem:[%s944 + $0x4c] sm:$0xf] %vm311, %v741
      %v996 = vld [vmem:[%s944 + $0x50] sm:$0x1]
      %v997 = vsel %vm953, %v742, %v996
      %998 = vst [vmem:[%s944 + $0x50] sm:$0x1] %v997
      %v999 = vld [vmem:[%s944 + $0x54] sm:$0xf]
      %v1000 = vsel %vm947, %v749, %v999
      %1001 = vst [vmem:[%s944 + $0x54] sm:$0xf] %v1000
      %1002 = vst.msk [vmem:[%s944 + $0x58] sm:$0xf] %vm311, %v758
      %v1003 = vld [vmem:[%s944 + $0x5c] sm:$0x1]
      %v1004 = vsel %vm953, %v759, %v1003
      %1005 = vst [vmem:[%s944 + $0x5c] sm:$0x1] %v1004
      %v1006 = vld [vmem:[%s944 + $0x60] sm:$0xf]
      %v1007 = vsel %vm947, %v766, %v1006
      %1008 = vst [vmem:[%s944 + $0x60] sm:$0xf] %v1007
      %1009 = vst.msk [vmem:[%s944 + $0x64] sm:$0xf] %vm311, %v775
      %v1010 = vld [vmem:[%s944 + $0x68] sm:$0x1]
      %v1011 = vsel %vm953, %v776, %v1010
      %1012 = vst [vmem:[%s944 + $0x68] sm:$0x1] %v1011
      %v1013 = vld [vmem:[%s944 + $0x6c] sm:$0xf]
      %v1014 = vsel %vm947, %v783, %v1013
      %1015 = vst [vmem:[%s944 + $0x6c] sm:$0xf] %v1014
      %1016 = vst.msk [vmem:[%s944 + $0x70] sm:$0xf] %vm311, %v792
      %v1017 = vld [vmem:[%s944 + $0x74] sm:$0x1]
      %v1018 = vsel %vm953, %v793, %v1017
      %1019 = vst [vmem:[%s944 + $0x74] sm:$0x1] %v1018
      %v1020 = vld [vmem:[%s944 + $0x78] sm:$0xf]
      %v1021 = vsel %vm947, %v800, %v1020
      %1022 = vst [vmem:[%s944 + $0x78] sm:$0xf] %v1021
      %1023 = vst.msk [vmem:[%s944 + $0x7c] sm:$0xf] %vm311, %v809
      %v1024 = vld [vmem:[%s944 + $0x80] sm:$0x1]
      %v1025 = vsel %vm953, %v810, %v1024
      %1026 = vst [vmem:[%s944 + $0x80] sm:$0x1] %v1025
      %v1027 = vld [vmem:[%s944 + $0x84] sm:$0xf]
      %v1028 = vsel %vm947, %v817, %v1027
      %1029 = vst [vmem:[%s944 + $0x84] sm:$0xf] %v1028
      %1030 = vst.msk [vmem:[%s944 + $0x88] sm:$0xf] %vm311, %v826
      %v1031 = vld [vmem:[%s944 + $0x8c] sm:$0x1]
      %v1032 = vsel %vm953, %v827, %v1031
      %1033 = vst [vmem:[%s944 + $0x8c] sm:$0x1] %v1032
      %v1034 = vld [vmem:[%s944 + $0x90] sm:$0xf]
      %v1035 = vsel %vm947, %v834, %v1034
      %1036 = vst [vmem:[%s944 + $0x90] sm:$0xf] %v1035
      %1037 = vst.msk [vmem:[%s944 + $0x94] sm:$0xf] %vm311, %v843
      %v1038 = vld [vmem:[%s944 + $0x98] sm:$0x1]
      %v1039 = vsel %vm953, %v844, %v1038
      %1040 = vst [vmem:[%s944 + $0x98] sm:$0x1] %v1039
      %v1041 = vld [vmem:[%s944 + $0x9c] sm:$0xf]
      %v1042 = vsel %vm947, %v851, %v1041
      %1043 = vst [vmem:[%s944 + $0x9c] sm:$0xf] %v1042
      %1044 = vst.msk [vmem:[%s944 + $0xa0] sm:$0xf] %vm311, %v860
      %v1045 = vld [vmem:[%s944 + $0xa4] sm:$0x1]
      %v1046 = vsel %vm953, %v861, %v1045
      %1047 = vst [vmem:[%s944 + $0xa4] sm:$0x1] %v1046
      %v1048 = vld [vmem:[%s944 + $0xa8] sm:$0xf]
      %v1049 = vsel %vm947, %v868, %v1048
      %1050 = vst [vmem:[%s944 + $0xa8] sm:$0xf] %v1049
      %1051 = vst.msk [vmem:[%s944 + $0xac] sm:$0xf] %vm311, %v877
      %v1052 = vld [vmem:[%s944 + $0xb0] sm:$0x1]
      %v1053 = vsel %vm953, %v878, %v1052
      %1054 = vst [vmem:[%s944 + $0xb0] sm:$0x1] %v1053
      %v1055 = vld [vmem:[%s944 + $0xb4] sm:$0xf]
      %v1056 = vsel %vm947, %v885, %v1055
      %1057 = vst [vmem:[%s944 + $0xb4] sm:$0xf] %v1056
      %1058 = vst.msk [vmem:[%s944 + $0xb8] sm:$0xf] %vm311, %v894
      %v1059 = vld [vmem:[%s944 + $0xbc] sm:$0x1]
      %v1060 = vsel %vm953, %v895, %v1059
      %1061 = vst [vmem:[%s944 + $0xbc] sm:$0x1] %v1060
      %v1062 = vld [vmem:[%s300] sm:$0xf]
      %v1063 = vld [vmem:[%s300 + $0x4] sm:$0xf]
      %v1064 = vld [vmem:[%s300 + $0x8] sm:$0xf]
      %v1065 = vld [vmem:[%s300 + $0xc] sm:$0xf]
      %v1066 = vld [vmem:[%s300 + $0x10] sm:$0xf]
      %v1067 = vld [vmem:[%s300 + $0x14] sm:$0xf]
      %v1068 = vld [vmem:[%s300 + $0x18] sm:$0xf]
      %v1069 = vld [vmem:[%s300 + $0x1c] sm:$0xf]
      %v1070 = vld [vmem:[%s300 + $0x20] sm:$0xf]
      %v1071 = vld [vmem:[%s300 + $0x24] sm:$0xf]
      %v1072 = vld [vmem:[%s300 + $0x28] sm:$0xf]
      %v1073 = vld [vmem:[%s300 + $0x2c] sm:$0xf]
      %v1074 = vld [vmem:[%s300 + $0x30] sm:$0xf]
      %v1075 = vld [vmem:[%s300 + $0x34] sm:$0xf]
      %v1076 = vld [vmem:[%s300 + $0x38] sm:$0xf]
      %v1077 = vld [vmem:[%s300 + $0x3c] sm:$0xf]
      %v1078 = vld [vmem:[%s300 + $0x40] sm:$0xf]
      %v1079 = vld [vmem:[%s300 + $0x44] sm:$0xf]
      %v1080 = vld [vmem:[%s300 + $0x48] sm:$0xf]
      %v1081 = vld [vmem:[%s300 + $0x4c] sm:$0xf]
      %v1082 = vld [vmem:[%s300 + $0x50] sm:$0xf]
      %v1083 = vld [vmem:[%s300 + $0x54] sm:$0xf]
      %v1084 = vld [vmem:[%s300 + $0x58] sm:$0xf]
      %v1085 = vld [vmem:[%s300 + $0x5c] sm:$0xf]
      %v1086 = vld [vmem:[%s300 + $0x60] sm:$0xf]
      %v1087 = vld [vmem:[%s300 + $0x64] sm:$0xf]
      %v1088 = vld [vmem:[%s300 + $0x68] sm:$0xf]
      %v1089 = vld [vmem:[%s300 + $0x6c] sm:$0xf]
      %v1090 = vld [vmem:[%s300 + $0x70] sm:$0xf]
      %v1091 = vld [vmem:[%s300 + $0x74] sm:$0xf]
      %v1092 = vld [vmem:[%s300 + $0x78] sm:$0xf]
      %v1093 = vld [vmem:[%s300 + $0x7c] sm:$0xf]
      %v1095 = vshrl.u32 %v1062, 16
      %v1097 = vrot.slane %v1095, 7
      %v1098 = vshll.u32 %v1062, 16
      %v1100 = vor.u32 %v1097, %v1098
      %v1101 = vrot.slane %v1097, 4
      %v1103 = vshrl.u32 %v1063, 16
      %v1105 = vrot.slane %v1103, 7
      %v1106 = vshll.u32 %v1063, 16
      %v1108 = vor.u32 %v1105, %v1106
      %v1109 = vsel %vm623, %v1101, %v1108
      %v1110 = vrot.slane %v1105, 4
      %v1112 = vshrl.u32 %v1064, 16
      %v1114 = vrot.slane %v1112, 7
      %v1115 = vshll.u32 %v1064, 16
      %v1117 = vor.u32 %v1114, %v1115
      %v1118 = vrot.slane %v1114, 4
      %v1120 = vshrl.u32 %v1065, 16
      %v1122 = vrot.slane %v1120, 7
      %v1123 = vshll.u32 %v1065, 16
      %v1125 = vor.u32 %v1122, %v1123
      %v1126 = vsel %vm623, %v1118, %v1125
      %v1127 = vrot.slane %v1122, 4
      %v1129 = vshrl.u32 %v1066, 16
      %v1131 = vrot.slane %v1129, 7
      %v1132 = vshll.u32 %v1066, 16
      %v1134 = vor.u32 %v1131, %v1132
      %v1135 = vrot.slane %v1131, 4
      %v1137 = vshrl.u32 %v1067, 16
      %v1139 = vrot.slane %v1137, 7
      %v1140 = vshll.u32 %v1067, 16
      %v1142 = vor.u32 %v1139, %v1140
      %v1143 = vsel %vm623, %v1135, %v1142
      %v1144 = vrot.slane %v1139, 4
      %v1146 = vshrl.u32 %v1068, 16
      %v1148 = vrot.slane %v1146, 7
      %v1149 = vshll.u32 %v1068, 16
      %v1151 = vor.u32 %v1148, %v1149
      %v1152 = vrot.slane %v1148, 4
      %v1154 = vshrl.u32 %v1069, 16
      %v1156 = vrot.slane %v1154, 7
      %v1157 = vshll.u32 %v1069, 16
      %v1159 = vor.u32 %v1156, %v1157
      %v1160 = vsel %vm623, %v1152, %v1159
      %v1161 = vrot.slane %v1156, 4
      %v1163 = vshrl.u32 %v1070, 16
      %v1165 = vrot.slane %v1163, 7
      %v1166 = vshll.u32 %v1070, 16
      %v1168 = vor.u32 %v1165, %v1166
      %v1169 = vrot.slane %v1165, 4
      %v1171 = vshrl.u32 %v1071, 16
      %v1173 = vrot.slane %v1171, 7
      %v1174 = vshll.u32 %v1071, 16
      %v1176 = vor.u32 %v1173, %v1174
      %v1177 = vsel %vm623, %v1169, %v1176
      %v1178 = vrot.slane %v1173, 4
      %v1180 = vshrl.u32 %v1072, 16
      %v1182 = vrot.slane %v1180, 7
      %v1183 = vshll.u32 %v1072, 16
      %v1185 = vor.u32 %v1182, %v1183
      %v1186 = vrot.slane %v1182, 4
      %v1188 = vshrl.u32 %v1073, 16
      %v1190 = vrot.slane %v1188, 7
      %v1191 = vshll.u32 %v1073, 16
      %v1193 = vor.u32 %v1190, %v1191
      %v1194 = vsel %vm623, %v1186, %v1193
      %v1195 = vrot.slane %v1190, 4
      %v1197 = vshrl.u32 %v1074, 16
      %v1199 = vrot.slane %v1197, 7
      %v1200 = vshll.u32 %v1074, 16
      %v1202 = vor.u32 %v1199, %v1200
      %v1203 = vrot.slane %v1199, 4
      %v1205 = vshrl.u32 %v1075, 16
      %v1207 = vrot.slane %v1205, 7
      %v1208 = vshll.u32 %v1075, 16
      %v1210 = vor.u32 %v1207, %v1208
      %v1211 = vsel %vm623, %v1203, %v1210
      %v1212 = vrot.slane %v1207, 4
      %v1214 = vshrl.u32 %v1076, 16
      %v1216 = vrot.slane %v1214, 7
      %v1217 = vshll.u32 %v1076, 16
      %v1219 = vor.u32 %v1216, %v1217
      %v1220 = vrot.slane %v1216, 4
      %v1222 = vshrl.u32 %v1077, 16
      %v1224 = vrot.slane %v1222, 7
      %v1225 = vshll.u32 %v1077, 16
      %v1227 = vor.u32 %v1224, %v1225
      %v1228 = vsel %vm623, %v1220, %v1227
      %v1229 = vrot.slane %v1224, 4
      %v1231 = vshrl.u32 %v1078, 16
      %v1233 = vrot.slane %v1231, 7
      %v1234 = vshll.u32 %v1078, 16
      %v1236 = vor.u32 %v1233, %v1234
      %v1237 = vrot.slane %v1233, 4
      %v1239 = vshrl.u32 %v1079, 16
      %v1241 = vrot.slane %v1239, 7
      %v1242 = vshll.u32 %v1079, 16
      %v1244 = vor.u32 %v1241, %v1242
      %v1245 = vsel %vm623, %v1237, %v1244
      %v1246 = vrot.slane %v1241, 4
      %v1248 = vshrl.u32 %v1080, 16
      %v1250 = vrot.slane %v1248, 7
      %v1251 = vshll.u32 %v1080, 16
      %v1253 = vor.u32 %v1250, %v1251
      %v1254 = vrot.slane %v1250, 4
      %v1256 = vshrl.u32 %v1081, 16
      %v1258 = vrot.slane %v1256, 7
      %v1259 = vshll.u32 %v1081, 16
      %v1261 = vor.u32 %v1258, %v1259
      %v1262 = vsel %vm623, %v1254, %v1261
      %v1263 = vrot.slane %v1258, 4
      %v1265 = vshrl.u32 %v1082, 16
      %v1267 = vrot.slane %v1265, 7
      %v1268 = vshll.u32 %v1082, 16
      %v1270 = vor.u32 %v1267, %v1268
      %v1271 = vrot.slane %v1267, 4
      %v1273 = vshrl.u32 %v1083, 16
      %v1275 = vrot.slane %v1273, 7
      %v1276 = vshll.u32 %v1083, 16
      %v1278 = vor.u32 %v1275, %v1276
      %v1279 = vsel %vm623, %v1271, %v1278
      %v1280 = vrot.slane %v1275, 4
      %v1282 = vshrl.u32 %v1084, 16
      %v1284 = vrot.slane %v1282, 7
      %v1285 = vshll.u32 %v1084, 16
      %v1287 = vor.u32 %v1284, %v1285
      %v1288 = vrot.slane %v1284, 4
      %v1290 = vshrl.u32 %v1085, 16
      %v1292 = vrot.slane %v1290, 7
      %v1293 = vshll.u32 %v1085, 16
      %v1295 = vor.u32 %v1292, %v1293
      %v1296 = vsel %vm623, %v1288, %v1295
      %v1297 = vrot.slane %v1292, 4
      %v1299 = vshrl.u32 %v1086, 16
      %v1301 = vrot.slane %v1299, 7
      %v1302 = vshll.u32 %v1086, 16
      %v1304 = vor.u32 %v1301, %v1302
      %v1305 = vrot.slane %v1301, 4
      %v1307 = vshrl.u32 %v1087, 16
      %v1309 = vrot.slane %v1307, 7
      %v1310 = vshll.u32 %v1087, 16
      %v1312 = vor.u32 %v1309, %v1310
      %v1313 = vsel %vm623, %v1305, %v1312
      %v1314 = vrot.slane %v1309, 4
      %v1316 = vshrl.u32 %v1088, 16
      %v1318 = vrot.slane %v1316, 7
      %v1319 = vshll.u32 %v1088, 16
      %v1321 = vor.u32 %v1318, %v1319
      %v1322 = vrot.slane %v1318, 4
      %v1324 = vshrl.u32 %v1089, 16
      %v1326 = vrot.slane %v1324, 7
      %v1327 = vshll.u32 %v1089, 16
      %v1329 = vor.u32 %v1326, %v1327
      %v1330 = vsel %vm623, %v1322, %v1329
      %v1331 = vrot.slane %v1326, 4
      %v1333 = vshrl.u32 %v1090, 16
      %v1335 = vrot.slane %v1333, 7
      %v1336 = vshll.u32 %v1090, 16
      %v1338 = vor.u32 %v1335, %v1336
      %v1339 = vrot.slane %v1335, 4
      %v1341 = vshrl.u32 %v1091, 16
      %v1343 = vrot.slane %v1341, 7
      %v1344 = vshll.u32 %v1091, 16
      %v1346 = vor.u32 %v1343, %v1344
      %v1347 = vsel %vm623, %v1339, %v1346
      %v1348 = vrot.slane %v1343, 4
      %v1350 = vshrl.u32 %v1092, 16
      %v1352 = vrot.slane %v1350, 7
      %v1353 = vshll.u32 %v1092, 16
      %v1355 = vor.u32 %v1352, %v1353
      %v1356 = vrot.slane %v1352, 4
      %v1358 = vshrl.u32 %v1093, 16
      %v1360 = vrot.slane %v1358, 7
      %v1361 = vshll.u32 %v1093, 16
      %v1363 = vor.u32 %v1360, %v1361
      %v1364 = vsel %vm623, %v1356, %v1363
      %v1365 = vrot.slane %v1360, 4
      %s1414 = scalar_lea.vmem [#allocation3], 12
      %v1415 = vld [vmem:[%s1414] sm:$0xf]
      %v1416 = vsel %vm947, %v1100, %v1415
      %1417 = vst [vmem:[%s1414] sm:$0xf] %v1416
      %1418 = vst.msk [vmem:[%s1414 + $0x4] sm:$0xf] %vm311, %v1109
      %v1419 = vld [vmem:[%s1414 + $0x8] sm:$0x1]
      %v1420 = vsel %vm953, %v1110, %v1419
      %1421 = vst [vmem:[%s1414 + $0x8] sm:$0x1] %v1420
      %v1422 = vld [vmem:[%s1414 + $0xc] sm:$0xf]
      %v1423 = vsel %vm947, %v1117, %v1422
      %1424 = vst [vmem:[%s1414 + $0xc] sm:$0xf] %v1423
      %1425 = vst.msk [vmem:[%s1414 + $0x10] sm:$0xf] %vm311, %v1126
      %v1426 = vld [vmem:[%s1414 + $0x14] sm:$0x1]
      %v1427 = vsel %vm953, %v1127, %v1426
      %1428 = vst [vmem:[%s1414 + $0x14] sm:$0x1] %v1427
      %v1429 = vld [vmem:[%s1414 + $0x18] sm:$0xf]
      %v1430 = vsel %vm947, %v1134, %v1429
      %1431 = vst [vmem:[%s1414 + $0x18] sm:$0xf] %v1430
      %1432 = vst.msk [vmem:[%s1414 + $0x1c] sm:$0xf] %vm311, %v1143
      %v1433 = vld [vmem:[%s1414 + $0x20] sm:$0x1]
      %v1434 = vsel %vm953, %v1144, %v1433
      %1435 = vst [vmem:[%s1414 + $0x20] sm:$0x1] %v1434
      %v1436 = vld [vmem:[%s1414 + $0x24] sm:$0xf]
      %v1437 = vsel %vm947, %v1151, %v1436
      %1438 = vst [vmem:[%s1414 + $0x24] sm:$0xf] %v1437
      %1439 = vst.msk [vmem:[%s1414 + $0x28] sm:$0xf] %vm311, %v1160
      %v1440 = vld [vmem:[%s1414 + $0x2c] sm:$0x1]
      %v1441 = vsel %vm953, %v1161, %v1440
      %1442 = vst [vmem:[%s1414 + $0x2c] sm:$0x1] %v1441
      %v1443 = vld [vmem:[%s1414 + $0x30] sm:$0xf]
      %v1444 = vsel %vm947, %v1168, %v1443
      %1445 = vst [vmem:[%s1414 + $0x30] sm:$0xf] %v1444
      %1446 = vst.msk [vmem:[%s1414 + $0x34] sm:$0xf] %vm311, %v1177
      %v1447 = vld [vmem:[%s1414 + $0x38] sm:$0x1]
      %v1448 = vsel %vm953, %v1178, %v1447
      %1449 = vst [vmem:[%s1414 + $0x38] sm:$0x1] %v1448
      %v1450 = vld [vmem:[%s1414 + $0x3c] sm:$0xf]
      %v1451 = vsel %vm947, %v1185, %v1450
      %1452 = vst [vmem:[%s1414 + $0x3c] sm:$0xf] %v1451
      %1453 = vst.msk [vmem:[%s1414 + $0x40] sm:$0xf] %vm311, %v1194
      %v1454 = vld [vmem:[%s1414 + $0x44] sm:$0x1]
      %v1455 = vsel %vm953, %v1195, %v1454
      %1456 = vst [vmem:[%s1414 + $0x44] sm:$0x1] %v1455
      %v1457 = vld [vmem:[%s1414 + $0x48] sm:$0xf]
      %v1458 = vsel %vm947, %v1202, %v1457
      %1459 = vst [vmem:[%s1414 + $0x48] sm:$0xf] %v1458
      %1460 = vst.msk [vmem:[%s1414 + $0x4c] sm:$0xf] %vm311, %v1211
      %v1461 = vld [vmem:[%s1414 + $0x50] sm:$0x1]
      %v1462 = vsel %vm953, %v1212, %v1461
      %1463 = vst [vmem:[%s1414 + $0x50] sm:$0x1] %v1462
      %v1464 = vld [vmem:[%s1414 + $0x54] sm:$0xf]
      %v1465 = vsel %vm947, %v1219, %v1464
      %1466 = vst [vmem:[%s1414 + $0x54] sm:$0xf] %v1465
      %1467 = vst.msk [vmem:[%s1414 + $0x58] sm:$0xf] %vm311, %v1228
      %v1468 = vld [vmem:[%s1414 + $0x5c] sm:$0x1]
      %v1469 = vsel %vm953, %v1229, %v1468
      %1470 = vst [vmem:[%s1414 + $0x5c] sm:$0x1] %v1469
      %v1471 = vld [vmem:[%s1414 + $0x60] sm:$0xf]
      %v1472 = vsel %vm947, %v1236, %v1471
      %1473 = vst [vmem:[%s1414 + $0x60] sm:$0xf] %v1472
      %1474 = vst.msk [vmem:[%s1414 + $0x64] sm:$0xf] %vm311, %v1245
      %v1475 = vld [vmem:[%s1414 + $0x68] sm:$0x1]
      %v1476 = vsel %vm953, %v1246, %v1475
      %1477 = vst [vmem:[%s1414 + $0x68] sm:$0x1] %v1476
      %v1478 = vld [vmem:[%s1414 + $0x6c] sm:$0xf]
      %v1479 = vsel %vm947, %v1253, %v1478
      %1480 = vst [vmem:[%s1414 + $0x6c] sm:$0xf] %v1479
      %1481 = vst.msk [vmem:[%s1414 + $0x70] sm:$0xf] %vm311, %v1262
      %v1482 = vld [vmem:[%s1414 + $0x74] sm:$0x1]
      %v1483 = vsel %vm953, %v1263, %v1482
      %1484 = vst [vmem:[%s1414 + $0x74] sm:$0x1] %v1483
      %v1485 = vld [vmem:[%s1414 + $0x78] sm:$0xf]
      %v1486 = vsel %vm947, %v1270, %v1485
      %1487 = vst [vmem:[%s1414 + $0x78] sm:$0xf] %v1486
      %1488 = vst.msk [vmem:[%s1414 + $0x7c] sm:$0xf] %vm311, %v1279
      %v1489 = vld [vmem:[%s1414 + $0x80] sm:$0x1]
      %v1490 = vsel %vm953, %v1280, %v1489
      %1491 = vst [vmem:[%s1414 + $0x80] sm:$0x1] %v1490
      %v1492 = vld [vmem:[%s1414 + $0x84] sm:$0xf]
      %v1493 = vsel %vm947, %v1287, %v1492
      %1494 = vst [vmem:[%s1414 + $0x84] sm:$0xf] %v1493
      %1495 = vst.msk [vmem:[%s1414 + $0x88] sm:$0xf] %vm311, %v1296
      %v1496 = vld [vmem:[%s1414 + $0x8c] sm:$0x1]
      %v1497 = vsel %vm953, %v1297, %v1496
      %1498 = vst [vmem:[%s1414 + $0x8c] sm:$0x1] %v1497
      %v1499 = vld [vmem:[%s1414 + $0x90] sm:$0xf]
      %v1500 = vsel %vm947, %v1304, %v1499
      %1501 = vst [vmem:[%s1414 + $0x90] sm:$0xf] %v1500
      %1502 = vst.msk [vmem:[%s1414 + $0x94] sm:$0xf] %vm311, %v1313
      %v1503 = vld [vmem:[%s1414 + $0x98] sm:$0x1]
      %v1504 = vsel %vm953, %v1314, %v1503
      %1505 = vst [vmem:[%s1414 + $0x98] sm:$0x1] %v1504
      %v1506 = vld [vmem:[%s1414 + $0x9c] sm:$0xf]
      %v1507 = vsel %vm947, %v1321, %v1506
      %1508 = vst [vmem:[%s1414 + $0x9c] sm:$0xf] %v1507
      %1509 = vst.msk [vmem:[%s1414 + $0xa0] sm:$0xf] %vm311, %v1330
      %v1510 = vld [vmem:[%s1414 + $0xa4] sm:$0x1]
      %v1511 = vsel %vm953, %v1331, %v1510
      %1512 = vst [vmem:[%s1414 + $0xa4] sm:$0x1] %v1511
      %v1513 = vld [vmem:[%s1414 + $0xa8] sm:$0xf]
      %v1514 = vsel %vm947, %v1338, %v1513
      %1515 = vst [vmem:[%s1414 + $0xa8] sm:$0xf] %v1514
      %1516 = vst.msk [vmem:[%s1414 + $0xac] sm:$0xf] %vm311, %v1347
      %v1517 = vld [vmem:[%s1414 + $0xb0] sm:$0x1]
      %v1518 = vsel %vm953, %v1348, %v1517
      %1519 = vst [vmem:[%s1414 + $0xb0] sm:$0x1] %v1518
      %v1520 = vld [vmem:[%s1414 + $0xb4] sm:$0xf]
      %v1521 = vsel %vm947, %v1355, %v1520
      %1522 = vst [vmem:[%s1414 + $0xb4] sm:$0xf] %v1521
      %1523 = vst.msk [vmem:[%s1414 + $0xb8] sm:$0xf] %vm311, %v1364
      %v1524 = vld [vmem:[%s1414 + $0xbc] sm:$0x1]
      %v1525 = vsel %vm953, %v1365, %v1524
      %1526 = vst [vmem:[%s1414 + $0xbc] sm:$0x1] %v1525
      %v1527 = vld [vmem:[#allocation2] sm:$0xf]
      %v1528 = vld [vmem:[#allocation2 + $0x4] sm:$0xf]
      %v1529 = vld [vmem:[#allocation2 + $0x8] sm:$0x1]
      %v1530 = vld [vmem:[#allocation2 + $0xc] sm:$0xf]
      %v1531 = vld [vmem:[#allocation2 + $0x10] sm:$0xf]
      %v1532 = vld [vmem:[#allocation2 + $0x14] sm:$0x1]
      %v1533 = vld [vmem:[#allocation2 + $0x18] sm:$0xf]
      %v1534 = vld [vmem:[#allocation2 + $0x1c] sm:$0xf]
      %v1535 = vld [vmem:[#allocation2 + $0x20] sm:$0x1]
      %v1536 = vld [vmem:[#allocation2 + $0x24] sm:$0xf]
      %v1537 = vld [vmem:[#allocation2 + $0x28] sm:$0xf]
      %v1538 = vld [vmem:[#allocation2 + $0x2c] sm:$0x1]
      %v1539 = vld [vmem:[#allocation2 + $0x30] sm:$0xf]
      %v1540 = vld [vmem:[#allocation2 + $0x34] sm:$0xf]
      %v1541 = vld [vmem:[#allocation2 + $0x38] sm:$0x1]
      %v1542 = vld [vmem:[#allocation2 + $0x3c] sm:$0xf]
      %v1543 = vld [vmem:[#allocation2 + $0x40] sm:$0xf]
      %v1544 = vld [vmem:[#allocation2 + $0x44] sm:$0x1]
      %v1545 = vld [vmem:[#allocation2 + $0x48] sm:$0xf]
      %v1546 = vld [vmem:[#allocation2 + $0x4c] sm:$0xf]
      %v1547 = vld [vmem:[#allocation2 + $0x50] sm:$0x1]
      %v1548 = vld [vmem:[#allocation2 + $0x54] sm:$0xf]
      %v1549 = vld [vmem:[#allocation2 + $0x58] sm:$0xf]
      %v1550 = vld [vmem:[#allocation2 + $0x5c] sm:$0x1]
      %v1551 = vld [vmem:[#allocation2 + $0x60] sm:$0xf]
      %v1552 = vld [vmem:[#allocation2 + $0x64] sm:$0xf]
      %v1553 = vld [vmem:[#allocation2 + $0x68] sm:$0x1]
      %v1554 = vld [vmem:[#allocation2 + $0x6c] sm:$0xf]
      %v1555 = vld [vmem:[#allocation2 + $0x70] sm:$0xf]
      %v1556 = vld [vmem:[#allocation2 + $0x74] sm:$0x1]
      %v1557 = vld [vmem:[#allocation2 + $0x78] sm:$0xf]
      %v1558 = vld [vmem:[#allocation2 + $0x7c] sm:$0xf]
      %v1559 = vld [vmem:[#allocation2 + $0x80] sm:$0x1]
      %v1560 = vld [vmem:[#allocation2 + $0x84] sm:$0xf]
      %v1561 = vld [vmem:[#allocation2 + $0x88] sm:$0xf]
      %v1562 = vld [vmem:[#allocation2 + $0x8c] sm:$0x1]
      %v1563 = vld [vmem:[#allocation2 + $0x90] sm:$0xf]
      %v1564 = vld [vmem:[#allocation2 + $0x94] sm:$0xf]
      %v1565 = vld [vmem:[#allocation2 + $0x98] sm:$0x1]
      %v1566 = vld [vmem:[#allocation2 + $0x9c] sm:$0xf]
      %v1567 = vld [vmem:[#allocation2 + $0xa0] sm:$0xf]
      %v1568 = vld [vmem:[#allocation2 + $0xa4] sm:$0x1]
      %v1569 = vld [vmem:[#allocation2 + $0xa8] sm:$0xf]
      %v1570 = vld [vmem:[#allocation2 + $0xac] sm:$0xf]
      %v1571 = vld [vmem:[#allocation2 + $0xb0] sm:$0x1]
      %v1572 = vld [vmem:[#allocation2 + $0xb4] sm:$0xf]
      %v1573 = vld [vmem:[#allocation2 + $0xb8] sm:$0xf]
      %v1574 = vld [vmem:[#allocation2 + $0xbc] sm:$0x1]
      %v1575 = vld [vmem:[#allocation2 + $0xc0] sm:$0xf]
      %v1576 = vld [vmem:[#allocation2 + $0xc4] sm:$0xf]
      %v1577 = vld [vmem:[#allocation2 + $0xc8] sm:$0x1]
      %v1578 = vld [vmem:[#allocation2 + $0xcc] sm:$0xf]
      %v1579 = vld [vmem:[#allocation2 + $0xd0] sm:$0xf]
      %v1580 = vld [vmem:[#allocation2 + $0xd4] sm:$0x1]
      %v1581 = vld [vmem:[%s4] sm:$0xf]
      %vm1582 = vsmask.f32 3328
      %vm1583 = vsmask.f32 7440
      %vm1584 = vmor %vm1582, %vm1583
      %v1586 = vshrl.u32 %v1527, 16
      %v1588 = vrot.slane %v1586, 4
      %v1589 = vshll.u32 %v1527, 16
      %v1591 = vrot.slane %v1589, 5
      %v1592 = vor.u32 %v1588, %v1591
      %v1593 = vrot.slane %v1592, 4
      %v1595 = vshll.u32 %v1528, 16
      %v1597 = vrot.slane %v1595, 5
      %v1598 = vsel %vm1584, %v1593, %v1597
      %v1599 = vshrl.u32 %v1528, 16
      %v1601 = vrot.slane %v1599, 4
      %v1602 = vor.u32 %v1601, %v1597
      %v1603 = vrot.slane %v1602, 4
      %v1605 = vshll.u32 %v1529, 16
      %v1607 = vrot.slane %v1605, 5
      %v1608 = vsel %vm1584, %v1603, %v1607
      %v1610 = vshrl.u32 %v1530, 16
      %v1612 = vrot.slane %v1610, 4
      %v1613 = vshll.u32 %v1530, 16
      %v1615 = vrot.slane %v1613, 5
      %v1616 = vor.u32 %v1612, %v1615
      %v1617 = vrot.slane %v1616, 4
      %v1619 = vshll.u32 %v1531, 16
      %v1621 = vrot.slane %v1619, 5
      %v1622 = vsel %vm1584, %v1617, %v1621
      %v1623 = vshrl.u32 %v1531, 16
      %v1625 = vrot.slane %v1623, 4
      %v1626 = vor.u32 %v1625, %v1621
      %v1627 = vrot.slane %v1626, 4
      %v1629 = vshll.u32 %v1532, 16
      %v1631 = vrot.slane %v1629, 5
      %v1632 = vsel %vm1584, %v1627, %v1631
      %v1634 = vshrl.u32 %v1533, 16
      %v1636 = vrot.slane %v1634, 4
      %v1637 = vshll.u32 %v1533, 16
      %v1639 = vrot.slane %v1637, 5
      %v1640 = vor.u32 %v1636, %v1639
      %v1641 = vrot.slane %v1640, 4
      %v1643 = vshll.u32 %v1534, 16
      %v1645 = vrot.slane %v1643, 5
      %v1646 = vsel %vm1584, %v1641, %v1645
      %v1647 = vshrl.u32 %v1534, 16
      %v1649 = vrot.slane %v1647, 4
      %v1650 = vor.u32 %v1649, %v1645
      %v1651 = vrot.slane %v1650, 4
      %v1653 = vshll.u32 %v1535, 16
      %v1655 = vrot.slane %v1653, 5
      %v1656 = vsel %vm1584, %v1651, %v1655
      %v1658 = vshrl.u32 %v1536, 16
      %v1660 = vrot.slane %v1658, 4
      %v1661 = vshll.u32 %v1536, 16
      %v1663 = vrot.slane %v1661, 5
      %v1664 = vor.u32 %v1660, %v1663
      %v1665 = vrot.slane %v1664, 4
      %v1667 = vshll.u32 %v1537, 16
      %v1669 = vrot.slane %v1667, 5
      %v1670 = vsel %vm1584, %v1665, %v1669
      %v1671 = vshrl.u32 %v1537, 16
      %v1673 = vrot.slane %v1671, 4
      %v1674 = vor.u32 %v1673, %v1669
      %v1675 = vrot.slane %v1674, 4
      %v1677 = vshll.u32 %v1538, 16
      %v1679 = vrot.slane %v1677, 5
      %v1680 = vsel %vm1584, %v1675, %v1679
      %v1682 = vshrl.u32 %v1539, 16
      %v1684 = vrot.slane %v1682, 4
      %v1685 = vshll.u32 %v1539, 16
      %v1687 = vrot.slane %v1685, 5
      %v1688 = vor.u32 %v1684, %v1687
      %v1689 = vrot.slane %v1688, 4
      %v1691 = vshll.u32 %v1540, 16
      %v1693 = vrot.slane %v1691, 5
      %v1694 = vsel %vm1584, %v1689, %v1693
      %v1695 = vshrl.u32 %v1540, 16
      %v1697 = vrot.slane %v1695, 4
      %v1698 = vor.u32 %v1697, %v1693
      %v1699 = vrot.slane %v1698, 4
      %v1701 = vshll.u32 %v1541, 16
      %v1703 = vrot.slane %v1701, 5
      %v1704 = vsel %vm1584, %v1699, %v1703
      %v1706 = vshrl.u32 %v1542, 16
      %v1708 = vrot.slane %v1706, 4
      %v1709 = vshll.u32 %v1542, 16
      %v1711 = vrot.slane %v1709, 5
      %v1712 = vor.u32 %v1708, %v1711
      %v1713 = vrot.slane %v1712, 4
      %v1715 = vshll.u32 %v1543, 16
      %v1717 = vrot.slane %v1715, 5
      %v1718 = vsel %vm1584, %v1713, %v1717
      %v1719 = vshrl.u32 %v1543, 16
      %v1721 = vrot.slane %v1719, 4
      %v1722 = vor.u32 %v1721, %v1717
      %v1723 = vrot.slane %v1722, 4
      %v1725 = vshll.u32 %v1544, 16
      %v1727 = vrot.slane %v1725, 5
      %v1728 = vsel %vm1584, %v1723, %v1727
      %v1730 = vshrl.u32 %v1545, 16
      %v1732 = vrot.slane %v1730, 4
      %v1733 = vshll.u32 %v1545, 16
      %v1735 = vrot.slane %v1733, 5
      %v1736 = vor.u32 %v1732, %v1735
      %v1737 = vrot.slane %v1736, 4
      %v1739 = vshll.u32 %v1546, 16
      %v1741 = vrot.slane %v1739, 5
      %v1742 = vsel %vm1584, %v1737, %v1741
      %v1743 = vshrl.u32 %v1546, 16
      %v1745 = vrot.slane %v1743, 4
      %v1746 = vor.u32 %v1745, %v1741
      %v1747 = vrot.slane %v1746, 4
      %v1749 = vshll.u32 %v1547, 16
      %v1751 = vrot.slane %v1749, 5
      %v1752 = vsel %vm1584, %v1747, %v1751
      %v1754 = vshrl.u32 %v1548, 16
      %v1756 = vrot.slane %v1754, 4
      %v1757 = vshll.u32 %v1548, 16
      %v1759 = vrot.slane %v1757, 5
      %v1760 = vor.u32 %v1756, %v1759
      %v1761 = vrot.slane %v1760, 4
      %v1763 = vshll.u32 %v1549, 16
      %v1765 = vrot.slane %v1763, 5
      %v1766 = vsel %vm1584, %v1761, %v1765
      %v1767 = vshrl.u32 %v1549, 16
      %v1769 = vrot.slane %v1767, 4
      %v1770 = vor.u32 %v1769, %v1765
      %v1771 = vrot.slane %v1770, 4
      %v1773 = vshll.u32 %v1550, 16
      %v1775 = vrot.slane %v1773, 5
      %v1776 = vsel %vm1584, %v1771, %v1775
      %v1778 = vshrl.u32 %v1551, 16
      %v1780 = vrot.slane %v1778, 4
      %v1781 = vshll.u32 %v1551, 16
      %v1783 = vrot.slane %v1781, 5
      %v1784 = vor.u32 %v1780, %v1783
      %v1785 = vrot.slane %v1784, 4
      %v1787 = vshll.u32 %v1552, 16
      %v1789 = vrot.slane %v1787, 5
      %v1790 = vsel %vm1584, %v1785, %v1789
      %v1791 = vshrl.u32 %v1552, 16
      %v1793 = vrot.slane %v1791, 4
      %v1794 = vor.u32 %v1793, %v1789
      %v1795 = vrot.slane %v1794, 4
      %v1797 = vshll.u32 %v1553, 16
      %v1799 = vrot.slane %v1797, 5
      %v1800 = vsel %vm1584, %v1795, %v1799
      %v1802 = vshrl.u32 %v1554, 16
      %v1804 = vrot.slane %v1802, 4
      %v1805 = vshll.u32 %v1554, 16
      %v1807 = vrot.slane %v1805, 5
      %v1808 = vor.u32 %v1804, %v1807
      %v1809 = vrot.slane %v1808, 4
      %v1811 = vshll.u32 %v1555, 16
      %v1813 = vrot.slane %v1811, 5
      %v1814 = vsel %vm1584, %v1809, %v1813
      %v1815 = vshrl.u32 %v1555, 16
      %v1817 = vrot.slane %v1815, 4
      %v1818 = vor.u32 %v1817, %v1813
      %v1819 = vrot.slane %v1818, 4
      %v1821 = vshll.u32 %v1556, 16
      %v1823 = vrot.slane %v1821, 5
      %v1824 = vsel %vm1584, %v1819, %v1823
      %v1826 = vshrl.u32 %v1557, 16
      %v1828 = vrot.slane %v1826, 4
      %v1829 = vshll.u32 %v1557, 16
      %v1831 = vrot.slane %v1829, 5
      %v1832 = vor.u32 %v1828, %v1831
      %v1833 = vrot.slane %v1832, 4
      %v1835 = vshll.u32 %v1558, 16
      %v1837 = vrot.slane %v1835, 5
      %v1838 = vsel %vm1584, %v1833, %v1837
      %v1839 = vshrl.u32 %v1558, 16
      %v1841 = vrot.slane %v1839, 4
      %v1842 = vor.u32 %v1841, %v1837
      %v1843 = vrot.slane %v1842, 4
      %v1845 = vshll.u32 %v1559, 16
      %v1847 = vrot.slane %v1845, 5
      %v1848 = vsel %vm1584, %v1843, %v1847
      %v1850 = vshrl.u32 %v1560, 16
      %v1852 = vrot.slane %v1850, 4
      %v1853 = vshll.u32 %v1560, 16
      %v1855 = vrot.slane %v1853, 5
      %v1856 = vor.u32 %v1852, %v1855
      %v1857 = vrot.slane %v1856, 4
      %v1859 = vshll.u32 %v1561, 16
      %v1861 = vrot.slane %v1859, 5
      %v1862 = vsel %vm1584, %v1857, %v1861
      %v1863 = vshrl.u32 %v1561, 16
      %v1865 = vrot.slane %v1863, 4
      %v1866 = vor.u32 %v1865, %v1861
      %v1867 = vrot.slane %v1866, 4
      %v1869 = vshll.u32 %v1562, 16
      %v1871 = vrot.slane %v1869, 5
      %v1872 = vsel %vm1584, %v1867, %v1871
      %v1874 = vshrl.u32 %v1563, 16
      %v1876 = vrot.slane %v1874, 4
      %v1877 = vshll.u32 %v1563, 16
      %v1879 = vrot.slane %v1877, 5
      %v1880 = vor.u32 %v1876, %v1879
      %v1881 = vrot.slane %v1880, 4
      %v1883 = vshll.u32 %v1564, 16
      %v1885 = vrot.slane %v1883, 5
      %v1886 = vsel %vm1584, %v1881, %v1885
      %v1887 = vshrl.u32 %v1564, 16
      %v1889 = vrot.slane %v1887, 4
      %v1890 = vor.u32 %v1889, %v1885
      %v1891 = vrot.slane %v1890, 4
      %v1893 = vshll.u32 %v1565, 16
      %v1895 = vrot.slane %v1893, 5
      %v1896 = vsel %vm1584, %v1891, %v1895
      %v1898 = vshrl.u32 %v1566, 16
      %v1900 = vrot.slane %v1898, 4
      %v1901 = vshll.u32 %v1566, 16
      %v1903 = vrot.slane %v1901, 5
      %v1904 = vor.u32 %v1900, %v1903
      %v1905 = vrot.slane %v1904, 4
      %v1907 = vshll.u32 %v1567, 16
      %v1909 = vrot.slane %v1907, 5
      %v1910 = vsel %vm1584, %v1905, %v1909
      %v1911 = vshrl.u32 %v1567, 16
      %v1913 = vrot.slane %v1911, 4
      %v1914 = vor.u32 %v1913, %v1909
      %v1915 = vrot.slane %v1914, 4
      %v1917 = vshll.u32 %v1568, 16
      %v1919 = vrot.slane %v1917, 5
      %v1920 = vsel %vm1584, %v1915, %v1919
      %v1922 = vshrl.u32 %v1569, 16
      %v1924 = vrot.slane %v1922, 4
      %v1925 = vshll.u32 %v1569, 16
      %v1927 = vrot.slane %v1925, 5
      %v1928 = vor.u32 %v1924, %v1927
      %v1929 = vrot.slane %v1928, 4
      %v1931 = vshll.u32 %v1570, 16
      %v1933 = vrot.slane %v1931, 5
      %v1934 = vsel %vm1584, %v1929, %v1933
      %v1935 = vshrl.u32 %v1570, 16
      %v1937 = vrot.slane %v1935, 4
      %v1938 = vor.u32 %v1937, %v1933
      %v1939 = vrot.slane %v1938, 4
      %v1941 = vshll.u32 %v1571, 16
      %v1943 = vrot.slane %v1941, 5
      %v1944 = vsel %vm1584, %v1939, %v1943
      %v1946 = vshrl.u32 %v1572, 16
      %v1948 = vrot.slane %v1946, 4
      %v1949 = vshll.u32 %v1572, 16
      %v1951 = vrot.slane %v1949, 5
      %v1952 = vor.u32 %v1948, %v1951
      %v1953 = vrot.slane %v1952, 4
      %v1955 = vshll.u32 %v1573, 16
      %v1957 = vrot.slane %v1955, 5
      %v1958 = vsel %vm1584, %v1953, %v1957
      %v1959 = vshrl.u32 %v1573, 16
      %v1961 = vrot.slane %v1959, 4
      %v1962 = vor.u32 %v1961, %v1957
      %v1963 = vrot.slane %v1962, 4
      %v1965 = vshll.u32 %v1574, 16
      %v1967 = vrot.slane %v1965, 5
      %v1968 = vsel %vm1584, %v1963, %v1967
      %s1969 = scalar_lea.vmem %s4, 4
      %v1970 = vld [vmem:[%s1969] sm:$0xf]
      %v1971 = vunpack.c.l.b16 %v1598
      %v1972 = vunpack.c.l.b16 %v1608
      %v1973 = vunpack.c.l.b16 %v1622
      %v1974 = vunpack.c.l.b16 %v1632
      %v1975 = vunpack.c.l.b16 %v1646
      %v1976 = vunpack.c.l.b16 %v1656
      %v1977 = vunpack.c.l.b16 %v1670
      %v1978 = vunpack.c.l.b16 %v1680
      %v1979 = vunpack.c.l.b16 %v1694
      %v1980 = vunpack.c.l.b16 %v1704
      %v1981 = vunpack.c.l.b16 %v1718
      %v1982 = vunpack.c.l.b16 %v1728
      %v1983 = vunpack.c.l.b16 %v1742
      %v1984 = vunpack.c.l.b16 %v1752
      %v1985 = vunpack.c.l.b16 %v1766
      %v1986 = vunpack.c.l.b16 %v1776
      %v1987 = vunpack.c.l.b16 %v1790
      %v1988 = vunpack.c.l.b16 %v1800
      %v1989 = vunpack.c.l.b16 %v1814
      %v1990 = vunpack.c.l.b16 %v1824
      %v1991 = vunpack.c.l.b16 %v1838
      %v1992 = vunpack.c.l.b16 %v1848
      %v1993 = vunpack.c.l.b16 %v1862
      %v1994 = vunpack.c.l.b16 %v1872
      %v1995 = vunpack.c.l.b16 %v1886
      %v1996 = vunpack.c.l.b16 %v1896
      %v1997 = vunpack.c.l.b16 %v1910
      %v1998 = vunpack.c.l.b16 %v1920
      %v1999 = vunpack.c.l.b16 %v1934
      %v2000 = vunpack.c.l.b16 %v1944
      %v2001 = vunpack.c.l.b16 %v1958
      %v2002 = vunpack.c.l.b16 %v1968
      %v2003 = vpack.c.b16 %v1972, %v1971
      %v2004 = vpack.c.b16 %v1974, %v1973
      %v2005 = vpack.c.b16 %v1976, %v1975
      %v2006 = vpack.c.b16 %v1978, %v1977
      %v2007 = vpack.c.b16 %v1980, %v1979
      %v2008 = vpack.c.b16 %v1982, %v1981
      %v2009 = vpack.c.b16 %v1984, %v1983
      %v2010 = vpack.c.b16 %v1986, %v1985
      %v2011 = vpack.c.b16 %v1988, %v1987
      %v2012 = vpack.c.b16 %v1990, %v1989
      %v2013 = vpack.c.b16 %v1992, %v1991
      %v2014 = vpack.c.b16 %v1994, %v1993
      %v2015 = vpack.c.b16 %v1996, %v1995
      %v2016 = vpack.c.b16 %v1998, %v1997
      %v2017 = vpack.c.b16 %v2000, %v1999
      %v2018 = vpack.c.b16 %v2002, %v2001
      %vm2019 = vcmask 64512
      %v2021 = vsel %vm2019, %v2003, 0
      %v2024 = vsel %vm2019, %v2004, 0
      %v2027 = vsel %vm2019, %v2005, 0
      %v2030 = vsel %vm2019, %v2006, 0
      %v2033 = vsel %vm2019, %v2007, 0
      %v2036 = vsel %vm2019, %v2008, 0
      %v2039 = vsel %vm2019, %v2009, 0
      %v2042 = vsel %vm2019, %v2010, 0
      %v2045 = vsel %vm2019, %v2011, 0
      %v2048 = vsel %vm2019, %v2012, 0
      %v2051 = vsel %vm2019, %v2013, 0
      %v2054 = vsel %vm2019, %v2014, 0
      %v2057 = vsel %vm2019, %v2015, 0
      %v2060 = vsel %vm2019, %v2016, 0
      %v2063 = vsel %vm2019, %v2017, 0
      %v2066 = vsel %vm2019, %v2018, 0
      %vm2068 = vcmask 1043456
      %v2070 = vsel %vm2068, %v1970, 0
      %2072 = vmatpush.bf16.msra.mxu0 0
      %2073 = vmatpush.bf16.msra.mxu0 0
      %2074 = vmatpush.bf16.msra.mxu0 0
      %2075 = vmatpush.bf16.msra.mxu0 0
      %2076 = vmatpush.bf16.msra.mxu0 0
      %2077 = vmatpush.bf16.msra.mxu0 0
      %2078 = vmatpush.bf16.msra.mxu0 0
      %2079 = vmatpush.bf16.msra.mxu0 %v2070
      %2080 = vmatmul.bf16.gmra.mxu0 %v2021
      %v2081 = vpop.f32.mrf.mxu0
      %v2082 = vadd.f32 0.0, %v2081
      %v2083 = vpop.f32.mrf.mxu0
      %v2084 = vadd.f32 0.0, %v2083
      %2085 = vmatmul.bf16.gmra.mxu0 %v2024
      %v2086 = vpop.f32.mrf.mxu0
      %v2087 = vadd.f32 0.0, %v2086
      %v2088 = vpop.f32.mrf.mxu0
      %v2089 = vadd.f32 0.0, %v2088
      %2090 = vmatmul.bf16.gmra.mxu0 %v2027
      %v2091 = vpop.f32.mrf.mxu0
      %v2092 = vadd.f32 0.0, %v2091
      %v2093 = vpop.f32.mrf.mxu0
      %v2094 = vadd.f32 0.0, %v2093
      %2095 = vmatmul.bf16.gmra.mxu0 %v2030
      %v2096 = vpop.f32.mrf.mxu0
      %v2097 = vadd.f32 0.0, %v2096
      %v2098 = vpop.f32.mrf.mxu0
      %v2099 = vadd.f32 0.0, %v2098
      %2100 = vmatmul.bf16.gmra.mxu0 %v2033
      %v2101 = vpop.f32.mrf.mxu0
      %v2102 = vadd.f32 0.0, %v2101
      %v2103 = vpop.f32.mrf.mxu0
      %v2104 = vadd.f32 0.0, %v2103
      %2105 = vmatmul.bf16.gmra.mxu0 %v2036
      %v2106 = vpop.f32.mrf.mxu0
      %v2107 = vadd.f32 0.0, %v2106
      %v2108 = vpop.f32.mrf.mxu0
      %v2109 = vadd.f32 0.0, %v2108
      %2110 = vmatmul.bf16.gmra.mxu0 %v2039
      %v2111 = vpop.f32.mrf.mxu0
      %v2112 = vadd.f32 0.0, %v2111
      %v2113 = vpop.f32.mrf.mxu0
      %v2114 = vadd.f32 0.0, %v2113
      %2115 = vmatmul.bf16.gmra.mxu0 %v2042
      %v2116 = vpop.f32.mrf.mxu0
      %v2117 = vadd.f32 0.0, %v2116
      %v2118 = vpop.f32.mrf.mxu0
      %v2119 = vadd.f32 0.0, %v2118
      %2120 = vmatmul.bf16.gmra.mxu0 %v2045
      %v2121 = vpop.f32.mrf.mxu0
      %v2122 = vadd.f32 0.0, %v2121
      %v2123 = vpop.f32.mrf.mxu0
      %v2124 = vadd.f32 0.0, %v2123
      %2125 = vmatmul.bf16.gmra.mxu0 %v2048
      %v2126 = vpop.f32.mrf.mxu0
      %v2127 = vadd.f32 0.0, %v2126
      %v2128 = vpop.f32.mrf.mxu0
      %v2129 = vadd.f32 0.0, %v2128
      %2130 = vmatmul.bf16.gmra.mxu0 %v2051
      %v2131 = vpop.f32.mrf.mxu0
      %v2132 = vadd.f32 0.0, %v2131
      %v2133 = vpop.f32.mrf.mxu0
      %v2134 = vadd.f32 0.0, %v2133
      %2135 = vmatmul.bf16.gmra.mxu0 %v2054
      %v2136 = vpop.f32.mrf.mxu0
      %v2137 = vadd.f32 0.0, %v2136
      %v2138 = vpop.f32.mrf.mxu0
      %v2139 = vadd.f32 0.0, %v2138
      %2140 = vmatmul.bf16.gmra.mxu0 %v2057
      %v2141 = vpop.f32.mrf.mxu0
      %v2142 = vadd.f32 0.0, %v2141
      %v2143 = vpop.f32.mrf.mxu0
      %v2144 = vadd.f32 0.0, %v2143
      %2145 = vmatmul.bf16.gmra.mxu0 %v2060
      %v2146 = vpop.f32.mrf.mxu0
      %v2147 = vadd.f32 0.0, %v2146
      %v2148 = vpop.f32.mrf.mxu0
      %v2149 = vadd.f32 0.0, %v2148
      %2150 = vmatmul.bf16.gmra.mxu0 %v2063
      %v2151 = vpop.f32.mrf.mxu0
      %v2152 = vadd.f32 0.0, %v2151
      %v2153 = vpop.f32.mrf.mxu0
      %v2154 = vadd.f32 0.0, %v2153
      %2155 = vmatmul.bf16.gmra.mxu0 %v2066
      %v2156 = vpop.f32.mrf.mxu0
      %v2157 = vadd.f32 0.0, %v2156
      %v2158 = vpop.f32.mrf.mxu0
      %v2159 = vadd.f32 0.0, %v2158
      %2160 = vdwg.mxu0
      %v2193 = vunpack.c.l.b16 %v1527
      %v2194 = vunpack.c.l.b16 %v1528
      %v2195 = vunpack.c.l.b16 %v1530
      %v2196 = vunpack.c.l.b16 %v1531
      %v2197 = vunpack.c.l.b16 %v1533
      %v2198 = vunpack.c.l.b16 %v1534
      %v2199 = vunpack.c.l.b16 %v1536
      %v2200 = vunpack.c.l.b16 %v1537
      %v2201 = vunpack.c.l.b16 %v1539
      %v2202 = vunpack.c.l.b16 %v1540
      %v2203 = vunpack.c.l.b16 %v1542
      %v2204 = vunpack.c.l.b16 %v1543
      %v2205 = vunpack.c.l.b16 %v1545
      %v2206 = vunpack.c.l.b16 %v1546
      %v2207 = vunpack.c.l.b16 %v1548
      %v2208 = vunpack.c.l.b16 %v1549
      %v2209 = vunpack.c.l.b16 %v1551
      %v2210 = vunpack.c.l.b16 %v1552
      %v2211 = vunpack.c.l.b16 %v1554
      %v2212 = vunpack.c.l.b16 %v1555
      %v2213 = vunpack.c.l.b16 %v1557
      %v2214 = vunpack.c.l.b16 %v1558
      %v2215 = vunpack.c.l.b16 %v1560
      %v2216 = vunpack.c.l.b16 %v1561
      %v2217 = vunpack.c.l.b16 %v1563
      %v2218 = vunpack.c.l.b16 %v1564
      %v2219 = vunpack.c.l.b16 %v1566
      %v2220 = vunpack.c.l.b16 %v1567
      %v2221 = vunpack.c.l.b16 %v1569
      %v2222 = vunpack.c.l.b16 %v1570
      %v2223 = vunpack.c.l.b16 %v1572
      %v2224 = vunpack.c.l.b16 %v1573
      %v2225 = vpack.c.b16 %v2194, %v2193
      %v2226 = vpack.c.b16 %v2196, %v2195
      %v2227 = vpack.c.b16 %v2198, %v2197
      %v2228 = vpack.c.b16 %v2200, %v2199
      %v2229 = vpack.c.b16 %v2202, %v2201
      %v2230 = vpack.c.b16 %v2204, %v2203
      %v2231 = vpack.c.b16 %v2206, %v2205
      %v2232 = vpack.c.b16 %v2208, %v2207
      %v2233 = vpack.c.b16 %v2210, %v2209
      %v2234 = vpack.c.b16 %v2212, %v2211
      %v2235 = vpack.c.b16 %v2214, %v2213
      %v2236 = vpack.c.b16 %v2216, %v2215
      %v2237 = vpack.c.b16 %v2218, %v2217
      %v2238 = vpack.c.b16 %v2220, %v2219
      %v2239 = vpack.c.b16 %v2222, %v2221
      %v2240 = vpack.c.b16 %v2224, %v2223
      %v2242 = vsel %vm2019, %v2225, 0
      %v2245 = vsel %vm2019, %v2226, 0
      %v2248 = vsel %vm2019, %v2227, 0
      %v2251 = vsel %vm2019, %v2228, 0
      %v2254 = vsel %vm2019, %v2229, 0
      %v2257 = vsel %vm2019, %v2230, 0
      %v2260 = vsel %vm2019, %v2231, 0
      %v2263 = vsel %vm2019, %v2232, 0
      %v2266 = vsel %vm2019, %v2233, 0
      %v2269 = vsel %vm2019, %v2234, 0
      %v2272 = vsel %vm2019, %v2235, 0
      %v2275 = vsel %vm2019, %v2236, 0
      %v2278 = vsel %vm2019, %v2237, 0
      %v2281 = vsel %vm2019, %v2238, 0
      %v2284 = vsel %vm2019, %v2239, 0
      %v2287 = vsel %vm2019, %v2240, 0
      %v2290 = vsel %vm2068, %v1581, 0
      %2292 = vmatpush.bf16.msra.mxu0 0
      %2293 = vmatpush.bf16.msra.mxu0 0
      %2294 = vmatpush.bf16.msra.mxu0 0
      %2295 = vmatpush.bf16.msra.mxu0 0
      %2296 = vmatpush.bf16.msra.mxu0 0
      %2297 = vmatpush.bf16.msra.mxu0 0
      %2298 = vmatpush.bf16.msra.mxu0 0
      %2299 = vmatpush.bf16.msra.mxu0 %v2290
      %2300 = vmatmul.bf16.gmra.mxu0 %v2242
      %v2301 = vpop.f32.mrf.mxu0
      %v2302 = vadd.f32 %v2082, %v2301
      %v2303 = vpop.f32.mrf.mxu0
      %v2304 = vadd.f32 %v2084, %v2303
      %2305 = vmatmul.bf16.gmra.mxu0 %v2245
      %v2306 = vpop.f32.mrf.mxu0
      %v2307 = vadd.f32 %v2087, %v2306
      %v2308 = vpop.f32.mrf.mxu0
      %v2309 = vadd.f32 %v2089, %v2308
      %2310 = vmatmul.bf16.gmra.mxu0 %v2248
      %v2311 = vpop.f32.mrf.mxu0
      %v2312 = vadd.f32 %v2092, %v2311
      %v2313 = vpop.f32.mrf.mxu0
      %v2314 = vadd.f32 %v2094, %v2313
      %2315 = vmatmul.bf16.gmra.mxu0 %v2251
      %v2316 = vpop.f32.mrf.mxu0
      %v2317 = vadd.f32 %v2097, %v2316
      %v2318 = vpop.f32.mrf.mxu0
      %v2319 = vadd.f32 %v2099, %v2318
      %2320 = vmatmul.bf16.gmra.mxu0 %v2254
      %v2321 = vpop.f32.mrf.mxu0
      %v2322 = vadd.f32 %v2102, %v2321
      %v2323 = vpop.f32.mrf.mxu0
      %v2324 = vadd.f32 %v2104, %v2323
      %2325 = vmatmul.bf16.gmra.mxu0 %v2257
      %v2326 = vpop.f32.mrf.mxu0
      %v2327 = vadd.f32 %v2107, %v2326
      %v2328 = vpop.f32.mrf.mxu0
      %v2329 = vadd.f32 %v2109, %v2328
      %2330 = vmatmul.bf16.gmra.mxu0 %v2260
      %v2331 = vpop.f32.mrf.mxu0
      %v2332 = vadd.f32 %v2112, %v2331
      %v2333 = vpop.f32.mrf.mxu0
      %v2334 = vadd.f32 %v2114, %v2333
      %2335 = vmatmul.bf16.gmra.mxu0 %v2263
      %v2336 = vpop.f32.mrf.mxu0
      %v2337 = vadd.f32 %v2117, %v2336
      %v2338 = vpop.f32.mrf.mxu0
      %v2339 = vadd.f32 %v2119, %v2338
      %2340 = vmatmul.bf16.gmra.mxu0 %v2266
      %v2341 = vpop.f32.mrf.mxu0
      %v2342 = vadd.f32 %v2122, %v2341
      %v2343 = vpop.f32.mrf.mxu0
      %v2344 = vadd.f32 %v2124, %v2343
      %2345 = vmatmul.bf16.gmra.mxu0 %v2269
      %v2346 = vpop.f32.mrf.mxu0
      %v2347 = vadd.f32 %v2127, %v2346
      %v2348 = vpop.f32.mrf.mxu0
      %v2349 = vadd.f32 %v2129, %v2348
      %2350 = vmatmul.bf16.gmra.mxu0 %v2272
      %v2351 = vpop.f32.mrf.mxu0
      %v2352 = vadd.f32 %v2132, %v2351
      %v2353 = vpop.f32.mrf.mxu0
      %v2354 = vadd.f32 %v2134, %v2353
      %2355 = vmatmul.bf16.gmra.mxu0 %v2275
      %v2356 = vpop.f32.mrf.mxu0
      %v2357 = vadd.f32 %v2137, %v2356
      %v2358 = vpop.f32.mrf.mxu0
      %v2359 = vadd.f32 %v2139, %v2358
      %2360 = vmatmul.bf16.gmra.mxu0 %v2278
      %v2361 = vpop.f32.mrf.mxu0
      %v2362 = vadd.f32 %v2142, %v2361
      %v2363 = vpop.f32.mrf.mxu0
      %v2364 = vadd.f32 %v2144, %v2363
      %2365 = vmatmul.bf16.gmra.mxu0 %v2281
      %v2366 = vpop.f32.mrf.mxu0
      %v2367 = vadd.f32 %v2147, %v2366
      %v2368 = vpop.f32.mrf.mxu0
      %v2369 = vadd.f32 %v2149, %v2368
      %2370 = vmatmul.bf16.gmra.mxu0 %v2284
      %v2371 = vpop.f32.mrf.mxu0
      %v2372 = vadd.f32 %v2152, %v2371
      %v2373 = vpop.f32.mrf.mxu0
      %v2374 = vadd.f32 %v2154, %v2373
      %2375 = vmatmul.bf16.gmra.mxu0 %v2287
      %v2376 = vpop.f32.mrf.mxu0
      %v2377 = vadd.f32 %v2157, %v2376
      %v2378 = vpop.f32.mrf.mxu0
      %v2379 = vadd.f32 %v2159, %v2378
      %2380 = vdwg.mxu0
      %vm2397 = vcmask 1042432
      %vm2398 = vcmask 1046532
      %vm2399 = vmor %vm2397, %vm2398
      %v2400 = vrot.slane %v1527, 5
      %v2401 = vrot.slane %v2400, 4
      %v2402 = vrot.slane %v1528, 5
      %v2403 = vsel %vm2399, %v2401, %v2402
      %v2404 = vrot.slane %v2402, 4
      %v2405 = vrot.slane %v1529, 5
      %v2406 = vsel %vm2399, %v2404, %v2405
      %v2407 = vrot.slane %v1530, 5
      %v2408 = vrot.slane %v2407, 4
      %v2409 = vrot.slane %v1531, 5
      %v2410 = vsel %vm2399, %v2408, %v2409
      %v2411 = vrot.slane %v2409, 4
      %v2412 = vrot.slane %v1532, 5
      %v2413 = vsel %vm2399, %v2411, %v2412
      %v2414 = vrot.slane %v1533, 5
      %v2415 = vrot.slane %v2414, 4
      %v2416 = vrot.slane %v1534, 5
      %v2417 = vsel %vm2399, %v2415, %v2416
      %v2418 = vrot.slane %v2416, 4
      %v2419 = vrot.slane %v1535, 5
      %v2420 = vsel %vm2399, %v2418, %v2419
      %v2421 = vrot.slane %v1536, 5
      %v2422 = vrot.slane %v2421, 4
      %v2423 = vrot.slane %v1537, 5
      %v2424 = vsel %vm2399, %v2422, %v2423
      %v2425 = vrot.slane %v2423, 4
      %v2426 = vrot.slane %v1538, 5
      %v2427 = vsel %vm2399, %v2425, %v2426
      %v2428 = vrot.slane %v1539, 5
      %v2429 = vrot.slane %v2428, 4
      %v2430 = vrot.slane %v1540, 5
      %v2431 = vsel %vm2399, %v2429, %v2430
      %v2432 = vrot.slane %v2430, 4
      %v2433 = vrot.slane %v1541, 5
      %v2434 = vsel %vm2399, %v2432, %v2433
      %v2435 = vrot.slane %v1542, 5
      %v2436 = vrot.slane %v2435, 4
      %v2437 = vrot.slane %v1543, 5
      %v2438 = vsel %vm2399, %v2436, %v2437
      %v2439 = vrot.slane %v2437, 4
      %v2440 = vrot.slane %v1544, 5
      %v2441 = vsel %vm2399, %v2439, %v2440
      %v2442 = vrot.slane %v1545, 5
      %v2443 = vrot.slane %v2442, 4
      %v2444 = vrot.slane %v1546, 5
      %v2445 = vsel %vm2399, %v2443, %v2444
      %v2446 = vrot.slane %v2444, 4
      %v2447 = vrot.slane %v1547, 5
      %v2448 = vsel %vm2399, %v2446, %v2447
      %v2449 = vrot.slane %v1548, 5
      %v2450 = vrot.slane %v2449, 4
      %v2451 = vrot.slane %v1549, 5
      %v2452 = vsel %vm2399, %v2450, %v2451
      %v2453 = vrot.slane %v2451, 4
      %v2454 = vrot.slane %v1550, 5
      %v2455 = vsel %vm2399, %v2453, %v2454
      %v2456 = vrot.slane %v1551, 5
      %v2457 = vrot.slane %v2456, 4
      %v2458 = vrot.slane %v1552, 5
      %v2459 = vsel %vm2399, %v2457, %v2458
      %v2460 = vrot.slane %v2458, 4
      %v2461 = vrot.slane %v1553, 5
      %v2462 = vsel %vm2399, %v2460, %v2461
      %v2463 = vrot.slane %v1554, 5
      %v2464 = vrot.slane %v2463, 4
      %v2465 = vrot.slane %v1555, 5
      %v2466 = vsel %vm2399, %v2464, %v2465
      %v2467 = vrot.slane %v2465, 4
      %v2468 = vrot.slane %v1556, 5
      %v2469 = vsel %vm2399, %v2467, %v2468
      %v2470 = vrot.slane %v1557, 5
      %v2471 = vrot.slane %v2470, 4
      %v2472 = vrot.slane %v1558, 5
      %v2473 = vsel %vm2399, %v2471, %v2472
      %v2474 = vrot.slane %v2472, 4
      %v2475 = vrot.slane %v1559, 5
      %v2476 = vsel %vm2399, %v2474, %v2475
      %v2477 = vrot.slane %v1560, 5
      %v2478 = vrot.slane %v2477, 4
      %v2479 = vrot.slane %v1561, 5
      %v2480 = vsel %vm2399, %v2478, %v2479
      %v2481 = vrot.slane %v2479, 4
      %v2482 = vrot.slane %v1562, 5
      %v2483 = vsel %vm2399, %v2481, %v2482
      %v2484 = vrot.slane %v1563, 5
      %v2485 = vrot.slane %v2484, 4
      %v2486 = vrot.slane %v1564, 5
      %v2487 = vsel %vm2399, %v2485, %v2486
      %v2488 = vrot.slane %v2486, 4
      %v2489 = vrot.slane %v1565, 5
      %v2490 = vsel %vm2399, %v2488, %v2489
      %v2491 = vrot.slane %v1566, 5
      %v2492 = vrot.slane %v2491, 4
      %v2493 = vrot.slane %v1567, 5
      %v2494 = vsel %vm2399, %v2492, %v2493
      %v2495 = vrot.slane %v2493, 4
      %v2496 = vrot.slane %v1568, 5
      %v2497 = vsel %vm2399, %v2495, %v2496
      %v2498 = vrot.slane %v1569, 5
      %v2499 = vrot.slane %v2498, 4
      %v2500 = vrot.slane %v1570, 5
      %v2501 = vsel %vm2399, %v2499, %v2500
      %v2502 = vrot.slane %v2500, 4
      %v2503 = vrot.slane %v1571, 5
      %v2504 = vsel %vm2399, %v2502, %v2503
      %v2505 = vrot.slane %v1572, 5
      %v2506 = vrot.slane %v2505, 4
      %v2507 = vrot.slane %v1573, 5
      %v2508 = vsel %vm2399, %v2506, %v2507
      %v2509 = vrot.slane %v2507, 4
      %v2510 = vrot.slane %v1574, 5
      %v2511 = vsel %vm2399, %v2509, %v2510
      %s2512 = scalar_lea.vmem %s4, 8
      %v2513 = vld [vmem:[%s2512] sm:$0xf]
      %v2514 = vunpack.c.l.b16 %v2403
      %v2515 = vunpack.c.l.b16 %v2406
      %v2516 = vunpack.c.l.b16 %v2410
      %v2517 = vunpack.c.l.b16 %v2413
      %v2518 = vunpack.c.l.b16 %v2417
      %v2519 = vunpack.c.l.b16 %v2420
      %v2520 = vunpack.c.l.b16 %v2424
      %v2521 = vunpack.c.l.b16 %v2427
      %v2522 = vunpack.c.l.b16 %v2431
      %v2523 = vunpack.c.l.b16 %v2434
      %v2524 = vunpack.c.l.b16 %v2438
      %v2525 = vunpack.c.l.b16 %v2441
      %v2526 = vunpack.c.l.b16 %v2445
      %v2527 = vunpack.c.l.b16 %v2448
      %v2528 = vunpack.c.l.b16 %v2452
      %v2529 = vunpack.c.l.b16 %v2455
      %v2530 = vunpack.c.l.b16 %v2459
      %v2531 = vunpack.c.l.b16 %v2462
      %v2532 = vunpack.c.l.b16 %v2466
      %v2533 = vunpack.c.l.b16 %v2469
      %v2534 = vunpack.c.l.b16 %v2473
      %v2535 = vunpack.c.l.b16 %v2476
      %v2536 = vunpack.c.l.b16 %v2480
      %v2537 = vunpack.c.l.b16 %v2483
      %v2538 = vunpack.c.l.b16 %v2487
      %v2539 = vunpack.c.l.b16 %v2490
      %v2540 = vunpack.c.l.b16 %v2494
      %v2541 = vunpack.c.l.b16 %v2497
      %v2542 = vunpack.c.l.b16 %v2501
      %v2543 = vunpack.c.l.b16 %v2504
      %v2544 = vunpack.c.l.b16 %v2508
      %v2545 = vunpack.c.l.b16 %v2511
      %v2546 = vpack.c.b16 %v2515, %v2514
      %v2547 = vpack.c.b16 %v2517, %v2516
      %v2548 = vpack.c.b16 %v2519, %v2518
      %v2549 = vpack.c.b16 %v2521, %v2520
      %v2550 = vpack.c.b16 %v2523, %v2522
      %v2551 = vpack.c.b16 %v2525, %v2524
      %v2552 = vpack.c.b16 %v2527, %v2526
      %v2553 = vpack.c.b16 %v2529, %v2528
      %v2554 = vpack.c.b16 %v2531, %v2530
      %v2555 = vpack.c.b16 %v2533, %v2532
      %v2556 = vpack.c.b16 %v2535, %v2534
      %v2557 = vpack.c.b16 %v2537, %v2536
      %v2558 = vpack.c.b16 %v2539, %v2538
      %v2559 = vpack.c.b16 %v2541, %v2540
      %v2560 = vpack.c.b16 %v2543, %v2542
      %v2561 = vpack.c.b16 %v2545, %v2544
      %v2563 = vsel %vm2019, %v2546, 0
      %v2566 = vsel %vm2019, %v2547, 0
      %v2569 = vsel %vm2019, %v2548, 0
      %v2572 = vsel %vm2019, %v2549, 0
      %v2575 = vsel %vm2019, %v2550, 0
      %v2578 = vsel %vm2019, %v2551, 0
      %v2581 = vsel %vm2019, %v2552, 0
      %v2584 = vsel %vm2019, %v2553, 0
      %v2587 = vsel %vm2019, %v2554, 0
      %v2590 = vsel %vm2019, %v2555, 0
      %v2593 = vsel %vm2019, %v2556, 0
      %v2596 = vsel %vm2019, %v2557, 0
      %v2599 = vsel %vm2019, %v2558, 0
      %v2602 = vsel %vm2019, %v2559, 0
      %v2605 = vsel %vm2019, %v2560, 0
      %v2608 = vsel %vm2019, %v2561, 0
      %v2611 = vsel %vm2068, %v2513, 0
      %2613 = vmatpush.bf16.msra.mxu0 0
      %2614 = vmatpush.bf16.msra.mxu0 0
      %2615 = vmatpush.bf16.msra.mxu0 0
      %2616 = vmatpush.bf16.msra.mxu0 0
      %2617 = vmatpush.bf16.msra.mxu0 0
      %2618 = vmatpush.bf16.msra.mxu0 0
      %2619 = vmatpush.bf16.msra.mxu0 0
      %2620 = vmatpush.bf16.msra.mxu0 %v2611
      %2621 = vmatmul.bf16.gmra.mxu0 %v2563
      %v2622 = vpop.f32.mrf.mxu0
      %v2623 = vadd.f32 0.0, %v2622
      %v2624 = vpop.f32.mrf.mxu0
      %v2625 = vadd.f32 0.0, %v2624
      %2626 = vmatmul.bf16.gmra.mxu0 %v2566
      %v2627 = vpop.f32.mrf.mxu0
      %v2628 = vadd.f32 0.0, %v2627
      %v2629 = vpop.f32.mrf.mxu0
      %v2630 = vadd.f32 0.0, %v2629
      %2631 = vmatmul.bf16.gmra.mxu0 %v2569
      %v2632 = vpop.f32.mrf.mxu0
      %v2633 = vadd.f32 0.0, %v2632
      %v2634 = vpop.f32.mrf.mxu0
      %v2635 = vadd.f32 0.0, %v2634
      %2636 = vmatmul.bf16.gmra.mxu0 %v2572
      %v2637 = vpop.f32.mrf.mxu0
      %v2638 = vadd.f32 0.0, %v2637
      %v2639 = vpop.f32.mrf.mxu0
      %v2640 = vadd.f32 0.0, %v2639
      %2641 = vmatmul.bf16.gmra.mxu0 %v2575
      %v2642 = vpop.f32.mrf.mxu0
      %v2643 = vadd.f32 0.0, %v2642
      %v2644 = vpop.f32.mrf.mxu0
      %v2645 = vadd.f32 0.0, %v2644
      %2646 = vmatmul.bf16.gmra.mxu0 %v2578
      %v2647 = vpop.f32.mrf.mxu0
      %v2648 = vadd.f32 0.0, %v2647
      %v2649 = vpop.f32.mrf.mxu0
      %v2650 = vadd.f32 0.0, %v2649
      %2651 = vmatmul.bf16.gmra.mxu0 %v2581
      %v2652 = vpop.f32.mrf.mxu0
      %v2653 = vadd.f32 0.0, %v2652
      %v2654 = vpop.f32.mrf.mxu0
      %v2655 = vadd.f32 0.0, %v2654
      %2656 = vmatmul.bf16.gmra.mxu0 %v2584
      %v2657 = vpop.f32.mrf.mxu0
      %v2658 = vadd.f32 0.0, %v2657
      %v2659 = vpop.f32.mrf.mxu0
      %v2660 = vadd.f32 0.0, %v2659
      %2661 = vmatmul.bf16.gmra.mxu0 %v2587
      %v2662 = vpop.f32.mrf.mxu0
      %v2663 = vadd.f32 0.0, %v2662
      %v2664 = vpop.f32.mrf.mxu0
      %v2665 = vadd.f32 0.0, %v2664
      %2666 = vmatmul.bf16.gmra.mxu0 %v2590
      %v2667 = vpop.f32.mrf.mxu0
      %v2668 = vadd.f32 0.0, %v2667
      %v2669 = vpop.f32.mrf.mxu0
      %v2670 = vadd.f32 0.0, %v2669
      %2671 = vmatmul.bf16.gmra.mxu0 %v2593
      %v2672 = vpop.f32.mrf.mxu0
      %v2673 = vadd.f32 0.0, %v2672
      %v2674 = vpop.f32.mrf.mxu0
      %v2675 = vadd.f32 0.0, %v2674
      %2676 = vmatmul.bf16.gmra.mxu0 %v2596
      %v2677 = vpop.f32.mrf.mxu0
      %v2678 = vadd.f32 0.0, %v2677
      %v2679 = vpop.f32.mrf.mxu0
      %v2680 = vadd.f32 0.0, %v2679
      %2681 = vmatmul.bf16.gmra.mxu0 %v2599
      %v2682 = vpop.f32.mrf.mxu0
      %v2683 = vadd.f32 0.0, %v2682
      %v2684 = vpop.f32.mrf.mxu0
      %v2685 = vadd.f32 0.0, %v2684
      %2686 = vmatmul.bf16.gmra.mxu0 %v2602
      %v2687 = vpop.f32.mrf.mxu0
      %v2688 = vadd.f32 0.0, %v2687
      %v2689 = vpop.f32.mrf.mxu0
      %v2690 = vadd.f32 0.0, %v2689
      %2691 = vmatmul.bf16.gmra.mxu0 %v2605
      %v2692 = vpop.f32.mrf.mxu0
      %v2693 = vadd.f32 0.0, %v2692
      %v2694 = vpop.f32.mrf.mxu0
      %v2695 = vadd.f32 0.0, %v2694
      %2696 = vmatmul.bf16.gmra.mxu0 %v2608
      %v2697 = vpop.f32.mrf.mxu0
      %v2698 = vadd.f32 0.0, %v2697
      %v2699 = vpop.f32.mrf.mxu0
      %v2700 = vadd.f32 0.0, %v2699
      %2701 = vdwg.mxu0
      %v2702 = vadd.f32 %v2302, %v2623
      %v2703 = vadd.f32 %v2304, %v2625
      %v2704 = vadd.f32 %v2307, %v2628
      %v2705 = vadd.f32 %v2309, %v2630
      %v2706 = vadd.f32 %v2312, %v2633
      %v2707 = vadd.f32 %v2314, %v2635
      %v2708 = vadd.f32 %v2317, %v2638
      %v2709 = vadd.f32 %v2319, %v2640
      %v2710 = vadd.f32 %v2322, %v2643
      %v2711 = vadd.f32 %v2324, %v2645
      %v2712 = vadd.f32 %v2327, %v2648
      %v2713 = vadd.f32 %v2329, %v2650
      %v2714 = vadd.f32 %v2332, %v2653
      %v2715 = vadd.f32 %v2334, %v2655
      %v2716 = vadd.f32 %v2337, %v2658
      %v2717 = vadd.f32 %v2339, %v2660
      %v2718 = vadd.f32 %v2342, %v2663
      %v2719 = vadd.f32 %v2344, %v2665
      %v2720 = vadd.f32 %v2347, %v2668
      %v2721 = vadd.f32 %v2349, %v2670
      %v2722 = vadd.f32 %v2352, %v2673
      %v2723 = vadd.f32 %v2354, %v2675
      %v2724 = vadd.f32 %v2357, %v2678
      %v2725 = vadd.f32 %v2359, %v2680
      %v2726 = vadd.f32 %v2362, %v2683
      %v2727 = vadd.f32 %v2364, %v2685
      %v2728 = vadd.f32 %v2367, %v2688
      %v2729 = vadd.f32 %v2369, %v2690
      %v2730 = vadd.f32 %v2372, %v2693
      %v2731 = vadd.f32 %v2374, %v2695
      %v2732 = vadd.f32 %v2377, %v2698
      %v2733 = vadd.f32 %v2379, %v2700
      %s2734 = scalar_lea.vmem %s4, 12
      %v2735 = vld [vmem:[%s2734] sm:$0xf]
      %v2738 = vunpack.c.l.b16 %v1575
      %v2739 = vunpack.c.l.b16 %v1576
      %v2740 = vpack.c.b16 %v2739, %v2738
      %v2742 = vsel %vm2019, %v2740, 0
      %v2745 = vsel %vm2068, %v2735, 0
      %2747 = vmatpush.bf16.msra.mxu0 0
      %2748 = vmatpush.bf16.msra.mxu0 0
      %2749 = vmatpush.bf16.msra.mxu0 0
      %2750 = vmatpush.bf16.msra.mxu0 0
      %2751 = vmatpush.bf16.msra.mxu0 0
      %2752 = vmatpush.bf16.msra.mxu0 0
      %2753 = vmatpush.bf16.msra.mxu0 0
      %2754 = vmatpush.bf16.msra.mxu0 %v2745
      %2755 = vmatmul.bf16.gmra.mxu0 %v2245
      %v2756 = vpop.f32.mrf.mxu0
      %v2757 = vadd.f32 0.0, %v2756
      %v2758 = vpop.f32.mrf.mxu0
      %v2759 = vadd.f32 0.0, %v2758
      %2760 = vmatmul.bf16.gmra.mxu0 %v2248
      %v2761 = vpop.f32.mrf.mxu0
      %v2762 = vadd.f32 0.0, %v2761
      %v2763 = vpop.f32.mrf.mxu0
      %v2764 = vadd.f32 0.0, %v2763
      %2765 = vmatmul.bf16.gmra.mxu0 %v2251
      %v2766 = vpop.f32.mrf.mxu0
      %v2767 = vadd.f32 0.0, %v2766
      %v2768 = vpop.f32.mrf.mxu0
      %v2769 = vadd.f32 0.0, %v2768
      %2770 = vmatmul.bf16.gmra.mxu0 %v2254
      %v2771 = vpop.f32.mrf.mxu0
      %v2772 = vadd.f32 0.0, %v2771
      %v2773 = vpop.f32.mrf.mxu0
      %v2774 = vadd.f32 0.0, %v2773
      %2775 = vmatmul.bf16.gmra.mxu0 %v2257
      %v2776 = vpop.f32.mrf.mxu0
      %v2777 = vadd.f32 0.0, %v2776
      %v2778 = vpop.f32.mrf.mxu0
      %v2779 = vadd.f32 0.0, %v2778
      %2780 = vmatmul.bf16.gmra.mxu0 %v2260
      %v2781 = vpop.f32.mrf.mxu0
      %v2782 = vadd.f32 0.0, %v2781
      %v2783 = vpop.f32.mrf.mxu0
      %v2784 = vadd.f32 0.0, %v2783
      %2785 = vmatmul.bf16.gmra.mxu0 %v2263
      %v2786 = vpop.f32.mrf.mxu0
      %v2787 = vadd.f32 0.0, %v2786
      %v2788 = vpop.f32.mrf.mxu0
      %v2789 = vadd.f32 0.0, %v2788
      %2790 = vmatmul.bf16.gmra.mxu0 %v2266
      %v2791 = vpop.f32.mrf.mxu0
      %v2792 = vadd.f32 0.0, %v2791
      %v2793 = vpop.f32.mrf.mxu0
      %v2794 = vadd.f32 0.0, %v2793
      %2795 = vmatmul.bf16.gmra.mxu0 %v2269
      %v2796 = vpop.f32.mrf.mxu0
      %v2797 = vadd.f32 0.0, %v2796
      %v2798 = vpop.f32.mrf.mxu0
      %v2799 = vadd.f32 0.0, %v2798
      %2800 = vmatmul.bf16.gmra.mxu0 %v2272
      %v2801 = vpop.f32.mrf.mxu0
      %v2802 = vadd.f32 0.0, %v2801
      %v2803 = vpop.f32.mrf.mxu0
      %v2804 = vadd.f32 0.0, %v2803
      %2805 = vmatmul.bf16.gmra.mxu0 %v2275
      %v2806 = vpop.f32.mrf.mxu0
      %v2807 = vadd.f32 0.0, %v2806
      %v2808 = vpop.f32.mrf.mxu0
      %v2809 = vadd.f32 0.0, %v2808
      %2810 = vmatmul.bf16.gmra.mxu0 %v2278
      %v2811 = vpop.f32.mrf.mxu0
      %v2812 = vadd.f32 0.0, %v2811
      %v2813 = vpop.f32.mrf.mxu0
      %v2814 = vadd.f32 0.0, %v2813
      %2815 = vmatmul.bf16.gmra.mxu0 %v2281
      %v2816 = vpop.f32.mrf.mxu0
      %v2817 = vadd.f32 0.0, %v2816
      %v2818 = vpop.f32.mrf.mxu0
      %v2819 = vadd.f32 0.0, %v2818
      %2820 = vmatmul.bf16.gmra.mxu0 %v2284
      %v2821 = vpop.f32.mrf.mxu0
      %v2822 = vadd.f32 0.0, %v2821
      %v2823 = vpop.f32.mrf.mxu0
      %v2824 = vadd.f32 0.0, %v2823
      %2825 = vmatmul.bf16.gmra.mxu0 %v2287
      %v2826 = vpop.f32.mrf.mxu0
      %v2827 = vadd.f32 0.0, %v2826
      %v2828 = vpop.f32.mrf.mxu0
      %v2829 = vadd.f32 0.0, %v2828
      %2830 = vmatmul.bf16.gmra.mxu0 %v2742
      %v2831 = vpop.f32.mrf.mxu0
      %v2832 = vadd.f32 0.0, %v2831
      %v2833 = vpop.f32.mrf.mxu0
      %v2834 = vadd.f32 0.0, %v2833
      %2835 = vdwg.mxu0
      %v2836 = vadd.f32 %v2702, %v2757
      %v2837 = vadd.f32 %v2703, %v2759
      %v2838 = vadd.f32 %v2704, %v2762
      %v2839 = vadd.f32 %v2705, %v2764
      %v2840 = vadd.f32 %v2706, %v2767
      %v2841 = vadd.f32 %v2707, %v2769
      %v2842 = vadd.f32 %v2708, %v2772
      %v2843 = vadd.f32 %v2709, %v2774
      %v2844 = vadd.f32 %v2710, %v2777
      %v2845 = vadd.f32 %v2711, %v2779
      %v2846 = vadd.f32 %v2712, %v2782
      %v2847 = vadd.f32 %v2713, %v2784
      %v2848 = vadd.f32 %v2714, %v2787
      %v2849 = vadd.f32 %v2715, %v2789
      %v2850 = vadd.f32 %v2716, %v2792
      %v2851 = vadd.f32 %v2717, %v2794
      %v2852 = vadd.f32 %v2718, %v2797
      %v2853 = vadd.f32 %v2719, %v2799
      %v2854 = vadd.f32 %v2720, %v2802
      %v2855 = vadd.f32 %v2721, %v2804
      %v2856 = vadd.f32 %v2722, %v2807
      %v2857 = vadd.f32 %v2723, %v2809
      %v2858 = vadd.f32 %v2724, %v2812
      %v2859 = vadd.f32 %v2725, %v2814
      %v2860 = vadd.f32 %v2726, %v2817
      %v2861 = vadd.f32 %v2727, %v2819
      %v2862 = vadd.f32 %v2728, %v2822
      %v2863 = vadd.f32 %v2729, %v2824
      %v2864 = vadd.f32 %v2730, %v2827
      %v2865 = vadd.f32 %v2731, %v2829
      %v2866 = vadd.f32 %v2732, %v2832
      %v2867 = vadd.f32 %v2733, %v2834
      %v2869 = vshrl.u32 %v1575, 16
      %v2871 = vrot.slane %v2869, 4
      %v2872 = vshll.u32 %v1575, 16
      %v2874 = vrot.slane %v2872, 5
      %v2875 = vor.u32 %v2871, %v2874
      %v2876 = vrot.slane %v2875, 4
      %v2878 = vshll.u32 %v1576, 16
      %v2880 = vrot.slane %v2878, 5
      %v2881 = vsel %vm1584, %v2876, %v2880
      %v2882 = vshrl.u32 %v1576, 16
      %v2884 = vrot.slane %v2882, 4
      %v2885 = vor.u32 %v2884, %v2880
      %v2886 = vrot.slane %v2885, 4
      %v2888 = vshll.u32 %v1577, 16
      %v2890 = vrot.slane %v2888, 5
      %v2891 = vsel %vm1584, %v2886, %v2890
      %s2892 = scalar_lea.vmem %s4, 16
      %v2893 = vld [vmem:[%s2892] sm:$0xf]
      %v2894 = vunpack.c.l.b16 %v2881
      %v2895 = vunpack.c.l.b16 %v2891
      %v2896 = vpack.c.b16 %v2895, %v2894
      %v2898 = vsel %vm2019, %v2896, 0
      %v2901 = vsel %vm2068, %v2893, 0
      %2903 = vmatpush.bf16.msra.mxu0 0
      %2904 = vmatpush.bf16.msra.mxu0 0
      %2905 = vmatpush.bf16.msra.mxu0 0
      %2906 = vmatpush.bf16.msra.mxu0 0
      %2907 = vmatpush.bf16.msra.mxu0 0
      %2908 = vmatpush.bf16.msra.mxu0 0
      %2909 = vmatpush.bf16.msra.mxu0 0
      %2910 = vmatpush.bf16.msra.mxu0 %v2901
      %2911 = vmatmul.bf16.gmra.mxu0 %v2024
      %v2912 = vpop.f32.mrf.mxu0
      %v2913 = vadd.f32 0.0, %v2912
      %v2914 = vpop.f32.mrf.mxu0
      %v2915 = vadd.f32 0.0, %v2914
      %2916 = vmatmul.bf16.gmra.mxu0 %v2027
      %v2917 = vpop.f32.mrf.mxu0
      %v2918 = vadd.f32 0.0, %v2917
      %v2919 = vpop.f32.mrf.mxu0
      %v2920 = vadd.f32 0.0, %v2919
      %2921 = vmatmul.bf16.gmra.mxu0 %v2030
      %v2922 = vpop.f32.mrf.mxu0
      %v2923 = vadd.f32 0.0, %v2922
      %v2924 = vpop.f32.mrf.mxu0
      %v2925 = vadd.f32 0.0, %v2924
      %2926 = vmatmul.bf16.gmra.mxu0 %v2033
      %v2927 = vpop.f32.mrf.mxu0
      %v2928 = vadd.f32 0.0, %v2927
      %v2929 = vpop.f32.mrf.mxu0
      %v2930 = vadd.f32 0.0, %v2929
      %2931 = vmatmul.bf16.gmra.mxu0 %v2036
      %v2932 = vpop.f32.mrf.mxu0
      %v2933 = vadd.f32 0.0, %v2932
      %v2934 = vpop.f32.mrf.mxu0
      %v2935 = vadd.f32 0.0, %v2934
      %2936 = vmatmul.bf16.gmra.mxu0 %v2039
      %v2937 = vpop.f32.mrf.mxu0
      %v2938 = vadd.f32 0.0, %v2937
      %v2939 = vpop.f32.mrf.mxu0
      %v2940 = vadd.f32 0.0, %v2939
      %2941 = vmatmul.bf16.gmra.mxu0 %v2042
      %v2942 = vpop.f32.mrf.mxu0
      %v2943 = vadd.f32 0.0, %v2942
      %v2944 = vpop.f32.mrf.mxu0
      %v2945 = vadd.f32 0.0, %v2944
      %2946 = vmatmul.bf16.gmra.mxu0 %v2045
      %v2947 = vpop.f32.mrf.mxu0
      %v2948 = vadd.f32 0.0, %v2947
      %v2949 = vpop.f32.mrf.mxu0
      %v2950 = vadd.f32 0.0, %v2949
      %2951 = vmatmul.bf16.gmra.mxu0 %v2048
      %v2952 = vpop.f32.mrf.mxu0
      %v2953 = vadd.f32 0.0, %v2952
      %v2954 = vpop.f32.mrf.mxu0
      %v2955 = vadd.f32 0.0, %v2954
      %2956 = vmatmul.bf16.gmra.mxu0 %v2051
      %v2957 = vpop.f32.mrf.mxu0
      %v2958 = vadd.f32 0.0, %v2957
      %v2959 = vpop.f32.mrf.mxu0
      %v2960 = vadd.f32 0.0, %v2959
      %2961 = vmatmul.bf16.gmra.mxu0 %v2054
      %v2962 = vpop.f32.mrf.mxu0
      %v2963 = vadd.f32 0.0, %v2962
      %v2964 = vpop.f32.mrf.mxu0
      %v2965 = vadd.f32 0.0, %v2964
      %2966 = vmatmul.bf16.gmra.mxu0 %v2057
      %v2967 = vpop.f32.mrf.mxu0
      %v2968 = vadd.f32 0.0, %v2967
      %v2969 = vpop.f32.mrf.mxu0
      %v2970 = vadd.f32 0.0, %v2969
      %2971 = vmatmul.bf16.gmra.mxu0 %v2060
      %v2972 = vpop.f32.mrf.mxu0
      %v2973 = vadd.f32 0.0, %v2972
      %v2974 = vpop.f32.mrf.mxu0
      %v2975 = vadd.f32 0.0, %v2974
      %2976 = vmatmul.bf16.gmra.mxu0 %v2063
      %v2977 = vpop.f32.mrf.mxu0
      %v2978 = vadd.f32 0.0, %v2977
      %v2979 = vpop.f32.mrf.mxu0
      %v2980 = vadd.f32 0.0, %v2979
      %2981 = vmatmul.bf16.gmra.mxu0 %v2066
      %v2982 = vpop.f32.mrf.mxu0
      %v2983 = vadd.f32 0.0, %v2982
      %v2984 = vpop.f32.mrf.mxu0
      %v2985 = vadd.f32 0.0, %v2984
      %2986 = vmatmul.bf16.gmra.mxu0 %v2898
      %v2987 = vpop.f32.mrf.mxu0
      %v2988 = vadd.f32 0.0, %v2987
      %v2989 = vpop.f32.mrf.mxu0
      %v2990 = vadd.f32 0.0, %v2989
      %2991 = vdwg.mxu0
      %v2992 = vadd.f32 %v2836, %v2913
      %v2993 = vadd.f32 %v2837, %v2915
      %v2994 = vadd.f32 %v2838, %v2918
      %v2995 = vadd.f32 %v2839, %v2920
      %v2996 = vadd.f32 %v2840, %v2923
      %v2997 = vadd.f32 %v2841, %v2925
      %v2998 = vadd.f32 %v2842, %v2928
      %v2999 = vadd.f32 %v2843, %v2930
      %v3000 = vadd.f32 %v2844, %v2933
      %v3001 = vadd.f32 %v2845, %v2935
      %v3002 = vadd.f32 %v2846, %v2938
      %v3003 = vadd.f32 %v2847, %v2940
      %v3004 = vadd.f32 %v2848, %v2943
      %v3005 = vadd.f32 %v2849, %v2945
      %v3006 = vadd.f32 %v2850, %v2948
      %v3007 = vadd.f32 %v2851, %v2950
      %v3008 = vadd.f32 %v2852, %v2953
      %v3009 = vadd.f32 %v2853, %v2955
      %v3010 = vadd.f32 %v2854, %v2958
      %v3011 = vadd.f32 %v2855, %v2960
      %v3012 = vadd.f32 %v2856, %v2963
      %v3013 = vadd.f32 %v2857, %v2965
      %v3014 = vadd.f32 %v2858, %v2968
      %v3015 = vadd.f32 %v2859, %v2970
      %v3016 = vadd.f32 %v2860, %v2973
      %v3017 = vadd.f32 %v2861, %v2975
      %v3018 = vadd.f32 %v2862, %v2978
      %v3019 = vadd.f32 %v2863, %v2980
      %v3020 = vadd.f32 %v2864, %v2983
      %v3021 = vadd.f32 %v2865, %v2985
      %v3022 = vadd.f32 %v2866, %v2988
      %v3023 = vadd.f32 %v2867, %v2990
      %v3025 = vrot.slane %v1575, 5
      %v3026 = vrot.slane %v3025, 4
      %v3027 = vrot.slane %v1576, 5
      %v3028 = vsel %vm2399, %v3026, %v3027
      %v3029 = vrot.slane %v3027, 4
      %v3030 = vrot.slane %v1577, 5
      %v3031 = vsel %vm2399, %v3029, %v3030
      %s3032 = scalar_lea.vmem %s4, 20
      %v3033 = vld [vmem:[%s3032] sm:$0xf]
      %v3034 = vunpack.c.l.b16 %v3028
      %v3035 = vunpack.c.l.b16 %v3031
      %v3036 = vpack.c.b16 %v3035, %v3034
      %v3038 = vsel %vm2019, %v3036, 0
      %v3041 = vsel %vm2068, %v3033, 0
      %3043 = vmatpush.bf16.msra.mxu0 0
      %3044 = vmatpush.bf16.msra.mxu0 0
      %3045 = vmatpush.bf16.msra.mxu0 0
      %3046 = vmatpush.bf16.msra.mxu0 0
      %3047 = vmatpush.bf16.msra.mxu0 0
      %3048 = vmatpush.bf16.msra.mxu0 0
      %3049 = vmatpush.bf16.msra.mxu0 0
      %3050 = vmatpush.bf16.msra.mxu0 %v3041
      %3051 = vmatmul.bf16.gmra.mxu0 %v2566
      %v3052 = vpop.f32.mrf.mxu0
      %v3053 = vadd.f32 0.0, %v3052
      %v3054 = vpop.f32.mrf.mxu0
      %v3055 = vadd.f32 0.0, %v3054
      %3056 = vmatmul.bf16.gmra.mxu0 %v2569
      %v3057 = vpop.f32.mrf.mxu0
      %v3058 = vadd.f32 0.0, %v3057
      %v3059 = vpop.f32.mrf.mxu0
      %v3060 = vadd.f32 0.0, %v3059
      %3061 = vmatmul.bf16.gmra.mxu0 %v2572
      %v3062 = vpop.f32.mrf.mxu0
      %v3063 = vadd.f32 0.0, %v3062
      %v3064 = vpop.f32.mrf.mxu0
      %v3065 = vadd.f32 0.0, %v3064
      %3066 = vmatmul.bf16.gmra.mxu0 %v2575
      %v3067 = vpop.f32.mrf.mxu0
      %v3068 = vadd.f32 0.0, %v3067
      %v3069 = vpop.f32.mrf.mxu0
      %v3070 = vadd.f32 0.0, %v3069
      %3071 = vmatmul.bf16.gmra.mxu0 %v2578
      %v3072 = vpop.f32.mrf.mxu0
      %v3073 = vadd.f32 0.0, %v3072
      %v3074 = vpop.f32.mrf.mxu0
      %v3075 = vadd.f32 0.0, %v3074
      %3076 = vmatmul.bf16.gmra.mxu0 %v2581
      %v3077 = vpop.f32.mrf.mxu0
      %v3078 = vadd.f32 0.0, %v3077
      %v3079 = vpop.f32.mrf.mxu0
      %v3080 = vadd.f32 0.0, %v3079
      %3081 = vmatmul.bf16.gmra.mxu0 %v2584
      %v3082 = vpop.f32.mrf.mxu0
      %v3083 = vadd.f32 0.0, %v3082
      %v3084 = vpop.f32.mrf.mxu0
      %v3085 = vadd.f32 0.0, %v3084
      %3086 = vmatmul.bf16.gmra.mxu0 %v2587
      %v3087 = vpop.f32.mrf.mxu0
      %v3088 = vadd.f32 0.0, %v3087
      %v3089 = vpop.f32.mrf.mxu0
      %v3090 = vadd.f32 0.0, %v3089
      %3091 = vmatmul.bf16.gmra.mxu0 %v2590
      %v3092 = vpop.f32.mrf.mxu0
      %v3093 = vadd.f32 0.0, %v3092
      %v3094 = vpop.f32.mrf.mxu0
      %v3095 = vadd.f32 0.0, %v3094
      %3096 = vmatmul.bf16.gmra.mxu0 %v2593
      %v3097 = vpop.f32.mrf.mxu0
      %v3098 = vadd.f32 0.0, %v3097
      %v3099 = vpop.f32.mrf.mxu0
      %v3100 = vadd.f32 0.0, %v3099
      %3101 = vmatmul.bf16.gmra.mxu0 %v2596
      %v3102 = vpop.f32.mrf.mxu0
      %v3103 = vadd.f32 0.0, %v3102
      %v3104 = vpop.f32.mrf.mxu0
      %v3105 = vadd.f32 0.0, %v3104
      %3106 = vmatmul.bf16.gmra.mxu0 %v2599
      %v3107 = vpop.f32.mrf.mxu0
      %v3108 = vadd.f32 0.0, %v3107
      %v3109 = vpop.f32.mrf.mxu0
      %v3110 = vadd.f32 0.0, %v3109
      %3111 = vmatmul.bf16.gmra.mxu0 %v2602
      %v3112 = vpop.f32.mrf.mxu0
      %v3113 = vadd.f32 0.0, %v3112
      %v3114 = vpop.f32.mrf.mxu0
      %v3115 = vadd.f32 0.0, %v3114
      %3116 = vmatmul.bf16.gmra.mxu0 %v2605
      %v3117 = vpop.f32.mrf.mxu0
      %v3118 = vadd.f32 0.0, %v3117
      %v3119 = vpop.f32.mrf.mxu0
      %v3120 = vadd.f32 0.0, %v3119
      %3121 = vmatmul.bf16.gmra.mxu0 %v2608
      %v3122 = vpop.f32.mrf.mxu0
      %v3123 = vadd.f32 0.0, %v3122
      %v3124 = vpop.f32.mrf.mxu0
      %v3125 = vadd.f32 0.0, %v3124
      %3126 = vmatmul.bf16.gmra.mxu0 %v3038
      %v3127 = vpop.f32.mrf.mxu0
      %v3128 = vadd.f32 0.0, %v3127
      %v3129 = vpop.f32.mrf.mxu0
      %v3130 = vadd.f32 0.0, %v3129
      %3131 = vdwg.mxu0
      %v3132 = vadd.f32 %v2992, %v3053
      %v3133 = vadd.f32 %v2993, %v3055
      %v3134 = vadd.f32 %v2994, %v3058
      %v3135 = vadd.f32 %v2995, %v3060
      %v3136 = vadd.f32 %v2996, %v3063
      %v3137 = vadd.f32 %v2997, %v3065
      %v3138 = vadd.f32 %v2998, %v3068
      %v3139 = vadd.f32 %v2999, %v3070
      %v3140 = vadd.f32 %v3000, %v3073
      %v3141 = vadd.f32 %v3001, %v3075
      %v3142 = vadd.f32 %v3002, %v3078
      %v3143 = vadd.f32 %v3003, %v3080
      %v3144 = vadd.f32 %v3004, %v3083
      %v3145 = vadd.f32 %v3005, %v3085
      %v3146 = vadd.f32 %v3006, %v3088
      %v3147 = vadd.f32 %v3007, %v3090
      %v3148 = vadd.f32 %v3008, %v3093
      %v3149 = vadd.f32 %v3009, %v3095
      %v3150 = vadd.f32 %v3010, %v3098
      %v3151 = vadd.f32 %v3011, %v3100
      %v3152 = vadd.f32 %v3012, %v3103
      %v3153 = vadd.f32 %v3013, %v3105
      %v3154 = vadd.f32 %v3014, %v3108
      %v3155 = vadd.f32 %v3015, %v3110
      %v3156 = vadd.f32 %v3016, %v3113
      %v3157 = vadd.f32 %v3017, %v3115
      %v3158 = vadd.f32 %v3018, %v3118
      %v3159 = vadd.f32 %v3019, %v3120
      %v3160 = vadd.f32 %v3020, %v3123
      %v3161 = vadd.f32 %v3021, %v3125
      %v3162 = vadd.f32 %v3022, %v3128
      %v3163 = vadd.f32 %v3023, %v3130
      %s3164 = scalar_lea.vmem %s4, 24
      %v3165 = vld [vmem:[%s3164] sm:$0xf]
      %v3168 = vunpack.c.l.b16 %v1578
      %v3169 = vunpack.c.l.b16 %v1579
      %v3170 = vpack.c.b16 %v3169, %v3168
      %v3172 = vsel %vm2019, %v3170, 0
      %v3175 = vsel %vm2068, %v3165, 0
      %3177 = vmatpush.bf16.msra.mxu0 0
      %3178 = vmatpush.bf16.msra.mxu0 0
      %3179 = vmatpush.bf16.msra.mxu0 0
      %3180 = vmatpush.bf16.msra.mxu0 0
      %3181 = vmatpush.bf16.msra.mxu0 0
      %3182 = vmatpush.bf16.msra.mxu0 0
      %3183 = vmatpush.bf16.msra.mxu0 0
      %3184 = vmatpush.bf16.msra.mxu0 %v3175
      %3185 = vmatmul.bf16.gmra.mxu0 %v2248
      %v3186 = vpop.f32.mrf.mxu0
      %v3187 = vadd.f32 0.0, %v3186
      %v3188 = vpop.f32.mrf.mxu0
      %v3189 = vadd.f32 0.0, %v3188
      %3190 = vmatmul.bf16.gmra.mxu0 %v2251
      %v3191 = vpop.f32.mrf.mxu0
      %v3192 = vadd.f32 0.0, %v3191
      %v3193 = vpop.f32.mrf.mxu0
      %v3194 = vadd.f32 0.0, %v3193
      %3195 = vmatmul.bf16.gmra.mxu0 %v2254
      %v3196 = vpop.f32.mrf.mxu0
      %v3197 = vadd.f32 0.0, %v3196
      %v3198 = vpop.f32.mrf.mxu0
      %v3199 = vadd.f32 0.0, %v3198
      %3200 = vmatmul.bf16.gmra.mxu0 %v2257
      %v3201 = vpop.f32.mrf.mxu0
      %v3202 = vadd.f32 0.0, %v3201
      %v3203 = vpop.f32.mrf.mxu0
      %v3204 = vadd.f32 0.0, %v3203
      %3205 = vmatmul.bf16.gmra.mxu0 %v2260
      %v3206 = vpop.f32.mrf.mxu0
      %v3207 = vadd.f32 0.0, %v3206
      %v3208 = vpop.f32.mrf.mxu0
      %v3209 = vadd.f32 0.0, %v3208
      %3210 = vmatmul.bf16.gmra.mxu0 %v2263
      %v3211 = vpop.f32.mrf.mxu0
      %v3212 = vadd.f32 0.0, %v3211
      %v3213 = vpop.f32.mrf.mxu0
      %v3214 = vadd.f32 0.0, %v3213
      %3215 = vmatmul.bf16.gmra.mxu0 %v2266
      %v3216 = vpop.f32.mrf.mxu0
      %v3217 = vadd.f32 0.0, %v3216
      %v3218 = vpop.f32.mrf.mxu0
      %v3219 = vadd.f32 0.0, %v3218
      %3220 = vmatmul.bf16.gmra.mxu0 %v2269
      %v3221 = vpop.f32.mrf.mxu0
      %v3222 = vadd.f32 0.0, %v3221
      %v3223 = vpop.f32.mrf.mxu0
      %v3224 = vadd.f32 0.0, %v3223
      %3225 = vmatmul.bf16.gmra.mxu0 %v2272
      %v3226 = vpop.f32.mrf.mxu0
      %v3227 = vadd.f32 0.0, %v3226
      %v3228 = vpop.f32.mrf.mxu0
      %v3229 = vadd.f32 0.0, %v3228
      %3230 = vmatmul.bf16.gmra.mxu0 %v2275
      %v3231 = vpop.f32.mrf.mxu0
      %v3232 = vadd.f32 0.0, %v3231
      %v3233 = vpop.f32.mrf.mxu0
      %v3234 = vadd.f32 0.0, %v3233
      %3235 = vmatmul.bf16.gmra.mxu0 %v2278
      %v3236 = vpop.f32.mrf.mxu0
      %v3237 = vadd.f32 0.0, %v3236
      %v3238 = vpop.f32.mrf.mxu0
      %v3239 = vadd.f32 0.0, %v3238
      %3240 = vmatmul.bf16.gmra.mxu0 %v2281
      %v3241 = vpop.f32.mrf.mxu0
      %v3242 = vadd.f32 0.0, %v3241
      %v3243 = vpop.f32.mrf.mxu0
      %v3244 = vadd.f32 0.0, %v3243
      %3245 = vmatmul.bf16.gmra.mxu0 %v2284
      %v3246 = vpop.f32.mrf.mxu0
      %v3247 = vadd.f32 0.0, %v3246
      %v3248 = vpop.f32.mrf.mxu0
      %v3249 = vadd.f32 0.0, %v3248
      %3250 = vmatmul.bf16.gmra.mxu0 %v2287
      %v3251 = vpop.f32.mrf.mxu0
      %v3252 = vadd.f32 0.0, %v3251
      %v3253 = vpop.f32.mrf.mxu0
      %v3254 = vadd.f32 0.0, %v3253
      %3255 = vmatmul.bf16.gmra.mxu0 %v2742
      %v3256 = vpop.f32.mrf.mxu0
      %v3257 = vadd.f32 0.0, %v3256
      %v3258 = vpop.f32.mrf.mxu0
      %v3259 = vadd.f32 0.0, %v3258
      %3260 = vmatmul.bf16.gmra.mxu0 %v3172
      %v3261 = vpop.f32.mrf.mxu0
      %v3262 = vadd.f32 0.0, %v3261
      %v3263 = vpop.f32.mrf.mxu0
      %v3264 = vadd.f32 0.0, %v3263
      %3265 = vdwg.mxu0
      %v3266 = vadd.f32 %v3132, %v3187
      %v3267 = vadd.f32 %v3133, %v3189
      %v3268 = vadd.f32 %v3134, %v3192
      %v3269 = vadd.f32 %v3135, %v3194
      %v3270 = vadd.f32 %v3136, %v3197
      %v3271 = vadd.f32 %v3137, %v3199
      %v3272 = vadd.f32 %v3138, %v3202
      %v3273 = vadd.f32 %v3139, %v3204
      %v3274 = vadd.f32 %v3140, %v3207
      %v3275 = vadd.f32 %v3141, %v3209
      %v3276 = vadd.f32 %v3142, %v3212
      %v3277 = vadd.f32 %v3143, %v3214
      %v3278 = vadd.f32 %v3144, %v3217
      %v3279 = vadd.f32 %v3145, %v3219
      %v3280 = vadd.f32 %v3146, %v3222
      %v3281 = vadd.f32 %v3147, %v3224
      %v3282 = vadd.f32 %v3148, %v3227
      %v3283 = vadd.f32 %v3149, %v3229
      %v3284 = vadd.f32 %v3150, %v3232
      %v3285 = vadd.f32 %v3151, %v3234
      %v3286 = vadd.f32 %v3152, %v3237
      %v3287 = vadd.f32 %v3153, %v3239
      %v3288 = vadd.f32 %v3154, %v3242
      %v3289 = vadd.f32 %v3155, %v3244
      %v3290 = vadd.f32 %v3156, %v3247
      %v3291 = vadd.f32 %v3157, %v3249
      %v3292 = vadd.f32 %v3158, %v3252
      %v3293 = vadd.f32 %v3159, %v3254
      %v3294 = vadd.f32 %v3160, %v3257
      %v3295 = vadd.f32 %v3161, %v3259
      %v3296 = vadd.f32 %v3162, %v3262
      %v3297 = vadd.f32 %v3163, %v3264
      %v3299 = vshrl.u32 %v1578, 16
      %v3301 = vrot.slane %v3299, 4
      %v3302 = vshll.u32 %v1578, 16
      %v3304 = vrot.slane %v3302, 5
      %v3305 = vor.u32 %v3301, %v3304
      %v3306 = vrot.slane %v3305, 4
      %v3308 = vshll.u32 %v1579, 16
      %v3310 = vrot.slane %v3308, 5
      %v3311 = vsel %vm1584, %v3306, %v3310
      %v3312 = vshrl.u32 %v1579, 16
      %v3314 = vrot.slane %v3312, 4
      %v3315 = vor.u32 %v3314, %v3310
      %v3316 = vrot.slane %v3315, 4
      %v3318 = vshll.u32 %v1580, 16
      %v3320 = vrot.slane %v3318, 5
      %v3321 = vsel %vm1584, %v3316, %v3320
      %s3322 = scalar_lea.vmem %s4, 28
      %v3323 = vld [vmem:[%s3322] sm:$0xf]
      %v3324 = vunpack.c.l.b16 %v3311
      %v3325 = vunpack.c.l.b16 %v3321
      %v3326 = vpack.c.b16 %v3325, %v3324
      %v3328 = vsel %vm2019, %v3326, 0
      %v3331 = vsel %vm2068, %v3323, 0
      %3333 = vmatpush.bf16.msra.mxu0 0
      %3334 = vmatpush.bf16.msra.mxu0 0
      %3335 = vmatpush.bf16.msra.mxu0 0
      %3336 = vmatpush.bf16.msra.mxu0 0
      %3337 = vmatpush.bf16.msra.mxu0 0
      %3338 = vmatpush.bf16.msra.mxu0 0
      %3339 = vmatpush.bf16.msra.mxu0 0
      %3340 = vmatpush.bf16.msra.mxu0 %v3331
      %3341 = vmatmul.bf16.gmra.mxu0 %v2027
      %v3342 = vpop.f32.mrf.mxu0
      %v3343 = vadd.f32 0.0, %v3342
      %v3344 = vpop.f32.mrf.mxu0
      %v3345 = vadd.f32 0.0, %v3344
      %3346 = vmatmul.bf16.gmra.mxu0 %v2030
      %v3347 = vpop.f32.mrf.mxu0
      %v3348 = vadd.f32 0.0, %v3347
      %v3349 = vpop.f32.mrf.mxu0
      %v3350 = vadd.f32 0.0, %v3349
      %3351 = vmatmul.bf16.gmra.mxu0 %v2033
      %v3352 = vpop.f32.mrf.mxu0
      %v3353 = vadd.f32 0.0, %v3352
      %v3354 = vpop.f32.mrf.mxu0
      %v3355 = vadd.f32 0.0, %v3354
      %3356 = vmatmul.bf16.gmra.mxu0 %v2036
      %v3357 = vpop.f32.mrf.mxu0
      %v3358 = vadd.f32 0.0, %v3357
      %v3359 = vpop.f32.mrf.mxu0
      %v3360 = vadd.f32 0.0, %v3359
      %3361 = vmatmul.bf16.gmra.mxu0 %v2039
      %v3362 = vpop.f32.mrf.mxu0
      %v3363 = vadd.f32 0.0, %v3362
      %v3364 = vpop.f32.mrf.mxu0
      %v3365 = vadd.f32 0.0, %v3364
      %3366 = vmatmul.bf16.gmra.mxu0 %v2042
      %v3367 = vpop.f32.mrf.mxu0
      %v3368 = vadd.f32 0.0, %v3367
      %v3369 = vpop.f32.mrf.mxu0
      %v3370 = vadd.f32 0.0, %v3369
      %3371 = vmatmul.bf16.gmra.mxu0 %v2045
      %v3372 = vpop.f32.mrf.mxu0
      %v3373 = vadd.f32 0.0, %v3372
      %v3374 = vpop.f32.mrf.mxu0
      %v3375 = vadd.f32 0.0, %v3374
      %3376 = vmatmul.bf16.gmra.mxu0 %v2048
      %v3377 = vpop.f32.mrf.mxu0
      %v3378 = vadd.f32 0.0, %v3377
      %v3379 = vpop.f32.mrf.mxu0
      %v3380 = vadd.f32 0.0, %v3379
      %3381 = vmatmul.bf16.gmra.mxu0 %v2051
      %v3382 = vpop.f32.mrf.mxu0
      %v3383 = vadd.f32 0.0, %v3382
      %v3384 = vpop.f32.mrf.mxu0
      %v3385 = vadd.f32 0.0, %v3384
      %3386 = vmatmul.bf16.gmra.mxu0 %v2054
      %v3387 = vpop.f32.mrf.mxu0
      %v3388 = vadd.f32 0.0, %v3387
      %v3389 = vpop.f32.mrf.mxu0
      %v3390 = vadd.f32 0.0, %v3389
      %3391 = vmatmul.bf16.gmra.mxu0 %v2057
      %v3392 = vpop.f32.mrf.mxu0
      %v3393 = vadd.f32 0.0, %v3392
      %v3394 = vpop.f32.mrf.mxu0
      %v3395 = vadd.f32 0.0, %v3394
      %3396 = vmatmul.bf16.gmra.mxu0 %v2060
      %v3397 = vpop.f32.mrf.mxu0
      %v3398 = vadd.f32 0.0, %v3397
      %v3399 = vpop.f32.mrf.mxu0
      %v3400 = vadd.f32 0.0, %v3399
      %3401 = vmatmul.bf16.gmra.mxu0 %v2063
      %v3402 = vpop.f32.mrf.mxu0
      %v3403 = vadd.f32 0.0, %v3402
      %v3404 = vpop.f32.mrf.mxu0
      %v3405 = vadd.f32 0.0, %v3404
      %3406 = vmatmul.bf16.gmra.mxu0 %v2066
      %v3407 = vpop.f32.mrf.mxu0
      %v3408 = vadd.f32 0.0, %v3407
      %v3409 = vpop.f32.mrf.mxu0
      %v3410 = vadd.f32 0.0, %v3409
      %3411 = vmatmul.bf16.gmra.mxu0 %v2898
      %v3412 = vpop.f32.mrf.mxu0
      %v3413 = vadd.f32 0.0, %v3412
      %v3414 = vpop.f32.mrf.mxu0
      %v3415 = vadd.f32 0.0, %v3414
      %3416 = vmatmul.bf16.gmra.mxu0 %v3328
      %v3417 = vpop.f32.mrf.mxu0
      %v3418 = vadd.f32 0.0, %v3417
      %v3419 = vpop.f32.mrf.mxu0
      %v3420 = vadd.f32 0.0, %v3419
      %3421 = vdwg.mxu0
      %v3422 = vadd.f32 %v3266, %v3343
      %v3423 = vadd.f32 %v3267, %v3345
      %v3424 = vadd.f32 %v3268, %v3348
      %v3425 = vadd.f32 %v3269, %v3350
      %v3426 = vadd.f32 %v3270, %v3353
      %v3427 = vadd.f32 %v3271, %v3355
      %v3428 = vadd.f32 %v3272, %v3358
      %v3429 = vadd.f32 %v3273, %v3360
      %v3430 = vadd.f32 %v3274, %v3363
      %v3431 = vadd.f32 %v3275, %v3365
      %v3432 = vadd.f32 %v3276, %v3368
      %v3433 = vadd.f32 %v3277, %v3370
      %v3434 = vadd.f32 %v3278, %v3373
      %v3435 = vadd.f32 %v3279, %v3375
      %v3436 = vadd.f32 %v3280, %v3378
      %v3437 = vadd.f32 %v3281, %v3380
      %v3438 = vadd.f32 %v3282, %v3383
      %v3439 = vadd.f32 %v3283, %v3385
      %v3440 = vadd.f32 %v3284, %v3388
      %v3441 = vadd.f32 %v3285, %v3390
      %v3442 = vadd.f32 %v3286, %v3393
      %v3443 = vadd.f32 %v3287, %v3395
      %v3444 = vadd.f32 %v3288, %v3398
      %v3445 = vadd.f32 %v3289, %v3400
      %v3446 = vadd.f32 %v3290, %v3403
      %v3447 = vadd.f32 %v3291, %v3405
      %v3448 = vadd.f32 %v3292, %v3408
      %v3449 = vadd.f32 %v3293, %v3410
      %v3450 = vadd.f32 %v3294, %v3413
      %v3451 = vadd.f32 %v3295, %v3415
      %v3452 = vadd.f32 %v3296, %v3418
      %v3453 = vadd.f32 %v3297, %v3420
      %v3455 = vrot.slane %v1578, 5
      %v3456 = vrot.slane %v3455, 4
      %v3457 = vrot.slane %v1579, 5
      %v3458 = vsel %vm2399, %v3456, %v3457
      %v3459 = vrot.slane %v3457, 4
      %v3460 = vrot.slane %v1580, 5
      %v3461 = vsel %vm2399, %v3459, %v3460
      %s3462 = scalar_lea.vmem %s4, 32
      %v3463 = vld [vmem:[%s3462] sm:$0xf]
      %v3464 = vunpack.c.l.b16 %v3458
      %v3465 = vunpack.c.l.b16 %v3461
      %v3466 = vpack.c.b16 %v3465, %v3464
      %v3468 = vsel %vm2019, %v3466, 0
      %v3471 = vsel %vm2068, %v3463, 0
      %3473 = vmatpush.bf16.msra.mxu0 0
      %3474 = vmatpush.bf16.msra.mxu0 0
      %3475 = vmatpush.bf16.msra.mxu0 0
      %3476 = vmatpush.bf16.msra.mxu0 0
      %3477 = vmatpush.bf16.msra.mxu0 0
      %3478 = vmatpush.bf16.msra.mxu0 0
      %3479 = vmatpush.bf16.msra.mxu0 0
      %3480 = vmatpush.bf16.msra.mxu0 %v3471
      %3481 = vmatmul.bf16.gmra.mxu0 %v2569
      %v3482 = vpop.f32.mrf.mxu0
      %v3483 = vadd.f32 0.0, %v3482
      %v3484 = vpop.f32.mrf.mxu0
      %v3485 = vadd.f32 0.0, %v3484
      %3486 = vmatmul.bf16.gmra.mxu0 %v2572
      %v3487 = vpop.f32.mrf.mxu0
      %v3488 = vadd.f32 0.0, %v3487
      %v3489 = vpop.f32.mrf.mxu0
      %v3490 = vadd.f32 0.0, %v3489
      %3491 = vmatmul.bf16.gmra.mxu0 %v2575
      %v3492 = vpop.f32.mrf.mxu0
      %v3493 = vadd.f32 0.0, %v3492
      %v3494 = vpop.f32.mrf.mxu0
      %v3495 = vadd.f32 0.0, %v3494
      %3496 = vmatmul.bf16.gmra.mxu0 %v2578
      %v3497 = vpop.f32.mrf.mxu0
      %v3498 = vadd.f32 0.0, %v3497
      %v3499 = vpop.f32.mrf.mxu0
      %v3500 = vadd.f32 0.0, %v3499
      %3501 = vmatmul.bf16.gmra.mxu0 %v2581
      %v3502 = vpop.f32.mrf.mxu0
      %v3503 = vadd.f32 0.0, %v3502
      %v3504 = vpop.f32.mrf.mxu0
      %v3505 = vadd.f32 0.0, %v3504
      %3506 = vmatmul.bf16.gmra.mxu0 %v2584
      %v3507 = vpop.f32.mrf.mxu0
      %v3508 = vadd.f32 0.0, %v3507
      %v3509 = vpop.f32.mrf.mxu0
      %v3510 = vadd.f32 0.0, %v3509
      %3511 = vmatmul.bf16.gmra.mxu0 %v2587
      %v3512 = vpop.f32.mrf.mxu0
      %v3513 = vadd.f32 0.0, %v3512
      %v3514 = vpop.f32.mrf.mxu0
      %v3515 = vadd.f32 0.0, %v3514
      %3516 = vmatmul.bf16.gmra.mxu0 %v2590
      %v3517 = vpop.f32.mrf.mxu0
      %v3518 = vadd.f32 0.0, %v3517
      %v3519 = vpop.f32.mrf.mxu0
      %v3520 = vadd.f32 0.0, %v3519
      %3521 = vmatmul.bf16.gmra.mxu0 %v2593
      %v3522 = vpop.f32.mrf.mxu0
      %v3523 = vadd.f32 0.0, %v3522
      %v3524 = vpop.f32.mrf.mxu0
      %v3525 = vadd.f32 0.0, %v3524
      %3526 = vmatmul.bf16.gmra.mxu0 %v2596
      %v3527 = vpop.f32.mrf.mxu0
      %v3528 = vadd.f32 0.0, %v3527
      %v3529 = vpop.f32.mrf.mxu0
      %v3530 = vadd.f32 0.0, %v3529
      %3531 = vmatmul.bf16.gmra.mxu0 %v2599
      %v3532 = vpop.f32.mrf.mxu0
      %v3533 = vadd.f32 0.0, %v3532
      %v3534 = vpop.f32.mrf.mxu0
      %v3535 = vadd.f32 0.0, %v3534
      %3536 = vmatmul.bf16.gmra.mxu0 %v2602
      %v3537 = vpop.f32.mrf.mxu0
      %v3538 = vadd.f32 0.0, %v3537
      %v3539 = vpop.f32.mrf.mxu0
      %v3540 = vadd.f32 0.0, %v3539
      %3541 = vmatmul.bf16.gmra.mxu0 %v2605
      %v3542 = vpop.f32.mrf.mxu0
      %v3543 = vadd.f32 0.0, %v3542
      %v3544 = vpop.f32.mrf.mxu0
      %v3545 = vadd.f32 0.0, %v3544
      %3546 = vmatmul.bf16.gmra.mxu0 %v2608
      %v3547 = vpop.f32.mrf.mxu0
      %v3548 = vadd.f32 0.0, %v3547
      %v3549 = vpop.f32.mrf.mxu0
      %v3550 = vadd.f32 0.0, %v3549
      %3551 = vmatmul.bf16.gmra.mxu0 %v3038
      %v3552 = vpop.f32.mrf.mxu0
      %v3553 = vadd.f32 0.0, %v3552
      %v3554 = vpop.f32.mrf.mxu0
      %v3555 = vadd.f32 0.0, %v3554
      %3556 = vmatmul.bf16.gmra.mxu0 %v3468
      %v3557 = vpop.f32.mrf.mxu0
      %v3558 = vadd.f32 0.0, %v3557
      %v3559 = vpop.f32.mrf.mxu0
      %v3560 = vadd.f32 0.0, %v3559
      %3561 = vdwg.mxu0
      %v3562 = vadd.f32 %v3422, %v3483
      %v3563 = vadd.f32 %v3423, %v3485
      %v3564 = vadd.f32 %v3424, %v3488
      %v3565 = vadd.f32 %v3425, %v3490
      %v3566 = vadd.f32 %v3426, %v3493
      %v3567 = vadd.f32 %v3427, %v3495
      %v3568 = vadd.f32 %v3428, %v3498
      %v3569 = vadd.f32 %v3429, %v3500
      %v3570 = vadd.f32 %v3430, %v3503
      %v3571 = vadd.f32 %v3431, %v3505
      %v3572 = vadd.f32 %v3432, %v3508
      %v3573 = vadd.f32 %v3433, %v3510
      %v3574 = vadd.f32 %v3434, %v3513
      %v3575 = vadd.f32 %v3435, %v3515
      %v3576 = vadd.f32 %v3436, %v3518
      %v3577 = vadd.f32 %v3437, %v3520
      %v3578 = vadd.f32 %v3438, %v3523
      %v3579 = vadd.f32 %v3439, %v3525
      %v3580 = vadd.f32 %v3440, %v3528
      %v3581 = vadd.f32 %v3441, %v3530
      %v3582 = vadd.f32 %v3442, %v3533
      %v3583 = vadd.f32 %v3443, %v3535
      %v3584 = vadd.f32 %v3444, %v3538
      %v3585 = vadd.f32 %v3445, %v3540
      %v3586 = vadd.f32 %v3446, %v3543
      %v3587 = vadd.f32 %v3447, %v3545
      %v3588 = vadd.f32 %v3448, %v3548
      %v3589 = vadd.f32 %v3449, %v3550
      %v3590 = vadd.f32 %v3450, %v3553
      %v3591 = vadd.f32 %v3451, %v3555
      %v3592 = vadd.f32 %v3452, %v3558
      %v3593 = vadd.f32 %v3453, %v3560
      %v3594 = vld [vmem:[#allocation3] sm:$0xf]
      %v3595 = vld [vmem:[#allocation3 + $0x4] sm:$0xf]
      %v3596 = vld [vmem:[#allocation3 + $0x8] sm:$0x1]
      %v3597 = vld [vmem:[#allocation3 + $0xc] sm:$0xf]
      %v3598 = vld [vmem:[#allocation3 + $0x10] sm:$0xf]
      %v3599 = vld [vmem:[#allocation3 + $0x14] sm:$0x1]
      %v3600 = vld [vmem:[#allocation3 + $0x18] sm:$0xf]
      %v3601 = vld [vmem:[#allocation3 + $0x1c] sm:$0xf]
      %v3602 = vld [vmem:[#allocation3 + $0x20] sm:$0x1]
      %v3603 = vld [vmem:[#allocation3 + $0x24] sm:$0xf]
      %v3604 = vld [vmem:[#allocation3 + $0x28] sm:$0xf]
      %v3605 = vld [vmem:[#allocation3 + $0x2c] sm:$0x1]
      %v3606 = vld [vmem:[#allocation3 + $0x30] sm:$0xf]
      %v3607 = vld [vmem:[#allocation3 + $0x34] sm:$0xf]
      %v3608 = vld [vmem:[#allocation3 + $0x38] sm:$0x1]
      %v3609 = vld [vmem:[#allocation3 + $0x3c] sm:$0xf]
      %v3610 = vld [vmem:[#allocation3 + $0x40] sm:$0xf]
      %v3611 = vld [vmem:[#allocation3 + $0x44] sm:$0x1]
      %v3612 = vld [vmem:[#allocation3 + $0x48] sm:$0xf]
      %v3613 = vld [vmem:[#allocation3 + $0x4c] sm:$0xf]
      %v3614 = vld [vmem:[#allocation3 + $0x50] sm:$0x1]
      %v3615 = vld [vmem:[#allocation3 + $0x54] sm:$0xf]
      %v3616 = vld [vmem:[#allocation3 + $0x58] sm:$0xf]
      %v3617 = vld [vmem:[#allocation3 + $0x5c] sm:$0x1]
      %v3618 = vld [vmem:[#allocation3 + $0x60] sm:$0xf]
      %v3619 = vld [vmem:[#allocation3 + $0x64] sm:$0xf]
      %v3620 = vld [vmem:[#allocation3 + $0x68] sm:$0x1]
      %v3621 = vld [vmem:[#allocation3 + $0x6c] sm:$0xf]
      %v3622 = vld [vmem:[#allocation3 + $0x70] sm:$0xf]
      %v3623 = vld [vmem:[#allocation3 + $0x74] sm:$0x1]
      %v3624 = vld [vmem:[#allocation3 + $0x78] sm:$0xf]
      %v3625 = vld [vmem:[#allocation3 + $0x7c] sm:$0xf]
      %v3626 = vld [vmem:[#allocation3 + $0x80] sm:$0x1]
      %v3627 = vld [vmem:[#allocation3 + $0x84] sm:$0xf]
      %v3628 = vld [vmem:[#allocation3 + $0x88] sm:$0xf]
      %v3629 = vld [vmem:[#allocation3 + $0x8c] sm:$0x1]
      %v3630 = vld [vmem:[#allocation3 + $0x90] sm:$0xf]
      %v3631 = vld [vmem:[#allocation3 + $0x94] sm:$0xf]
      %v3632 = vld [vmem:[#allocation3 + $0x98] sm:$0x1]
      %v3633 = vld [vmem:[#allocation3 + $0x9c] sm:$0xf]
      %v3634 = vld [vmem:[#allocation3 + $0xa0] sm:$0xf]
      %v3635 = vld [vmem:[#allocation3 + $0xa4] sm:$0x1]
      %v3636 = vld [vmem:[#allocation3 + $0xa8] sm:$0xf]
      %v3637 = vld [vmem:[#allocation3 + $0xac] sm:$0xf]
      %v3638 = vld [vmem:[#allocation3 + $0xb0] sm:$0x1]
      %v3639 = vld [vmem:[#allocation3 + $0xb4] sm:$0xf]
      %v3640 = vld [vmem:[#allocation3 + $0xb8] sm:$0xf]
      %v3641 = vld [vmem:[#allocation3 + $0xbc] sm:$0x1]
      %v3642 = vld [vmem:[#allocation3 + $0xc0] sm:$0xf]
      %v3643 = vld [vmem:[#allocation3 + $0xc4] sm:$0xf]
      %v3644 = vld [vmem:[#allocation3 + $0xc8] sm:$0x1]
      %v3645 = vld [vmem:[#allocation3 + $0xcc] sm:$0xf]
      %v3646 = vld [vmem:[#allocation3 + $0xd0] sm:$0xf]
      %v3647 = vld [vmem:[#allocation3 + $0xd4] sm:$0x1]
      %v3648 = vld [vmem:[%s5] sm:$0xf]
      %v3681 = vunpack.c.l.b16 %v3594
      %v3682 = vunpack.c.l.b16 %v3595
      %v3683 = vunpack.c.l.b16 %v3597
      %v3684 = vunpack.c.l.b16 %v3598
      %v3685 = vunpack.c.l.b16 %v3600
      %v3686 = vunpack.c.l.b16 %v3601
      %v3687 = vunpack.c.l.b16 %v3603
      %v3688 = vunpack.c.l.b16 %v3604
      %v3689 = vunpack.c.l.b16 %v3606
      %v3690 = vunpack.c.l.b16 %v3607
      %v3691 = vunpack.c.l.b16 %v3609
      %v3692 = vunpack.c.l.b16 %v3610
      %v3693 = vunpack.c.l.b16 %v3612
      %v3694 = vunpack.c.l.b16 %v3613
      %v3695 = vunpack.c.l.b16 %v3615
      %v3696 = vunpack.c.l.b16 %v3616
      %v3697 = vunpack.c.l.b16 %v3618
      %v3698 = vunpack.c.l.b16 %v3619
      %v3699 = vunpack.c.l.b16 %v3621
      %v3700 = vunpack.c.l.b16 %v3622
      %v3701 = vunpack.c.l.b16 %v3624
      %v3702 = vunpack.c.l.b16 %v3625
      %v3703 = vunpack.c.l.b16 %v3627
      %v3704 = vunpack.c.l.b16 %v3628
      %v3705 = vunpack.c.l.b16 %v3630
      %v3706 = vunpack.c.l.b16 %v3631
      %v3707 = vunpack.c.l.b16 %v3633
      %v3708 = vunpack.c.l.b16 %v3634
      %v3709 = vunpack.c.l.b16 %v3636
      %v3710 = vunpack.c.l.b16 %v3637
      %v3711 = vunpack.c.l.b16 %v3639
      %v3712 = vunpack.c.l.b16 %v3640
      %v3713 = vpack.c.b16 %v3682, %v3681
      %v3714 = vpack.c.b16 %v3684, %v3683
      %v3715 = vpack.c.b16 %v3686, %v3685
      %v3716 = vpack.c.b16 %v3688, %v3687
      %v3717 = vpack.c.b16 %v3690, %v3689
      %v3718 = vpack.c.b16 %v3692, %v3691
      %v3719 = vpack.c.b16 %v3694, %v3693
      %v3720 = vpack.c.b16 %v3696, %v3695
      %v3721 = vpack.c.b16 %v3698, %v3697
      %v3722 = vpack.c.b16 %v3700, %v3699
      %v3723 = vpack.c.b16 %v3702, %v3701
      %v3724 = vpack.c.b16 %v3704, %v3703
      %v3725 = vpack.c.b16 %v3706, %v3705
      %v3726 = vpack.c.b16 %v3708, %v3707
      %v3727 = vpack.c.b16 %v3710, %v3709
      %v3728 = vpack.c.b16 %v3712, %v3711
      %v3730 = vsel %vm2019, %v3713, 0
      %v3733 = vsel %vm2019, %v3714, 0
      %v3736 = vsel %vm2019, %v3715, 0
      %v3739 = vsel %vm2019, %v3716, 0
      %v3742 = vsel %vm2019, %v3717, 0
      %v3745 = vsel %vm2019, %v3718, 0
      %v3748 = vsel %vm2019, %v3719, 0
      %v3751 = vsel %vm2019, %v3720, 0
      %v3754 = vsel %vm2019, %v3721, 0
      %v3757 = vsel %vm2019, %v3722, 0
      %v3760 = vsel %vm2019, %v3723, 0
      %v3763 = vsel %vm2019, %v3724, 0
      %v3766 = vsel %vm2019, %v3725, 0
      %v3769 = vsel %vm2019, %v3726, 0
      %v3772 = vsel %vm2019, %v3727, 0
      %v3775 = vsel %vm2019, %v3728, 0
      %v3778 = vsel %vm2068, %v3648, 0
      %3780 = vmatpush.bf16.msra.mxu0 0
      %3781 = vmatpush.bf16.msra.mxu0 0
      %3782 = vmatpush.bf16.msra.mxu0 0
      %3783 = vmatpush.bf16.msra.mxu0 0
      %3784 = vmatpush.bf16.msra.mxu0 0
      %3785 = vmatpush.bf16.msra.mxu0 0
      %3786 = vmatpush.bf16.msra.mxu0 0
      %3787 = vmatpush.bf16.msra.mxu0 %v3778
      %3788 = vmatmul.bf16.gmra.mxu0 %v3730
      %v3789 = vpop.f32.mrf.mxu0
      %v3790 = vadd.f32 0.0, %v3789
      %v3791 = vpop.f32.mrf.mxu0
      %v3792 = vadd.f32 0.0, %v3791
      %3793 = vmatmul.bf16.gmra.mxu0 %v3733
      %v3794 = vpop.f32.mrf.mxu0
      %v3795 = vadd.f32 0.0, %v3794
      %v3796 = vpop.f32.mrf.mxu0
      %v3797 = vadd.f32 0.0, %v3796
      %3798 = vmatmul.bf16.gmra.mxu0 %v3736
      %v3799 = vpop.f32.mrf.mxu0
      %v3800 = vadd.f32 0.0, %v3799
      %v3801 = vpop.f32.mrf.mxu0
      %v3802 = vadd.f32 0.0, %v3801
      %3803 = vmatmul.bf16.gmra.mxu0 %v3739
      %v3804 = vpop.f32.mrf.mxu0
      %v3805 = vadd.f32 0.0, %v3804
      %v3806 = vpop.f32.mrf.mxu0
      %v3807 = vadd.f32 0.0, %v3806
      %3808 = vmatmul.bf16.gmra.mxu0 %v3742
      %v3809 = vpop.f32.mrf.mxu0
      %v3810 = vadd.f32 0.0, %v3809
      %v3811 = vpop.f32.mrf.mxu0
      %v3812 = vadd.f32 0.0, %v3811
      %3813 = vmatmul.bf16.gmra.mxu0 %v3745
      %v3814 = vpop.f32.mrf.mxu0
      %v3815 = vadd.f32 0.0, %v3814
      %v3816 = vpop.f32.mrf.mxu0
      %v3817 = vadd.f32 0.0, %v3816
      %3818 = vmatmul.bf16.gmra.mxu0 %v3748
      %v3819 = vpop.f32.mrf.mxu0
      %v3820 = vadd.f32 0.0, %v3819
      %v3821 = vpop.f32.mrf.mxu0
      %v3822 = vadd.f32 0.0, %v3821
      %3823 = vmatmul.bf16.gmra.mxu0 %v3751
      %v3824 = vpop.f32.mrf.mxu0
      %v3825 = vadd.f32 0.0, %v3824
      %v3826 = vpop.f32.mrf.mxu0
      %v3827 = vadd.f32 0.0, %v3826
      %3828 = vmatmul.bf16.gmra.mxu0 %v3754
      %v3829 = vpop.f32.mrf.mxu0
      %v3830 = vadd.f32 0.0, %v3829
      %v3831 = vpop.f32.mrf.mxu0
      %v3832 = vadd.f32 0.0, %v3831
      %3833 = vmatmul.bf16.gmra.mxu0 %v3757
      %v3834 = vpop.f32.mrf.mxu0
      %v3835 = vadd.f32 0.0, %v3834
      %v3836 = vpop.f32.mrf.mxu0
      %v3837 = vadd.f32 0.0, %v3836
      %3838 = vmatmul.bf16.gmra.mxu0 %v3760
      %v3839 = vpop.f32.mrf.mxu0
      %v3840 = vadd.f32 0.0, %v3839
      %v3841 = vpop.f32.mrf.mxu0
      %v3842 = vadd.f32 0.0, %v3841
      %3843 = vmatmul.bf16.gmra.mxu0 %v3763
      %v3844 = vpop.f32.mrf.mxu0
      %v3845 = vadd.f32 0.0, %v3844
      %v3846 = vpop.f32.mrf.mxu0
      %v3847 = vadd.f32 0.0, %v3846
      %3848 = vmatmul.bf16.gmra.mxu0 %v3766
      %v3849 = vpop.f32.mrf.mxu0
      %v3850 = vadd.f32 0.0, %v3849
      %v3851 = vpop.f32.mrf.mxu0
      %v3852 = vadd.f32 0.0, %v3851
      %3853 = vmatmul.bf16.gmra.mxu0 %v3769
      %v3854 = vpop.f32.mrf.mxu0
      %v3855 = vadd.f32 0.0, %v3854
      %v3856 = vpop.f32.mrf.mxu0
      %v3857 = vadd.f32 0.0, %v3856
      %3858 = vmatmul.bf16.gmra.mxu0 %v3772
      %v3859 = vpop.f32.mrf.mxu0
      %v3860 = vadd.f32 0.0, %v3859
      %v3861 = vpop.f32.mrf.mxu0
      %v3862 = vadd.f32 0.0, %v3861
      %3863 = vmatmul.bf16.gmra.mxu0 %v3775
      %v3864 = vpop.f32.mrf.mxu0
      %v3865 = vadd.f32 0.0, %v3864
      %v3866 = vpop.f32.mrf.mxu0
      %v3867 = vadd.f32 0.0, %v3866
      %3868 = vdwg.mxu0
      %v3869 = vadd.f32 %v3562, %v3790
      %v3870 = vadd.f32 %v3563, %v3792
      %v3871 = vadd.f32 %v3564, %v3795
      %v3872 = vadd.f32 %v3565, %v3797
      %v3873 = vadd.f32 %v3566, %v3800
      %v3874 = vadd.f32 %v3567, %v3802
      %v3875 = vadd.f32 %v3568, %v3805
      %v3876 = vadd.f32 %v3569, %v3807
      %v3877 = vadd.f32 %v3570, %v3810
      %v3878 = vadd.f32 %v3571, %v3812
      %v3879 = vadd.f32 %v3572, %v3815
      %v3880 = vadd.f32 %v3573, %v3817
      %v3881 = vadd.f32 %v3574, %v3820
      %v3882 = vadd.f32 %v3575, %v3822
      %v3883 = vadd.f32 %v3576, %v3825
      %v3884 = vadd.f32 %v3577, %v3827
      %v3885 = vadd.f32 %v3578, %v3830
      %v3886 = vadd.f32 %v3579, %v3832
      %v3887 = vadd.f32 %v3580, %v3835
      %v3888 = vadd.f32 %v3581, %v3837
      %v3889 = vadd.f32 %v3582, %v3840
      %v3890 = vadd.f32 %v3583, %v3842
      %v3891 = vadd.f32 %v3584, %v3845
      %v3892 = vadd.f32 %v3585, %v3847
      %v3893 = vadd.f32 %v3586, %v3850
      %v3894 = vadd.f32 %v3587, %v3852
      %v3895 = vadd.f32 %v3588, %v3855
      %v3896 = vadd.f32 %v3589, %v3857
      %v3897 = vadd.f32 %v3590, %v3860
      %v3898 = vadd.f32 %v3591, %v3862
      %v3899 = vadd.f32 %v3592, %v3865
      %v3900 = vadd.f32 %v3593, %v3867
      %v3902 = vshrl.u32 %v3594, 16
      %v3904 = vrot.slane %v3902, 4
      %v3905 = vshll.u32 %v3594, 16
      %v3907 = vrot.slane %v3905, 5
      %v3908 = vor.u32 %v3904, %v3907
      %v3909 = vrot.slane %v3908, 4
      %v3911 = vshll.u32 %v3595, 16
      %v3913 = vrot.slane %v3911, 5
      %v3914 = vsel %vm1584, %v3909, %v3913
      %v3915 = vshrl.u32 %v3595, 16
      %v3917 = vrot.slane %v3915, 4
      %v3918 = vor.u32 %v3917, %v3913
      %v3919 = vrot.slane %v3918, 4
      %v3921 = vshll.u32 %v3596, 16
      %v3923 = vrot.slane %v3921, 5
      %v3924 = vsel %vm1584, %v3919, %v3923
      %v3926 = vshrl.u32 %v3597, 16
      %v3928 = vrot.slane %v3926, 4
      %v3929 = vshll.u32 %v3597, 16
      %v3931 = vrot.slane %v3929, 5
      %v3932 = vor.u32 %v3928, %v3931
      %v3933 = vrot.slane %v3932, 4
      %v3935 = vshll.u32 %v3598, 16
      %v3937 = vrot.slane %v3935, 5
      %v3938 = vsel %vm1584, %v3933, %v3937
      %v3939 = vshrl.u32 %v3598, 16
      %v3941 = vrot.slane %v3939, 4
      %v3942 = vor.u32 %v3941, %v3937
      %v3943 = vrot.slane %v3942, 4
      %v3945 = vshll.u32 %v3599, 16
      %v3947 = vrot.slane %v3945, 5
      %v3948 = vsel %vm1584, %v3943, %v3947
      %v3950 = vshrl.u32 %v3600, 16
      %v3952 = vrot.slane %v3950, 4
      %v3953 = vshll.u32 %v3600, 16
      %v3955 = vrot.slane %v3953, 5
      %v3956 = vor.u32 %v3952, %v3955
      %v3957 = vrot.slane %v3956, 4
      %v3959 = vshll.u32 %v3601, 16
      %v3961 = vrot.slane %v3959, 5
      %v3962 = vsel %vm1584, %v3957, %v3961
      %v3963 = vshrl.u32 %v3601, 16
      %v3965 = vrot.slane %v3963, 4
      %v3966 = vor.u32 %v3965, %v3961
      %v3967 = vrot.slane %v3966, 4
      %v3969 = vshll.u32 %v3602, 16
      %v3971 = vrot.slane %v3969, 5
      %v3972 = vsel %vm1584, %v3967, %v3971
      %v3974 = vshrl.u32 %v3603, 16
      %v3976 = vrot.slane %v3974, 4
      %v3977 = vshll.u32 %v3603, 16
      %v3979 = vrot.slane %v3977, 5
      %v3980 = vor.u32 %v3976, %v3979
      %v3981 = vrot.slane %v3980, 4
      %v3983 = vshll.u32 %v3604, 16
      %v3985 = vrot.slane %v3983, 5
      %v3986 = vsel %vm1584, %v3981, %v3985
      %v3987 = vshrl.u32 %v3604, 16
      %v3989 = vrot.slane %v3987, 4
      %v3990 = vor.u32 %v3989, %v3985
      %v3991 = vrot.slane %v3990, 4
      %v3993 = vshll.u32 %v3605, 16
      %v3995 = vrot.slane %v3993, 5
      %v3996 = vsel %vm1584, %v3991, %v3995
      %v3998 = vshrl.u32 %v3606, 16
      %v4000 = vrot.slane %v3998, 4
      %v4001 = vshll.u32 %v3606, 16
      %v4003 = vrot.slane %v4001, 5
      %v4004 = vor.u32 %v4000, %v4003
      %v4005 = vrot.slane %v4004, 4
      %v4007 = vshll.u32 %v3607, 16
      %v4009 = vrot.slane %v4007, 5
      %v4010 = vsel %vm1584, %v4005, %v4009
      %v4011 = vshrl.u32 %v3607, 16
      %v4013 = vrot.slane %v4011, 4
      %v4014 = vor.u32 %v4013, %v4009
      %v4015 = vrot.slane %v4014, 4
      %v4017 = vshll.u32 %v3608, 16
      %v4019 = vrot.slane %v4017, 5
      %v4020 = vsel %vm1584, %v4015, %v4019
      %v4022 = vshrl.u32 %v3609, 16
      %v4024 = vrot.slane %v4022, 4
      %v4025 = vshll.u32 %v3609, 16
      %v4027 = vrot.slane %v4025, 5
      %v4028 = vor.u32 %v4024, %v4027
      %v4029 = vrot.slane %v4028, 4
      %v4031 = vshll.u32 %v3610, 16
      %v4033 = vrot.slane %v4031, 5
      %v4034 = vsel %vm1584, %v4029, %v4033
      %v4035 = vshrl.u32 %v3610, 16
      %v4037 = vrot.slane %v4035, 4
      %v4038 = vor.u32 %v4037, %v4033
      %v4039 = vrot.slane %v4038, 4
      %v4041 = vshll.u32 %v3611, 16
      %v4043 = vrot.slane %v4041, 5
      %v4044 = vsel %vm1584, %v4039, %v4043
      %v4046 = vshrl.u32 %v3612, 16
      %v4048 = vrot.slane %v4046, 4
      %v4049 = vshll.u32 %v3612, 16
      %v4051 = vrot.slane %v4049, 5
      %v4052 = vor.u32 %v4048, %v4051
      %v4053 = vrot.slane %v4052, 4
      %v4055 = vshll.u32 %v3613, 16
      %v4057 = vrot.slane %v4055, 5
      %v4058 = vsel %vm1584, %v4053, %v4057
      %v4059 = vshrl.u32 %v3613, 16
      %v4061 = vrot.slane %v4059, 4
      %v4062 = vor.u32 %v4061, %v4057
      %v4063 = vrot.slane %v4062, 4
      %v4065 = vshll.u32 %v3614, 16
      %v4067 = vrot.slane %v4065, 5
      %v4068 = vsel %vm1584, %v4063, %v4067
      %v4070 = vshrl.u32 %v3615, 16
      %v4072 = vrot.slane %v4070, 4
      %v4073 = vshll.u32 %v3615, 16
      %v4075 = vrot.slane %v4073, 5
      %v4076 = vor.u32 %v4072, %v4075
      %v4077 = vrot.slane %v4076, 4
      %v4079 = vshll.u32 %v3616, 16
      %v4081 = vrot.slane %v4079, 5
      %v4082 = vsel %vm1584, %v4077, %v4081
      %v4083 = vshrl.u32 %v3616, 16
      %v4085 = vrot.slane %v4083, 4
      %v4086 = vor.u32 %v4085, %v4081
      %v4087 = vrot.slane %v4086, 4
      %v4089 = vshll.u32 %v3617, 16
      %v4091 = vrot.slane %v4089, 5
      %v4092 = vsel %vm1584, %v4087, %v4091
      %v4094 = vshrl.u32 %v3618, 16
      %v4096 = vrot.slane %v4094, 4
      %v4097 = vshll.u32 %v3618, 16
      %v4099 = vrot.slane %v4097, 5
      %v4100 = vor.u32 %v4096, %v4099
      %v4101 = vrot.slane %v4100, 4
      %v4103 = vshll.u32 %v3619, 16
      %v4105 = vrot.slane %v4103, 5
      %v4106 = vsel %vm1584, %v4101, %v4105
      %v4107 = vshrl.u32 %v3619, 16
      %v4109 = vrot.slane %v4107, 4
      %v4110 = vor.u32 %v4109, %v4105
      %v4111 = vrot.slane %v4110, 4
      %v4113 = vshll.u32 %v3620, 16
      %v4115 = vrot.slane %v4113, 5
      %v4116 = vsel %vm1584, %v4111, %v4115
      %v4118 = vshrl.u32 %v3621, 16
      %v4120 = vrot.slane %v4118, 4
      %v4121 = vshll.u32 %v3621, 16
      %v4123 = vrot.slane %v4121, 5
      %v4124 = vor.u32 %v4120, %v4123
      %v4125 = vrot.slane %v4124, 4
      %v4127 = vshll.u32 %v3622, 16
      %v4129 = vrot.slane %v4127, 5
      %v4130 = vsel %vm1584, %v4125, %v4129
      %v4131 = vshrl.u32 %v3622, 16
      %v4133 = vrot.slane %v4131, 4
      %v4134 = vor.u32 %v4133, %v4129
      %v4135 = vrot.slane %v4134, 4
      %v4137 = vshll.u32 %v3623, 16
      %v4139 = vrot.slane %v4137, 5
      %v4140 = vsel %vm1584, %v4135, %v4139
      %v4142 = vshrl.u32 %v3624, 16
      %v4144 = vrot.slane %v4142, 4
      %v4145 = vshll.u32 %v3624, 16
      %v4147 = vrot.slane %v4145, 5
      %v4148 = vor.u32 %v4144, %v4147
      %v4149 = vrot.slane %v4148, 4
      %v4151 = vshll.u32 %v3625, 16
      %v4153 = vrot.slane %v4151, 5
      %v4154 = vsel %vm1584, %v4149, %v4153
      %v4155 = vshrl.u32 %v3625, 16
      %v4157 = vrot.slane %v4155, 4
      %v4158 = vor.u32 %v4157, %v4153
      %v4159 = vrot.slane %v4158, 4
      %v4161 = vshll.u32 %v3626, 16
      %v4163 = vrot.slane %v4161, 5
      %v4164 = vsel %vm1584, %v4159, %v4163
      %v4166 = vshrl.u32 %v3627, 16
      %v4168 = vrot.slane %v4166, 4
      %v4169 = vshll.u32 %v3627, 16
      %v4171 = vrot.slane %v4169, 5
      %v4172 = vor.u32 %v4168, %v4171
      %v4173 = vrot.slane %v4172, 4
      %v4175 = vshll.u32 %v3628, 16
      %v4177 = vrot.slane %v4175, 5
      %v4178 = vsel %vm1584, %v4173, %v4177
      %v4179 = vshrl.u32 %v3628, 16
      %v4181 = vrot.slane %v4179, 4
      %v4182 = vor.u32 %v4181, %v4177
      %v4183 = vrot.slane %v4182, 4
      %v4185 = vshll.u32 %v3629, 16
      %v4187 = vrot.slane %v4185, 5
      %v4188 = vsel %vm1584, %v4183, %v4187
      %v4190 = vshrl.u32 %v3630, 16
      %v4192 = vrot.slane %v4190, 4
      %v4193 = vshll.u32 %v3630, 16
      %v4195 = vrot.slane %v4193, 5
      %v4196 = vor.u32 %v4192, %v4195
      %v4197 = vrot.slane %v4196, 4
      %v4199 = vshll.u32 %v3631, 16
      %v4201 = vrot.slane %v4199, 5
      %v4202 = vsel %vm1584, %v4197, %v4201
      %v4203 = vshrl.u32 %v3631, 16
      %v4205 = vrot.slane %v4203, 4
      %v4206 = vor.u32 %v4205, %v4201
      %v4207 = vrot.slane %v4206, 4
      %v4209 = vshll.u32 %v3632, 16
      %v4211 = vrot.slane %v4209, 5
      %v4212 = vsel %vm1584, %v4207, %v4211
      %v4214 = vshrl.u32 %v3633, 16
      %v4216 = vrot.slane %v4214, 4
      %v4217 = vshll.u32 %v3633, 16
      %v4219 = vrot.slane %v4217, 5
      %v4220 = vor.u32 %v4216, %v4219
      %v4221 = vrot.slane %v4220, 4
      %v4223 = vshll.u32 %v3634, 16
      %v4225 = vrot.slane %v4223, 5
      %v4226 = vsel %vm1584, %v4221, %v4225
      %v4227 = vshrl.u32 %v3634, 16
      %v4229 = vrot.slane %v4227, 4
      %v4230 = vor.u32 %v4229, %v4225
      %v4231 = vrot.slane %v4230, 4
      %v4233 = vshll.u32 %v3635, 16
      %v4235 = vrot.slane %v4233, 5
      %v4236 = vsel %vm1584, %v4231, %v4235
      %v4238 = vshrl.u32 %v3636, 16
      %v4240 = vrot.slane %v4238, 4
      %v4241 = vshll.u32 %v3636, 16
      %v4243 = vrot.slane %v4241, 5
      %v4244 = vor.u32 %v4240, %v4243
      %v4245 = vrot.slane %v4244, 4
      %v4247 = vshll.u32 %v3637, 16
      %v4249 = vrot.slane %v4247, 5
      %v4250 = vsel %vm1584, %v4245, %v4249
      %v4251 = vshrl.u32 %v3637, 16
      %v4253 = vrot.slane %v4251, 4
      %v4254 = vor.u32 %v4253, %v4249
      %v4255 = vrot.slane %v4254, 4
      %v4257 = vshll.u32 %v3638, 16
      %v4259 = vrot.slane %v4257, 5
      %v4260 = vsel %vm1584, %v4255, %v4259
      %v4262 = vshrl.u32 %v3639, 16
      %v4264 = vrot.slane %v4262, 4
      %v4265 = vshll.u32 %v3639, 16
      %v4267 = vrot.slane %v4265, 5
      %v4268 = vor.u32 %v4264, %v4267
      %v4269 = vrot.slane %v4268, 4
      %v4271 = vshll.u32 %v3640, 16
      %v4273 = vrot.slane %v4271, 5
      %v4274 = vsel %vm1584, %v4269, %v4273
      %v4275 = vshrl.u32 %v3640, 16
      %v4277 = vrot.slane %v4275, 4
      %v4278 = vor.u32 %v4277, %v4273
      %v4279 = vrot.slane %v4278, 4
      %v4281 = vshll.u32 %v3641, 16
      %v4283 = vrot.slane %v4281, 5
      %v4284 = vsel %vm1584, %v4279, %v4283
      %s4285 = scalar_lea.vmem %s5, 4
      %v4286 = vld [vmem:[%s4285] sm:$0xf]
      %v4287 = vunpack.c.l.b16 %v3914
      %v4288 = vunpack.c.l.b16 %v3924
      %v4289 = vunpack.c.l.b16 %v3938
      %v4290 = vunpack.c.l.b16 %v3948
      %v4291 = vunpack.c.l.b16 %v3962
      %v4292 = vunpack.c.l.b16 %v3972
      %v4293 = vunpack.c.l.b16 %v3986
      %v4294 = vunpack.c.l.b16 %v3996
      %v4295 = vunpack.c.l.b16 %v4010
      %v4296 = vunpack.c.l.b16 %v4020
      %v4297 = vunpack.c.l.b16 %v4034
      %v4298 = vunpack.c.l.b16 %v4044
      %v4299 = vunpack.c.l.b16 %v4058
      %v4300 = vunpack.c.l.b16 %v4068
      %v4301 = vunpack.c.l.b16 %v4082
      %v4302 = vunpack.c.l.b16 %v4092
      %v4303 = vunpack.c.l.b16 %v4106
      %v4304 = vunpack.c.l.b16 %v4116
      %v4305 = vunpack.c.l.b16 %v4130
      %v4306 = vunpack.c.l.b16 %v4140
      %v4307 = vunpack.c.l.b16 %v4154
      %v4308 = vunpack.c.l.b16 %v4164
      %v4309 = vunpack.c.l.b16 %v4178
      %v4310 = vunpack.c.l.b16 %v4188
      %v4311 = vunpack.c.l.b16 %v4202
      %v4312 = vunpack.c.l.b16 %v4212
      %v4313 = vunpack.c.l.b16 %v4226
      %v4314 = vunpack.c.l.b16 %v4236
      %v4315 = vunpack.c.l.b16 %v4250
      %v4316 = vunpack.c.l.b16 %v4260
      %v4317 = vunpack.c.l.b16 %v4274
      %v4318 = vunpack.c.l.b16 %v4284
      %v4319 = vpack.c.b16 %v4288, %v4287
      %v4320 = vpack.c.b16 %v4290, %v4289
      %v4321 = vpack.c.b16 %v4292, %v4291
      %v4322 = vpack.c.b16 %v4294, %v4293
      %v4323 = vpack.c.b16 %v4296, %v4295
      %v4324 = vpack.c.b16 %v4298, %v4297
      %v4325 = vpack.c.b16 %v4300, %v4299
      %v4326 = vpack.c.b16 %v4302, %v4301
      %v4327 = vpack.c.b16 %v4304, %v4303
      %v4328 = vpack.c.b16 %v4306, %v4305
      %v4329 = vpack.c.b16 %v4308, %v4307
      %v4330 = vpack.c.b16 %v4310, %v4309
      %v4331 = vpack.c.b16 %v4312, %v4311
      %v4332 = vpack.c.b16 %v4314, %v4313
      %v4333 = vpack.c.b16 %v4316, %v4315
      %v4334 = vpack.c.b16 %v4318, %v4317
      %v4336 = vsel %vm2019, %v4319, 0
      %v4339 = vsel %vm2019, %v4320, 0
      %v4342 = vsel %vm2019, %v4321, 0
      %v4345 = vsel %vm2019, %v4322, 0
      %v4348 = vsel %vm2019, %v4323, 0
      %v4351 = vsel %vm2019, %v4324, 0
      %v4354 = vsel %vm2019, %v4325, 0
      %v4357 = vsel %vm2019, %v4326, 0
      %v4360 = vsel %vm2019, %v4327, 0
      %v4363 = vsel %vm2019, %v4328, 0
      %v4366 = vsel %vm2019, %v4329, 0
      %v4369 = vsel %vm2019, %v4330, 0
      %v4372 = vsel %vm2019, %v4331, 0
      %v4375 = vsel %vm2019, %v4332, 0
      %v4378 = vsel %vm2019, %v4333, 0
      %v4381 = vsel %vm2019, %v4334, 0
      %v4384 = vsel %vm2068, %v4286, 0
      %4386 = vmatpush.bf16.msra.mxu0 0
      %4387 = vmatpush.bf16.msra.mxu0 0
      %4388 = vmatpush.bf16.msra.mxu0 0
      %4389 = vmatpush.bf16.msra.mxu0 0
      %4390 = vmatpush.bf16.msra.mxu0 0
      %4391 = vmatpush.bf16.msra.mxu0 0
      %4392 = vmatpush.bf16.msra.mxu0 0
      %4393 = vmatpush.bf16.msra.mxu0 %v4384
      %4394 = vmatmul.bf16.gmra.mxu0 %v4336
      %v4395 = vpop.f32.mrf.mxu0
      %v4396 = vadd.f32 0.0, %v4395
      %v4397 = vpop.f32.mrf.mxu0
      %v4398 = vadd.f32 0.0, %v4397
      %4399 = vmatmul.bf16.gmra.mxu0 %v4339
      %v4400 = vpop.f32.mrf.mxu0
      %v4401 = vadd.f32 0.0, %v4400
      %v4402 = vpop.f32.mrf.mxu0
      %v4403 = vadd.f32 0.0, %v4402
      %4404 = vmatmul.bf16.gmra.mxu0 %v4342
      %v4405 = vpop.f32.mrf.mxu0
      %v4406 = vadd.f32 0.0, %v4405
      %v4407 = vpop.f32.mrf.mxu0
      %v4408 = vadd.f32 0.0, %v4407
      %4409 = vmatmul.bf16.gmra.mxu0 %v4345
      %v4410 = vpop.f32.mrf.mxu0
      %v4411 = vadd.f32 0.0, %v4410
      %v4412 = vpop.f32.mrf.mxu0
      %v4413 = vadd.f32 0.0, %v4412
      %4414 = vmatmul.bf16.gmra.mxu0 %v4348
      %v4415 = vpop.f32.mrf.mxu0
      %v4416 = vadd.f32 0.0, %v4415
      %v4417 = vpop.f32.mrf.mxu0
      %v4418 = vadd.f32 0.0, %v4417
      %4419 = vmatmul.bf16.gmra.mxu0 %v4351
      %v4420 = vpop.f32.mrf.mxu0
      %v4421 = vadd.f32 0.0, %v4420
      %v4422 = vpop.f32.mrf.mxu0
      %v4423 = vadd.f32 0.0, %v4422
      %4424 = vmatmul.bf16.gmra.mxu0 %v4354
      %v4425 = vpop.f32.mrf.mxu0
      %v4426 = vadd.f32 0.0, %v4425
      %v4427 = vpop.f32.mrf.mxu0
      %v4428 = vadd.f32 0.0, %v4427
      %4429 = vmatmul.bf16.gmra.mxu0 %v4357
      %v4430 = vpop.f32.mrf.mxu0
      %v4431 = vadd.f32 0.0, %v4430
      %v4432 = vpop.f32.mrf.mxu0
      %v4433 = vadd.f32 0.0, %v4432
      %4434 = vmatmul.bf16.gmra.mxu0 %v4360
      %v4435 = vpop.f32.mrf.mxu0
      %v4436 = vadd.f32 0.0, %v4435
      %v4437 = vpop.f32.mrf.mxu0
      %v4438 = vadd.f32 0.0, %v4437
      %4439 = vmatmul.bf16.gmra.mxu0 %v4363
      %v4440 = vpop.f32.mrf.mxu0
      %v4441 = vadd.f32 0.0, %v4440
      %v4442 = vpop.f32.mrf.mxu0
      %v4443 = vadd.f32 0.0, %v4442
      %4444 = vmatmul.bf16.gmra.mxu0 %v4366
      %v4445 = vpop.f32.mrf.mxu0
      %v4446 = vadd.f32 0.0, %v4445
      %v4447 = vpop.f32.mrf.mxu0
      %v4448 = vadd.f32 0.0, %v4447
      %4449 = vmatmul.bf16.gmra.mxu0 %v4369
      %v4450 = vpop.f32.mrf.mxu0
      %v4451 = vadd.f32 0.0, %v4450
      %v4452 = vpop.f32.mrf.mxu0
      %v4453 = vadd.f32 0.0, %v4452
      %4454 = vmatmul.bf16.gmra.mxu0 %v4372
      %v4455 = vpop.f32.mrf.mxu0
      %v4456 = vadd.f32 0.0, %v4455
      %v4457 = vpop.f32.mrf.mxu0
      %v4458 = vadd.f32 0.0, %v4457
      %4459 = vmatmul.bf16.gmra.mxu0 %v4375
      %v4460 = vpop.f32.mrf.mxu0
      %v4461 = vadd.f32 0.0, %v4460
      %v4462 = vpop.f32.mrf.mxu0
      %v4463 = vadd.f32 0.0, %v4462
      %4464 = vmatmul.bf16.gmra.mxu0 %v4378
      %v4465 = vpop.f32.mrf.mxu0
      %v4466 = vadd.f32 0.0, %v4465
      %v4467 = vpop.f32.mrf.mxu0
      %v4468 = vadd.f32 0.0, %v4467
      %4469 = vmatmul.bf16.gmra.mxu0 %v4381
      %v4470 = vpop.f32.mrf.mxu0
      %v4471 = vadd.f32 0.0, %v4470
      %v4472 = vpop.f32.mrf.mxu0
      %v4473 = vadd.f32 0.0, %v4472
      %4474 = vdwg.mxu0
      %v4475 = vadd.f32 %v3869, %v4396
      %v4476 = vadd.f32 %v3870, %v4398
      %v4477 = vadd.f32 %v3871, %v4401
      %v4478 = vadd.f32 %v3872, %v4403
      %v4479 = vadd.f32 %v3873, %v4406
      %v4480 = vadd.f32 %v3874, %v4408
      %v4481 = vadd.f32 %v3875, %v4411
      %v4482 = vadd.f32 %v3876, %v4413
      %v4483 = vadd.f32 %v3877, %v4416
      %v4484 = vadd.f32 %v3878, %v4418
      %v4485 = vadd.f32 %v3879, %v4421
      %v4486 = vadd.f32 %v3880, %v4423
      %v4487 = vadd.f32 %v3881, %v4426
      %v4488 = vadd.f32 %v3882, %v4428
      %v4489 = vadd.f32 %v3883, %v4431
      %v4490 = vadd.f32 %v3884, %v4433
      %v4491 = vadd.f32 %v3885, %v4436
      %v4492 = vadd.f32 %v3886, %v4438
      %v4493 = vadd.f32 %v3887, %v4441
      %v4494 = vadd.f32 %v3888, %v4443
      %v4495 = vadd.f32 %v3889, %v4446
      %v4496 = vadd.f32 %v3890, %v4448
      %v4497 = vadd.f32 %v3891, %v4451
      %v4498 = vadd.f32 %v3892, %v4453
      %v4499 = vadd.f32 %v3893, %v4456
      %v4500 = vadd.f32 %v3894, %v4458
      %v4501 = vadd.f32 %v3895, %v4461
      %v4502 = vadd.f32 %v3896, %v4463
      %v4503 = vadd.f32 %v3897, %v4466
      %v4504 = vadd.f32 %v3898, %v4468
      %v4505 = vadd.f32 %v3899, %v4471
      %v4506 = vadd.f32 %v3900, %v4473
      %v4523 = vrot.slane %v3594, 5
      %v4524 = vrot.slane %v4523, 4
      %v4525 = vrot.slane %v3595, 5
      %v4526 = vsel %vm2399, %v4524, %v4525
      %v4527 = vrot.slane %v4525, 4
      %v4528 = vrot.slane %v3596, 5
      %v4529 = vsel %vm2399, %v4527, %v4528
      %v4530 = vrot.slane %v3597, 5
      %v4531 = vrot.slane %v4530, 4
      %v4532 = vrot.slane %v3598, 5
      %v4533 = vsel %vm2399, %v4531, %v4532
      %v4534 = vrot.slane %v4532, 4
      %v4535 = vrot.slane %v3599, 5
      %v4536 = vsel %vm2399, %v4534, %v4535
      %v4537 = vrot.slane %v3600, 5
      %v4538 = vrot.slane %v4537, 4
      %v4539 = vrot.slane %v3601, 5
      %v4540 = vsel %vm2399, %v4538, %v4539
      %v4541 = vrot.slane %v4539, 4
      %v4542 = vrot.slane %v3602, 5
      %v4543 = vsel %vm2399, %v4541, %v4542
      %v4544 = vrot.slane %v3603, 5
      %v4545 = vrot.slane %v4544, 4
      %v4546 = vrot.slane %v3604, 5
      %v4547 = vsel %vm2399, %v4545, %v4546
      %v4548 = vrot.slane %v4546, 4
      %v4549 = vrot.slane %v3605, 5
      %v4550 = vsel %vm2399, %v4548, %v4549
      %v4551 = vrot.slane %v3606, 5
      %v4552 = vrot.slane %v4551, 4
      %v4553 = vrot.slane %v3607, 5
      %v4554 = vsel %vm2399, %v4552, %v4553
      %v4555 = vrot.slane %v4553, 4
      %v4556 = vrot.slane %v3608, 5
      %v4557 = vsel %vm2399, %v4555, %v4556
      %v4558 = vrot.slane %v3609, 5
      %v4559 = vrot.slane %v4558, 4
      %v4560 = vrot.slane %v3610, 5
      %v4561 = vsel %vm2399, %v4559, %v4560
      %v4562 = vrot.slane %v4560, 4
      %v4563 = vrot.slane %v3611, 5
      %v4564 = vsel %vm2399, %v4562, %v4563
      %v4565 = vrot.slane %v3612, 5
      %v4566 = vrot.slane %v4565, 4
      %v4567 = vrot.slane %v3613, 5
      %v4568 = vsel %vm2399, %v4566, %v4567
      %v4569 = vrot.slane %v4567, 4
      %v4570 = vrot.slane %v3614, 5
      %v4571 = vsel %vm2399, %v4569, %v4570
      %v4572 = vrot.slane %v3615, 5
      %v4573 = vrot.slane %v4572, 4
      %v4574 = vrot.slane %v3616, 5
      %v4575 = vsel %vm2399, %v4573, %v4574
      %v4576 = vrot.slane %v4574, 4
      %v4577 = vrot.slane %v3617, 5
      %v4578 = vsel %vm2399, %v4576, %v4577
      %v4579 = vrot.slane %v3618, 5
      %v4580 = vrot.slane %v4579, 4
      %v4581 = vrot.slane %v3619, 5
      %v4582 = vsel %vm2399, %v4580, %v4581
      %v4583 = vrot.slane %v4581, 4
      %v4584 = vrot.slane %v3620, 5
      %v4585 = vsel %vm2399, %v4583, %v4584
      %v4586 = vrot.slane %v3621, 5
      %v4587 = vrot.slane %v4586, 4
      %v4588 = vrot.slane %v3622, 5
      %v4589 = vsel %vm2399, %v4587, %v4588
      %v4590 = vrot.slane %v4588, 4
      %v4591 = vrot.slane %v3623, 5
      %v4592 = vsel %vm2399, %v4590, %v4591
      %v4593 = vrot.slane %v3624, 5
      %v4594 = vrot.slane %v4593, 4
      %v4595 = vrot.slane %v3625, 5
      %v4596 = vsel %vm2399, %v4594, %v4595
      %v4597 = vrot.slane %v4595, 4
      %v4598 = vrot.slane %v3626, 5
      %v4599 = vsel %vm2399, %v4597, %v4598
      %v4600 = vrot.slane %v3627, 5
      %v4601 = vrot.slane %v4600, 4
      %v4602 = vrot.slane %v3628, 5
      %v4603 = vsel %vm2399, %v4601, %v4602
      %v4604 = vrot.slane %v4602, 4
      %v4605 = vrot.slane %v3629, 5
      %v4606 = vsel %vm2399, %v4604, %v4605
      %v4607 = vrot.slane %v3630, 5
      %v4608 = vrot.slane %v4607, 4
      %v4609 = vrot.slane %v3631, 5
      %v4610 = vsel %vm2399, %v4608, %v4609
      %v4611 = vrot.slane %v4609, 4
      %v4612 = vrot.slane %v3632, 5
      %v4613 = vsel %vm2399, %v4611, %v4612
      %v4614 = vrot.slane %v3633, 5
      %v4615 = vrot.slane %v4614, 4
      %v4616 = vrot.slane %v3634, 5
      %v4617 = vsel %vm2399, %v4615, %v4616
      %v4618 = vrot.slane %v4616, 4
      %v4619 = vrot.slane %v3635, 5
      %v4620 = vsel %vm2399, %v4618, %v4619
      %v4621 = vrot.slane %v3636, 5
      %v4622 = vrot.slane %v4621, 4
      %v4623 = vrot.slane %v3637, 5
      %v4624 = vsel %vm2399, %v4622, %v4623
      %v4625 = vrot.slane %v4623, 4
      %v4626 = vrot.slane %v3638, 5
      %v4627 = vsel %vm2399, %v4625, %v4626
      %v4628 = vrot.slane %v3639, 5
      %v4629 = vrot.slane %v4628, 4
      %v4630 = vrot.slane %v3640, 5
      %v4631 = vsel %vm2399, %v4629, %v4630
      %v4632 = vrot.slane %v4630, 4
      %v4633 = vrot.slane %v3641, 5
      %v4634 = vsel %vm2399, %v4632, %v4633
      %s4635 = scalar_lea.vmem %s5, 8
      %v4636 = vld [vmem:[%s4635] sm:$0xf]
      %v4637 = vunpack.c.l.b16 %v4526
      %v4638 = vunpack.c.l.b16 %v4529
      %v4639 = vunpack.c.l.b16 %v4533
      %v4640 = vunpack.c.l.b16 %v4536
      %v4641 = vunpack.c.l.b16 %v4540
      %v4642 = vunpack.c.l.b16 %v4543
      %v4643 = vunpack.c.l.b16 %v4547
      %v4644 = vunpack.c.l.b16 %v4550
      %v4645 = vunpack.c.l.b16 %v4554
      %v4646 = vunpack.c.l.b16 %v4557
      %v4647 = vunpack.c.l.b16 %v4561
      %v4648 = vunpack.c.l.b16 %v4564
      %v4649 = vunpack.c.l.b16 %v4568
      %v4650 = vunpack.c.l.b16 %v4571
      %v4651 = vunpack.c.l.b16 %v4575
      %v4652 = vunpack.c.l.b16 %v4578
      %v4653 = vunpack.c.l.b16 %v4582
      %v4654 = vunpack.c.l.b16 %v4585
      %v4655 = vunpack.c.l.b16 %v4589
      %v4656 = vunpack.c.l.b16 %v4592
      %v4657 = vunpack.c.l.b16 %v4596
      %v4658 = vunpack.c.l.b16 %v4599
      %v4659 = vunpack.c.l.b16 %v4603
      %v4660 = vunpack.c.l.b16 %v4606
      %v4661 = vunpack.c.l.b16 %v4610
      %v4662 = vunpack.c.l.b16 %v4613
      %v4663 = vunpack.c.l.b16 %v4617
      %v4664 = vunpack.c.l.b16 %v4620
      %v4665 = vunpack.c.l.b16 %v4624
      %v4666 = vunpack.c.l.b16 %v4627
      %v4667 = vunpack.c.l.b16 %v4631
      %v4668 = vunpack.c.l.b16 %v4634
      %v4669 = vpack.c.b16 %v4638, %v4637
      %v4670 = vpack.c.b16 %v4640, %v4639
      %v4671 = vpack.c.b16 %v4642, %v4641
      %v4672 = vpack.c.b16 %v4644, %v4643
      %v4673 = vpack.c.b16 %v4646, %v4645
      %v4674 = vpack.c.b16 %v4648, %v4647
      %v4675 = vpack.c.b16 %v4650, %v4649
      %v4676 = vpack.c.b16 %v4652, %v4651
      %v4677 = vpack.c.b16 %v4654, %v4653
      %v4678 = vpack.c.b16 %v4656, %v4655
      %v4679 = vpack.c.b16 %v4658, %v4657
      %v4680 = vpack.c.b16 %v4660, %v4659
      %v4681 = vpack.c.b16 %v4662, %v4661
      %v4682 = vpack.c.b16 %v4664, %v4663
      %v4683 = vpack.c.b16 %v4666, %v4665
      %v4684 = vpack.c.b16 %v4668, %v4667
      %v4686 = vsel %vm2019, %v4669, 0
      %v4689 = vsel %vm2019, %v4670, 0
      %v4692 = vsel %vm2019, %v4671, 0
      %v4695 = vsel %vm2019, %v4672, 0
      %v4698 = vsel %vm2019, %v4673, 0
      %v4701 = vsel %vm2019, %v4674, 0
      %v4704 = vsel %vm2019, %v4675, 0
      %v4707 = vsel %vm2019, %v4676, 0
      %v4710 = vsel %vm2019, %v4677, 0
      %v4713 = vsel %vm2019, %v4678, 0
      %v4716 = vsel %vm2019, %v4679, 0
      %v4719 = vsel %vm2019, %v4680, 0
      %v4722 = vsel %vm2019, %v4681, 0
      %v4725 = vsel %vm2019, %v4682, 0
      %v4728 = vsel %vm2019, %v4683, 0
      %v4731 = vsel %vm2019, %v4684, 0
      %v4734 = vsel %vm2068, %v4636, 0
      %4736 = vmatpush.bf16.msra.mxu0 0
      %4737 = vmatpush.bf16.msra.mxu0 0
      %4738 = vmatpush.bf16.msra.mxu0 0
      %4739 = vmatpush.bf16.msra.mxu0 0
      %4740 = vmatpush.bf16.msra.mxu0 0
      %4741 = vmatpush.bf16.msra.mxu0 0
      %4742 = vmatpush.bf16.msra.mxu0 0
      %4743 = vmatpush.bf16.msra.mxu0 %v4734
      %4744 = vmatmul.bf16.gmra.mxu0 %v4686
      %v4745 = vpop.f32.mrf.mxu0
      %v4746 = vadd.f32 0.0, %v4745
      %v4747 = vpop.f32.mrf.mxu0
      %v4748 = vadd.f32 0.0, %v4747
      %4749 = vmatmul.bf16.gmra.mxu0 %v4689
      %v4750 = vpop.f32.mrf.mxu0
      %v4751 = vadd.f32 0.0, %v4750
      %v4752 = vpop.f32.mrf.mxu0
      %v4753 = vadd.f32 0.0, %v4752
      %4754 = vmatmul.bf16.gmra.mxu0 %v4692
      %v4755 = vpop.f32.mrf.mxu0
      %v4756 = vadd.f32 0.0, %v4755
      %v4757 = vpop.f32.mrf.mxu0
      %v4758 = vadd.f32 0.0, %v4757
      %4759 = vmatmul.bf16.gmra.mxu0 %v4695
      %v4760 = vpop.f32.mrf.mxu0
      %v4761 = vadd.f32 0.0, %v4760
      %v4762 = vpop.f32.mrf.mxu0
      %v4763 = vadd.f32 0.0, %v4762
      %4764 = vmatmul.bf16.gmra.mxu0 %v4698
      %v4765 = vpop.f32.mrf.mxu0
      %v4766 = vadd.f32 0.0, %v4765
      %v4767 = vpop.f32.mrf.mxu0
      %v4768 = vadd.f32 0.0, %v4767
      %4769 = vmatmul.bf16.gmra.mxu0 %v4701
      %v4770 = vpop.f32.mrf.mxu0
      %v4771 = vadd.f32 0.0, %v4770
      %v4772 = vpop.f32.mrf.mxu0
      %v4773 = vadd.f32 0.0, %v4772
      %4774 = vmatmul.bf16.gmra.mxu0 %v4704
      %v4775 = vpop.f32.mrf.mxu0
      %v4776 = vadd.f32 0.0, %v4775
      %v4777 = vpop.f32.mrf.mxu0
      %v4778 = vadd.f32 0.0, %v4777
      %4779 = vmatmul.bf16.gmra.mxu0 %v4707
      %v4780 = vpop.f32.mrf.mxu0
      %v4781 = vadd.f32 0.0, %v4780
      %v4782 = vpop.f32.mrf.mxu0
      %v4783 = vadd.f32 0.0, %v4782
      %4784 = vmatmul.bf16.gmra.mxu0 %v4710
      %v4785 = vpop.f32.mrf.mxu0
      %v4786 = vadd.f32 0.0, %v4785
      %v4787 = vpop.f32.mrf.mxu0
      %v4788 = vadd.f32 0.0, %v4787
      %4789 = vmatmul.bf16.gmra.mxu0 %v4713
      %v4790 = vpop.f32.mrf.mxu0
      %v4791 = vadd.f32 0.0, %v4790
      %v4792 = vpop.f32.mrf.mxu0
      %v4793 = vadd.f32 0.0, %v4792
      %4794 = vmatmul.bf16.gmra.mxu0 %v4716
      %v4795 = vpop.f32.mrf.mxu0
      %v4796 = vadd.f32 0.0, %v4795
      %v4797 = vpop.f32.mrf.mxu0
      %v4798 = vadd.f32 0.0, %v4797
      %4799 = vmatmul.bf16.gmra.mxu0 %v4719
      %v4800 = vpop.f32.mrf.mxu0
      %v4801 = vadd.f32 0.0, %v4800
      %v4802 = vpop.f32.mrf.mxu0
      %v4803 = vadd.f32 0.0, %v4802
      %4804 = vmatmul.bf16.gmra.mxu0 %v4722
      %v4805 = vpop.f32.mrf.mxu0
      %v4806 = vadd.f32 0.0, %v4805
      %v4807 = vpop.f32.mrf.mxu0
      %v4808 = vadd.f32 0.0, %v4807
      %4809 = vmatmul.bf16.gmra.mxu0 %v4725
      %v4810 = vpop.f32.mrf.mxu0
      %v4811 = vadd.f32 0.0, %v4810
      %v4812 = vpop.f32.mrf.mxu0
      %v4813 = vadd.f32 0.0, %v4812
      %4814 = vmatmul.bf16.gmra.mxu0 %v4728
      %v4815 = vpop.f32.mrf.mxu0
      %v4816 = vadd.f32 0.0, %v4815
      %v4817 = vpop.f32.mrf.mxu0
      %v4818 = vadd.f32 0.0, %v4817
      %4819 = vmatmul.bf16.gmra.mxu0 %v4731
      %v4820 = vpop.f32.mrf.mxu0
      %v4821 = vadd.f32 0.0, %v4820
      %v4822 = vpop.f32.mrf.mxu0
      %v4823 = vadd.f32 0.0, %v4822
      %4824 = vdwg.mxu0
      %v4825 = vadd.f32 %v4475, %v4746
      %v4826 = vadd.f32 %v4476, %v4748
      %v4827 = vadd.f32 %v4477, %v4751
      %v4828 = vadd.f32 %v4478, %v4753
      %v4829 = vadd.f32 %v4479, %v4756
      %v4830 = vadd.f32 %v4480, %v4758
      %v4831 = vadd.f32 %v4481, %v4761
      %v4832 = vadd.f32 %v4482, %v4763
      %v4833 = vadd.f32 %v4483, %v4766
      %v4834 = vadd.f32 %v4484, %v4768
      %v4835 = vadd.f32 %v4485, %v4771
      %v4836 = vadd.f32 %v4486, %v4773
      %v4837 = vadd.f32 %v4487, %v4776
      %v4838 = vadd.f32 %v4488, %v4778
      %v4839 = vadd.f32 %v4489, %v4781
      %v4840 = vadd.f32 %v4490, %v4783
      %v4841 = vadd.f32 %v4491, %v4786
      %v4842 = vadd.f32 %v4492, %v4788
      %v4843 = vadd.f32 %v4493, %v4791
      %v4844 = vadd.f32 %v4494, %v4793
      %v4845 = vadd.f32 %v4495, %v4796
      %v4846 = vadd.f32 %v4496, %v4798
      %v4847 = vadd.f32 %v4497, %v4801
      %v4848 = vadd.f32 %v4498, %v4803
      %v4849 = vadd.f32 %v4499, %v4806
      %v4850 = vadd.f32 %v4500, %v4808
      %v4851 = vadd.f32 %v4501, %v4811
      %v4852 = vadd.f32 %v4502, %v4813
      %v4853 = vadd.f32 %v4503, %v4816
      %v4854 = vadd.f32 %v4504, %v4818
      %v4855 = vadd.f32 %v4505, %v4821
      %v4856 = vadd.f32 %v4506, %v4823
      %s4857 = scalar_lea.vmem %s5, 12
      %v4858 = vld [vmem:[%s4857] sm:$0xf]
      %v4861 = vunpack.c.l.b16 %v3642
      %v4862 = vunpack.c.l.b16 %v3643
      %v4863 = vpack.c.b16 %v4862, %v4861
      %v4865 = vsel %vm2019, %v4863, 0
      %v4868 = vsel %vm2068, %v4858, 0
      %4870 = vmatpush.bf16.msra.mxu0 0
      %4871 = vmatpush.bf16.msra.mxu0 0
      %4872 = vmatpush.bf16.msra.mxu0 0
      %4873 = vmatpush.bf16.msra.mxu0 0
      %4874 = vmatpush.bf16.msra.mxu0 0
      %4875 = vmatpush.bf16.msra.mxu0 0
      %4876 = vmatpush.bf16.msra.mxu0 0
      %4877 = vmatpush.bf16.msra.mxu0 %v4868
      %4878 = vmatmul.bf16.gmra.mxu0 %v3733
      %v4879 = vpop.f32.mrf.mxu0
      %v4880 = vadd.f32 0.0, %v4879
      %v4881 = vpop.f32.mrf.mxu0
      %v4882 = vadd.f32 0.0, %v4881
      %4883 = vmatmul.bf16.gmra.mxu0 %v3736
      %v4884 = vpop.f32.mrf.mxu0
      %v4885 = vadd.f32 0.0, %v4884
      %v4886 = vpop.f32.mrf.mxu0
      %v4887 = vadd.f32 0.0, %v4886
      %4888 = vmatmul.bf16.gmra.mxu0 %v3739
      %v4889 = vpop.f32.mrf.mxu0
      %v4890 = vadd.f32 0.0, %v4889
      %v4891 = vpop.f32.mrf.mxu0
      %v4892 = vadd.f32 0.0, %v4891
      %4893 = vmatmul.bf16.gmra.mxu0 %v3742
      %v4894 = vpop.f32.mrf.mxu0
      %v4895 = vadd.f32 0.0, %v4894
      %v4896 = vpop.f32.mrf.mxu0
      %v4897 = vadd.f32 0.0, %v4896
      %4898 = vmatmul.bf16.gmra.mxu0 %v3745
      %v4899 = vpop.f32.mrf.mxu0
      %v4900 = vadd.f32 0.0, %v4899
      %v4901 = vpop.f32.mrf.mxu0
      %v4902 = vadd.f32 0.0, %v4901
      %4903 = vmatmul.bf16.gmra.mxu0 %v3748
      %v4904 = vpop.f32.mrf.mxu0
      %v4905 = vadd.f32 0.0, %v4904
      %v4906 = vpop.f32.mrf.mxu0
      %v4907 = vadd.f32 0.0, %v4906
      %4908 = vmatmul.bf16.gmra.mxu0 %v3751
      %v4909 = vpop.f32.mrf.mxu0
      %v4910 = vadd.f32 0.0, %v4909
      %v4911 = vpop.f32.mrf.mxu0
      %v4912 = vadd.f32 0.0, %v4911
      %4913 = vmatmul.bf16.gmra.mxu0 %v3754
      %v4914 = vpop.f32.mrf.mxu0
      %v4915 = vadd.f32 0.0, %v4914
      %v4916 = vpop.f32.mrf.mxu0
      %v4917 = vadd.f32 0.0, %v4916
      %4918 = vmatmul.bf16.gmra.mxu0 %v3757
      %v4919 = vpop.f32.mrf.mxu0
      %v4920 = vadd.f32 0.0, %v4919
      %v4921 = vpop.f32.mrf.mxu0
      %v4922 = vadd.f32 0.0, %v4921
      %4923 = vmatmul.bf16.gmra.mxu0 %v3760
      %v4924 = vpop.f32.mrf.mxu0
      %v4925 = vadd.f32 0.0, %v4924
      %v4926 = vpop.f32.mrf.mxu0
      %v4927 = vadd.f32 0.0, %v4926
      %4928 = vmatmul.bf16.gmra.mxu0 %v3763
      %v4929 = vpop.f32.mrf.mxu0
      %v4930 = vadd.f32 0.0, %v4929
      %v4931 = vpop.f32.mrf.mxu0
      %v4932 = vadd.f32 0.0, %v4931
      %4933 = vmatmul.bf16.gmra.mxu0 %v3766
      %v4934 = vpop.f32.mrf.mxu0
      %v4935 = vadd.f32 0.0, %v4934
      %v4936 = vpop.f32.mrf.mxu0
      %v4937 = vadd.f32 0.0, %v4936
      %4938 = vmatmul.bf16.gmra.mxu0 %v3769
      %v4939 = vpop.f32.mrf.mxu0
      %v4940 = vadd.f32 0.0, %v4939
      %v4941 = vpop.f32.mrf.mxu0
      %v4942 = vadd.f32 0.0, %v4941
      %4943 = vmatmul.bf16.gmra.mxu0 %v3772
      %v4944 = vpop.f32.mrf.mxu0
      %v4945 = vadd.f32 0.0, %v4944
      %v4946 = vpop.f32.mrf.mxu0
      %v4947 = vadd.f32 0.0, %v4946
      %4948 = vmatmul.bf16.gmra.mxu0 %v3775
      %v4949 = vpop.f32.mrf.mxu0
      %v4950 = vadd.f32 0.0, %v4949
      %v4951 = vpop.f32.mrf.mxu0
      %v4952 = vadd.f32 0.0, %v4951
      %4953 = vmatmul.bf16.gmra.mxu0 %v4865
      %v4954 = vpop.f32.mrf.mxu0
      %v4955 = vadd.f32 0.0, %v4954
      %v4956 = vpop.f32.mrf.mxu0
      %v4957 = vadd.f32 0.0, %v4956
      %4958 = vdwg.mxu0
      %v4959 = vadd.f32 %v4825, %v4880
      %v4960 = vadd.f32 %v4826, %v4882
      %v4961 = vadd.f32 %v4827, %v4885
      %v4962 = vadd.f32 %v4828, %v4887
      %v4963 = vadd.f32 %v4829, %v4890
      %v4964 = vadd.f32 %v4830, %v4892
      %v4965 = vadd.f32 %v4831, %v4895
      %v4966 = vadd.f32 %v4832, %v4897
      %v4967 = vadd.f32 %v4833, %v4900
      %v4968 = vadd.f32 %v4834, %v4902
      %v4969 = vadd.f32 %v4835, %v4905
      %v4970 = vadd.f32 %v4836, %v4907
      %v4971 = vadd.f32 %v4837, %v4910
      %v4972 = vadd.f32 %v4838, %v4912
      %v4973 = vadd.f32 %v4839, %v4915
      %v4974 = vadd.f32 %v4840, %v4917
      %v4975 = vadd.f32 %v4841, %v4920
      %v4976 = vadd.f32 %v4842, %v4922
      %v4977 = vadd.f32 %v4843, %v4925
      %v4978 = vadd.f32 %v4844, %v4927
      %v4979 = vadd.f32 %v4845, %v4930
      %v4980 = vadd.f32 %v4846, %v4932
      %v4981 = vadd.f32 %v4847, %v4935
      %v4982 = vadd.f32 %v4848, %v4937
      %v4983 = vadd.f32 %v4849, %v4940
      %v4984 = vadd.f32 %v4850, %v4942
      %v4985 = vadd.f32 %v4851, %v4945
      %v4986 = vadd.f32 %v4852, %v4947
      %v4987 = vadd.f32 %v4853, %v4950
      %v4988 = vadd.f32 %v4854, %v4952
      %v4989 = vadd.f32 %v4855, %v4955
      %v4990 = vadd.f32 %v4856, %v4957
      %v4992 = vshrl.u32 %v3642, 16
      %v4994 = vrot.slane %v4992, 4
      %v4995 = vshll.u32 %v3642, 16
      %v4997 = vrot.slane %v4995, 5
      %v4998 = vor.u32 %v4994, %v4997
      %v4999 = vrot.slane %v4998, 4
      %v5001 = vshll.u32 %v3643, 16
      %v5003 = vrot.slane %v5001, 5
      %v5004 = vsel %vm1584, %v4999, %v5003
      %v5005 = vshrl.u32 %v3643, 16
      %v5007 = vrot.slane %v5005, 4
      %v5008 = vor.u32 %v5007, %v5003
      %v5009 = vrot.slane %v5008, 4
      %v5011 = vshll.u32 %v3644, 16
      %v5013 = vrot.slane %v5011, 5
      %v5014 = vsel %vm1584, %v5009, %v5013
      %s5015 = scalar_lea.vmem %s5, 16
      %v5016 = vld [vmem:[%s5015] sm:$0xf]
      %v5017 = vunpack.c.l.b16 %v5004
      %v5018 = vunpack.c.l.b16 %v5014
      %v5019 = vpack.c.b16 %v5018, %v5017
      %v5021 = vsel %vm2019, %v5019, 0
      %v5024 = vsel %vm2068, %v5016, 0
      %5026 = vmatpush.bf16.msra.mxu0 0
      %5027 = vmatpush.bf16.msra.mxu0 0
      %5028 = vmatpush.bf16.msra.mxu0 0
      %5029 = vmatpush.bf16.msra.mxu0 0
      %5030 = vmatpush.bf16.msra.mxu0 0
      %5031 = vmatpush.bf16.msra.mxu0 0
      %5032 = vmatpush.bf16.msra.mxu0 0
      %5033 = vmatpush.bf16.msra.mxu0 %v5024
      %5034 = vmatmul.bf16.gmra.mxu0 %v4339
      %v5035 = vpop.f32.mrf.mxu0
      %v5036 = vadd.f32 0.0, %v5035
      %v5037 = vpop.f32.mrf.mxu0
      %v5038 = vadd.f32 0.0, %v5037
      %5039 = vmatmul.bf16.gmra.mxu0 %v4342
      %v5040 = vpop.f32.mrf.mxu0
      %v5041 = vadd.f32 0.0, %v5040
      %v5042 = vpop.f32.mrf.mxu0
      %v5043 = vadd.f32 0.0, %v5042
      %5044 = vmatmul.bf16.gmra.mxu0 %v4345
      %v5045 = vpop.f32.mrf.mxu0
      %v5046 = vadd.f32 0.0, %v5045
      %v5047 = vpop.f32.mrf.mxu0
      %v5048 = vadd.f32 0.0, %v5047
      %5049 = vmatmul.bf16.gmra.mxu0 %v4348
      %v5050 = vpop.f32.mrf.mxu0
      %v5051 = vadd.f32 0.0, %v5050
      %v5052 = vpop.f32.mrf.mxu0
      %v5053 = vadd.f32 0.0, %v5052
      %5054 = vmatmul.bf16.gmra.mxu0 %v4351
      %v5055 = vpop.f32.mrf.mxu0
      %v5056 = vadd.f32 0.0, %v5055
      %v5057 = vpop.f32.mrf.mxu0
      %v5058 = vadd.f32 0.0, %v5057
      %5059 = vmatmul.bf16.gmra.mxu0 %v4354
      %v5060 = vpop.f32.mrf.mxu0
      %v5061 = vadd.f32 0.0, %v5060
      %v5062 = vpop.f32.mrf.mxu0
      %v5063 = vadd.f32 0.0, %v5062
      %5064 = vmatmul.bf16.gmra.mxu0 %v4357
      %v5065 = vpop.f32.mrf.mxu0
      %v5066 = vadd.f32 0.0, %v5065
      %v5067 = vpop.f32.mrf.mxu0
      %v5068 = vadd.f32 0.0, %v5067
      %5069 = vmatmul.bf16.gmra.mxu0 %v4360
      %v5070 = vpop.f32.mrf.mxu0
      %v5071 = vadd.f32 0.0, %v5070
      %v5072 = vpop.f32.mrf.mxu0
      %v5073 = vadd.f32 0.0, %v5072
      %5074 = vmatmul.bf16.gmra.mxu0 %v4363
      %v5075 = vpop.f32.mrf.mxu0
      %v5076 = vadd.f32 0.0, %v5075
      %v5077 = vpop.f32.mrf.mxu0
      %v5078 = vadd.f32 0.0, %v5077
      %5079 = vmatmul.bf16.gmra.mxu0 %v4366
      %v5080 = vpop.f32.mrf.mxu0
      %v5081 = vadd.f32 0.0, %v5080
      %v5082 = vpop.f32.mrf.mxu0
      %v5083 = vadd.f32 0.0, %v5082
      %5084 = vmatmul.bf16.gmra.mxu0 %v4369
      %v5085 = vpop.f32.mrf.mxu0
      %v5086 = vadd.f32 0.0, %v5085
      %v5087 = vpop.f32.mrf.mxu0
      %v5088 = vadd.f32 0.0, %v5087
      %5089 = vmatmul.bf16.gmra.mxu0 %v4372
      %v5090 = vpop.f32.mrf.mxu0
      %v5091 = vadd.f32 0.0, %v5090
      %v5092 = vpop.f32.mrf.mxu0
      %v5093 = vadd.f32 0.0, %v5092
      %5094 = vmatmul.bf16.gmra.mxu0 %v4375
      %v5095 = vpop.f32.mrf.mxu0
      %v5096 = vadd.f32 0.0, %v5095
      %v5097 = vpop.f32.mrf.mxu0
      %v5098 = vadd.f32 0.0, %v5097
      %5099 = vmatmul.bf16.gmra.mxu0 %v4378
      %v5100 = vpop.f32.mrf.mxu0
      %v5101 = vadd.f32 0.0, %v5100
      %v5102 = vpop.f32.mrf.mxu0
      %v5103 = vadd.f32 0.0, %v5102
      %5104 = vmatmul.bf16.gmra.mxu0 %v4381
      %v5105 = vpop.f32.mrf.mxu0
      %v5106 = vadd.f32 0.0, %v5105
      %v5107 = vpop.f32.mrf.mxu0
      %v5108 = vadd.f32 0.0, %v5107
      %5109 = vmatmul.bf16.gmra.mxu0 %v5021
      %v5110 = vpop.f32.mrf.mxu0
      %v5111 = vadd.f32 0.0, %v5110
      %v5112 = vpop.f32.mrf.mxu0
      %v5113 = vadd.f32 0.0, %v5112
      %5114 = vdwg.mxu0
      %v5115 = vadd.f32 %v4959, %v5036
      %v5116 = vadd.f32 %v4960, %v5038
      %v5117 = vadd.f32 %v4961, %v5041
      %v5118 = vadd.f32 %v4962, %v5043
      %v5119 = vadd.f32 %v4963, %v5046
      %v5120 = vadd.f32 %v4964, %v5048
      %v5121 = vadd.f32 %v4965, %v5051
      %v5122 = vadd.f32 %v4966, %v5053
      %v5123 = vadd.f32 %v4967, %v5056
      %v5124 = vadd.f32 %v4968, %v5058
      %v5125 = vadd.f32 %v4969, %v5061
      %v5126 = vadd.f32 %v4970, %v5063
      %v5127 = vadd.f32 %v4971, %v5066
      %v5128 = vadd.f32 %v4972, %v5068
      %v5129 = vadd.f32 %v4973, %v5071
      %v5130 = vadd.f32 %v4974, %v5073
      %v5131 = vadd.f32 %v4975, %v5076
      %v5132 = vadd.f32 %v4976, %v5078
      %v5133 = vadd.f32 %v4977, %v5081
      %v5134 = vadd.f32 %v4978, %v5083
      %v5135 = vadd.f32 %v4979, %v5086
      %v5136 = vadd.f32 %v4980, %v5088
      %v5137 = vadd.f32 %v4981, %v5091
      %v5138 = vadd.f32 %v4982, %v5093
      %v5139 = vadd.f32 %v4983, %v5096
      %v5140 = vadd.f32 %v4984, %v5098
      %v5141 = vadd.f32 %v4985, %v5101
      %v5142 = vadd.f32 %v4986, %v5103
      %v5143 = vadd.f32 %v4987, %v5106
      %v5144 = vadd.f32 %v4988, %v5108
      %v5145 = vadd.f32 %v4989, %v5111
      %v5146 = vadd.f32 %v4990, %v5113
      %v5148 = vrot.slane %v3642, 5
      %v5149 = vrot.slane %v5148, 4
      %v5150 = vrot.slane %v3643, 5
      %v5151 = vsel %vm2399, %v5149, %v5150
      %v5152 = vrot.slane %v5150, 4
      %v5153 = vrot.slane %v3644, 5
      %v5154 = vsel %vm2399, %v5152, %v5153
      %s5155 = scalar_lea.vmem %s5, 20
      %v5156 = vld [vmem:[%s5155] sm:$0xf]
      %v5157 = vunpack.c.l.b16 %v5151
      %v5158 = vunpack.c.l.b16 %v5154
      %v5159 = vpack.c.b16 %v5158, %v5157
      %v5161 = vsel %vm2019, %v5159, 0
      %v5164 = vsel %vm2068, %v5156, 0
      %5166 = vmatpush.bf16.msra.mxu0 0
      %5167 = vmatpush.bf16.msra.mxu0 0
      %5168 = vmatpush.bf16.msra.mxu0 0
      %5169 = vmatpush.bf16.msra.mxu0 0
      %5170 = vmatpush.bf16.msra.mxu0 0
      %5171 = vmatpush.bf16.msra.mxu0 0
      %5172 = vmatpush.bf16.msra.mxu0 0
      %5173 = vmatpush.bf16.msra.mxu0 %v5164
      %5174 = vmatmul.bf16.gmra.mxu0 %v4689
      %v5175 = vpop.f32.mrf.mxu0
      %v5176 = vadd.f32 0.0, %v5175
      %v5177 = vpop.f32.mrf.mxu0
      %v5178 = vadd.f32 0.0, %v5177
      %5179 = vmatmul.bf16.gmra.mxu0 %v4692
      %v5180 = vpop.f32.mrf.mxu0
      %v5181 = vadd.f32 0.0, %v5180
      %v5182 = vpop.f32.mrf.mxu0
      %v5183 = vadd.f32 0.0, %v5182
      %5184 = vmatmul.bf16.gmra.mxu0 %v4695
      %v5185 = vpop.f32.mrf.mxu0
      %v5186 = vadd.f32 0.0, %v5185
      %v5187 = vpop.f32.mrf.mxu0
      %v5188 = vadd.f32 0.0, %v5187
      %5189 = vmatmul.bf16.gmra.mxu0 %v4698
      %v5190 = vpop.f32.mrf.mxu0
      %v5191 = vadd.f32 0.0, %v5190
      %v5192 = vpop.f32.mrf.mxu0
      %v5193 = vadd.f32 0.0, %v5192
      %5194 = vmatmul.bf16.gmra.mxu0 %v4701
      %v5195 = vpop.f32.mrf.mxu0
      %v5196 = vadd.f32 0.0, %v5195
      %v5197 = vpop.f32.mrf.mxu0
      %v5198 = vadd.f32 0.0, %v5197
      %5199 = vmatmul.bf16.gmra.mxu0 %v4704
      %v5200 = vpop.f32.mrf.mxu0
      %v5201 = vadd.f32 0.0, %v5200
      %v5202 = vpop.f32.mrf.mxu0
      %v5203 = vadd.f32 0.0, %v5202
      %5204 = vmatmul.bf16.gmra.mxu0 %v4707
      %v5205 = vpop.f32.mrf.mxu0
      %v5206 = vadd.f32 0.0, %v5205
      %v5207 = vpop.f32.mrf.mxu0
      %v5208 = vadd.f32 0.0, %v5207
      %5209 = vmatmul.bf16.gmra.mxu0 %v4710
      %v5210 = vpop.f32.mrf.mxu0
      %v5211 = vadd.f32 0.0, %v5210
      %v5212 = vpop.f32.mrf.mxu0
      %v5213 = vadd.f32 0.0, %v5212
      %5214 = vmatmul.bf16.gmra.mxu0 %v4713
      %v5215 = vpop.f32.mrf.mxu0
      %v5216 = vadd.f32 0.0, %v5215
      %v5217 = vpop.f32.mrf.mxu0
      %v5218 = vadd.f32 0.0, %v5217
      %5219 = vmatmul.bf16.gmra.mxu0 %v4716
      %v5220 = vpop.f32.mrf.mxu0
      %v5221 = vadd.f32 0.0, %v5220
      %v5222 = vpop.f32.mrf.mxu0
      %v5223 = vadd.f32 0.0, %v5222
      %5224 = vmatmul.bf16.gmra.mxu0 %v4719
      %v5225 = vpop.f32.mrf.mxu0
      %v5226 = vadd.f32 0.0, %v5225
      %v5227 = vpop.f32.mrf.mxu0
      %v5228 = vadd.f32 0.0, %v5227
      %5229 = vmatmul.bf16.gmra.mxu0 %v4722
      %v5230 = vpop.f32.mrf.mxu0
      %v5231 = vadd.f32 0.0, %v5230
      %v5232 = vpop.f32.mrf.mxu0
      %v5233 = vadd.f32 0.0, %v5232
      %5234 = vmatmul.bf16.gmra.mxu0 %v4725
      %v5235 = vpop.f32.mrf.mxu0
      %v5236 = vadd.f32 0.0, %v5235
      %v5237 = vpop.f32.mrf.mxu0
      %v5238 = vadd.f32 0.0, %v5237
      %5239 = vmatmul.bf16.gmra.mxu0 %v4728
      %v5240 = vpop.f32.mrf.mxu0
      %v5241 = vadd.f32 0.0, %v5240
      %v5242 = vpop.f32.mrf.mxu0
      %v5243 = vadd.f32 0.0, %v5242
      %5244 = vmatmul.bf16.gmra.mxu0 %v4731
      %v5245 = vpop.f32.mrf.mxu0
      %v5246 = vadd.f32 0.0, %v5245
      %v5247 = vpop.f32.mrf.mxu0
      %v5248 = vadd.f32 0.0, %v5247
      %5249 = vmatmul.bf16.gmra.mxu0 %v5161
      %v5250 = vpop.f32.mrf.mxu0
      %v5251 = vadd.f32 0.0, %v5250
      %v5252 = vpop.f32.mrf.mxu0
      %v5253 = vadd.f32 0.0, %v5252
      %5254 = vdwg.mxu0
      %v5255 = vadd.f32 %v5115, %v5176
      %v5256 = vadd.f32 %v5116, %v5178
      %v5257 = vadd.f32 %v5117, %v5181
      %v5258 = vadd.f32 %v5118, %v5183
      %v5259 = vadd.f32 %v5119, %v5186
      %v5260 = vadd.f32 %v5120, %v5188
      %v5261 = vadd.f32 %v5121, %v5191
      %v5262 = vadd.f32 %v5122, %v5193
      %v5263 = vadd.f32 %v5123, %v5196
      %v5264 = vadd.f32 %v5124, %v5198
      %v5265 = vadd.f32 %v5125, %v5201
      %v5266 = vadd.f32 %v5126, %v5203
      %v5267 = vadd.f32 %v5127, %v5206
      %v5268 = vadd.f32 %v5128, %v5208
      %v5269 = vadd.f32 %v5129, %v5211
      %v5270 = vadd.f32 %v5130, %v5213
      %v5271 = vadd.f32 %v5131, %v5216
      %v5272 = vadd.f32 %v5132, %v5218
      %v5273 = vadd.f32 %v5133, %v5221
      %v5274 = vadd.f32 %v5134, %v5223
      %v5275 = vadd.f32 %v5135, %v5226
      %v5276 = vadd.f32 %v5136, %v5228
      %v5277 = vadd.f32 %v5137, %v5231
      %v5278 = vadd.f32 %v5138, %v5233
      %v5279 = vadd.f32 %v5139, %v5236
      %v5280 = vadd.f32 %v5140, %v5238
      %v5281 = vadd.f32 %v5141, %v5241
      %v5282 = vadd.f32 %v5142, %v5243
      %v5283 = vadd.f32 %v5143, %v5246
      %v5284 = vadd.f32 %v5144, %v5248
      %v5285 = vadd.f32 %v5145, %v5251
      %v5286 = vadd.f32 %v5146, %v5253
      %s5287 = scalar_lea.vmem %s5, 24
      %v5288 = vld [vmem:[%s5287] sm:$0xf]
      %v5291 = vunpack.c.l.b16 %v3645
      %v5292 = vunpack.c.l.b16 %v3646
      %v5293 = vpack.c.b16 %v5292, %v5291
      %v5295 = vsel %vm2019, %v5293, 0
      %v5298 = vsel %vm2068, %v5288, 0
      %5300 = vmatpush.bf16.msra.mxu0 0
      %5301 = vmatpush.bf16.msra.mxu0 0
      %5302 = vmatpush.bf16.msra.mxu0 0
      %5303 = vmatpush.bf16.msra.mxu0 0
      %5304 = vmatpush.bf16.msra.mxu0 0
      %5305 = vmatpush.bf16.msra.mxu0 0
      %5306 = vmatpush.bf16.msra.mxu0 0
      %5307 = vmatpush.bf16.msra.mxu0 %v5298
      %5308 = vmatmul.bf16.gmra.mxu0 %v3736
      %v5309 = vpop.f32.mrf.mxu0
      %v5310 = vadd.f32 0.0, %v5309
      %v5311 = vpop.f32.mrf.mxu0
      %v5312 = vadd.f32 0.0, %v5311
      %5313 = vmatmul.bf16.gmra.mxu0 %v3739
      %v5314 = vpop.f32.mrf.mxu0
      %v5315 = vadd.f32 0.0, %v5314
      %v5316 = vpop.f32.mrf.mxu0
      %v5317 = vadd.f32 0.0, %v5316
      %5318 = vmatmul.bf16.gmra.mxu0 %v3742
      %v5319 = vpop.f32.mrf.mxu0
      %v5320 = vadd.f32 0.0, %v5319
      %v5321 = vpop.f32.mrf.mxu0
      %v5322 = vadd.f32 0.0, %v5321
      %5323 = vmatmul.bf16.gmra.mxu0 %v3745
      %v5324 = vpop.f32.mrf.mxu0
      %v5325 = vadd.f32 0.0, %v5324
      %v5326 = vpop.f32.mrf.mxu0
      %v5327 = vadd.f32 0.0, %v5326
      %5328 = vmatmul.bf16.gmra.mxu0 %v3748
      %v5329 = vpop.f32.mrf.mxu0
      %v5330 = vadd.f32 0.0, %v5329
      %v5331 = vpop.f32.mrf.mxu0
      %v5332 = vadd.f32 0.0, %v5331
      %5333 = vmatmul.bf16.gmra.mxu0 %v3751
      %v5334 = vpop.f32.mrf.mxu0
      %v5335 = vadd.f32 0.0, %v5334
      %v5336 = vpop.f32.mrf.mxu0
      %v5337 = vadd.f32 0.0, %v5336
      %5338 = vmatmul.bf16.gmra.mxu0 %v3754
      %v5339 = vpop.f32.mrf.mxu0
      %v5340 = vadd.f32 0.0, %v5339
      %v5341 = vpop.f32.mrf.mxu0
      %v5342 = vadd.f32 0.0, %v5341
      %5343 = vmatmul.bf16.gmra.mxu0 %v3757
      %v5344 = vpop.f32.mrf.mxu0
      %v5345 = vadd.f32 0.0, %v5344
      %v5346 = vpop.f32.mrf.mxu0
      %v5347 = vadd.f32 0.0, %v5346
      %5348 = vmatmul.bf16.gmra.mxu0 %v3760
      %v5349 = vpop.f32.mrf.mxu0
      %v5350 = vadd.f32 0.0, %v5349
      %v5351 = vpop.f32.mrf.mxu0
      %v5352 = vadd.f32 0.0, %v5351
      %5353 = vmatmul.bf16.gmra.mxu0 %v3763
      %v5354 = vpop.f32.mrf.mxu0
      %v5355 = vadd.f32 0.0, %v5354
      %v5356 = vpop.f32.mrf.mxu0
      %v5357 = vadd.f32 0.0, %v5356
      %5358 = vmatmul.bf16.gmra.mxu0 %v3766
      %v5359 = vpop.f32.mrf.mxu0
      %v5360 = vadd.f32 0.0, %v5359
      %v5361 = vpop.f32.mrf.mxu0
      %v5362 = vadd.f32 0.0, %v5361
      %5363 = vmatmul.bf16.gmra.mxu0 %v3769
      %v5364 = vpop.f32.mrf.mxu0
      %v5365 = vadd.f32 0.0, %v5364
      %v5366 = vpop.f32.mrf.mxu0
      %v5367 = vadd.f32 0.0, %v5366
      %5368 = vmatmul.bf16.gmra.mxu0 %v3772
      %v5369 = vpop.f32.mrf.mxu0
      %v5370 = vadd.f32 0.0, %v5369
      %v5371 = vpop.f32.mrf.mxu0
      %v5372 = vadd.f32 0.0, %v5371
      %5373 = vmatmul.bf16.gmra.mxu0 %v3775
      %v5374 = vpop.f32.mrf.mxu0
      %v5375 = vadd.f32 0.0, %v5374
      %v5376 = vpop.f32.mrf.mxu0
      %v5377 = vadd.f32 0.0, %v5376
      %5378 = vmatmul.bf16.gmra.mxu0 %v4865
      %v5379 = vpop.f32.mrf.mxu0
      %v5380 = vadd.f32 0.0, %v5379
      %v5381 = vpop.f32.mrf.mxu0
      %v5382 = vadd.f32 0.0, %v5381
      %5383 = vmatmul.bf16.gmra.mxu0 %v5295
      %v5384 = vpop.f32.mrf.mxu0
      %v5385 = vadd.f32 0.0, %v5384
      %v5386 = vpop.f32.mrf.mxu0
      %v5387 = vadd.f32 0.0, %v5386
      %5388 = vdwg.mxu0
      %v5389 = vadd.f32 %v5255, %v5310
      %v5390 = vadd.f32 %v5256, %v5312
      %v5391 = vadd.f32 %v5257, %v5315
      %v5392 = vadd.f32 %v5258, %v5317
      %v5393 = vadd.f32 %v5259, %v5320
      %v5394 = vadd.f32 %v5260, %v5322
      %v5395 = vadd.f32 %v5261, %v5325
      %v5396 = vadd.f32 %v5262, %v5327
      %v5397 = vadd.f32 %v5263, %v5330
      %v5398 = vadd.f32 %v5264, %v5332
      %v5399 = vadd.f32 %v5265, %v5335
      %v5400 = vadd.f32 %v5266, %v5337
      %v5401 = vadd.f32 %v5267, %v5340
      %v5402 = vadd.f32 %v5268, %v5342
      %v5403 = vadd.f32 %v5269, %v5345
      %v5404 = vadd.f32 %v5270, %v5347
      %v5405 = vadd.f32 %v5271, %v5350
      %v5406 = vadd.f32 %v5272, %v5352
      %v5407 = vadd.f32 %v5273, %v5355
      %v5408 = vadd.f32 %v5274, %v5357
      %v5409 = vadd.f32 %v5275, %v5360
      %v5410 = vadd.f32 %v5276, %v5362
      %v5411 = vadd.f32 %v5277, %v5365
      %v5412 = vadd.f32 %v5278, %v5367
      %v5413 = vadd.f32 %v5279, %v5370
      %v5414 = vadd.f32 %v5280, %v5372
      %v5415 = vadd.f32 %v5281, %v5375
      %v5416 = vadd.f32 %v5282, %v5377
      %v5417 = vadd.f32 %v5283, %v5380
      %v5418 = vadd.f32 %v5284, %v5382
      %v5419 = vadd.f32 %v5285, %v5385
      %v5420 = vadd.f32 %v5286, %v5387
      %v5422 = vshrl.u32 %v3645, 16
      %v5424 = vrot.slane %v5422, 4
      %v5425 = vshll.u32 %v3645, 16
      %v5427 = vrot.slane %v5425, 5
      %v5428 = vor.u32 %v5424, %v5427
      %v5429 = vrot.slane %v5428, 4
      %v5431 = vshll.u32 %v3646, 16
      %v5433 = vrot.slane %v5431, 5
      %v5434 = vsel %vm1584, %v5429, %v5433
      %v5435 = vshrl.u32 %v3646, 16
      %v5437 = vrot.slane %v5435, 4
      %v5438 = vor.u32 %v5437, %v5433
      %v5439 = vrot.slane %v5438, 4
      %v5441 = vshll.u32 %v3647, 16
      %v5443 = vrot.slane %v5441, 5
      %v5444 = vsel %vm1584, %v5439, %v5443
      %s5445 = scalar_lea.vmem %s5, 28
      %v5446 = vld [vmem:[%s5445] sm:$0xf]
      %v5447 = vunpack.c.l.b16 %v5434
      %v5448 = vunpack.c.l.b16 %v5444
      %v5449 = vpack.c.b16 %v5448, %v5447
      %v5451 = vsel %vm2019, %v5449, 0
      %v5454 = vsel %vm2068, %v5446, 0
      %5456 = vmatpush.bf16.msra.mxu0 0
      %5457 = vmatpush.bf16.msra.mxu0 0
      %5458 = vmatpush.bf16.msra.mxu0 0
      %5459 = vmatpush.bf16.msra.mxu0 0
      %5460 = vmatpush.bf16.msra.mxu0 0
      %5461 = vmatpush.bf16.msra.mxu0 0
      %5462 = vmatpush.bf16.msra.mxu0 0
      %5463 = vmatpush.bf16.msra.mxu0 %v5454
      %5464 = vmatmul.bf16.gmra.mxu0 %v4342
      %v5465 = vpop.f32.mrf.mxu0
      %v5466 = vadd.f32 0.0, %v5465
      %v5467 = vpop.f32.mrf.mxu0
      %v5468 = vadd.f32 0.0, %v5467
      %5469 = vmatmul.bf16.gmra.mxu0 %v4345
      %v5470 = vpop.f32.mrf.mxu0
      %v5471 = vadd.f32 0.0, %v5470
      %v5472 = vpop.f32.mrf.mxu0
      %v5473 = vadd.f32 0.0, %v5472
      %5474 = vmatmul.bf16.gmra.mxu0 %v4348
      %v5475 = vpop.f32.mrf.mxu0
      %v5476 = vadd.f32 0.0, %v5475
      %v5477 = vpop.f32.mrf.mxu0
      %v5478 = vadd.f32 0.0, %v5477
      %5479 = vmatmul.bf16.gmra.mxu0 %v4351
      %v5480 = vpop.f32.mrf.mxu0
      %v5481 = vadd.f32 0.0, %v5480
      %v5482 = vpop.f32.mrf.mxu0
      %v5483 = vadd.f32 0.0, %v5482
      %5484 = vmatmul.bf16.gmra.mxu0 %v4354
      %v5485 = vpop.f32.mrf.mxu0
      %v5486 = vadd.f32 0.0, %v5485
      %v5487 = vpop.f32.mrf.mxu0
      %v5488 = vadd.f32 0.0, %v5487
      %5489 = vmatmul.bf16.gmra.mxu0 %v4357
      %v5490 = vpop.f32.mrf.mxu0
      %v5491 = vadd.f32 0.0, %v5490
      %v5492 = vpop.f32.mrf.mxu0
      %v5493 = vadd.f32 0.0, %v5492
      %5494 = vmatmul.bf16.gmra.mxu0 %v4360
      %v5495 = vpop.f32.mrf.mxu0
      %v5496 = vadd.f32 0.0, %v5495
      %v5497 = vpop.f32.mrf.mxu0
      %v5498 = vadd.f32 0.0, %v5497
      %5499 = vmatmul.bf16.gmra.mxu0 %v4363
      %v5500 = vpop.f32.mrf.mxu0
      %v5501 = vadd.f32 0.0, %v5500
      %v5502 = vpop.f32.mrf.mxu0
      %v5503 = vadd.f32 0.0, %v5502
      %5504 = vmatmul.bf16.gmra.mxu0 %v4366
      %v5505 = vpop.f32.mrf.mxu0
      %v5506 = vadd.f32 0.0, %v5505
      %v5507 = vpop.f32.mrf.mxu0
      %v5508 = vadd.f32 0.0, %v5507
      %5509 = vmatmul.bf16.gmra.mxu0 %v4369
      %v5510 = vpop.f32.mrf.mxu0
      %v5511 = vadd.f32 0.0, %v5510
      %v5512 = vpop.f32.mrf.mxu0
      %v5513 = vadd.f32 0.0, %v5512
      %5514 = vmatmul.bf16.gmra.mxu0 %v4372
      %v5515 = vpop.f32.mrf.mxu0
      %v5516 = vadd.f32 0.0, %v5515
      %v5517 = vpop.f32.mrf.mxu0
      %v5518 = vadd.f32 0.0, %v5517
      %5519 = vmatmul.bf16.gmra.mxu0 %v4375
      %v5520 = vpop.f32.mrf.mxu0
      %v5521 = vadd.f32 0.0, %v5520
      %v5522 = vpop.f32.mrf.mxu0
      %v5523 = vadd.f32 0.0, %v5522
      %5524 = vmatmul.bf16.gmra.mxu0 %v4378
      %v5525 = vpop.f32.mrf.mxu0
      %v5526 = vadd.f32 0.0, %v5525
      %v5527 = vpop.f32.mrf.mxu0
      %v5528 = vadd.f32 0.0, %v5527
      %5529 = vmatmul.bf16.gmra.mxu0 %v4381
      %v5530 = vpop.f32.mrf.mxu0
      %v5531 = vadd.f32 0.0, %v5530
      %v5532 = vpop.f32.mrf.mxu0
      %v5533 = vadd.f32 0.0, %v5532
      %5534 = vmatmul.bf16.gmra.mxu0 %v5021
      %v5535 = vpop.f32.mrf.mxu0
      %v5536 = vadd.f32 0.0, %v5535
      %v5537 = vpop.f32.mrf.mxu0
      %v5538 = vadd.f32 0.0, %v5537
      %5539 = vmatmul.bf16.gmra.mxu0 %v5451
      %v5540 = vpop.f32.mrf.mxu0
      %v5541 = vadd.f32 0.0, %v5540
      %v5542 = vpop.f32.mrf.mxu0
      %v5543 = vadd.f32 0.0, %v5542
      %5544 = vdwg.mxu0
      %v5545 = vadd.f32 %v5389, %v5466
      %v5546 = vadd.f32 %v5390, %v5468
      %v5547 = vadd.f32 %v5391, %v5471
      %v5548 = vadd.f32 %v5392, %v5473
      %v5549 = vadd.f32 %v5393, %v5476
      %v5550 = vadd.f32 %v5394, %v5478
      %v5551 = vadd.f32 %v5395, %v5481
      %v5552 = vadd.f32 %v5396, %v5483
      %v5553 = vadd.f32 %v5397, %v5486
      %v5554 = vadd.f32 %v5398, %v5488
      %v5555 = vadd.f32 %v5399, %v5491
      %v5556 = vadd.f32 %v5400, %v5493
      %v5557 = vadd.f32 %v5401, %v5496
      %v5558 = vadd.f32 %v5402, %v5498
      %v5559 = vadd.f32 %v5403, %v5501
      %v5560 = vadd.f32 %v5404, %v5503
      %v5561 = vadd.f32 %v5405, %v5506
      %v5562 = vadd.f32 %v5406, %v5508
      %v5563 = vadd.f32 %v5407, %v5511
      %v5564 = vadd.f32 %v5408, %v5513
      %v5565 = vadd.f32 %v5409, %v5516
      %v5566 = vadd.f32 %v5410, %v5518
      %v5567 = vadd.f32 %v5411, %v5521
      %v5568 = vadd.f32 %v5412, %v5523
      %v5569 = vadd.f32 %v5413, %v5526
      %v5570 = vadd.f32 %v5414, %v5528
      %v5571 = vadd.f32 %v5415, %v5531
      %v5572 = vadd.f32 %v5416, %v5533
      %v5573 = vadd.f32 %v5417, %v5536
      %v5574 = vadd.f32 %v5418, %v5538
      %v5575 = vadd.f32 %v5419, %v5541
      %v5576 = vadd.f32 %v5420, %v5543
      %v5578 = vrot.slane %v3645, 5
      %v5579 = vrot.slane %v5578, 4
      %v5580 = vrot.slane %v3646, 5
      %v5581 = vsel %vm2399, %v5579, %v5580
      %v5582 = vrot.slane %v5580, 4
      %v5583 = vrot.slane %v3647, 5
      %v5584 = vsel %vm2399, %v5582, %v5583
      %s5585 = scalar_lea.vmem %s5, 32
      %v5586 = vld [vmem:[%s5585] sm:$0xf]
      %v5587 = vunpack.c.l.b16 %v5581
      %v5588 = vunpack.c.l.b16 %v5584
      %v5589 = vpack.c.b16 %v5588, %v5587
      %v5591 = vsel %vm2019, %v5589, 0
      %v5594 = vsel %vm2068, %v5586, 0
      %5596 = vmatpush.bf16.msra.mxu0 0
      %5597 = vmatpush.bf16.msra.mxu0 0
      %5598 = vmatpush.bf16.msra.mxu0 0
      %5599 = vmatpush.bf16.msra.mxu0 0
      %5600 = vmatpush.bf16.msra.mxu0 0
      %5601 = vmatpush.bf16.msra.mxu0 0
      %5602 = vmatpush.bf16.msra.mxu0 0
      %5603 = vmatpush.bf16.msra.mxu0 %v5594
      %5604 = vmatmul.bf16.gmra.mxu0 %v4692
      %v5605 = vpop.f32.mrf.mxu0
      %v5606 = vadd.f32 0.0, %v5605
      %v5607 = vpop.f32.mrf.mxu0
      %v5608 = vadd.f32 0.0, %v5607
      %5609 = vmatmul.bf16.gmra.mxu0 %v4695
      %v5610 = vpop.f32.mrf.mxu0
      %v5611 = vadd.f32 0.0, %v5610
      %v5612 = vpop.f32.mrf.mxu0
      %v5613 = vadd.f32 0.0, %v5612
      %5614 = vmatmul.bf16.gmra.mxu0 %v4698
      %v5615 = vpop.f32.mrf.mxu0
      %v5616 = vadd.f32 0.0, %v5615
      %v5617 = vpop.f32.mrf.mxu0
      %v5618 = vadd.f32 0.0, %v5617
      %5619 = vmatmul.bf16.gmra.mxu0 %v4701
      %v5620 = vpop.f32.mrf.mxu0
      %v5621 = vadd.f32 0.0, %v5620
      %v5622 = vpop.f32.mrf.mxu0
      %v5623 = vadd.f32 0.0, %v5622
      %5624 = vmatmul.bf16.gmra.mxu0 %v4704
      %v5625 = vpop.f32.mrf.mxu0
      %v5626 = vadd.f32 0.0, %v5625
      %v5627 = vpop.f32.mrf.mxu0
      %v5628 = vadd.f32 0.0, %v5627
      %5629 = vmatmul.bf16.gmra.mxu0 %v4707
      %v5630 = vpop.f32.mrf.mxu0
      %v5631 = vadd.f32 0.0, %v5630
      %v5632 = vpop.f32.mrf.mxu0
      %v5633 = vadd.f32 0.0, %v5632
      %5634 = vmatmul.bf16.gmra.mxu0 %v4710
      %v5635 = vpop.f32.mrf.mxu0
      %v5636 = vadd.f32 0.0, %v5635
      %v5637 = vpop.f32.mrf.mxu0
      %v5638 = vadd.f32 0.0, %v5637
      %5639 = vmatmul.bf16.gmra.mxu0 %v4713
      %v5640 = vpop.f32.mrf.mxu0
      %v5641 = vadd.f32 0.0, %v5640
      %v5642 = vpop.f32.mrf.mxu0
      %v5643 = vadd.f32 0.0, %v5642
      %5644 = vmatmul.bf16.gmra.mxu0 %v4716
      %v5645 = vpop.f32.mrf.mxu0
      %v5646 = vadd.f32 0.0, %v5645
      %v5647 = vpop.f32.mrf.mxu0
      %v5648 = vadd.f32 0.0, %v5647
      %5649 = vmatmul.bf16.gmra.mxu0 %v4719
      %v5650 = vpop.f32.mrf.mxu0
      %v5651 = vadd.f32 0.0, %v5650
      %v5652 = vpop.f32.mrf.mxu0
      %v5653 = vadd.f32 0.0, %v5652
      %5654 = vmatmul.bf16.gmra.mxu0 %v4722
      %v5655 = vpop.f32.mrf.mxu0
      %v5656 = vadd.f32 0.0, %v5655
      %v5657 = vpop.f32.mrf.mxu0
      %v5658 = vadd.f32 0.0, %v5657
      %5659 = vmatmul.bf16.gmra.mxu0 %v4725
      %v5660 = vpop.f32.mrf.mxu0
      %v5661 = vadd.f32 0.0, %v5660
      %v5662 = vpop.f32.mrf.mxu0
      %v5663 = vadd.f32 0.0, %v5662
      %5664 = vmatmul.bf16.gmra.mxu0 %v4728
      %v5665 = vpop.f32.mrf.mxu0
      %v5666 = vadd.f32 0.0, %v5665
      %v5667 = vpop.f32.mrf.mxu0
      %v5668 = vadd.f32 0.0, %v5667
      %5669 = vmatmul.bf16.gmra.mxu0 %v4731
      %v5670 = vpop.f32.mrf.mxu0
      %v5671 = vadd.f32 0.0, %v5670
      %v5672 = vpop.f32.mrf.mxu0
      %v5673 = vadd.f32 0.0, %v5672
      %5674 = vmatmul.bf16.gmra.mxu0 %v5161
      %v5675 = vpop.f32.mrf.mxu0
      %v5676 = vadd.f32 0.0, %v5675
      %v5677 = vpop.f32.mrf.mxu0
      %v5678 = vadd.f32 0.0, %v5677
      %5679 = vmatmul.bf16.gmra.mxu0 %v5591
      %v5680 = vpop.f32.mrf.mxu0
      %v5681 = vadd.f32 0.0, %v5680
      %v5682 = vpop.f32.mrf.mxu0
      %v5683 = vadd.f32 0.0, %v5682
      %5684 = vdwg.mxu0
      %v5685 = vadd.f32 %v5545, %v5606
      %v5686 = vadd.f32 %v5546, %v5608
      %v5687 = vadd.f32 %v5547, %v5611
      %v5688 = vadd.f32 %v5548, %v5613
      %v5689 = vadd.f32 %v5549, %v5616
      %v5690 = vadd.f32 %v5550, %v5618
      %v5691 = vadd.f32 %v5551, %v5621
      %v5692 = vadd.f32 %v5552, %v5623
      %v5693 = vadd.f32 %v5553, %v5626
      %v5694 = vadd.f32 %v5554, %v5628
      %v5695 = vadd.f32 %v5555, %v5631
      %v5696 = vadd.f32 %v5556, %v5633
      %v5697 = vadd.f32 %v5557, %v5636
      %v5698 = vadd.f32 %v5558, %v5638
      %v5699 = vadd.f32 %v5559, %v5641
      %v5700 = vadd.f32 %v5560, %v5643
      %v5701 = vadd.f32 %v5561, %v5646
      %v5702 = vadd.f32 %v5562, %v5648
      %v5703 = vadd.f32 %v5563, %v5651
      %v5704 = vadd.f32 %v5564, %v5653
      %v5705 = vadd.f32 %v5565, %v5656
      %v5706 = vadd.f32 %v5566, %v5658
      %v5707 = vadd.f32 %v5567, %v5661
      %v5708 = vadd.f32 %v5568, %v5663
      %v5709 = vadd.f32 %v5569, %v5666
      %v5710 = vadd.f32 %v5570, %v5668
      %v5711 = vadd.f32 %v5571, %v5671
      %v5712 = vadd.f32 %v5572, %v5673
      %v5713 = vadd.f32 %v5573, %v5676
      %v5714 = vadd.f32 %v5574, %v5678
      %v5715 = vadd.f32 %v5575, %v5681
      %v5716 = vadd.f32 %v5576, %v5683
      %v5717 = vpack.c.bf16 %v5685, %v5685
      %v5718 = vpack.c.bf16 %v5686, %v5686
      %v5719 = vpack.c.bf16 %v5687, %v5687
      %v5720 = vpack.c.bf16 %v5688, %v5688
      %v5721 = vpack.c.bf16 %v5689, %v5689
      %v5722 = vpack.c.bf16 %v5690, %v5690
      %v5723 = vpack.c.bf16 %v5691, %v5691
      %v5724 = vpack.c.bf16 %v5692, %v5692
      %v5725 = vpack.c.bf16 %v5693, %v5693
      %v5726 = vpack.c.bf16 %v5694, %v5694
      %v5727 = vpack.c.bf16 %v5695, %v5695
      %v5728 = vpack.c.bf16 %v5696, %v5696
      %v5729 = vpack.c.bf16 %v5697, %v5697
      %v5730 = vpack.c.bf16 %v5698, %v5698
      %v5731 = vpack.c.bf16 %v5699, %v5699
      %v5732 = vpack.c.bf16 %v5700, %v5700
      %v5733 = vpack.c.bf16 %v5701, %v5701
      %v5734 = vpack.c.bf16 %v5702, %v5702
      %v5735 = vpack.c.bf16 %v5703, %v5703
      %v5736 = vpack.c.bf16 %v5704, %v5704
      %v5737 = vpack.c.bf16 %v5705, %v5705
      %v5738 = vpack.c.bf16 %v5706, %v5706
      %v5739 = vpack.c.bf16 %v5707, %v5707
      %v5740 = vpack.c.bf16 %v5708, %v5708
      %v5741 = vpack.c.bf16 %v5709, %v5709
      %v5742 = vpack.c.bf16 %v5710, %v5710
      %v5743 = vpack.c.bf16 %v5711, %v5711
      %v5744 = vpack.c.bf16 %v5712, %v5712
      %v5745 = vpack.c.bf16 %v5713, %v5713
      %v5746 = vpack.c.bf16 %v5714, %v5714
      %v5747 = vpack.c.bf16 %v5715, %v5715
      %v5748 = vpack.c.bf16 %v5716, %v5716
      %5749 = vst.msk [vmem:[%s305] sm:$0xf] %vm311, %v5717
      %5750 = vst.msk [vmem:[%s305 + $0x4] sm:$0xf] %vm311, %v5718
      %5751 = vst.msk [vmem:[%s305 + $0x8] sm:$0xf] %vm311, %v5719
      %5752 = vst.msk [vmem:[%s305 + $0xc] sm:$0xf] %vm311, %v5720
      %5753 = vst.msk [vmem:[%s305 + $0x10] sm:$0xf] %vm311, %v5721
      %5754 = vst.msk [vmem:[%s305 + $0x14] sm:$0xf] %vm311, %v5722
      %5755 = vst.msk [vmem:[%s305 + $0x18] sm:$0xf] %vm311, %v5723
      %5756 = vst.msk [vmem:[%s305 + $0x1c] sm:$0xf] %vm311, %v5724
      %5757 = vst.msk [vmem:[%s305 + $0x20] sm:$0xf] %vm311, %v5725
      %5758 = vst.msk [vmem:[%s305 + $0x24] sm:$0xf] %vm311, %v5726
      %5759 = vst.msk [vmem:[%s305 + $0x28] sm:$0xf] %vm311, %v5727
      %5760 = vst.msk [vmem:[%s305 + $0x2c] sm:$0xf] %vm311, %v5728
      %5761 = vst.msk [vmem:[%s305 + $0x30] sm:$0xf] %vm311, %v5729
      %5762 = vst.msk [vmem:[%s305 + $0x34] sm:$0xf] %vm311, %v5730
      %5763 = vst.msk [vmem:[%s305 + $0x38] sm:$0xf] %vm311, %v5731
      %5764 = vst.msk [vmem:[%s305 + $0x3c] sm:$0xf] %vm311, %v5732
      %5765 = vst.msk [vmem:[%s305 + $0x40] sm:$0xf] %vm311, %v5733
      %5766 = vst.msk [vmem:[%s305 + $0x44] sm:$0xf] %vm311, %v5734
      %5767 = vst.msk [vmem:[%s305 + $0x48] sm:$0xf] %vm311, %v5735
      %5768 = vst.msk [vmem:[%s305 + $0x4c] sm:$0xf] %vm311, %v5736
      %5769 = vst.msk [vmem:[%s305 + $0x50] sm:$0xf] %vm311, %v5737
      %5770 = vst.msk [vmem:[%s305 + $0x54] sm:$0xf] %vm311, %v5738
      %5771 = vst.msk [vmem:[%s305 + $0x58] sm:$0xf] %vm311, %v5739
      %5772 = vst.msk [vmem:[%s305 + $0x5c] sm:$0xf] %vm311, %v5740
      %5773 = vst.msk [vmem:[%s305 + $0x60] sm:$0xf] %vm311, %v5741
      %5774 = vst.msk [vmem:[%s305 + $0x64] sm:$0xf] %vm311, %v5742
      %5775 = vst.msk [vmem:[%s305 + $0x68] sm:$0xf] %vm311, %v5743
      %5776 = vst.msk [vmem:[%s305 + $0x6c] sm:$0xf] %vm311, %v5744
      %5777 = vst.msk [vmem:[%s305 + $0x70] sm:$0xf] %vm311, %v5745
      %5778 = vst.msk [vmem:[%s305 + $0x74] sm:$0xf] %vm311, %v5746
      %5779 = vst.msk [vmem:[%s305 + $0x78] sm:$0xf] %vm311, %v5747
      %5780 = vst.msk [vmem:[%s305 + $0x7c] sm:$0xf] %vm311, %v5748
      %v5781 = vsel %vm2019, %v5685, 0.0
      %v5782 = vsel %vm2019, %v5686, 0.0
      %v5783 = vadd.f32 %v5781, %v5782
      %v5784 = vsel %vm2019, %v5687, 0.0
      %v5785 = vadd.f32 %v5783, %v5784
      %v5786 = vsel %vm2019, %v5688, 0.0
      %v5787 = vadd.f32 %v5785, %v5786
      %v5788 = vsel %vm2019, %v5689, 0.0
      %v5789 = vadd.f32 %v5787, %v5788
      %v5790 = vsel %vm2019, %v5690, 0.0
      %v5791 = vadd.f32 %v5789, %v5790
      %v5792 = vsel %vm2019, %v5691, 0.0
      %v5793 = vadd.f32 %v5791, %v5792
      %v5794 = vsel %vm2019, %v5692, 0.0
      %v5795 = vadd.f32 %v5793, %v5794
      %v5796 = vsel %vm2019, %v5693, 0.0
      %v5797 = vadd.f32 %v5795, %v5796
      %v5798 = vsel %vm2019, %v5694, 0.0
      %v5799 = vadd.f32 %v5797, %v5798
      %v5800 = vsel %vm2019, %v5695, 0.0
      %v5801 = vadd.f32 %v5799, %v5800
      %v5802 = vsel %vm2019, %v5696, 0.0
      %v5803 = vadd.f32 %v5801, %v5802
      %v5804 = vsel %vm2019, %v5697, 0.0
      %v5805 = vadd.f32 %v5803, %v5804
      %v5806 = vsel %vm2019, %v5698, 0.0
      %v5807 = vadd.f32 %v5805, %v5806
      %v5808 = vsel %vm2019, %v5699, 0.0
      %v5809 = vadd.f32 %v5807, %v5808
      %v5810 = vsel %vm2019, %v5700, 0.0
      %v5811 = vadd.f32 %v5809, %v5810
      %v5812 = vsel %vm2019, %v5701, 0.0
      %v5813 = vadd.f32 %v5811, %v5812
      %v5814 = vsel %vm2019, %v5702, 0.0
      %v5815 = vadd.f32 %v5813, %v5814
      %v5816 = vsel %vm2019, %v5703, 0.0
      %v5817 = vadd.f32 %v5815, %v5816
      %v5818 = vsel %vm2019, %v5704, 0.0
      %v5819 = vadd.f32 %v5817, %v5818
      %v5820 = vsel %vm2019, %v5705, 0.0
      %v5821 = vadd.f32 %v5819, %v5820
      %v5822 = vsel %vm2019, %v5706, 0.0
      %v5823 = vadd.f32 %v5821, %v5822
      %v5824 = vsel %vm2019, %v5707, 0.0
      %v5825 = vadd.f32 %v5823, %v5824
      %v5826 = vsel %vm2019, %v5708, 0.0
      %v5827 = vadd.f32 %v5825, %v5826
      %v5828 = vsel %vm2019, %v5709, 0.0
      %v5829 = vadd.f32 %v5827, %v5828
      %v5830 = vsel %vm2019, %v5710, 0.0
      %v5831 = vadd.f32 %v5829, %v5830
      %v5832 = vsel %vm2019, %v5711, 0.0
      %v5833 = vadd.f32 %v5831, %v5832
      %v5834 = vsel %vm2019, %v5712, 0.0
      %v5835 = vadd.f32 %v5833, %v5834
      %v5836 = vsel %vm2019, %v5713, 0.0
      %v5837 = vadd.f32 %v5835, %v5836
      %v5838 = vsel %vm2019, %v5714, 0.0
      %v5839 = vadd.f32 %v5837, %v5838
      %v5840 = vsel %vm2019, %v5715, 0.0
      %v5841 = vadd.f32 %v5839, %v5840
      %v5842 = vsel %vm2019, %v5716, 0.0
      %v5843 = vadd.f32 %v5841, %v5842
      %v5844 = vrot.slane %v5843, 4
      %v5845 = vadd.f32 %v5843, %v5844
      %v5846 = vrot.slane %v5845, 2
      %v5847 = vadd.f32 %v5845, %v5846
      %v5848 = vrot.slane %v5847, 1
      %v5849 = vadd.f32 %v5847, %v5848
      %v5850 = vmul.f32 %v5849, 0.00390625
      %v5851 = vsub.f32 %v5685, %v5850
      %v5852 = vsub.f32 %v5686, %v5850
      %v5853 = vsub.f32 %v5687, %v5850
      %v5854 = vsub.f32 %v5688, %v5850
      %v5855 = vsub.f32 %v5689, %v5850
      %v5856 = vsub.f32 %v5690, %v5850
      %v5857 = vsub.f32 %v5691, %v5850
      %v5858 = vsub.f32 %v5692, %v5850
      %v5859 = vsub.f32 %v5693, %v5850
      %v5860 = vsub.f32 %v5694, %v5850
      %v5861 = vsub.f32 %v5695, %v5850
      %v5862 = vsub.f32 %v5696, %v5850
      %v5863 = vsub.f32 %v5697, %v5850
      %v5864 = vsub.f32 %v5698, %v5850
      %v5865 = vsub.f32 %v5699, %v5850
      %v5866 = vsub.f32 %v5700, %v5850
      %v5867 = vsub.f32 %v5701, %v5850
      %v5868 = vsub.f32 %v5702, %v5850
      %v5869 = vsub.f32 %v5703, %v5850
      %v5870 = vsub.f32 %v5704, %v5850
      %v5871 = vsub.f32 %v5705, %v5850
      %v5872 = vsub.f32 %v5706, %v5850
      %v5873 = vsub.f32 %v5707, %v5850
      %v5874 = vsub.f32 %v5708, %v5850
      %v5875 = vsub.f32 %v5709, %v5850
      %v5876 = vsub.f32 %v5710, %v5850
      %v5877 = vsub.f32 %v5711, %v5850
      %v5878 = vsub.f32 %v5712, %v5850
      %v5879 = vsub.f32 %v5713, %v5850
      %v5880 = vsub.f32 %v5714, %v5850
      %v5881 = vsub.f32 %v5715, %v5850
      %v5882 = vsub.f32 %v5716, %v5850
      %5883 = vst.msk [vmem:[%s309] sm:$0x1] %vm314, %v5849
      %v5884 = vmul.f32 %v5851, %v5851
      %v5885 = vmul.f32 %v5852, %v5852
      %v5886 = vmul.f32 %v5853, %v5853
      %v5887 = vmul.f32 %v5854, %v5854
      %v5888 = vmul.f32 %v5855, %v5855
      %v5889 = vmul.f32 %v5856, %v5856
      %v5890 = vmul.f32 %v5857, %v5857
      %v5891 = vmul.f32 %v5858, %v5858
      %v5892 = vmul.f32 %v5859, %v5859
      %v5893 = vmul.f32 %v5860, %v5860
      %v5894 = vmul.f32 %v5861, %v5861
      %v5895 = vmul.f32 %v5862, %v5862
      %v5896 = vmul.f32 %v5863, %v5863
      %v5897 = vmul.f32 %v5864, %v5864
      %v5898 = vmul.f32 %v5865, %v5865
      %v5899 = vmul.f32 %v5866, %v5866
      %v5900 = vmul.f32 %v5867, %v5867
      %v5901 = vmul.f32 %v5868, %v5868
      %v5902 = vmul.f32 %v5869, %v5869
      %v5903 = vmul.f32 %v5870, %v5870
      %v5904 = vmul.f32 %v5871, %v5871
      %v5905 = vmul.f32 %v5872, %v5872
      %v5906 = vmul.f32 %v5873, %v5873
      %v5907 = vmul.f32 %v5874, %v5874
      %v5908 = vmul.f32 %v5875, %v5875
      %v5909 = vmul.f32 %v5876, %v5876
      %v5910 = vmul.f32 %v5877, %v5877
      %v5911 = vmul.f32 %v5878, %v5878
      %v5912 = vmul.f32 %v5879, %v5879
      %v5913 = vmul.f32 %v5880, %v5880
      %v5914 = vmul.f32 %v5881, %v5881
      %v5915 = vmul.f32 %v5882, %v5882
      %v5916 = vsel %vm2019, %v5884, 0.0
      %v5917 = vsel %vm2019, %v5885, 0.0
      %v5918 = vadd.f32 %v5916, %v5917
      %v5919 = vsel %vm2019, %v5886, 0.0
      %v5920 = vadd.f32 %v5918, %v5919
      %v5921 = vsel %vm2019, %v5887, 0.0
      %v5922 = vadd.f32 %v5920, %v5921
      %v5923 = vsel %vm2019, %v5888, 0.0
      %v5924 = vadd.f32 %v5922, %v5923
      %v5925 = vsel %vm2019, %v5889, 0.0
      %v5926 = vadd.f32 %v5924, %v5925
      %v5927 = vsel %vm2019, %v5890, 0.0
      %v5928 = vadd.f32 %v5926, %v5927
      %v5929 = vsel %vm2019, %v5891, 0.0
      %v5930 = vadd.f32 %v5928, %v5929
      %v5931 = vsel %vm2019, %v5892, 0.0
      %v5932 = vadd.f32 %v5930, %v5931
      %v5933 = vsel %vm2019, %v5893, 0.0
      %v5934 = vadd.f32 %v5932, %v5933
      %v5935 = vsel %vm2019, %v5894, 0.0
      %v5936 = vadd.f32 %v5934, %v5935
      %v5937 = vsel %vm2019, %v5895, 0.0
      %v5938 = vadd.f32 %v5936, %v5937
      %v5939 = vsel %vm2019, %v5896, 0.0
      %v5940 = vadd.f32 %v5938, %v5939
      %v5941 = vsel %vm2019, %v5897, 0.0
      %v5942 = vadd.f32 %v5940, %v5941
      %v5943 = vsel %vm2019, %v5898, 0.0
      %v5944 = vadd.f32 %v5942, %v5943
      %v5945 = vsel %vm2019, %v5899, 0.0
      %v5946 = vadd.f32 %v5944, %v5945
      %v5947 = vsel %vm2019, %v5900, 0.0
      %v5948 = vadd.f32 %v5946, %v5947
      %v5949 = vsel %vm2019, %v5901, 0.0
      %v5950 = vadd.f32 %v5948, %v5949
      %v5951 = vsel %vm2019, %v5902, 0.0
      %v5952 = vadd.f32 %v5950, %v5951
      %v5953 = vsel %vm2019, %v5903, 0.0
      %v5954 = vadd.f32 %v5952, %v5953
      %v5955 = vsel %vm2019, %v5904, 0.0
      %v5956 = vadd.f32 %v5954, %v5955
      %v5957 = vsel %vm2019, %v5905, 0.0
      %v5958 = vadd.f32 %v5956, %v5957
      %v5959 = vsel %vm2019, %v5906, 0.0
      %v5960 = vadd.f32 %v5958, %v5959
      %v5961 = vsel %vm2019, %v5907, 0.0
      %v5962 = vadd.f32 %v5960, %v5961
      %v5963 = vsel %vm2019, %v5908, 0.0
      %v5964 = vadd.f32 %v5962, %v5963
      %v5965 = vsel %vm2019, %v5909, 0.0
      %v5966 = vadd.f32 %v5964, %v5965
      %v5967 = vsel %vm2019, %v5910, 0.0
      %v5968 = vadd.f32 %v5966, %v5967
      %v5969 = vsel %vm2019, %v5911, 0.0
      %v5970 = vadd.f32 %v5968, %v5969
      %v5971 = vsel %vm2019, %v5912, 0.0
      %v5972 = vadd.f32 %v5970, %v5971
      %v5973 = vsel %vm2019, %v5913, 0.0
      %v5974 = vadd.f32 %v5972, %v5973
      %v5975 = vsel %vm2019, %v5914, 0.0
      %v5976 = vadd.f32 %v5974, %v5975
      %v5977 = vsel %vm2019, %v5915, 0.0
      %v5978 = vadd.f32 %v5976, %v5977
      %v5979 = vrot.slane %v5978, 4
      %v5980 = vadd.f32 %v5978, %v5979
      %v5981 = vrot.slane %v5980, 2
      %v5982 = vadd.f32 %v5980, %v5981
      %v5983 = vrot.slane %v5982, 1
      %v5984 = vadd.f32 %v5982, %v5983
      %5985 = vst.msk [vmem:[%s309 + $0x1] sm:$0x1] %vm314, %v5984
      %p5986 = scmp.lt.s32.totalorder %s19, 1
      %s5987 = scalar_select %p5986, %s19, 1
      %s5988 = smul.addr %s5987, 32
      %s5989 = smul.addr %s5988, 4
      %s5990 = scalar_lea.vmem %s6, %s5989
      %p5991 = scmp.lt.s32.totalorder %s19, 1
      %s5992 = scalar_select %p5991, %s19, 1
      %s5993 = smul.addr %s5992, 2
      %s5994 = scalar_lea.vmem %s7, %s5993
      // Predicated region
      $region45: #{upsampling_block.6} parent=43 // pred_check
        %p5995 = pneg %p173
      $region46: #{upsampling_block.6} parent=43 // pred_check_branch
        %5997 = sbr.rel (%p5995) target = $region48
      $region47: #{upsampling_block.6} parent=43 // pred_region
        _
      $region48: #{upsampling_block.6} parent=43 // pred_fallthru
        _
      // Predicated region
      $region49: #{upsampling_block.6} parent=43 // pred_check
        %p5998 = pneg %p199
      $region50: #{upsampling_block.6} parent=43 // pred_check_branch
        %6000 = sbr.rel (%p5998) target = $region52
      $region51: #{upsampling_block.6} parent=43 // pred_region
        _
      $region52: #{upsampling_block.6} parent=43 // pred_fallthru
        _
    $region44: #{upsampling_block.6} parent=5 // pred_fallthru
      _
    %p6001 = scmp.le.s32.totalorder 2, %s14
    // Predicated region
    $region53: #{upsampling_block.6} parent=5 // pred_check
      %p6002 = pneg %p6001
    $region54: #{upsampling_block.6} parent=5 // pred_check_branch
      %6004 = sbr.rel (%p6002) target = $region56
    $region55: #{upsampling_block.6} parent=5 // pred_region
      %s6005 = ssub.s32 %s14, 2
      // Predicated region
      $region57: #{upsampling_block.6} parent=55 // pred_check
        %p6006 = pneg %p179
      $region58: #{upsampling_block.6} parent=55 // pred_check_branch
        %6008 = sbr.rel (%p6006) target = $region60
      $region59: #{upsampling_block.6} parent=55 // pred_region
        %p6009 = scmp.lt.s32.totalorder %s20, 1
        %s6010 = scalar_select %p6009, %s20, 1
        %s6011 = smul.addr %s6010, 32
        %s6012 = smul.addr %s6011, 4
        %s6013 = scalar_lea.vmem %s6, %s6012
      $region60: #{upsampling_block.6} parent=55 // pred_fallthru
        _
      // Predicated region
      $region61: #{upsampling_block.6} parent=55 // pred_check
        %p6014 = pneg %p205
      $region62: #{upsampling_block.6} parent=55 // pred_check_branch
        %6016 = sbr.rel (%p6014) target = $region64
      $region63: #{upsampling_block.6} parent=55 // pred_region
        %p6017 = scmp.lt.s32.totalorder %s20, 1
        %s6018 = scalar_select %p6017, %s20, 1
        %s6019 = smul.addr %s6018, 2
        %s6020 = scalar_lea.vmem %s7, %s6019
      $region64: #{upsampling_block.6} parent=55 // pred_fallthru
        _
    $region56: #{upsampling_block.6} parent=5 // pred_fallthru
      _
  $region6: #{upsampling_block.6} parent=0 // loop_footer
    %s18 = sadd.s32 1, %s14
  $region7: #{upsampling_block.6} parent=0 // loop_footer_branch
    %13 = sbr.rel target = $region3
  $region8: #{upsampling_block.6} parent=0 // loop_exit
    _

</llo_original>
